<compile_context>
chip_gen: v6e
topology: v6e:2x2x1
jax: 0.10.0
libtpu: 0.0.40
codegen_flags: <defaults>
</compile_context>

<pallas_src>
import functools
import math

import jax
import jax.numpy as jnp
from jax.experimental import pallas as pl
from jax.experimental.pallas import tpu as pltpu

BN_EPS = 1e-5


# --------------------------- fused block kernel --------------------------------

def _bottleneck_kernel(*refs, H, W, D, stride, has_down):
    if has_down:
        (x_ref, wr_ref, br_ref, wc_ref, bc_ref, we_ref, be_ref,
         wd_ref, bd_ref, o_ref, pad_ref) = refs
    else:
        (x_ref, wr_ref, br_ref, wc_ref, bc_ref, we_ref, be_ref,
         o_ref, pad_ref) = refs

    Cin = x_ref.shape[-1]
    Cout = o_ref.shape[-1]
    oh = (H + 2 - 3) // stride + 1
    ow = (W + 2 - 3) // stride + 1

    x = x_ref[0]                                   # (H, W, Cin) f32, one image
    x2d = x.reshape(H * W, Cin)
    x2d_bf = x2d.astype(jnp.bfloat16)

    # --- conv_reduce (1x1) + BN + ReLU (BN scale folded into wr, only bias here) ---
    r = jnp.dot(x2d_bf, wr_ref[...], preferred_element_type=jnp.float32)
    r = jnp.maximum(r + br_ref[...], 0.0)

    # --- grouped 3x3 conv: padded activation in VMEM scratch, 9 tap matmuls -------
    pad_ref[...] = jnp.zeros_like(pad_ref)
    pad_ref[1:H + 1, 1:W + 1, :] = r.reshape(H, W, D)

    acc = jnp.zeros((oh * ow, D), jnp.float32)
    for ti in range(3):
        for tj in range(3):
            if stride == 1:
                tap = pad_ref[ti:ti + oh, tj:tj + ow, :]
            else:
                tap = pad_ref[pl.ds(ti, oh, stride), pl.ds(tj, ow, stride), :]
            a = tap.reshape(oh * ow, D).astype(jnp.bfloat16)
            acc = acc + jnp.dot(a, wc_ref[ti * 3 + tj],
                                preferred_element_type=jnp.float32)
    mid = jnp.maximum(acc + bc_ref[...], 0.0).astype(jnp.bfloat16)

    # --- conv_expand (1x1) + BN --------------------------------------------------
    y = jnp.dot(mid, we_ref[...], preferred_element_type=jnp.float32) + be_ref[...]

    # --- residual (identity or fused downsample conv+BN) + ReLU epilogue ----------
    if has_down:
        if stride == 1:
            xs = x2d_bf
        else:
            xs = x_ref[0, pl.ds(0, oh, stride), pl.ds(0, ow, stride), :]
            xs = xs.reshape(oh * ow, Cin).astype(jnp.bfloat16)
        res = jnp.dot(xs, wd_ref[...], preferred_element_type=jnp.float32) + bd_ref[...]
    else:
        res = x2d                                  # identity: Cin == Cout, stride == 1
    out = jnp.maximum(y + res, 0.0)
    o_ref[0] = out.reshape(oh, ow, Cout).astype(o_ref.dtype)


# --------------------------- wrapper --------------------------------------------

def bottleneck_forward_nhwc(params, x):
    """Fused ResNeXtBottleneck forward. x: (N, H, W, Cin) f32 -> (N, oh, ow, Cout) f32."""
    N, H, W, Cin = x.shape
    stride = params['stride']
    D = params['w_reduce'].shape[1]
    Cout = params['w_expand'].shape[1]
    has_down = 'w_down' in params
    oh = (H + 2 - 3) // stride + 1
    ow = (W + 2 - 3) // stride + 1

    in_specs = [
        pl.BlockSpec((1, H, W, Cin), lambda n: (n, 0, 0, 0)),   # one image per grid step
        pl.BlockSpec((Cin, D), lambda n: (0, 0)),               # weights: grid-resident
        pl.BlockSpec((1, D), lambda n: (0, 0)),
        pl.BlockSpec((9, D, D), lambda n: (0, 0, 0)),
        pl.BlockSpec((1, D), lambda n: (0, 0)),
        pl.BlockSpec((D, Cout), lambda n: (0, 0)),
        pl.BlockSpec((1, Cout), lambda n: (0, 0)),
    ]
    args = [x, params['w_reduce'], params['b_reduce'], params['w_conv'],
            params['b_conv'], params['w_expand'], params['b_expand']]
    if has_down:
        in_specs += [pl.BlockSpec((Cin, Cout), lambda n: (0, 0)),
                     pl.BlockSpec((1, Cout), lambda n: (0, 0))]
        args += [params['w_down'], params['b_down']]

    kernel = functools.partial(_bottleneck_kernel, H=H, W=W, D=D,
                               stride=stride, has_down=has_down)
    return pl.pallas_call(
        kernel,
        out_shape=jax.ShapeDtypeStruct((N, oh, ow, Cout), jnp.float32),
        grid_spec=pltpu.PrefetchScalarGridSpec(
            num_scalar_prefetch=0,
            grid=(N,),
            in_specs=in_specs,
            out_specs=pl.BlockSpec((1, oh, ow, Cout), lambda n: (n, 0, 0, 0)),
            scratch_shapes=[pltpu.VMEM((H + 2, W + 2, D), jnp.float32)],
        ),
        compiler_params=pltpu.CompilerParams(
            dimension_semantics=("parallel",)),
    )(*args)


def bottleneck_forward(params, x_nchw):
    """PyTorch-layout entry point: NCHW f32 in, NCHW f32 out."""
    x = jnp.transpose(x_nchw.astype(jnp.float32), (0, 2, 3, 1))
    y = bottleneck_forward_nhwc(params, x)
    return jnp.transpose(y, (0, 3, 1, 2))


# --------------------------- parameter init -------------------------------------

def _conv_init(key, kh, kw, cin_g, cout):
    std = math.sqrt(2.0 / (kh * kw * cout))
    return jax.random.normal(key, (kh, kw, cin_g, cout), jnp.float32) * std


def _fold_bn(c):
    gamma = jnp.ones((c,), jnp.float32)
    beta = jnp.zeros((c,), jnp.float32)
    mean = jnp.zeros((c,), jnp.float32)
    var = jnp.ones((c,), jnp.float32)
    scale = gamma / jnp.sqrt(var + BN_EPS)
    bias = beta - mean * scale
    return scale, bias


def init_bottleneck(key, inplanes, planes, cardinality, base_width, stride=1):
    """Returns (kernel params, pure-JAX reference params) for one bottleneck block."""
    dim = int(math.floor(planes * (base_width / 64.0)))
    D = dim * cardinality
    Cout = planes * 4
    has_down = (stride != 1) or (inplanes != Cout)
    keys = jax.random.split(key, 4)

    w_reduce = _conv_init(keys[0], 1, 1, inplanes, D)
    w_conv = _conv_init(keys[1], 3, 3, dim, D)          # grouped: cin/group = dim
    w_expand = _conv_init(keys[2], 1, 1, D, Cout)
    s_r, b_r = _fold_bn(D)
    s_c, b_c = _fold_bn(D)
    s_e, b_e = _fold_bn(Cout)

    # block-diagonal per-tap weights (9, D, D) for the grouped conv; BN scale folded in.
    wt = jnp.zeros((9, D, D), jnp.float32)
    wc9 = w_conv.reshape(9, dim, D)
    for g in range(cardinality):
        sl = slice(g * dim, (g + 1) * dim)
        wt = wt.at[:, sl, sl].set(wc9[:, :, sl])

    params = {
        'stride': stride,
        'w_reduce': (w_reduce.reshape(inplanes, D) * s_r).astype(jnp.bfloat16),
        'b_reduce': b_r.reshape(1, D),
        'w_conv': (wt * s_c).astype(jnp.bfloat16),
        'b_conv': b_c.reshape(1, D),
        'w_expand': (w_expand.reshape(D, Cout) * s_e).astype(jnp.bfloat16),
        'b_expand': b_e.reshape(1, Cout),
    }
    ref = {
        'stride': stride, 'groups': cardinality,
        'w_reduce': w_reduce, 's_r': s_r, 'b_r': b_r,
        'w_conv': w_conv, 's_c': s_c, 'b_c': b_c,
        'w_expand': w_expand, 's_e': s_e, 'b_e': b_e,
    }
    if has_down:
        w_down = _conv_init(keys[3], 1, 1, inplanes, Cout)
        s_d, b_d = _fold_bn(Cout)
        params['w_down'] = (w_down.reshape(inplanes, Cout) * s_d).astype(jnp.bfloat16)
        params['b_down'] = b_d.reshape(1, Cout)
        ref.update(w_down=w_down, s_d=s_d, b_d=b_d)
    return params, ref


# --------------------------- pure-JAX f32 reference ------------------------------

def _ref_conv(x, w, stride, padding, groups=1):
    return jax.lax.conv_general_dilated(
        x, w, window_strides=(stride, stride), padding=padding,
        dimension_numbers=('NHWC', 'HWIO', 'NHWC'),
        feature_group_count=groups, precision=jax.lax.Precision.HIGHEST)


def reference_block_nhwc(x, ref):
    r = jax.nn.relu(_ref_conv(x, ref['w_reduce'], 1, 'VALID') * ref['s_r'] + ref['b_r'])
    c = jax.nn.relu(_ref_conv(r, ref['w_conv'], ref['stride'], [(1, 1), (1, 1)],
                              groups=ref['groups']) * ref['s_c'] + ref['b_c'])
    e = _ref_conv(c, ref['w_expand'], 1, 'VALID') * ref['s_e'] + ref['b_e']
    if 'w_down' in ref:
        res = _ref_conv(x, ref['w_down'], ref['stride'], 'VALID') * ref['s_d'] + ref['b_d']
    else:
        res = x
    return jax.nn.relu(e + res)


# --------------------------- main --------------------------------------------------

if __name__ == "__main__":
    key = jax.random.PRNGKey(0)
    k1, k2, kx = jax.random.split(key, 3)

    # Stage-1-style ResNeXt-29 (4x32d) blocks at small shapes.
    # Block 1: 64 -> 256 channels, exercises the downsample-residual path.
    p1, r1 = init_bottleneck(k1, inplanes=64, planes=64, cardinality=4,
                             base_width=32, stride=1)
    # Block 2: 256 -> 256 channels, exercises the identity-residual path.
    p2, r2 = init_bottleneck(k2, inplanes=256, planes=64, cardinality=4,
                             base_width=32, stride=1)

    x_nchw = jax.random.normal(kx, (2, 64, 16, 16), jnp.float32)

    fwd = jax.jit(lambda xin: bottleneck_forward(p2, bottleneck_forward(p1, xin)))
    y = fwd(x_nchw)
    jax.block_until_ready(y)
    assert y.shape == (2, 256, 16, 16) and y.dtype == jnp.float32

    # Per-block tolerance check against a pure-JAX f32 reference (bf16 MXU inputs).
    x_nhwc = jnp.transpose(x_nchw, (0, 2, 3, 1))
    y1 = bottleneck_forward_nhwc(p1, x_nhwc)
    err1 = float(jnp.max(jnp.abs(y1 - reference_block_nhwc(x_nhwc, r1))))
    y2 = bottleneck_forward_nhwc(p2, y1)
    err2 = float(jnp.max(jnp.abs(y2 - reference_block_nhwc(y1, r2))))
    assert err1 < 0.15 and err2 < 0.15, (err1, err2)

    print("KERNEL_OK")
</pallas_src>

<mosaic_0001>
module attributes {stable_mosaic.version = 11 : i64} {
  func.func @_bottleneck_kernel(%arg0: i32, %arg1: memref<1x16x16x256xf32, #tpu.memory_space<vmem>>, %arg2: memref<256x128xbf16, #tpu.memory_space<vmem>>, %arg3: memref<1x128xf32, #tpu.memory_space<vmem>>, %arg4: memref<9x128x128xbf16, #tpu.memory_space<vmem>>, %arg5: memref<1x128xf32, #tpu.memory_space<vmem>>, %arg6: memref<128x256xbf16, #tpu.memory_space<vmem>>, %arg7: memref<1x256xf32, #tpu.memory_space<vmem>>, %arg8: memref<1x16x16x256xf32, #tpu.memory_space<vmem>>, %arg9: memref<18x18x128xf32, #tpu.memory_space<vmem>>) attributes {dimension_semantics = [#tpu.dimension_semantics<parallel>], iteration_bounds = array<i64: 2>, scalar_prefetch = 0 : i64, scratch_operands = 1 : i64, tpu.core_type = #tpu.core_type<tc>, window_params = [{transform_indices = @transform_0, window_bounds = array<i64: 1, 16, 16, 256>}, {pipeline_mode = #tpu.pipeline_mode<synchronous>, transform_indices = @transform_1, window_bounds = array<i64: 256, 128>}, {pipeline_mode = #tpu.pipeline_mode<synchronous>, transform_indices = @transform_2, window_bounds = array<i64: 1, 128>}, {pipeline_mode = #tpu.pipeline_mode<synchronous>, transform_indices = @transform_3, window_bounds = array<i64: 9, 128, 128>}, {pipeline_mode = #tpu.pipeline_mode<synchronous>, transform_indices = @transform_4, window_bounds = array<i64: 1, 128>}, {pipeline_mode = #tpu.pipeline_mode<synchronous>, transform_indices = @transform_5, window_bounds = array<i64: 128, 256>}, {pipeline_mode = #tpu.pipeline_mode<synchronous>, transform_indices = @transform_6, window_bounds = array<i64: 1, 256>}, {transform_indices = @transform_7, window_bounds = array<i64: 1, 16, 16, 256>}]} {
    %c0 = arith.constant 0 : index
    %c0_0 = arith.constant 0 : index
    %c0_1 = arith.constant 0 : index
    %c0_2 = arith.constant 0 : index
    %0 = vector.load %arg1[%c0, %c0_0, %c0_1, %c0_2] : memref<1x16x16x256xf32, #tpu.memory_space<vmem>>, vector<1x16x16x256xf32>
    %1 = vector.shape_cast %0 : vector<1x16x16x256xf32> to vector<16x16x256xf32>
    %2 = vector.shape_cast %1 : vector<16x16x256xf32> to vector<256x256xf32>
    %3 = arith.truncf %2 : vector<256x256xf32> to vector<256x256xbf16>
    %c0_3 = arith.constant 0 : index
    %c0_4 = arith.constant 0 : index
    %4 = vector.load %arg2[%c0_3, %c0_4] : memref<256x128xbf16, #tpu.memory_space<vmem>>, vector<256x128xbf16>
    %cst = arith.constant dense<0.000000e+00> : vector<256x128xf32>
    %5 = tpu.matmul %3, %4, %cst {dimension_numbers = #tpu.dot_dimension_numbers<[1], [0], [0], [1], [0, 0, 1, 1], [], []>} : vector<256x256xbf16>, vector<256x128xbf16>, vector<256x128xf32> -> vector<256x128xf32>
    %c0_5 = arith.constant 0 : index
    %c0_6 = arith.constant 0 : index
    %6 = vector.load %arg3[%c0_5, %c0_6] : memref<1x128xf32, #tpu.memory_space<vmem>>, vector<1x128xf32>
    %7 = vector.broadcast %6 : vector<1x128xf32> to vector<256x128xf32>
    %8 = arith.addf %5, %7 : vector<256x128xf32>
    %cst_7 = arith.constant 0.000000e+00 : f32
    %9 = vector.broadcast %cst_7 : f32 to vector<256x128xf32>
    %10 = arith.maximumf %8, %9 : vector<256x128xf32>
    %cst_8 = arith.constant 0.000000e+00 : f32
    %11 = vector.broadcast %cst_8 : f32 to vector<18x18x128xf32>
    %c0_9 = arith.constant 0 : index
    %c0_10 = arith.constant 0 : index
    %c0_11 = arith.constant 0 : index
    %12 = vector.load %arg9[%c0_9, %c0_10, %c0_11] : memref<18x18x128xf32, #tpu.memory_space<vmem>>, vector<18x18x128xf32>
    tpu.vector_store %arg9[%c0_9, %c0_10, %c0_11], %11 {strides = array<i32>} : memref<18x18x128xf32, #tpu.memory_space<vmem>>, vector<18x18x128xf32>,
    %13 = vector.shape_cast %10 : vector<256x128xf32> to vector<16x16x128xf32>
    %c1 = arith.constant 1 : index
    %c1_12 = arith.constant 1 : index
    %c0_13 = arith.constant 0 : index
    %14 = vector.load %arg9[%c1, %c1_12, %c0_13] : memref<18x18x128xf32, #tpu.memory_space<vmem>>, vector<16x16x128xf32>
    tpu.vector_store %arg9[%c1, %c1_12, %c0_13], %13 {strides = array<i32>} : memref<18x18x128xf32, #tpu.memory_space<vmem>>, vector<16x16x128xf32>,
    %cst_14 = arith.constant 0.000000e+00 : f32
    %15 = vector.broadcast %cst_14 : f32 to vector<256x128xf32>
    %c0_15 = arith.constant 0 : index
    %c0_16 = arith.constant 0 : index
    %c0_17 = arith.constant 0 : index
    %16 = vector.load %arg9[%c0_15, %c0_16, %c0_17] : memref<18x18x128xf32, #tpu.memory_space<vmem>>, vector<16x16x128xf32>
    %17 = vector.shape_cast %16 : vector<16x16x128xf32> to vector<256x128xf32>
    %18 = arith.truncf %17 : vector<256x128xf32> to vector<256x128xbf16>
    %c0_18 = arith.constant 0 : index
    %c0_19 = arith.constant 0 : index
    %c0_20 = arith.constant 0 : index
    %19 = vector.load %arg4[%c0_18, %c0_19, %c0_20] : memref<9x128x128xbf16, #tpu.memory_space<vmem>>, vector<1x128x128xbf16>
    %20 = vector.shape_cast %19 : vector<1x128x128xbf16> to vector<128x128xbf16>
    %cst_21 = arith.constant dense<0.000000e+00> : vector<256x128xf32>
    %21 = tpu.matmul %18, %20, %cst_21 {dimension_numbers = #tpu.dot_dimension_numbers<[1], [0], [0], [1], [0, 0, 1, 1], [], []>} : vector<256x128xbf16>, vector<128x128xbf16>, vector<256x128xf32> -> vector<256x128xf32>
    %22 = arith.addf %15, %21 : vector<256x128xf32>
    %c0_22 = arith.constant 0 : index
    %c1_23 = arith.constant 1 : index
    %c0_24 = arith.constant 0 : index
    %23 = vector.load %arg9[%c0_22, %c1_23, %c0_24] : memref<18x18x128xf32, #tpu.memory_space<vmem>>, vector<16x16x128xf32>
    %24 = vector.shape_cast %23 : vector<16x16x128xf32> to vector<256x128xf32>
    %25 = arith.truncf %24 : vector<256x128xf32> to vector<256x128xbf16>
    %c1_25 = arith.constant 1 : index
    %c0_26 = arith.constant 0 : index
    %c0_27 = arith.constant 0 : index
    %26 = vector.load %arg4[%c1_25, %c0_26, %c0_27] : memref<9x128x128xbf16, #tpu.memory_space<vmem>>, vector<1x128x128xbf16>
    %27 = vector.shape_cast %26 : vector<1x128x128xbf16> to vector<128x128xbf16>
    %cst_28 = arith.constant dense<0.000000e+00> : vector<256x128xf32>
    %28 = tpu.matmul %25, %27, %cst_28 {dimension_numbers = #tpu.dot_dimension_numbers<[1], [0], [0], [1], [0, 0, 1, 1], [], []>} : vector<256x128xbf16>, vector<128x128xbf16>, vector<256x128xf32> -> vector<256x128xf32>
    %29 = arith.addf %22, %28 : vector<256x128xf32>
    %c0_29 = arith.constant 0 : index
    %c2 = arith.constant 2 : index
    %c0_30 = arith.constant 0 : index
    %30 = vector.load %arg9[%c0_29, %c2, %c0_30] : memref<18x18x128xf32, #tpu.memory_space<vmem>>, vector<16x16x128xf32>
    %31 = vector.shape_cast %30 : vector<16x16x128xf32> to vector<256x128xf32>
    %32 = arith.truncf %31 : vector<256x128xf32> to vector<256x128xbf16>
    %c2_31 = arith.constant 2 : index
    %c0_32 = arith.constant 0 : index
    %c0_33 = arith.constant 0 : index
    %33 = vector.load %arg4[%c2_31, %c0_32, %c0_33] : memref<9x128x128xbf16, #tpu.memory_space<vmem>>, vector<1x128x128xbf16>
    %34 = vector.shape_cast %33 : vector<1x128x128xbf16> to vector<128x128xbf16>
    %cst_34 = arith.constant dense<0.000000e+00> : vector<256x128xf32>
    %35 = tpu.matmul %32, %34, %cst_34 {dimension_numbers = #tpu.dot_dimension_numbers<[1], [0], [0], [1], [0, 0, 1, 1], [], []>} : vector<256x128xbf16>, vector<128x128xbf16>, vector<256x128xf32> -> vector<256x128xf32>
    %36 = arith.addf %29, %35 : vector<256x128xf32>
    %c1_35 = arith.constant 1 : index
    %c0_36 = arith.constant 0 : index
    %c0_37 = arith.constant 0 : index
    %37 = vector.load %arg9[%c1_35, %c0_36, %c0_37] : memref<18x18x128xf32, #tpu.memory_space<vmem>>, vector<16x16x128xf32>
    %38 = vector.shape_cast %37 : vector<16x16x128xf32> to vector<256x128xf32>
    %39 = arith.truncf %38 : vector<256x128xf32> to vector<256x128xbf16>
    %c3 = arith.constant 3 : index
    %c0_38 = arith.constant 0 : index
    %c0_39 = arith.constant 0 : index
    %40 = vector.load %arg4[%c3, %c0_38, %c0_39] : memref<9x128x128xbf16, #tpu.memory_space<vmem>>, vector<1x128x128xbf16>
    %41 = vector.shape_cast %40 : vector<1x128x128xbf16> to vector<128x128xbf16>
    %cst_40 = arith.constant dense<0.000000e+00> : vector<256x128xf32>
    %42 = tpu.matmul %39, %41, %cst_40 {dimension_numbers = #tpu.dot_dimension_numbers<[1], [0], [0], [1], [0, 0, 1, 1], [], []>} : vector<256x128xbf16>, vector<128x128xbf16>, vector<256x128xf32> -> vector<256x128xf32>
    %43 = arith.addf %36, %42 : vector<256x128xf32>
    %c1_41 = arith.constant 1 : index
    %c1_42 = arith.constant 1 : index
    %c0_43 = arith.constant 0 : index
    %44 = vector.load %arg9[%c1_41, %c1_42, %c0_43] : memref<18x18x128xf32, #tpu.memory_space<vmem>>, vector<16x16x128xf32>
    %45 = vector.shape_cast %44 : vector<16x16x128xf32> to vector<256x128xf32>
    %46 = arith.truncf %45 : vector<256x128xf32> to vector<256x128xbf16>
    %c4 = arith.constant 4 : index
    %c0_44 = arith.constant 0 : index
    %c0_45 = arith.constant 0 : index
    %47 = vector.load %arg4[%c4, %c0_44, %c0_45] : memref<9x128x128xbf16, #tpu.memory_space<vmem>>, vector<1x128x128xbf16>
    %48 = vector.shape_cast %47 : vector<1x128x128xbf16> to vector<128x128xbf16>
    %cst_46 = arith.constant dense<0.000000e+00> : vector<256x128xf32>
    %49 = tpu.matmul %46, %48, %cst_46 {dimension_numbers = #tpu.dot_dimension_numbers<[1], [0], [0], [1], [0, 0, 1, 1], [], []>} : vector<256x128xbf16>, vector<128x128xbf16>, vector<256x128xf32> -> vector<256x128xf32>
    %50 = arith.addf %43, %49 : vector<256x128xf32>
    %c1_47 = arith.constant 1 : index
    %c2_48 = arith.constant 2 : index
    %c0_49 = arith.constant 0 : index
    %51 = vector.load %arg9[%c1_47, %c2_48, %c0_49] : memref<18x18x128xf32, #tpu.memory_space<vmem>>, vector<16x16x128xf32>
    %52 = vector.shape_cast %51 : vector<16x16x128xf32> to vector<256x128xf32>
    %53 = arith.truncf %52 : vector<256x128xf32> to vector<256x128xbf16>
    %c5 = arith.constant 5 : index
    %c0_50 = arith.constant 0 : index
    %c0_51 = arith.constant 0 : index
    %54 = vector.load %arg4[%c5, %c0_50, %c0_51] : memref<9x128x128xbf16, #tpu.memory_space<vmem>>, vector<1x128x128xbf16>
    %55 = vector.shape_cast %54 : vector<1x128x128xbf16> to vector<128x128xbf16>
    %cst_52 = arith.constant dense<0.000000e+00> : vector<256x128xf32>
    %56 = tpu.matmul %53, %55, %cst_52 {dimension_numbers = #tpu.dot_dimension_numbers<[1], [0], [0], [1], [0, 0, 1, 1], [], []>} : vector<256x128xbf16>, vector<128x128xbf16>, vector<256x128xf32> -> vector<256x128xf32>
    %57 = arith.addf %50, %56 : vector<256x128xf32>
    %c2_53 = arith.constant 2 : index
    %c0_54 = arith.constant 0 : index
    %c0_55 = arith.constant 0 : index
    %58 = vector.load %arg9[%c2_53, %c0_54, %c0_55] : memref<18x18x128xf32, #tpu.memory_space<vmem>>, vector<16x16x128xf32>
    %59 = vector.shape_cast %58 : vector<16x16x128xf32> to vector<256x128xf32>
    %60 = arith.truncf %59 : vector<256x128xf32> to vector<256x128xbf16>
    %c6 = arith.constant 6 : index
    %c0_56 = arith.constant 0 : index
    %c0_57 = arith.constant 0 : index
    %61 = vector.load %arg4[%c6, %c0_56, %c0_57] : memref<9x128x128xbf16, #tpu.memory_space<vmem>>, vector<1x128x128xbf16>
    %62 = vector.shape_cast %61 : vector<1x128x128xbf16> to vector<128x128xbf16>
    %cst_58 = arith.constant dense<0.000000e+00> : vector<256x128xf32>
    %63 = tpu.matmul %60, %62, %cst_58 {dimension_numbers = #tpu.dot_dimension_numbers<[1], [0], [0], [1], [0, 0, 1, 1], [], []>} : vector<256x128xbf16>, vector<128x128xbf16>, vector<256x128xf32> -> vector<256x128xf32>
    %64 = arith.addf %57, %63 : vector<256x128xf32>
    %c2_59 = arith.constant 2 : index
    %c1_60 = arith.constant 1 : index
    %c0_61 = arith.constant 0 : index
    %65 = vector.load %arg9[%c2_59, %c1_60, %c0_61] : memref<18x18x128xf32, #tpu.memory_space<vmem>>, vector<16x16x128xf32>
    %66 = vector.shape_cast %65 : vector<16x16x128xf32> to vector<256x128xf32>
    %67 = arith.truncf %66 : vector<256x128xf32> to vector<256x128xbf16>
    %c7 = arith.constant 7 : index
    %c0_62 = arith.constant 0 : index
    %c0_63 = arith.constant 0 : index
    %68 = vector.load %arg4[%c7, %c0_62, %c0_63] : memref<9x128x128xbf16, #tpu.memory_space<vmem>>, vector<1x128x128xbf16>
    %69 = vector.shape_cast %68 : vector<1x128x128xbf16> to vector<128x128xbf16>
    %cst_64 = arith.constant dense<0.000000e+00> : vector<256x128xf32>
    %70 = tpu.matmul %67, %69, %cst_64 {dimension_numbers = #tpu.dot_dimension_numbers<[1], [0], [0], [1], [0, 0, 1, 1], [], []>} : vector<256x128xbf16>, vector<128x128xbf16>, vector<256x128xf32> -> vector<256x128xf32>
    %71 = arith.addf %64, %70 : vector<256x128xf32>
    %c2_65 = arith.constant 2 : index
    %c2_66 = arith.constant 2 : index
    %c0_67 = arith.constant 0 : index
    %72 = vector.load %arg9[%c2_65, %c2_66, %c0_67] : memref<18x18x128xf32, #tpu.memory_space<vmem>>, vector<16x16x128xf32>
    %73 = vector.shape_cast %72 : vector<16x16x128xf32> to vector<256x128xf32>
    %74 = arith.truncf %73 : vector<256x128xf32> to vector<256x128xbf16>
    %c8 = arith.constant 8 : index
    %c0_68 = arith.constant 0 : index
    %c0_69 = arith.constant 0 : index
    %75 = vector.load %arg4[%c8, %c0_68, %c0_69] : memref<9x128x128xbf16, #tpu.memory_space<vmem>>, vector<1x128x128xbf16>
    %76 = vector.shape_cast %75 : vector<1x128x128xbf16> to vector<128x128xbf16>
    %cst_70 = arith.constant dense<0.000000e+00> : vector<256x128xf32>
    %77 = tpu.matmul %74, %76, %cst_70 {dimension_numbers = #tpu.dot_dimension_numbers<[1], [0], [0], [1], [0, 0, 1, 1], [], []>} : vector<256x128xbf16>, vector<128x128xbf16>, vector<256x128xf32> -> vector<256x128xf32>
    %78 = arith.addf %71, %77 : vector<256x128xf32>
    %c0_71 = arith.constant 0 : index
    %c0_72 = arith.constant 0 : index
    %79 = vector.load %arg5[%c0_71, %c0_72] : memref<1x128xf32, #tpu.memory_space<vmem>>, vector<1x128xf32>
    %80 = vector.broadcast %79 : vector<1x128xf32> to vector<256x128xf32>
    %81 = arith.addf %78, %80 : vector<256x128xf32>
    %cst_73 = arith.constant 0.000000e+00 : f32
    %82 = vector.broadcast %cst_73 : f32 to vector<256x128xf32>
    %83 = arith.maximumf %81, %82 : vector<256x128xf32>
    %84 = arith.truncf %83 : vector<256x128xf32> to vector<256x128xbf16>
    %c0_74 = arith.constant 0 : index
    %c0_75 = arith.constant 0 : index
    %85 = vector.load %arg6[%c0_74, %c0_75] : memref<128x256xbf16, #tpu.memory_space<vmem>>, vector<128x256xbf16>
    %cst_76 = arith.constant dense<0.000000e+00> : vector<256x256xf32>
    %86 = tpu.matmul %84, %85, %cst_76 {dimension_numbers = #tpu.dot_dimension_numbers<[1], [0], [0], [1], [0, 0, 1, 1], [], []>} : vector<256x128xbf16>, vector<128x256xbf16>, vector<256x256xf32> -> vector<256x256xf32>
    %c0_77 = arith.constant 0 : index
    %c0_78 = arith.constant 0 : index
    %87 = vector.load %arg7[%c0_77, %c0_78] : memref<1x256xf32, #tpu.memory_space<vmem>>, vector<1x256xf32>
    %88 = vector.broadcast %87 : vector<1x256xf32> to vector<256x256xf32>
    %89 = arith.addf %86, %88 : vector<256x256xf32>
    %90 = arith.addf %89, %2 : vector<256x256xf32>
    %cst_79 = arith.constant 0.000000e+00 : f32
    %91 = vector.broadcast %cst_79 : f32 to vector<256x256xf32>
    %92 = arith.maximumf %90, %91 : vector<256x256xf32>
    %93 = vector.shape_cast %92 : vector<256x256xf32> to vector<16x16x256xf32>
    %c0_80 = arith.constant 0 : index
    %c0_81 = arith.constant 0 : index
    %c0_82 = arith.constant 0 : index
    %c0_83 = arith.constant 0 : index
    %94 = vector.load %arg8[%c0_80, %c0_81, %c0_82, %c0_83] : memref<1x16x16x256xf32, #tpu.memory_space<vmem>>, vector<1x16x16x256xf32>
    %95 = vector.shape_cast %94 : vector<1x16x16x256xf32> to vector<16x16x256xf32>
    %96 = vector.shape_cast %93 : vector<16x16x256xf32> to vector<1x16x16x256xf32>
    tpu.vector_store %arg8[%c0_80, %c0_81, %c0_82, %c0_83], %96 {strides = array<i32>} : memref<1x16x16x256xf32, #tpu.memory_space<vmem>>, vector<1x16x16x256xf32>,
    return
  }
  func.func @transform_0(%arg0: i32) -> (i32, i32, i32, i32) {
    %c0_i32 = arith.constant 0 : i32
    %c0_i32_0 = arith.constant 0 : i32
    %c0_i32_1 = arith.constant 0 : i32
    %c0_i32_2 = arith.constant 0 : i32
    return %arg0, %c0_i32, %c0_i32_0, %c0_i32_1 : i32, i32, i32, i32
  }
  func.func @transform_1(%arg0: i32) -> (i32, i32) {
    %c0_i32 = arith.constant 0 : i32
    %c0_i32_0 = arith.constant 0 : i32
    %c0_i32_1 = arith.constant 0 : i32
    return %c0_i32, %c0_i32_0 : i32, i32
  }
  func.func @transform_2(%arg0: i32) -> (i32, i32) {
    %c0_i32 = arith.constant 0 : i32
    %c0_i32_0 = arith.constant 0 : i32
    %c0_i32_1 = arith.constant 0 : i32
    return %c0_i32, %c0_i32_0 : i32, i32
  }
  func.func @transform_3(%arg0: i32) -> (i32, i32, i32) {
    %c0_i32 = arith.constant 0 : i32
    %c0_i32_0 = arith.constant 0 : i32
    %c0_i32_1 = arith.constant 0 : i32
    %c0_i32_2 = arith.constant 0 : i32
    return %c0_i32, %c0_i32_0, %c0_i32_1 : i32, i32, i32
  }
  func.func @transform_4(%arg0: i32) -> (i32, i32) {
    %c0_i32 = arith.constant 0 : i32
    %c0_i32_0 = arith.constant 0 : i32
    %c0_i32_1 = arith.constant 0 : i32
    return %c0_i32, %c0_i32_0 : i32, i32
  }
  func.func @transform_5(%arg0: i32) -> (i32, i32) {
    %c0_i32 = arith.constant 0 : i32
    %c0_i32_0 = arith.constant 0 : i32
    %c0_i32_1 = arith.constant 0 : i32
    return %c0_i32, %c0_i32_0 : i32, i32
  }
  func.func @transform_6(%arg0: i32) -> (i32, i32) {
    %c0_i32 = arith.constant 0 : i32
    %c0_i32_0 = arith.constant 0 : i32
    %c0_i32_1 = arith.constant 0 : i32
    return %c0_i32, %c0_i32_0 : i32, i32
  }
  func.func @transform_7(%arg0: i32) -> (i32, i32, i32, i32) {
    %c0_i32 = arith.constant 0 : i32
    %c0_i32_0 = arith.constant 0 : i32
    %c0_i32_1 = arith.constant 0 : i32
    %c0_i32_2 = arith.constant 0 : i32
    return %arg0, %c0_i32, %c0_i32_0, %c0_i32_1 : i32, i32, i32, i32
  }
}

module attributes {stable_mosaic.version = 11 : i64} {
  func.func @_bottleneck_kernel(%arg0: i32, %arg1: memref<1x16x16x64xf32, #tpu.memory_space<vmem>>, %arg2: memref<64x128xbf16, #tpu.memory_space<vmem>>, %arg3: memref<1x128xf32, #tpu.memory_space<vmem>>, %arg4: memref<9x128x128xbf16, #tpu.memory_space<vmem>>, %arg5: memref<1x128xf32, #tpu.memory_space<vmem>>, %arg6: memref<128x256xbf16, #tpu.memory_space<vmem>>, %arg7: memref<1x256xf32, #tpu.memory_space<vmem>>, %arg8: memref<64x256xbf16, #tpu.memory_space<vmem>>, %arg9: memref<1x256xf32, #tpu.memory_space<vmem>>, %arg10: memref<1x16x16x256xf32, #tpu.memory_space<vmem>>, %arg11: memref<18x18x128xf32, #tpu.memory_space<vmem>>) attributes {dimension_semantics = [#tpu.dimension_semantics<parallel>], iteration_bounds = array<i64: 2>, scalar_prefetch = 0 : i64, scratch_operands = 1 : i64, tpu.core_type = #tpu.core_type<tc>, window_params = [{transform_indices = @transform_0, window_bounds = array<i64: 1, 16, 16, 64>}, {pipeline_mode = #tpu.pipeline_mode<synchronous>, transform_indices = @transform_1, window_bounds = array<i64: 64, 128>}, {pipeline_mode = #tpu.pipeline_mode<synchronous>, transform_indices = @transform_2, window_bounds = array<i64: 1, 128>}, {pipeline_mode = #tpu.pipeline_mode<synchronous>, transform_indices = @transform_3, window_bounds = array<i64: 9, 128, 128>}, {pipeline_mode = #tpu.pipeline_mode<synchronous>, transform_indices = @transform_4, window_bounds = array<i64: 1, 128>}, {pipeline_mode = #tpu.pipeline_mode<synchronous>, transform_indices = @transform_5, window_bounds = array<i64: 128, 256>}, {pipeline_mode = #tpu.pipeline_mode<synchronous>, transform_indices = @transform_6, window_bounds = array<i64: 1, 256>}, {pipeline_mode = #tpu.pipeline_mode<synchronous>, transform_indices = @transform_7, window_bounds = array<i64: 64, 256>}, {pipeline_mode = #tpu.pipeline_mode<synchronous>, transform_indices = @transform_8, window_bounds = array<i64: 1, 256>}, {transform_indices = @transform_9, window_bounds = array<i64: 1, 16, 16, 256>}]} {
    %c0 = arith.constant 0 : index
    %c0_0 = arith.constant 0 : index
    %c0_1 = arith.constant 0 : index
    %c0_2 = arith.constant 0 : index
    %0 = vector.load %arg1[%c0, %c0_0, %c0_1, %c0_2] : memref<1x16x16x64xf32, #tpu.memory_space<vmem>>, vector<1x16x16x64xf32>
    %1 = vector.shape_cast %0 : vector<1x16x16x64xf32> to vector<16x16x64xf32>
    %2 = vector.shape_cast %1 : vector<16x16x64xf32> to vector<256x64xf32>
    %3 = arith.truncf %2 : vector<256x64xf32> to vector<256x64xbf16>
    %c0_3 = arith.constant 0 : index
    %c0_4 = arith.constant 0 : index
    %4 = vector.load %arg2[%c0_3, %c0_4] : memref<64x128xbf16, #tpu.memory_space<vmem>>, vector<64x128xbf16>
    %cst = arith.constant dense<0.000000e+00> : vector<256x128xf32>
    %5 = tpu.matmul %3, %4, %cst {dimension_numbers = #tpu.dot_dimension_numbers<[1], [0], [0], [1], [0, 0, 1, 1], [], []>} : vector<256x64xbf16>, vector<64x128xbf16>, vector<256x128xf32> -> vector<256x128xf32>
    %c0_5 = arith.constant 0 : index
    %c0_6 = arith.constant 0 : index
    %6 = vector.load %arg3[%c0_5, %c0_6] : memref<1x128xf32, #tpu.memory_space<vmem>>, vector<1x128xf32>
    %7 = vector.broadcast %6 : vector<1x128xf32> to vector<256x128xf32>
    %8 = arith.addf %5, %7 : vector<256x128xf32>
    %cst_7 = arith.constant 0.000000e+00 : f32
    %9 = vector.broadcast %cst_7 : f32 to vector<256x128xf32>
    %10 = arith.maximumf %8, %9 : vector<256x128xf32>
    %cst_8 = arith.constant 0.000000e+00 : f32
    %11 = vector.broadcast %cst_8 : f32 to vector<18x18x128xf32>
    %c0_9 = arith.constant 0 : index
    %c0_10 = arith.constant 0 : index
    %c0_11 = arith.constant 0 : index
    %12 = vector.load %arg11[%c0_9, %c0_10, %c0_11] : memref<18x18x128xf32, #tpu.memory_space<vmem>>, vector<18x18x128xf32>
    tpu.vector_store %arg11[%c0_9, %c0_10, %c0_11], %11 {strides = array<i32>} : memref<18x18x128xf32, #tpu.memory_space<vmem>>, vector<18x18x128xf32>,
    %13 = vector.shape_cast %10 : vector<256x128xf32> to vector<16x16x128xf32>
    %c1 = arith.constant 1 : index
    %c1_12 = arith.constant 1 : index
    %c0_13 = arith.constant 0 : index
    %14 = vector.load %arg11[%c1, %c1_12, %c0_13] : memref<18x18x128xf32, #tpu.memory_space<vmem>>, vector<16x16x128xf32>
    tpu.vector_store %arg11[%c1, %c1_12, %c0_13], %13 {strides = array<i32>} : memref<18x18x128xf32, #tpu.memory_space<vmem>>, vector<16x16x128xf32>,
    %cst_14 = arith.constant 0.000000e+00 : f32
    %15 = vector.broadcast %cst_14 : f32 to vector<256x128xf32>
    %c0_15 = arith.constant 0 : index
    %c0_16 = arith.constant 0 : index
    %c0_17 = arith.constant 0 : index
    %16 = vector.load %arg11[%c0_15, %c0_16, %c0_17] : memref<18x18x128xf32, #tpu.memory_space<vmem>>, vector<16x16x128xf32>
    %17 = vector.shape_cast %16 : vector<16x16x128xf32> to vector<256x128xf32>
    %18 = arith.truncf %17 : vector<256x128xf32> to vector<256x128xbf16>
    %c0_18 = arith.constant 0 : index
    %c0_19 = arith.constant 0 : index
    %c0_20 = arith.constant 0 : index
    %19 = vector.load %arg4[%c0_18, %c0_19, %c0_20] : memref<9x128x128xbf16, #tpu.memory_space<vmem>>, vector<1x128x128xbf16>
    %20 = vector.shape_cast %19 : vector<1x128x128xbf16> to vector<128x128xbf16>
    %cst_21 = arith.constant dense<0.000000e+00> : vector<256x128xf32>
    %21 = tpu.matmul %18, %20, %cst_21 {dimension_numbers = #tpu.dot_dimension_numbers<[1], [0], [0], [1], [0, 0, 1, 1], [], []>} : vector<256x128xbf16>, vector<128x128xbf16>, vector<256x128xf32> -> vector<256x128xf32>
    %22 = arith.addf %15, %21 : vector<256x128xf32>
    %c0_22 = arith.constant 0 : index
    %c1_23 = arith.constant 1 : index
    %c0_24 = arith.constant 0 : index
    %23 = vector.load %arg11[%c0_22, %c1_23, %c0_24] : memref<18x18x128xf32, #tpu.memory_space<vmem>>, vector<16x16x128xf32>
    %24 = vector.shape_cast %23 : vector<16x16x128xf32> to vector<256x128xf32>
    %25 = arith.truncf %24 : vector<256x128xf32> to vector<256x128xbf16>
    %c1_25 = arith.constant 1 : index
    %c0_26 = arith.constant 0 : index
    %c0_27 = arith.constant 0 : index
    %26 = vector.load %arg4[%c1_25, %c0_26, %c0_27] : memref<9x128x128xbf16, #tpu.memory_space<vmem>>, vector<1x128x128xbf16>
    %27 = vector.shape_cast %26 : vector<1x128x128xbf16> to vector<128x128xbf16>
    %cst_28 = arith.constant dense<0.000000e+00> : vector<256x128xf32>
    %28 = tpu.matmul %25, %27, %cst_28 {dimension_numbers = #tpu.dot_dimension_numbers<[1], [0], [0], [1], [0, 0, 1, 1], [], []>} : vector<256x128xbf16>, vector<128x128xbf16>, vector<256x128xf32> -> vector<256x128xf32>
    %29 = arith.addf %22, %28 : vector<256x128xf32>
    %c0_29 = arith.constant 0 : index
    %c2 = arith.constant 2 : index
    %c0_30 = arith.constant 0 : index
    %30 = vector.load %arg11[%c0_29, %c2, %c0_30] : memref<18x18x128xf32, #tpu.memory_space<vmem>>, vector<16x16x128xf32>
    %31 = vector.shape_cast %30 : vector<16x16x128xf32> to vector<256x128xf32>
    %32 = arith.truncf %31 : vector<256x128xf32> to vector<256x128xbf16>
    %c2_31 = arith.constant 2 : index
    %c0_32 = arith.constant 0 : index
    %c0_33 = arith.constant 0 : index
    %33 = vector.load %arg4[%c2_31, %c0_32, %c0_33] : memref<9x128x128xbf16, #tpu.memory_space<vmem>>, vector<1x128x128xbf16>
    %34 = vector.shape_cast %33 : vector<1x128x128xbf16> to vector<128x128xbf16>
    %cst_34 = arith.constant dense<0.000000e+00> : vector<256x128xf32>
    %35 = tpu.matmul %32, %34, %cst_34 {dimension_numbers = #tpu.dot_dimension_numbers<[1], [0], [0], [1], [0, 0, 1, 1], [], []>} : vector<256x128xbf16>, vector<128x128xbf16>, vector<256x128xf32> -> vector<256x128xf32>
    %36 = arith.addf %29, %35 : vector<256x128xf32>
    %c1_35 = arith.constant 1 : index
    %c0_36 = arith.constant 0 : index
    %c0_37 = arith.constant 0 : index
    %37 = vector.load %arg11[%c1_35, %c0_36, %c0_37] : memref<18x18x128xf32, #tpu.memory_space<vmem>>, vector<16x16x128xf32>
    %38 = vector.shape_cast %37 : vector<16x16x128xf32> to vector<256x128xf32>
    %39 = arith.truncf %38 : vector<256x128xf32> to vector<256x128xbf16>
    %c3 = arith.constant 3 : index
    %c0_38 = arith.constant 0 : index
    %c0_39 = arith.constant 0 : index
    %40 = vector.load %arg4[%c3, %c0_38, %c0_39] : memref<9x128x128xbf16, #tpu.memory_space<vmem>>, vector<1x128x128xbf16>
    %41 = vector.shape_cast %40 : vector<1x128x128xbf16> to vector<128x128xbf16>
    %cst_40 = arith.constant dense<0.000000e+00> : vector<256x128xf32>
    %42 = tpu.matmul %39, %41, %cst_40 {dimension_numbers = #tpu.dot_dimension_numbers<[1], [0], [0], [1], [0, 0, 1, 1], [], []>} : vector<256x128xbf16>, vector<128x128xbf16>, vector<256x128xf32> -> vector<256x128xf32>
    %43 = arith.addf %36, %42 : vector<256x128xf32>
    %c1_41 = arith.constant 1 : index
    %c1_42 = arith.constant 1 : index
    %c0_43 = arith.constant 0 : index
    %44 = vector.load %arg11[%c1_41, %c1_42, %c0_43] : memref<18x18x128xf32, #tpu.memory_space<vmem>>, vector<16x16x128xf32>
    %45 = vector.shape_cast %44 : vector<16x16x128xf32> to vector<256x128xf32>
    %46 = arith.truncf %45 : vector<256x128xf32> to vector<256x128xbf16>
    %c4 = arith.constant 4 : index
    %c0_44 = arith.constant 0 : index
    %c0_45 = arith.constant 0 : index
    %47 = vector.load %arg4[%c4, %c0_44, %c0_45] : memref<9x128x128xbf16, #tpu.memory_space<vmem>>, vector<1x128x128xbf16>
    %48 = vector.shape_cast %47 : vector<1x128x128xbf16> to vector<128x128xbf16>
    %cst_46 = arith.constant dense<0.000000e+00> : vector<256x128xf32>
    %49 = tpu.matmul %46, %48, %cst_46 {dimension_numbers = #tpu.dot_dimension_numbers<[1], [0], [0], [1], [0, 0, 1, 1], [], []>} : vector<256x128xbf16>, vector<128x128xbf16>, vector<256x128xf32> -> vector<256x128xf32>
    %50 = arith.addf %43, %49 : vector<256x128xf32>
    %c1_47 = arith.constant 1 : index
    %c2_48 = arith.constant 2 : index
    %c0_49 = arith.constant 0 : index
    %51 = vector.load %arg11[%c1_47, %c2_48, %c0_49] : memref<18x18x128xf32, #tpu.memory_space<vmem>>, vector<16x16x128xf32>
    %52 = vector.shape_cast %51 : vector<16x16x128xf32> to vector<256x128xf32>
    %53 = arith.truncf %52 : vector<256x128xf32> to vector<256x128xbf16>
    %c5 = arith.constant 5 : index
    %c0_50 = arith.constant 0 : index
    %c0_51 = arith.constant 0 : index
    %54 = vector.load %arg4[%c5, %c0_50, %c0_51] : memref<9x128x128xbf16, #tpu.memory_space<vmem>>, vector<1x128x128xbf16>
    %55 = vector.shape_cast %54 : vector<1x128x128xbf16> to vector<128x128xbf16>
    %cst_52 = arith.constant dense<0.000000e+00> : vector<256x128xf32>
    %56 = tpu.matmul %53, %55, %cst_52 {dimension_numbers = #tpu.dot_dimension_numbers<[1], [0], [0], [1], [0, 0, 1, 1], [], []>} : vector<256x128xbf16>, vector<128x128xbf16>, vector<256x128xf32> -> vector<256x128xf32>
    %57 = arith.addf %50, %56 : vector<256x128xf32>
    %c2_53 = arith.constant 2 : index
    %c0_54 = arith.constant 0 : index
    %c0_55 = arith.constant 0 : index
    %58 = vector.load %arg11[%c2_53, %c0_54, %c0_55] : memref<18x18x128xf32, #tpu.memory_space<vmem>>, vector<16x16x128xf32>
    %59 = vector.shape_cast %58 : vector<16x16x128xf32> to vector<256x128xf32>
    %60 = arith.truncf %59 : vector<256x128xf32> to vector<256x128xbf16>
    %c6 = arith.constant 6 : index
    %c0_56 = arith.constant 0 : index
    %c0_57 = arith.constant 0 : index
    %61 = vector.load %arg4[%c6, %c0_56, %c0_57] : memref<9x128x128xbf16, #tpu.memory_space<vmem>>, vector<1x128x128xbf16>
    %62 = vector.shape_cast %61 : vector<1x128x128xbf16> to vector<128x128xbf16>
    %cst_58 = arith.constant dense<0.000000e+00> : vector<256x128xf32>
    %63 = tpu.matmul %60, %62, %cst_58 {dimension_numbers = #tpu.dot_dimension_numbers<[1], [0], [0], [1], [0, 0, 1, 1], [], []>} : vector<256x128xbf16>, vector<128x128xbf16>, vector<256x128xf32> -> vector<256x128xf32>
    %64 = arith.addf %57, %63 : vector<256x128xf32>
    %c2_59 = arith.constant 2 : index
    %c1_60 = arith.constant 1 : index
    %c0_61 = arith.constant 0 : index
    %65 = vector.load %arg11[%c2_59, %c1_60, %c0_61] : memref<18x18x128xf32, #tpu.memory_space<vmem>>, vector<16x16x128xf32>
    %66 = vector.shape_cast %65 : vector<16x16x128xf32> to vector<256x128xf32>
    %67 = arith.truncf %66 : vector<256x128xf32> to vector<256x128xbf16>
    %c7 = arith.constant 7 : index
    %c0_62 = arith.constant 0 : index
    %c0_63 = arith.constant 0 : index
    %68 = vector.load %arg4[%c7, %c0_62, %c0_63] : memref<9x128x128xbf16, #tpu.memory_space<vmem>>, vector<1x128x128xbf16>
    %69 = vector.shape_cast %68 : vector<1x128x128xbf16> to vector<128x128xbf16>
    %cst_64 = arith.constant dense<0.000000e+00> : vector<256x128xf32>
    %70 = tpu.matmul %67, %69, %cst_64 {dimension_numbers = #tpu.dot_dimension_numbers<[1], [0], [0], [1], [0, 0, 1, 1], [], []>} : vector<256x128xbf16>, vector<128x128xbf16>, vector<256x128xf32> -> vector<256x128xf32>
    %71 = arith.addf %64, %70 : vector<256x128xf32>
    %c2_65 = arith.constant 2 : index
    %c2_66 = arith.constant 2 : index
    %c0_67 = arith.constant 0 : index
    %72 = vector.load %arg11[%c2_65, %c2_66, %c0_67] : memref<18x18x128xf32, #tpu.memory_space<vmem>>, vector<16x16x128xf32>
    %73 = vector.shape_cast %72 : vector<16x16x128xf32> to vector<256x128xf32>
    %74 = arith.truncf %73 : vector<256x128xf32> to vector<256x128xbf16>
    %c8 = arith.constant 8 : index
    %c0_68 = arith.constant 0 : index
    %c0_69 = arith.constant 0 : index
    %75 = vector.load %arg4[%c8, %c0_68, %c0_69] : memref<9x128x128xbf16, #tpu.memory_space<vmem>>, vector<1x128x128xbf16>
    %76 = vector.shape_cast %75 : vector<1x128x128xbf16> to vector<128x128xbf16>
    %cst_70 = arith.constant dense<0.000000e+00> : vector<256x128xf32>
    %77 = tpu.matmul %74, %76, %cst_70 {dimension_numbers = #tpu.dot_dimension_numbers<[1], [0], [0], [1], [0, 0, 1, 1], [], []>} : vector<256x128xbf16>, vector<128x128xbf16>, vector<256x128xf32> -> vector<256x128xf32>
    %78 = arith.addf %71, %77 : vector<256x128xf32>
    %c0_71 = arith.constant 0 : index
    %c0_72 = arith.constant 0 : index
    %79 = vector.load %arg5[%c0_71, %c0_72] : memref<1x128xf32, #tpu.memory_space<vmem>>, vector<1x128xf32>
    %80 = vector.broadcast %79 : vector<1x128xf32> to vector<256x128xf32>
    %81 = arith.addf %78, %80 : vector<256x128xf32>
    %cst_73 = arith.constant 0.000000e+00 : f32
    %82 = vector.broadcast %cst_73 : f32 to vector<256x128xf32>
    %83 = arith.maximumf %81, %82 : vector<256x128xf32>
    %84 = arith.truncf %83 : vector<256x128xf32> to vector<256x128xbf16>
    %c0_74 = arith.constant 0 : index
    %c0_75 = arith.constant 0 : index
    %85 = vector.load %arg6[%c0_74, %c0_75] : memref<128x256xbf16, #tpu.memory_space<vmem>>, vector<128x256xbf16>
    %cst_76 = arith.constant dense<0.000000e+00> : vector<256x256xf32>
    %86 = tpu.matmul %84, %85, %cst_76 {dimension_numbers = #tpu.dot_dimension_numbers<[1], [0], [0], [1], [0, 0, 1, 1], [], []>} : vector<256x128xbf16>, vector<128x256xbf16>, vector<256x256xf32> -> vector<256x256xf32>
    %c0_77 = arith.constant 0 : index
    %c0_78 = arith.constant 0 : index
    %87 = vector.load %arg7[%c0_77, %c0_78] : memref<1x256xf32, #tpu.memory_space<vmem>>, vector<1x256xf32>
    %88 = vector.broadcast %87 : vector<1x256xf32> to vector<256x256xf32>
    %89 = arith.addf %86, %88 : vector<256x256xf32>
    %c0_79 = arith.constant 0 : index
    %c0_80 = arith.constant 0 : index
    %90 = vector.load %arg8[%c0_79, %c0_80] : memref<64x256xbf16, #tpu.memory_space<vmem>>, vector<64x256xbf16>
    %cst_81 = arith.constant dense<0.000000e+00> : vector<256x256xf32>
    %91 = tpu.matmul %3, %90, %cst_81 {dimension_numbers = #tpu.dot_dimension_numbers<[1], [0], [0], [1], [0, 0, 1, 1], [], []>} : vector<256x64xbf16>, vector<64x256xbf16>, vector<256x256xf32> -> vector<256x256xf32>
    %c0_82 = arith.constant 0 : index
    %c0_83 = arith.constant 0 : index
    %92 = vector.load %arg9[%c0_82, %c0_83] : memref<1x256xf32, #tpu.memory_space<vmem>>, vector<1x256xf32>
    %93 = vector.broadcast %92 : vector<1x256xf32> to vector<256x256xf32>
    %94 = arith.addf %91, %93 : vector<256x256xf32>
    %95 = arith.addf %89, %94 : vector<256x256xf32>
    %cst_84 = arith.constant 0.000000e+00 : f32
    %96 = vector.broadcast %cst_84 : f32 to vector<256x256xf32>
    %97 = arith.maximumf %95, %96 : vector<256x256xf32>
    %98 = vector.shape_cast %97 : vector<256x256xf32> to vector<16x16x256xf32>
    %c0_85 = arith.constant 0 : index
    %c0_86 = arith.constant 0 : index
    %c0_87 = arith.constant 0 : index
    %c0_88 = arith.constant 0 : index
    %99 = vector.load %arg10[%c0_85, %c0_86, %c0_87, %c0_88] : memref<1x16x16x256xf32, #tpu.memory_space<vmem>>, vector<1x16x16x256xf32>
    %100 = vector.shape_cast %99 : vector<1x16x16x256xf32> to vector<16x16x256xf32>
    %101 = vector.shape_cast %98 : vector<16x16x256xf32> to vector<1x16x16x256xf32>
    tpu.vector_store %arg10[%c0_85, %c0_86, %c0_87, %c0_88], %101 {strides = array<i32>} : memref<1x16x16x256xf32, #tpu.memory_space<vmem>>, vector<1x16x16x256xf32>,
    return
  }
  func.func @transform_0(%arg0: i32) -> (i32, i32, i32, i32) {
    %c0_i32 = arith.constant 0 : i32
    %c0_i32_0 = arith.constant 0 : i32
    %c0_i32_1 = arith.constant 0 : i32
    %c0_i32_2 = arith.constant 0 : i32
    return %arg0, %c0_i32, %c0_i32_0, %c0_i32_1 : i32, i32, i32, i32
  }
  func.func @transform_1(%arg0: i32) -> (i32, i32) {
    %c0_i32 = arith.constant 0 : i32
    %c0_i32_0 = arith.constant 0 : i32
    %c0_i32_1 = arith.constant 0 : i32
    return %c0_i32, %c0_i32_0 : i32, i32
  }
  func.func @transform_2(%arg0: i32) -> (i32, i32) {
    %c0_i32 = arith.constant 0 : i32
    %c0_i32_0 = arith.constant 0 : i32
    %c0_i32_1 = arith.constant 0 : i32
    return %c0_i32, %c0_i32_0 : i32, i32
  }
  func.func @transform_3(%arg0: i32) -> (i32, i32, i32) {
    %c0_i32 = arith.constant 0 : i32
    %c0_i32_0 = arith.constant 0 : i32
    %c0_i32_1 = arith.constant 0 : i32
    %c0_i32_2 = arith.constant 0 : i32
    return %c0_i32, %c0_i32_0, %c0_i32_1 : i32, i32, i32
  }
  func.func @transform_4(%arg0: i32) -> (i32, i32) {
    %c0_i32 = arith.constant 0 : i32
    %c0_i32_0 = arith.constant 0 : i32
    %c0_i32_1 = arith.constant 0 : i32
    return %c0_i32, %c0_i32_0 : i32, i32
  }
  func.func @transform_5(%arg0: i32) -> (i32, i32) {
    %c0_i32 = arith.constant 0 : i32
    %c0_i32_0 = arith.constant 0 : i32
    %c0_i32_1 = arith.constant 0 : i32
    return %c0_i32, %c0_i32_0 : i32, i32
  }
  func.func @transform_6(%arg0: i32) -> (i32, i32) {
    %c0_i32 = arith.constant 0 : i32
    %c0_i32_0 = arith.constant 0 : i32
    %c0_i32_1 = arith.constant 0 : i32
    return %c0_i32, %c0_i32_0 : i32, i32
  }
  func.func @transform_7(%arg0: i32) -> (i32, i32) {
    %c0_i32 = arith.constant 0 : i32
    %c0_i32_0 = arith.constant 0 : i32
    %c0_i32_1 = arith.constant 0 : i32
    return %c0_i32, %c0_i32_0 : i32, i32
  }
  func.func @transform_8(%arg0: i32) -> (i32, i32) {
    %c0_i32 = arith.constant 0 : i32
    %c0_i32_0 = arith.constant 0 : i32
    %c0_i32_1 = arith.constant 0 : i32
    return %c0_i32, %c0_i32_0 : i32, i32
  }
  func.func @transform_9(%arg0: i32) -> (i32, i32, i32, i32) {
    %c0_i32 = arith.constant 0 : i32
    %c0_i32_0 = arith.constant 0 : i32
    %c0_i32_1 = arith.constant 0 : i32
    %c0_i32_2 = arith.constant 0 : i32
    return %arg0, %c0_i32, %c0_i32_0, %c0_i32_1 : i32, i32, i32, i32
  }
}

</mosaic_0001>

<llo_original>
// kernel: _lambda_.3
$region0: #{_lambda_.3}
  #allocation0 [shape = 'u32[]', space=smem, size = 0x4, offset = 0x4, fixed_abs, tag = 'smem constant byte address 0x4 - core index']
  #allocation1 [shape = 'u32[144,128]{1,0:T(1,128)}', space=vmem, size = 0x12000, scoped, tag = 'internal scratch']
  #allocation2 [shape = 'f32[18,18,128]{2,1,0:T(8,128)}', space=vmem, size = 0x36000, scoped, tag = 'scratch operand']
  %s0 = inlined_call_operand.vmem [shape: f32[2,16,16,256], index: 0, kind: input, shape index: {}]
  %s1 = inlined_call_operand.vmem [shape: bf16[256,128], index: 1, kind: input, shape index: {}]
  %s2 = inlined_call_operand.vmem [shape: f32[1,128], index: 2, kind: input, shape index: {}, may-alias: {2,4}]
  %s3 = inlined_call_operand.vmem [shape: bf16[9,128,128], index: 3, kind: input, shape index: {}]
  %s4 = inlined_call_operand.vmem [shape: f32[1,128], index: 4, kind: input, shape index: {}, may-alias: {2,4}]
  %s5 = inlined_call_operand.vmem [shape: bf16[128,256], index: 5, kind: input, shape index: {}]
  %s6 = inlined_call_operand.vmem [shape: f32[1,256], index: 6, kind: input, shape index: {}]
  %s7 = inlined_call_operand.hbm [shape: f32[2,16,16,256], index: 7, kind: output, shape index: {}]
  %s8 = sld [smem:[#allocation0]]
  $region61: #{_lambda_.3} parent=0
    _
  %s10 = ssub.s32 1, %s8
  %s11 = scalar_select 0, %s10, %s8
  $region1: #{_lambda_.3} parent=0
    #allocation3 [shape = 'u8[524288]{0}', space=vmem, size = 0x80000, scoped, tag = 'output window, operand 0']
    #allocation4 [shape = 's32[2]{0}', space=sflag, size = 0x8, scoped, tag = 'scoped memory for _lambda_.3']
    %12 = vsyncpa [#allocation4], 0
    %s13 = scalar_lea.sflag [#allocation4], 1
    %14 = vsyncpa %s13, 0
    loop: start=0, step=1, limit=4
    $region2: #{_lambda_.3} parent=1 // loop_pre_header
      _
    $region3: #{_lambda_.3} parent=1 // loop_header
      %s16 = sphi 0, %s20
      %p17 = scmp.ge.s32.totalorder %s16, 4
      %s26 = sphi 0, %s28
      %s29 = sphi 0, %s26
      %s30 = sphi 0, %s29
      %s46 = sphi 0, %s30
      %s50 = sphi 0, %s50
      %s52 = sphi 0, %s50
      %s53 = sphi 0, %s52
      %s67 = sphi 0, %s53
      %s71 = sphi 0, %s71
      %s73 = sphi 0, %s71
      %s74 = sphi 0, %s73
      %s88 = sphi 0, %s74
      %s92 = sphi 0, %s92
      %s94 = sphi 0, %s92
      %s95 = sphi 0, %s94
      %s109 = sphi 0, %s95
      %s113 = sphi 0, %s113
      %s115 = sphi 0, %s113
      %s116 = sphi 0, %s115
      %s130 = sphi 0, %s116
      %s134 = sphi 0, %s134
      %s136 = sphi 0, %s134
      %s137 = sphi 0, %s136
      %s151 = sphi 0, %s137
      %s155 = sphi 0, %s155
      %s157 = sphi 0, %s155
      %s158 = sphi 0, %s157
      %s172 = sphi 0, %s158
      %s178 = sphi 0, %s180
      %s181 = sphi 0, %s178
      %s182 = sphi 0, %s181
      %s198 = sphi 0, %s182
    $region4: #{_lambda_.3} parent=1 // loop_header_branch
      %19 = sbr.rel (%p17) target = $region8
    $region5: #{_lambda_.3} parent=1 // loop_body
      %s21 = ssub.s32 %s16, 1
      %s22 = ssub.s32 %s16, 2
      %s23 = sadd.s32 %s16, 1
      %s24 = ssub.s32 %s16, %s23
      %p25 = scmp.eq.s32.totalorder %s24, 0
      %s27 = sadd.s32 %s26, 1
      %s28 = scalar_select %p25, %s26, %s27
      %p31 = pneg %p25
      %p32 = scmp.eq.s32.totalorder %s16, 1
      %p33 = por %p31, %p32
      %p34 = scmp.ne.s32.totalorder %s26, %s29
      %p35 = scmp.eq.s32.totalorder %s16, 0
      %p36 = por %p34, %p35
      %p37 = scmp.ne.s32.totalorder %s26, %s29
      %p38 = scmp.eq.s32.totalorder %s21, 1
      %p39 = por %p37, %p38
      %p40 = scmp.ne.s32.totalorder %s29, %s30
      %p41 = scmp.eq.s32.totalorder %s21, 0
      %p42 = por %p40, %p41
      %p43 = scmp.ne.s32.totalorder %s29, %s30
      %p44 = scmp.eq.s32.totalorder %s22, 1
      %p45 = por %p43, %p44
      %p47 = scmp.ne.s32.totalorder %s30, %s46
      %p48 = scmp.eq.s32.totalorder %s22, 0
      %p49 = por %p47, %p48
      %s51 = sadd.s32 %s50, 1
      %p54 = scmp.eq.s32.totalorder %s16, 1
      %p55 = scmp.ne.s32.totalorder %s50, %s52
      %p56 = scmp.eq.s32.totalorder %s16, 0
      %p57 = por %p55, %p56
      %p58 = scmp.ne.s32.totalorder %s50, %s52
      %p59 = scmp.eq.s32.totalorder %s21, 1
      %p60 = por %p58, %p59
      %p61 = scmp.ne.s32.totalorder %s52, %s53
      %p62 = scmp.eq.s32.totalorder %s21, 0
      %p63 = por %p61, %p62
      %p64 = scmp.ne.s32.totalorder %s52, %s53
      %p65 = scmp.eq.s32.totalorder %s22, 1
      %p66 = por %p64, %p65
      %p68 = scmp.ne.s32.totalorder %s53, %s67
      %p69 = scmp.eq.s32.totalorder %s22, 0
      %p70 = por %p68, %p69
      %s72 = sadd.s32 %s71, 1
      %p75 = scmp.eq.s32.totalorder %s16, 1
      %p76 = scmp.ne.s32.totalorder %s71, %s73
      %p77 = scmp.eq.s32.totalorder %s16, 0
      %p78 = por %p76, %p77
      %p79 = scmp.ne.s32.totalorder %s71, %s73
      %p80 = scmp.eq.s32.totalorder %s21, 1
      %p81 = por %p79, %p80
      %p82 = scmp.ne.s32.totalorder %s73, %s74
      %p83 = scmp.eq.s32.totalorder %s21, 0
      %p84 = por %p82, %p83
      %p85 = scmp.ne.s32.totalorder %s73, %s74
      %p86 = scmp.eq.s32.totalorder %s22, 1
      %p87 = por %p85, %p86
      %p89 = scmp.ne.s32.totalorder %s74, %s88
      %p90 = scmp.eq.s32.totalorder %s22, 0
      %p91 = por %p89, %p90
      %s93 = sadd.s32 %s92, 1
      %p96 = scmp.eq.s32.totalorder %s16, 1
      %p97 = scmp.ne.s32.totalorder %s92, %s94
      %p98 = scmp.eq.s32.totalorder %s16, 0
      %p99 = por %p97, %p98
      %p100 = scmp.ne.s32.totalorder %s92, %s94
      %p101 = scmp.eq.s32.totalorder %s21, 1
      %p102 = por %p100, %p101
      %p103 = scmp.ne.s32.totalorder %s94, %s95
      %p104 = scmp.eq.s32.totalorder %s21, 0
      %p105 = por %p103, %p104
      %p106 = scmp.ne.s32.totalorder %s94, %s95
      %p107 = scmp.eq.s32.totalorder %s22, 1
      %p108 = por %p106, %p107
      %p110 = scmp.ne.s32.totalorder %s95, %s109
      %p111 = scmp.eq.s32.totalorder %s22, 0
      %p112 = por %p110, %p111
      %s114 = sadd.s32 %s113, 1
      %p117 = scmp.eq.s32.totalorder %s16, 1
      %p118 = scmp.ne.s32.totalorder %s113, %s115
      %p119 = scmp.eq.s32.totalorder %s16, 0
      %p120 = por %p118, %p119
      %p121 = scmp.ne.s32.totalorder %s113, %s115
      %p122 = scmp.eq.s32.totalorder %s21, 1
      %p123 = por %p121, %p122
      %p124 = scmp.ne.s32.totalorder %s115, %s116
      %p125 = scmp.eq.s32.totalorder %s21, 0
      %p126 = por %p124, %p125
      %p127 = scmp.ne.s32.totalorder %s115, %s116
      %p128 = scmp.eq.s32.totalorder %s22, 1
      %p129 = por %p127, %p128
      %p131 = scmp.ne.s32.totalorder %s116, %s130
      %p132 = scmp.eq.s32.totalorder %s22, 0
      %p133 = por %p131, %p132
      %s135 = sadd.s32 %s134, 1
      %p138 = scmp.eq.s32.totalorder %s16, 1
      %p139 = scmp.ne.s32.totalorder %s134, %s136
      %p140 = scmp.eq.s32.totalorder %s16, 0
      %p141 = por %p139, %p140
      %p142 = scmp.ne.s32.totalorder %s134, %s136
      %p143 = scmp.eq.s32.totalorder %s21, 1
      %p144 = por %p142, %p143
      %p145 = scmp.ne.s32.totalorder %s136, %s137
      %p146 = scmp.eq.s32.totalorder %s21, 0
      %p147 = por %p145, %p146
      %p148 = scmp.ne.s32.totalorder %s136, %s137
      %p149 = scmp.eq.s32.totalorder %s22, 1
      %p150 = por %p148, %p149
      %p152 = scmp.ne.s32.totalorder %s137, %s151
      %p153 = scmp.eq.s32.totalorder %s22, 0
      %p154 = por %p152, %p153
      %s156 = sadd.s32 %s155, 1
      %p159 = scmp.eq.s32.totalorder %s16, 1
      %p160 = scmp.ne.s32.totalorder %s155, %s157
      %p161 = scmp.eq.s32.totalorder %s16, 0
      %p162 = por %p160, %p161
      %p163 = scmp.ne.s32.totalorder %s155, %s157
      %p164 = scmp.eq.s32.totalorder %s21, 1
      %p165 = por %p163, %p164
      %p166 = scmp.ne.s32.totalorder %s157, %s158
      %p167 = scmp.eq.s32.totalorder %s21, 0
      %p168 = por %p166, %p167
      %p169 = scmp.ne.s32.totalorder %s157, %s158
      %p170 = scmp.eq.s32.totalorder %s22, 1
      %p171 = por %p169, %p170
      %p173 = scmp.ne.s32.totalorder %s158, %s172
      %p174 = scmp.eq.s32.totalorder %s22, 0
      %p175 = por %p173, %p174
      %s176 = ssub.s32 %s16, %s23
      %p177 = scmp.eq.s32.totalorder %s176, 0
      %s179 = sadd.s32 %s178, 1
      %s180 = scalar_select %p177, %s178, %s179
      %p183 = pneg %p177
      %p184 = scmp.eq.s32.totalorder %s16, 1
      %p185 = por %p183, %p184
      %p186 = scmp.ne.s32.totalorder %s178, %s181
      %p187 = scmp.eq.s32.totalorder %s16, 0
      %p188 = por %p186, %p187
      %p189 = scmp.ne.s32.totalorder %s178, %s181
      %p190 = scmp.eq.s32.totalorder %s21, 1
      %p191 = por %p189, %p190
      %p192 = scmp.ne.s32.totalorder %s181, %s182
      %p193 = scmp.eq.s32.totalorder %s21, 0
      %p194 = por %p192, %p193
      %p195 = scmp.ne.s32.totalorder %s181, %s182
      %p196 = scmp.eq.s32.totalorder %s22, 1
      %p197 = por %p195, %p196
      %p199 = scmp.ne.s32.totalorder %s182, %s198
      %p200 = scmp.eq.s32.totalorder %s22, 0
      %p201 = por %p199, %p200
      %p202 = scmp.le.s32.totalorder 1, %s16
      %p203 = scmp.lt.s32.totalorder %s16, 3
      %p204 = pnand %p202, %p203
      %p205 = pneg %p204
      // Predicated region
      $region9: #{_lambda_.3} parent=5 // pred_check
        _
      $region10: #{_lambda_.3} parent=5 // pred_check_branch
        %207 = sbr.rel (%p204) target = $region12
      $region11: #{_lambda_.3} parent=5 // pred_region
        %s208 = ssub.s32 %s16, 1
        // Predicated region
        $region13: #{_lambda_.3} parent=11 // pred_check
          %p209 = pneg %p63
        $region14: #{_lambda_.3} parent=11 // pred_check_branch
          %211 = sbr.rel (%p209) target = $region16
        $region15: #{_lambda_.3} parent=11 // pred_region
          _
        $region16: #{_lambda_.3} parent=11 // pred_fallthru
          _
        // Predicated region
        $region17: #{_lambda_.3} parent=11 // pred_check
          %p212 = pneg %p84
        $region18: #{_lambda_.3} parent=11 // pred_check_branch
          %214 = sbr.rel (%p212) target = $region20
        $region19: #{_lambda_.3} parent=11 // pred_region
          _
        $region20: #{_lambda_.3} parent=11 // pred_fallthru
          _
        // Predicated region
        $region21: #{_lambda_.3} parent=11 // pred_check
          %p215 = pneg %p105
        $region22: #{_lambda_.3} parent=11 // pred_check_branch
          %217 = sbr.rel (%p215) target = $region24
        $region23: #{_lambda_.3} parent=11 // pred_region
          _
        $region24: #{_lambda_.3} parent=11 // pred_fallthru
          _
        // Predicated region
        $region25: #{_lambda_.3} parent=11 // pred_check
          %p218 = pneg %p126
        $region26: #{_lambda_.3} parent=11 // pred_check_branch
          %220 = sbr.rel (%p218) target = $region28
        $region27: #{_lambda_.3} parent=11 // pred_region
          _
        $region28: #{_lambda_.3} parent=11 // pred_fallthru
          _
        // Predicated region
        $region29: #{_lambda_.3} parent=11 // pred_check
          %p221 = pneg %p147
        $region30: #{_lambda_.3} parent=11 // pred_check_branch
          %223 = sbr.rel (%p221) target = $region32
        $region31: #{_lambda_.3} parent=11 // pred_region
          _
        $region32: #{_lambda_.3} parent=11 // pred_fallthru
          _
        // Predicated region
        $region33: #{_lambda_.3} parent=11 // pred_check
          %p224 = pneg %p168
        $region34: #{_lambda_.3} parent=11 // pred_check_branch
          %226 = sbr.rel (%p224) target = $region36
        $region35: #{_lambda_.3} parent=11 // pred_region
          _
        $region36: #{_lambda_.3} parent=11 // pred_fallthru
          _
      $region12: #{_lambda_.3} parent=5 // pred_fallthru
        _
      %p227 = scmp.lt.s32.totalorder %s16, 2
      // Predicated region
      $region37: #{_lambda_.3} parent=5 // pred_check
        %p228 = pneg %p227
      $region38: #{_lambda_.3} parent=5 // pred_check_branch
        %230 = sbr.rel (%p228) target = $region40
      $region39: #{_lambda_.3} parent=5 // pred_region
        // Predicated region
        $region41: #{_lambda_.3} parent=39 // pred_check
          %p231 = pneg %p36
        $region42: #{_lambda_.3} parent=39 // pred_check_branch
          %233 = sbr.rel (%p231) target = $region44
        $region43: #{_lambda_.3} parent=39 // pred_region
          %p234 = scmp.lt.s32.totalorder %s16, 1
          %s235 = scalar_select %p234, %s16, 1
          %s236 = smul.addr %s235, 64
          %s237 = smul.addr %s236, 8
          %s238 = scalar_lea.vmem %s0, %s237
        $region44: #{_lambda_.3} parent=39 // pred_fallthru
          _
      $region40: #{_lambda_.3} parent=5 // pred_fallthru
        _
      %p239 = scmp.le.s32.totalorder 1, %s16
      %p240 = scmp.lt.s32.totalorder %s16, 3
      %p241 = pnand %p239, %p240
      %p242 = pneg %p241
      // Predicated region
      $region45: #{_lambda_.3} parent=5 // pred_check
        _
      $region46: #{_lambda_.3} parent=5 // pred_check_branch
        %244 = sbr.rel (%p241) target = $region48
      $region47: #{_lambda_.3} parent=5 // pred_region
        %s245 = ssub.s32 %s16, 1
        %p246 = scmp.lt.s32.totalorder %s21, 1
        %s247 = scalar_select %p246, %s21, 1
        %s248 = smul.addr %s247, 64
        %s249 = smul.addr %s248, 8
        %s250 = scalar_lea.vmem %s0, %s249
        %p251 = pneg %p42
        %p252 = pneg %p39
        %p253 = pneg %p63
        %p254 = pneg %p60
        %p255 = pneg %p84
        %p256 = pneg %p81
        %p257 = pneg %p105
        %p258 = pneg %p102
        %p259 = pneg %p126
        %p260 = pneg %p123
        %p261 = pneg %p147
        %p262 = pneg %p144
        %p263 = pneg %p168
        %p264 = pneg %p165
        %p265 = pneg %p194
        %p266 = pneg %p191
        %s267 = sand.u32 %s181, 1
        %s268 = scalar_lea.sflag [#allocation4], %s267
        %s269 = sand.u32 %s181, 1
        %s270 = smul.addr %s269, 512
        %s271 = scalar_lea.vmem [#allocation3], %s270
        %p272 = scmp.lt.s32.totalorder %s21, 1
        %s273 = scalar_select %p272, %s21, 1
        %s274 = smul.addr %s273, 64
        %s275 = smul.addr %s274, 8
        %s276 = scalar_lea.vmem %s0, %s275
        %v278 = vld [vmem:[%s276] sm:$0xff]
        %v279 = vld [vmem:[%s276 + $0x8] sm:$0xff]
        %v280 = vld [vmem:[%s276 + $0x10] sm:$0xff]
        %v281 = vld [vmem:[%s276 + $0x18] sm:$0xff]
        %v282 = vld [vmem:[%s276 + $0x20] sm:$0xff]
        %v283 = vld [vmem:[%s276 + $0x28] sm:$0xff]
        %v284 = vld [vmem:[%s276 + $0x30] sm:$0xff]
        %v285 = vld [vmem:[%s276 + $0x38] sm:$0xff]
        %v286 = vld [vmem:[%s276 + $0x40] sm:$0xff]
        %v287 = vld [vmem:[%s276 + $0x48] sm:$0xff]
        %v288 = vld [vmem:[%s276 + $0x50] sm:$0xff]
        %v289 = vld [vmem:[%s276 + $0x58] sm:$0xff]
        %v290 = vld [vmem:[%s276 + $0x60] sm:$0xff]
        %v291 = vld [vmem:[%s276 + $0x68] sm:$0xff]
        %v292 = vld [vmem:[%s276 + $0x70] sm:$0xff]
        %v293 = vld [vmem:[%s276 + $0x78] sm:$0xff]
        %v294 = vld [vmem:[%s276 + $0x80] sm:$0xff]
        %v295 = vld [vmem:[%s276 + $0x88] sm:$0xff]
        %v296 = vld [vmem:[%s276 + $0x90] sm:$0xff]
        %v297 = vld [vmem:[%s276 + $0x98] sm:$0xff]
        %v298 = vld [vmem:[%s276 + $0xa0] sm:$0xff]
        %v299 = vld [vmem:[%s276 + $0xa8] sm:$0xff]
        %v300 = vld [vmem:[%s276 + $0xb0] sm:$0xff]
        %v301 = vld [vmem:[%s276 + $0xb8] sm:$0xff]
        %v302 = vld [vmem:[%s276 + $0xc0] sm:$0xff]
        %v303 = vld [vmem:[%s276 + $0xc8] sm:$0xff]
        %v304 = vld [vmem:[%s276 + $0xd0] sm:$0xff]
        %v305 = vld [vmem:[%s276 + $0xd8] sm:$0xff]
        %v306 = vld [vmem:[%s276 + $0xe0] sm:$0xff]
        %v307 = vld [vmem:[%s276 + $0xe8] sm:$0xff]
        %v308 = vld [vmem:[%s276 + $0xf0] sm:$0xff]
        %v309 = vld [vmem:[%s276 + $0xf8] sm:$0xff]
        %v310 = vld [vmem:[%s276 + $0x100] sm:$0xff]
        %v311 = vld [vmem:[%s276 + $0x108] sm:$0xff]
        %v312 = vld [vmem:[%s276 + $0x110] sm:$0xff]
        %v313 = vld [vmem:[%s276 + $0x118] sm:$0xff]
        %v314 = vld [vmem:[%s276 + $0x120] sm:$0xff]
        %v315 = vld [vmem:[%s276 + $0x128] sm:$0xff]
        %v316 = vld [vmem:[%s276 + $0x130] sm:$0xff]
        %v317 = vld [vmem:[%s276 + $0x138] sm:$0xff]
        %v318 = vld [vmem:[%s276 + $0x140] sm:$0xff]
        %v319 = vld [vmem:[%s276 + $0x148] sm:$0xff]
        %v320 = vld [vmem:[%s276 + $0x150] sm:$0xff]
        %v321 = vld [vmem:[%s276 + $0x158] sm:$0xff]
        %v322 = vld [vmem:[%s276 + $0x160] sm:$0xff]
        %v323 = vld [vmem:[%s276 + $0x168] sm:$0xff]
        %v324 = vld [vmem:[%s276 + $0x170] sm:$0xff]
        %v325 = vld [vmem:[%s276 + $0x178] sm:$0xff]
        %v326 = vld [vmem:[%s276 + $0x180] sm:$0xff]
        %v327 = vld [vmem:[%s276 + $0x188] sm:$0xff]
        %v328 = vld [vmem:[%s276 + $0x190] sm:$0xff]
        %v329 = vld [vmem:[%s276 + $0x198] sm:$0xff]
        %v330 = vld [vmem:[%s276 + $0x1a0] sm:$0xff]
        %v331 = vld [vmem:[%s276 + $0x1a8] sm:$0xff]
        %v332 = vld [vmem:[%s276 + $0x1b0] sm:$0xff]
        %v333 = vld [vmem:[%s276 + $0x1b8] sm:$0xff]
        %v334 = vld [vmem:[%s276 + $0x1c0] sm:$0xff]
        %v335 = vld [vmem:[%s276 + $0x1c8] sm:$0xff]
        %v336 = vld [vmem:[%s276 + $0x1d0] sm:$0xff]
        %v337 = vld [vmem:[%s276 + $0x1d8] sm:$0xff]
        %v338 = vld [vmem:[%s276 + $0x1e0] sm:$0xff]
        %v339 = vld [vmem:[%s276 + $0x1e8] sm:$0xff]
        %v340 = vld [vmem:[%s276 + $0x1f0] sm:$0xff]
        %v341 = vld [vmem:[%s276 + $0x1f8] sm:$0xff]
        %v342 = vpack.c.bf16 %v280, %v278
        %v343 = vpack.c.bf16 %v281, %v279
        %v344 = vpack.c.bf16 %v284, %v282
        %v345 = vpack.c.bf16 %v285, %v283
        %v346 = vpack.c.bf16 %v288, %v286
        %v347 = vpack.c.bf16 %v289, %v287
        %v348 = vpack.c.bf16 %v292, %v290
        %v349 = vpack.c.bf16 %v293, %v291
        %v350 = vpack.c.bf16 %v296, %v294
        %v351 = vpack.c.bf16 %v297, %v295
        %v352 = vpack.c.bf16 %v300, %v298
        %v353 = vpack.c.bf16 %v301, %v299
        %v354 = vpack.c.bf16 %v304, %v302
        %v355 = vpack.c.bf16 %v305, %v303
        %v356 = vpack.c.bf16 %v308, %v306
        %v357 = vpack.c.bf16 %v309, %v307
        %v358 = vpack.c.bf16 %v312, %v310
        %v359 = vpack.c.bf16 %v313, %v311
        %v360 = vpack.c.bf16 %v316, %v314
        %v361 = vpack.c.bf16 %v317, %v315
        %v362 = vpack.c.bf16 %v320, %v318
        %v363 = vpack.c.bf16 %v321, %v319
        %v364 = vpack.c.bf16 %v324, %v322
        %v365 = vpack.c.bf16 %v325, %v323
        %v366 = vpack.c.bf16 %v328, %v326
        %v367 = vpack.c.bf16 %v329, %v327
        %v368 = vpack.c.bf16 %v332, %v330
        %v369 = vpack.c.bf16 %v333, %v331
        %v370 = vpack.c.bf16 %v336, %v334
        %v371 = vpack.c.bf16 %v337, %v335
        %v372 = vpack.c.bf16 %v340, %v338
        %v373 = vpack.c.bf16 %v341, %v339
        %v374 = vld [vmem:[%s1] sm:$0xf]
        %v375 = vld [vmem:[%s1 + $0x4] sm:$0xf]
        %v376 = vld [vmem:[%s1 + $0x8] sm:$0xf]
        %v377 = vld [vmem:[%s1 + $0xc] sm:$0xf]
        %v378 = vld [vmem:[%s1 + $0x10] sm:$0xf]
        %v379 = vld [vmem:[%s1 + $0x14] sm:$0xf]
        %v380 = vld [vmem:[%s1 + $0x18] sm:$0xf]
        %v381 = vld [vmem:[%s1 + $0x1c] sm:$0xf]
        %v382 = vld [vmem:[%s1 + $0x20] sm:$0xf]
        %v383 = vld [vmem:[%s1 + $0x24] sm:$0xf]
        %v384 = vld [vmem:[%s1 + $0x28] sm:$0xf]
        %v385 = vld [vmem:[%s1 + $0x2c] sm:$0xf]
        %v386 = vld [vmem:[%s1 + $0x30] sm:$0xf]
        %v387 = vld [vmem:[%s1 + $0x34] sm:$0xf]
        %v388 = vld [vmem:[%s1 + $0x38] sm:$0xf]
        %v389 = vld [vmem:[%s1 + $0x3c] sm:$0xf]
        %v390 = vld [vmem:[%s1 + $0x40] sm:$0xf]
        %v391 = vld [vmem:[%s1 + $0x44] sm:$0xf]
        %v392 = vld [vmem:[%s1 + $0x48] sm:$0xf]
        %v393 = vld [vmem:[%s1 + $0x4c] sm:$0xf]
        %v394 = vld [vmem:[%s1 + $0x50] sm:$0xf]
        %v395 = vld [vmem:[%s1 + $0x54] sm:$0xf]
        %v396 = vld [vmem:[%s1 + $0x58] sm:$0xf]
        %v397 = vld [vmem:[%s1 + $0x5c] sm:$0xf]
        %v398 = vld [vmem:[%s1 + $0x60] sm:$0xf]
        %v399 = vld [vmem:[%s1 + $0x64] sm:$0xf]
        %v400 = vld [vmem:[%s1 + $0x68] sm:$0xf]
        %v401 = vld [vmem:[%s1 + $0x6c] sm:$0xf]
        %v402 = vld [vmem:[%s1 + $0x70] sm:$0xf]
        %v403 = vld [vmem:[%s1 + $0x74] sm:$0xf]
        %v404 = vld [vmem:[%s1 + $0x78] sm:$0xf]
        %v405 = vld [vmem:[%s1 + $0x7c] sm:$0xf]
        %v406 = vld [vmem:[%s2] sm:$0x1]
        %v408 = vlaneseq
        %v409 = vshrl.u32 %v408, 7
        %v410 = vsub.s32 0, %v409
        %v411 = vrot.slane %v406, %v410
        %v445 = vunpack.c.l.b16 %v374
        %v446 = vunpack.c.l.b16 %v375
        %v447 = vunpack.c.l.b16 %v376
        %v448 = vunpack.c.l.b16 %v377
        %v449 = vunpack.c.l.b16 %v378
        %v450 = vunpack.c.l.b16 %v379
        %v451 = vunpack.c.l.b16 %v380
        %v452 = vunpack.c.l.b16 %v381
        %v453 = vunpack.c.l.b16 %v382
        %v454 = vunpack.c.l.b16 %v383
        %v455 = vunpack.c.l.b16 %v384
        %v456 = vunpack.c.l.b16 %v385
        %v457 = vunpack.c.l.b16 %v386
        %v458 = vunpack.c.l.b16 %v387
        %v459 = vunpack.c.l.b16 %v388
        %v460 = vunpack.c.l.b16 %v389
        %v461 = vunpack.c.l.b16 %v390
        %v462 = vunpack.c.l.b16 %v391
        %v463 = vunpack.c.l.b16 %v392
        %v464 = vunpack.c.l.b16 %v393
        %v465 = vunpack.c.l.b16 %v394
        %v466 = vunpack.c.l.b16 %v395
        %v467 = vunpack.c.l.b16 %v396
        %v468 = vunpack.c.l.b16 %v397
        %v469 = vunpack.c.l.b16 %v398
        %v470 = vunpack.c.l.b16 %v399
        %v471 = vunpack.c.l.b16 %v400
        %v472 = vunpack.c.l.b16 %v401
        %v473 = vunpack.c.l.b16 %v402
        %v474 = vunpack.c.l.b16 %v403
        %v475 = vunpack.c.l.b16 %v404
        %v476 = vunpack.c.l.b16 %v405
        %v477 = vpack.c.b16 %v446, %v445
        %v478 = vpack.c.b16 %v448, %v447
        %v479 = vpack.c.b16 %v450, %v449
        %v480 = vpack.c.b16 %v452, %v451
        %v481 = vpack.c.b16 %v454, %v453
        %v482 = vpack.c.b16 %v456, %v455
        %v483 = vpack.c.b16 %v458, %v457
        %v484 = vpack.c.b16 %v460, %v459
        %v485 = vpack.c.b16 %v462, %v461
        %v486 = vpack.c.b16 %v464, %v463
        %v487 = vpack.c.b16 %v466, %v465
        %v488 = vpack.c.b16 %v468, %v467
        %v489 = vpack.c.b16 %v470, %v469
        %v490 = vpack.c.b16 %v472, %v471
        %v491 = vpack.c.b16 %v474, %v473
        %v492 = vpack.c.b16 %v476, %v475
        %509 = vmatprep.subr.bf16.mxu0 0
        %510 = vmatpush1.bf16.msra.mxu0 %v484
        %511 = vmatprep.subr.bf16.mxu0 0
        %512 = vmatpush1.bf16.msra.mxu0 %v483
        %513 = vmatprep.subr.bf16.mxu0 0
        %514 = vmatpush1.bf16.msra.mxu0 %v482
        %515 = vmatprep.subr.bf16.mxu0 0
        %516 = vmatpush1.bf16.msra.mxu0 %v481
        %517 = vmatprep.subr.bf16.mxu0 0
        %518 = vmatpush1.bf16.msra.mxu0 %v480
        %519 = vmatprep.subr.bf16.mxu0 0
        %520 = vmatpush1.bf16.msra.mxu0 %v479
        %521 = vmatprep.subr.bf16.mxu0 0
        %522 = vmatpush1.bf16.msra.mxu0 %v478
        %523 = vmatprep.subr.bf16.mxu0 0
        %524 = vmatpush1.bf16.msra.mxu0 %v477
        %525 = vmatprep.subr.bf16.mxu0 0
        %526 = vmatpush2.bf16.msra.mxu0 %v492
        %527 = vmatprep.subr.bf16.mxu0 0
        %528 = vmatpush2.bf16.msra.mxu0 %v491
        %529 = vmatprep.subr.bf16.mxu0 0
        %530 = vmatpush2.bf16.msra.mxu0 %v490
        %531 = vmatprep.subr.bf16.mxu0 0
        %532 = vmatpush2.bf16.msra.mxu0 %v489
        %533 = vmatprep.subr.bf16.mxu0 0
        %534 = vmatpush2.bf16.msra.mxu0 %v488
        %535 = vmatprep.subr.bf16.mxu0 0
        %536 = vmatpush2.bf16.msra.mxu0 %v487
        %537 = vmatprep.subr.bf16.mxu0 0
        %538 = vmatpush2.bf16.msra.mxu0 %v486
        %539 = vmatprep.subr.bf16.mxu0 0
        %540 = vmatpush2.bf16.msra.mxu0 %v485
        %541 = vmatprep.mubr.bf16.mxu0 %v343
        %542 = vmatmul.mubr.bf16.gmra.mxu0 %v342
        %v543 = vpop.f32.mrf.mxu0
        %v544 = vadd.f32 %v411, %v543
        %v545 = vpop.f32.mrf.mxu0
        %v546 = vpop.f32.mrf.mxu0
        %v547 = vadd.f32 %v411, %v546
        %v548 = vpop.f32.mrf.mxu0
        %549 = vmatprep.mubr.bf16.mxu0 %v345
        %550 = vmatmul.mubr.bf16.gmra.mxu0 %v344
        %v551 = vpop.f32.mrf.mxu0
        %v552 = vadd.f32 %v411, %v551
        %v553 = vpop.f32.mrf.mxu0
        %v554 = vpop.f32.mrf.mxu0
        %v555 = vadd.f32 %v411, %v554
        %v556 = vpop.f32.mrf.mxu0
        %557 = vmatprep.mubr.bf16.mxu0 %v347
        %558 = vmatmul.mubr.bf16.gmra.mxu0 %v346
        %v559 = vpop.f32.mrf.mxu0
        %v560 = vadd.f32 %v411, %v559
        %v561 = vpop.f32.mrf.mxu0
        %v562 = vpop.f32.mrf.mxu0
        %v563 = vadd.f32 %v411, %v562
        %v564 = vpop.f32.mrf.mxu0
        %565 = vmatprep.mubr.bf16.mxu0 %v349
        %566 = vmatmul.mubr.bf16.gmra.mxu0 %v348
        %v567 = vpop.f32.mrf.mxu0
        %v568 = vadd.f32 %v411, %v567
        %v569 = vpop.f32.mrf.mxu0
        %v570 = vpop.f32.mrf.mxu0
        %v571 = vadd.f32 %v411, %v570
        %v572 = vpop.f32.mrf.mxu0
        %573 = vmatprep.mubr.bf16.mxu0 %v351
        %574 = vmatmul.mubr.bf16.gmra.mxu0 %v350
        %v575 = vpop.f32.mrf.mxu0
        %v576 = vadd.f32 %v411, %v575
        %v577 = vpop.f32.mrf.mxu0
        %v578 = vpop.f32.mrf.mxu0
        %v579 = vadd.f32 %v411, %v578
        %v580 = vpop.f32.mrf.mxu0
        %581 = vmatprep.mubr.bf16.mxu0 %v353
        %582 = vmatmul.mubr.bf16.gmra.mxu0 %v352
        %v583 = vpop.f32.mrf.mxu0
        %v584 = vadd.f32 %v411, %v583
        %v585 = vpop.f32.mrf.mxu0
        %v586 = vpop.f32.mrf.mxu0
        %v587 = vadd.f32 %v411, %v586
        %v588 = vpop.f32.mrf.mxu0
        %589 = vmatprep.mubr.bf16.mxu0 %v355
        %590 = vmatmul.mubr.bf16.gmra.mxu0 %v354
        %v591 = vpop.f32.mrf.mxu0
        %v592 = vadd.f32 %v411, %v591
        %v593 = vpop.f32.mrf.mxu0
        %v594 = vpop.f32.mrf.mxu0
        %v595 = vadd.f32 %v411, %v594
        %v596 = vpop.f32.mrf.mxu0
        %597 = vmatprep.mubr.bf16.mxu0 %v357
        %598 = vmatmul.mubr.bf16.gmra.mxu0 %v356
        %v599 = vpop.f32.mrf.mxu0
        %v600 = vadd.f32 %v411, %v599
        %v601 = vpop.f32.mrf.mxu0
        %v602 = vpop.f32.mrf.mxu0
        %v603 = vadd.f32 %v411, %v602
        %v604 = vpop.f32.mrf.mxu0
        %605 = vmatprep.mubr.bf16.mxu0 %v359
        %606 = vmatmul.mubr.bf16.gmra.mxu0 %v358
        %v607 = vpop.f32.mrf.mxu0
        %v608 = vadd.f32 %v411, %v607
        %v609 = vpop.f32.mrf.mxu0
        %v610 = vpop.f32.mrf.mxu0
        %v611 = vadd.f32 %v411, %v610
        %v612 = vpop.f32.mrf.mxu0
        %613 = vmatprep.mubr.bf16.mxu0 %v361
        %614 = vmatmul.mubr.bf16.gmra.mxu0 %v360
        %v615 = vpop.f32.mrf.mxu0
        %v616 = vadd.f32 %v411, %v615
        %v617 = vpop.f32.mrf.mxu0
        %v618 = vpop.f32.mrf.mxu0
        %v619 = vadd.f32 %v411, %v618
        %v620 = vpop.f32.mrf.mxu0
        %621 = vmatprep.mubr.bf16.mxu0 %v363
        %622 = vmatmul.mubr.bf16.gmra.mxu0 %v362
        %v623 = vpop.f32.mrf.mxu0
        %v624 = vadd.f32 %v411, %v623
        %v625 = vpop.f32.mrf.mxu0
        %v626 = vpop.f32.mrf.mxu0
        %v627 = vadd.f32 %v411, %v626
        %v628 = vpop.f32.mrf.mxu0
        %629 = vmatprep.mubr.bf16.mxu0 %v365
        %630 = vmatmul.mubr.bf16.gmra.mxu0 %v364
        %v631 = vpop.f32.mrf.mxu0
        %v632 = vadd.f32 %v411, %v631
        %v633 = vpop.f32.mrf.mxu0
        %v634 = vpop.f32.mrf.mxu0
        %v635 = vadd.f32 %v411, %v634
        %v636 = vpop.f32.mrf.mxu0
        %637 = vmatprep.mubr.bf16.mxu0 %v367
        %638 = vmatmul.mubr.bf16.gmra.mxu0 %v366
        %v639 = vpop.f32.mrf.mxu0
        %v640 = vadd.f32 %v411, %v639
        %v641 = vpop.f32.mrf.mxu0
        %v642 = vpop.f32.mrf.mxu0
        %v643 = vadd.f32 %v411, %v642
        %v644 = vpop.f32.mrf.mxu0
        %645 = vmatprep.mubr.bf16.mxu0 %v369
        %646 = vmatmul.mubr.bf16.gmra.mxu0 %v368
        %v647 = vpop.f32.mrf.mxu0
        %v648 = vadd.f32 %v411, %v647
        %v649 = vpop.f32.mrf.mxu0
        %v650 = vpop.f32.mrf.mxu0
        %v651 = vadd.f32 %v411, %v650
        %v652 = vpop.f32.mrf.mxu0
        %653 = vmatprep.mubr.bf16.mxu0 %v371
        %654 = vmatmul.mubr.bf16.gmra.mxu0 %v370
        %v655 = vpop.f32.mrf.mxu0
        %v656 = vadd.f32 %v411, %v655
        %v657 = vpop.f32.mrf.mxu0
        %v658 = vpop.f32.mrf.mxu0
        %v659 = vadd.f32 %v411, %v658
        %v660 = vpop.f32.mrf.mxu0
        %661 = vmatprep.mubr.bf16.mxu0 %v373
        %662 = vmatmul.mubr.bf16.gmra.mxu0 %v372
        %v663 = vpop.f32.mrf.mxu0
        %v664 = vadd.f32 %v411, %v663
        %v665 = vpop.f32.mrf.mxu0
        %v666 = vpop.f32.mrf.mxu0
        %v667 = vadd.f32 %v411, %v666
        %v668 = vpop.f32.mrf.mxu0
        %669 = vdwg.mxu0
        %v670 = vmax.f32 %v544, 0.0
        %v671 = vmax.f32 %v547, 0.0
        %v672 = vmax.f32 %v552, 0.0
        %v673 = vmax.f32 %v555, 0.0
        %v674 = vmax.f32 %v560, 0.0
        %v675 = vmax.f32 %v563, 0.0
        %v676 = vmax.f32 %v568, 0.0
        %v677 = vmax.f32 %v571, 0.0
        %v678 = vmax.f32 %v576, 0.0
        %v679 = vmax.f32 %v579, 0.0
        %v680 = vmax.f32 %v584, 0.0
        %v681 = vmax.f32 %v587, 0.0
        %v682 = vmax.f32 %v592, 0.0
        %v683 = vmax.f32 %v595, 0.0
        %v684 = vmax.f32 %v600, 0.0
        %v685 = vmax.f32 %v603, 0.0
        %v686 = vmax.f32 %v608, 0.0
        %v687 = vmax.f32 %v611, 0.0
        %v688 = vmax.f32 %v616, 0.0
        %v689 = vmax.f32 %v619, 0.0
        %v690 = vmax.f32 %v624, 0.0
        %v691 = vmax.f32 %v627, 0.0
        %v692 = vmax.f32 %v632, 0.0
        %v693 = vmax.f32 %v635, 0.0
        %v694 = vmax.f32 %v640, 0.0
        %v695 = vmax.f32 %v643, 0.0
        %v696 = vmax.f32 %v648, 0.0
        %v697 = vmax.f32 %v651, 0.0
        %v698 = vmax.f32 %v656, 0.0
        %v699 = vmax.f32 %v659, 0.0
        %v700 = vmax.f32 %v664, 0.0
        %v701 = vmax.f32 %v667, 0.0
        %702 = vst [vmem:[#allocation2] sm:$0xff] 0.0
        %703 = vst [vmem:[#allocation2 + $0x8] sm:$0xff] 0.0
        %704 = vst [vmem:[#allocation2 + $0x10] sm:$0x3] 0.0
        %705 = vst [vmem:[#allocation2 + $0x18] sm:$0xff] 0.0
        %706 = vst [vmem:[#allocation2 + $0x20] sm:$0xff] 0.0
        %707 = vst [vmem:[#allocation2 + $0x28] sm:$0x3] 0.0
        %708 = vst [vmem:[#allocation2 + $0x30] sm:$0xff] 0.0
        %709 = vst [vmem:[#allocation2 + $0x38] sm:$0xff] 0.0
        %710 = vst [vmem:[#allocation2 + $0x40] sm:$0x3] 0.0
        %711 = vst [vmem:[#allocation2 + $0x48] sm:$0xff] 0.0
        %712 = vst [vmem:[#allocation2 + $0x50] sm:$0xff] 0.0
        %713 = vst [vmem:[#allocation2 + $0x58] sm:$0x3] 0.0
        %714 = vst [vmem:[#allocation2 + $0x60] sm:$0xff] 0.0
        %715 = vst [vmem:[#allocation2 + $0x68] sm:$0xff] 0.0
        %716 = vst [vmem:[#allocation2 + $0x70] sm:$0x3] 0.0
        %717 = vst [vmem:[#allocation2 + $0x78] sm:$0xff] 0.0
        %718 = vst [vmem:[#allocation2 + $0x80] sm:$0xff] 0.0
        %719 = vst [vmem:[#allocation2 + $0x88] sm:$0x3] 0.0
        %720 = vst [vmem:[#allocation2 + $0x90] sm:$0xff] 0.0
        %721 = vst [vmem:[#allocation2 + $0x98] sm:$0xff] 0.0
        %722 = vst [vmem:[#allocation2 + $0xa0] sm:$0x3] 0.0
        %723 = vst [vmem:[#allocation2 + $0xa8] sm:$0xff] 0.0
        %724 = vst [vmem:[#allocation2 + $0xb0] sm:$0xff] 0.0
        %725 = vst [vmem:[#allocation2 + $0xb8] sm:$0x3] 0.0
        %726 = vst [vmem:[#allocation2 + $0xc0] sm:$0xff] 0.0
        %727 = vst [vmem:[#allocation2 + $0xc8] sm:$0xff] 0.0
        %728 = vst [vmem:[#allocation2 + $0xd0] sm:$0x3] 0.0
        %729 = vst [vmem:[#allocation2 + $0xd8] sm:$0xff] 0.0
        %730 = vst [vmem:[#allocation2 + $0xe0] sm:$0xff] 0.0
        %731 = vst [vmem:[#allocation2 + $0xe8] sm:$0x3] 0.0
        %732 = vst [vmem:[#allocation2 + $0xf0] sm:$0xff] 0.0
        %733 = vst [vmem:[#allocation2 + $0xf8] sm:$0xff] 0.0
        %734 = vst [vmem:[#allocation2 + $0x100] sm:$0x3] 0.0
        %735 = vst [vmem:[#allocation2 + $0x108] sm:$0xff] 0.0
        %736 = vst [vmem:[#allocation2 + $0x110] sm:$0xff] 0.0
        %737 = vst [vmem:[#allocation2 + $0x118] sm:$0x3] 0.0
        %738 = vst [vmem:[#allocation2 + $0x120] sm:$0xff] 0.0
        %739 = vst [vmem:[#allocation2 + $0x128] sm:$0xff] 0.0
        %740 = vst [vmem:[#allocation2 + $0x130] sm:$0x3] 0.0
        %741 = vst [vmem:[#allocation2 + $0x138] sm:$0xff] 0.0
        %742 = vst [vmem:[#allocation2 + $0x140] sm:$0xff] 0.0
        %743 = vst [vmem:[#allocation2 + $0x148] sm:$0x3] 0.0
        %744 = vst [vmem:[#allocation2 + $0x150] sm:$0xff] 0.0
        %745 = vst [vmem:[#allocation2 + $0x158] sm:$0xff] 0.0
        %746 = vst [vmem:[#allocation2 + $0x160] sm:$0x3] 0.0
        %747 = vst [vmem:[#allocation2 + $0x168] sm:$0xff] 0.0
        %748 = vst [vmem:[#allocation2 + $0x170] sm:$0xff] 0.0
        %749 = vst [vmem:[#allocation2 + $0x178] sm:$0x3] 0.0
        %750 = vst [vmem:[#allocation2 + $0x180] sm:$0xff] 0.0
        %751 = vst [vmem:[#allocation2 + $0x188] sm:$0xff] 0.0
        %752 = vst [vmem:[#allocation2 + $0x190] sm:$0x3] 0.0
        %753 = vst [vmem:[#allocation2 + $0x198] sm:$0xff] 0.0
        %754 = vst [vmem:[#allocation2 + $0x1a0] sm:$0xff] 0.0
        %755 = vst [vmem:[#allocation2 + $0x1a8] sm:$0x3] 0.0
        %s756 = scalar_lea.vmem [#allocation2], 24
        %757 = vst [vmem:[%s756 + $0x1] sm:$0xff] %v670
        %758 = vst [vmem:[%s756 + $0x9] sm:$0xff] %v671
        %759 = vst [vmem:[%s756 + $0x19] sm:$0xff] %v672
        %760 = vst [vmem:[%s756 + $0x21] sm:$0xff] %v673
        %761 = vst [vmem:[%s756 + $0x31] sm:$0xff] %v674
        %762 = vst [vmem:[%s756 + $0x39] sm:$0xff] %v675
        %763 = vst [vmem:[%s756 + $0x49] sm:$0xff] %v676
        %764 = vst [vmem:[%s756 + $0x51] sm:$0xff] %v677
        %765 = vst [vmem:[%s756 + $0x61] sm:$0xff] %v678
        %766 = vst [vmem:[%s756 + $0x69] sm:$0xff] %v679
        %767 = vst [vmem:[%s756 + $0x79] sm:$0xff] %v680
        %768 = vst [vmem:[%s756 + $0x81] sm:$0xff] %v681
        %769 = vst [vmem:[%s756 + $0x91] sm:$0xff] %v682
        %770 = vst [vmem:[%s756 + $0x99] sm:$0xff] %v683
        %771 = vst [vmem:[%s756 + $0xa9] sm:$0xff] %v684
        %772 = vst [vmem:[%s756 + $0xb1] sm:$0xff] %v685
        %773 = vst [vmem:[%s756 + $0xc1] sm:$0xff] %v686
        %774 = vst [vmem:[%s756 + $0xc9] sm:$0xff] %v687
        %775 = vst [vmem:[%s756 + $0xd9] sm:$0xff] %v688
        %776 = vst [vmem:[%s756 + $0xe1] sm:$0xff] %v689
        %777 = vst [vmem:[%s756 + $0xf1] sm:$0xff] %v690
        %778 = vst [vmem:[%s756 + $0xf9] sm:$0xff] %v691
        %779 = vst [vmem:[%s756 + $0x109] sm:$0xff] %v692
        %780 = vst [vmem:[%s756 + $0x111] sm:$0xff] %v693
        %781 = vst [vmem:[%s756 + $0x121] sm:$0xff] %v694
        %782 = vst [vmem:[%s756 + $0x129] sm:$0xff] %v695
        %783 = vst [vmem:[%s756 + $0x139] sm:$0xff] %v696
        %784 = vst [vmem:[%s756 + $0x141] sm:$0xff] %v697
        %785 = vst [vmem:[%s756 + $0x151] sm:$0xff] %v698
        %786 = vst [vmem:[%s756 + $0x159] sm:$0xff] %v699
        %787 = vst [vmem:[%s756 + $0x169] sm:$0xff] %v700
        %788 = vst [vmem:[%s756 + $0x171] sm:$0xff] %v701
        %v789 = vld [vmem:[#allocation2] sm:$0xff]
        %v790 = vld [vmem:[#allocation2 + $0x8] sm:$0xff]
        %v791 = vld [vmem:[#allocation2 + $0x18] sm:$0xff]
        %v792 = vld [vmem:[#allocation2 + $0x20] sm:$0xff]
        %v793 = vld [vmem:[#allocation2 + $0x30] sm:$0xff]
        %v794 = vld [vmem:[#allocation2 + $0x38] sm:$0xff]
        %v795 = vld [vmem:[#allocation2 + $0x48] sm:$0xff]
        %v796 = vld [vmem:[#allocation2 + $0x50] sm:$0xff]
        %v797 = vld [vmem:[#allocation2 + $0x60] sm:$0xff]
        %v798 = vld [vmem:[#allocation2 + $0x68] sm:$0xff]
        %v799 = vld [vmem:[#allocation2 + $0x78] sm:$0xff]
        %v800 = vld [vmem:[#allocation2 + $0x80] sm:$0xff]
        %v801 = vld [vmem:[#allocation2 + $0x90] sm:$0xff]
        %v802 = vld [vmem:[#allocation2 + $0x98] sm:$0xff]
        %v803 = vld [vmem:[#allocation2 + $0xa8] sm:$0xff]
        %v804 = vld [vmem:[#allocation2 + $0xb0] sm:$0xff]
        %v805 = vld [vmem:[#allocation2 + $0xc0] sm:$0xff]
        %v806 = vld [vmem:[#allocation2 + $0xc8] sm:$0xff]
        %v807 = vld [vmem:[#allocation2 + $0xd8] sm:$0xff]
        %v808 = vld [vmem:[#allocation2 + $0xe0] sm:$0xff]
        %v809 = vld [vmem:[#allocation2 + $0xf0] sm:$0xff]
        %v810 = vld [vmem:[#allocation2 + $0xf8] sm:$0xff]
        %v811 = vld [vmem:[#allocation2 + $0x108] sm:$0xff]
        %v812 = vld [vmem:[#allocation2 + $0x110] sm:$0xff]
        %v813 = vld [vmem:[#allocation2 + $0x120] sm:$0xff]
        %v814 = vld [vmem:[#allocation2 + $0x128] sm:$0xff]
        %v815 = vld [vmem:[#allocation2 + $0x138] sm:$0xff]
        %v816 = vld [vmem:[#allocation2 + $0x140] sm:$0xff]
        %v817 = vld [vmem:[#allocation2 + $0x150] sm:$0xff]
        %v818 = vld [vmem:[#allocation2 + $0x158] sm:$0xff]
        %v819 = vld [vmem:[#allocation2 + $0x168] sm:$0xff]
        %v820 = vld [vmem:[#allocation2 + $0x170] sm:$0xff]
        %v821 = vpack.c.bf16 %v790, %v789
        %v822 = vpack.c.bf16 %v792, %v791
        %v823 = vpack.c.bf16 %v794, %v793
        %v824 = vpack.c.bf16 %v796, %v795
        %v825 = vpack.c.bf16 %v798, %v797
        %v826 = vpack.c.bf16 %v800, %v799
        %v827 = vpack.c.bf16 %v802, %v801
        %v828 = vpack.c.bf16 %v804, %v803
        %v829 = vpack.c.bf16 %v806, %v805
        %v830 = vpack.c.bf16 %v808, %v807
        %v831 = vpack.c.bf16 %v810, %v809
        %v832 = vpack.c.bf16 %v812, %v811
        %v833 = vpack.c.bf16 %v814, %v813
        %v834 = vpack.c.bf16 %v816, %v815
        %v835 = vpack.c.bf16 %v818, %v817
        %v836 = vpack.c.bf16 %v820, %v819
        %v837 = vld [vmem:[%s3] sm:$0xf]
        %v838 = vld [vmem:[%s3 + $0x4] sm:$0xf]
        %v839 = vld [vmem:[%s3 + $0x8] sm:$0xf]
        %v840 = vld [vmem:[%s3 + $0xc] sm:$0xf]
        %v841 = vld [vmem:[%s3 + $0x10] sm:$0xf]
        %v842 = vld [vmem:[%s3 + $0x14] sm:$0xf]
        %v843 = vld [vmem:[%s3 + $0x18] sm:$0xf]
        %v844 = vld [vmem:[%s3 + $0x1c] sm:$0xf]
        %v845 = vld [vmem:[%s3 + $0x20] sm:$0xf]
        %v846 = vld [vmem:[%s3 + $0x24] sm:$0xf]
        %v847 = vld [vmem:[%s3 + $0x28] sm:$0xf]
        %v848 = vld [vmem:[%s3 + $0x2c] sm:$0xf]
        %v849 = vld [vmem:[%s3 + $0x30] sm:$0xf]
        %v850 = vld [vmem:[%s3 + $0x34] sm:$0xf]
        %v851 = vld [vmem:[%s3 + $0x38] sm:$0xf]
        %v852 = vld [vmem:[%s3 + $0x3c] sm:$0xf]
        %v853 = vld [vmem:[#allocation2 + $0x1] sm:$0xff]
        %v854 = vld [vmem:[#allocation2 + $0x9] sm:$0xff]
        %v855 = vld [vmem:[#allocation2 + $0x19] sm:$0xff]
        %v856 = vld [vmem:[#allocation2 + $0x21] sm:$0xff]
        %v857 = vld [vmem:[#allocation2 + $0x31] sm:$0xff]
        %v858 = vld [vmem:[#allocation2 + $0x39] sm:$0xff]
        %v859 = vld [vmem:[#allocation2 + $0x49] sm:$0xff]
        %v860 = vld [vmem:[#allocation2 + $0x51] sm:$0xff]
        %v861 = vld [vmem:[#allocation2 + $0x61] sm:$0xff]
        %v862 = vld [vmem:[#allocation2 + $0x69] sm:$0xff]
        %v863 = vld [vmem:[#allocation2 + $0x79] sm:$0xff]
        %v864 = vld [vmem:[#allocation2 + $0x81] sm:$0xff]
        %v865 = vld [vmem:[#allocation2 + $0x91] sm:$0xff]
        %v866 = vld [vmem:[#allocation2 + $0x99] sm:$0xff]
        %v867 = vld [vmem:[#allocation2 + $0xa9] sm:$0xff]
        %v868 = vld [vmem:[#allocation2 + $0xb1] sm:$0xff]
        %v869 = vld [vmem:[#allocation2 + $0xc1] sm:$0xff]
        %v870 = vld [vmem:[#allocation2 + $0xc9] sm:$0xff]
        %v871 = vld [vmem:[#allocation2 + $0xd9] sm:$0xff]
        %v872 = vld [vmem:[#allocation2 + $0xe1] sm:$0xff]
        %v873 = vld [vmem:[#allocation2 + $0xf1] sm:$0xff]
        %v874 = vld [vmem:[#allocation2 + $0xf9] sm:$0xff]
        %v875 = vld [vmem:[#allocation2 + $0x109] sm:$0xff]
        %v876 = vld [vmem:[#allocation2 + $0x111] sm:$0xff]
        %v877 = vld [vmem:[#allocation2 + $0x121] sm:$0xff]
        %v878 = vld [vmem:[#allocation2 + $0x129] sm:$0xff]
        %v879 = vld [vmem:[#allocation2 + $0x139] sm:$0xff]
        %v880 = vld [vmem:[#allocation2 + $0x141] sm:$0xff]
        %v881 = vld [vmem:[#allocation2 + $0x151] sm:$0xff]
        %v882 = vld [vmem:[#allocation2 + $0x159] sm:$0xff]
        %v883 = vld [vmem:[#allocation2 + $0x169] sm:$0xff]
        %v884 = vld [vmem:[#allocation2 + $0x171] sm:$0xff]
        %v885 = vpack.c.bf16 %v854, %v853
        %v886 = vpack.c.bf16 %v856, %v855
        %v887 = vpack.c.bf16 %v858, %v857
        %v888 = vpack.c.bf16 %v860, %v859
        %v889 = vpack.c.bf16 %v862, %v861
        %v890 = vpack.c.bf16 %v864, %v863
        %v891 = vpack.c.bf16 %v866, %v865
        %v892 = vpack.c.bf16 %v868, %v867
        %v893 = vpack.c.bf16 %v870, %v869
        %v894 = vpack.c.bf16 %v872, %v871
        %v895 = vpack.c.bf16 %v874, %v873
        %v896 = vpack.c.bf16 %v876, %v875
        %v897 = vpack.c.bf16 %v878, %v877
        %v898 = vpack.c.bf16 %v880, %v879
        %v899 = vpack.c.bf16 %v882, %v881
        %v900 = vpack.c.bf16 %v884, %v883
        %s901 = scalar_lea.vmem %s3, 64
        %v902 = vld [vmem:[%s901] sm:$0xf]
        %v903 = vld [vmem:[%s901 + $0x4] sm:$0xf]
        %v904 = vld [vmem:[%s901 + $0x8] sm:$0xf]
        %v905 = vld [vmem:[%s901 + $0xc] sm:$0xf]
        %v906 = vld [vmem:[%s901 + $0x10] sm:$0xf]
        %v907 = vld [vmem:[%s901 + $0x14] sm:$0xf]
        %v908 = vld [vmem:[%s901 + $0x18] sm:$0xf]
        %v909 = vld [vmem:[%s901 + $0x1c] sm:$0xf]
        %v910 = vld [vmem:[%s901 + $0x20] sm:$0xf]
        %v911 = vld [vmem:[%s901 + $0x24] sm:$0xf]
        %v912 = vld [vmem:[%s901 + $0x28] sm:$0xf]
        %v913 = vld [vmem:[%s901 + $0x2c] sm:$0xf]
        %v914 = vld [vmem:[%s901 + $0x30] sm:$0xf]
        %v915 = vld [vmem:[%s901 + $0x34] sm:$0xf]
        %v916 = vld [vmem:[%s901 + $0x38] sm:$0xf]
        %v917 = vld [vmem:[%s901 + $0x3c] sm:$0xf]
        %v934 = vunpack.c.l.b16 %v902
        %v935 = vunpack.c.l.b16 %v903
        %v936 = vunpack.c.l.b16 %v904
        %v937 = vunpack.c.l.b16 %v905
        %v938 = vunpack.c.l.b16 %v906
        %v939 = vunpack.c.l.b16 %v907
        %v940 = vunpack.c.l.b16 %v908
        %v941 = vunpack.c.l.b16 %v909
        %v942 = vunpack.c.l.b16 %v910
        %v943 = vunpack.c.l.b16 %v911
        %v944 = vunpack.c.l.b16 %v912
        %v945 = vunpack.c.l.b16 %v913
        %v946 = vunpack.c.l.b16 %v914
        %v947 = vunpack.c.l.b16 %v915
        %v948 = vunpack.c.l.b16 %v916
        %v949 = vunpack.c.l.b16 %v917
        %v950 = vpack.c.b16 %v935, %v934
        %v951 = vpack.c.b16 %v937, %v936
        %v952 = vpack.c.b16 %v939, %v938
        %v953 = vpack.c.b16 %v941, %v940
        %v954 = vpack.c.b16 %v943, %v942
        %v955 = vpack.c.b16 %v945, %v944
        %v956 = vpack.c.b16 %v947, %v946
        %v957 = vpack.c.b16 %v949, %v948
        %966 = vmatprep.subr.bf16.mxu0 0
        %967 = vmatpush1.bf16.msra.mxu0 %v957
        %968 = vmatprep.subr.bf16.mxu0 0
        %969 = vmatpush1.bf16.msra.mxu0 %v956
        %970 = vmatprep.subr.bf16.mxu0 0
        %971 = vmatpush1.bf16.msra.mxu0 %v955
        %972 = vmatprep.subr.bf16.mxu0 0
        %973 = vmatpush1.bf16.msra.mxu0 %v954
        %974 = vmatprep.subr.bf16.mxu0 0
        %975 = vmatpush1.bf16.msra.mxu0 %v953
        %976 = vmatprep.subr.bf16.mxu0 0
        %977 = vmatpush1.bf16.msra.mxu0 %v952
        %978 = vmatprep.subr.bf16.mxu0 0
        %979 = vmatpush1.bf16.msra.mxu0 %v951
        %980 = vmatprep.subr.bf16.mxu0 0
        %981 = vmatpush1.bf16.msra.mxu0 %v950
        %982 = vmatprep.subr.bf16.mxu0 0
        %983 = vmatpush2.bf16.msra.mxu0 0
        %984 = vmatprep.subr.bf16.mxu0 0
        %985 = vmatpush2.bf16.msra.mxu0 0
        %986 = vmatprep.subr.bf16.mxu0 0
        %987 = vmatpush2.bf16.msra.mxu0 0
        %988 = vmatprep.subr.bf16.mxu0 0
        %989 = vmatpush2.bf16.msra.mxu0 0
        %990 = vmatprep.subr.bf16.mxu0 0
        %991 = vmatpush2.bf16.msra.mxu0 0
        %992 = vmatprep.subr.bf16.mxu0 0
        %993 = vmatpush2.bf16.msra.mxu0 0
        %994 = vmatprep.subr.bf16.mxu0 0
        %995 = vmatpush2.bf16.msra.mxu0 0
        %996 = vmatprep.subr.bf16.mxu0 0
        %997 = vmatpush2.bf16.msra.mxu0 0
        %998 = vmatprep.mubr.bf16.mxu0 0
        %999 = vmatmul.mubr.bf16.gmra.mxu0 %v885
        %v1000 = vpop.f32.mrf.mxu0
        %v1001 = vadd.f32 0.0, %v1000
        %v1002 = vpop.f32.mrf.mxu0
        %v1003 = vpop.f32.mrf.mxu0
        %v1004 = vadd.f32 0.0, %v1003
        %v1005 = vpop.f32.mrf.mxu0
        %1006 = vmatprep.mubr.bf16.mxu0 0
        %1007 = vmatmul.mubr.bf16.gmra.mxu0 %v886
        %v1008 = vpop.f32.mrf.mxu0
        %v1009 = vadd.f32 0.0, %v1008
        %v1010 = vpop.f32.mrf.mxu0
        %v1011 = vpop.f32.mrf.mxu0
        %v1012 = vadd.f32 0.0, %v1011
        %v1013 = vpop.f32.mrf.mxu0
        %1014 = vmatprep.mubr.bf16.mxu0 0
        %1015 = vmatmul.mubr.bf16.gmra.mxu0 %v887
        %v1016 = vpop.f32.mrf.mxu0
        %v1017 = vadd.f32 0.0, %v1016
        %v1018 = vpop.f32.mrf.mxu0
        %v1019 = vpop.f32.mrf.mxu0
        %v1020 = vadd.f32 0.0, %v1019
        %v1021 = vpop.f32.mrf.mxu0
        %1022 = vmatprep.mubr.bf16.mxu0 0
        %1023 = vmatmul.mubr.bf16.gmra.mxu0 %v888
        %v1024 = vpop.f32.mrf.mxu0
        %v1025 = vadd.f32 0.0, %v1024
        %v1026 = vpop.f32.mrf.mxu0
        %v1027 = vpop.f32.mrf.mxu0
        %v1028 = vadd.f32 0.0, %v1027
        %v1029 = vpop.f32.mrf.mxu0
        %1030 = vmatprep.mubr.bf16.mxu0 0
        %1031 = vmatmul.mubr.bf16.gmra.mxu0 %v889
        %v1032 = vpop.f32.mrf.mxu0
        %v1033 = vadd.f32 0.0, %v1032
        %v1034 = vpop.f32.mrf.mxu0
        %v1035 = vpop.f32.mrf.mxu0
        %v1036 = vadd.f32 0.0, %v1035
        %v1037 = vpop.f32.mrf.mxu0
        %1038 = vmatprep.mubr.bf16.mxu0 0
        %1039 = vmatmul.mubr.bf16.gmra.mxu0 %v890
        %v1040 = vpop.f32.mrf.mxu0
        %v1041 = vadd.f32 0.0, %v1040
        %v1042 = vpop.f32.mrf.mxu0
        %v1043 = vpop.f32.mrf.mxu0
        %v1044 = vadd.f32 0.0, %v1043
        %v1045 = vpop.f32.mrf.mxu0
        %1046 = vmatprep.mubr.bf16.mxu0 0
        %1047 = vmatmul.mubr.bf16.gmra.mxu0 %v891
        %v1048 = vpop.f32.mrf.mxu0
        %v1049 = vadd.f32 0.0, %v1048
        %v1050 = vpop.f32.mrf.mxu0
        %v1051 = vpop.f32.mrf.mxu0
        %v1052 = vadd.f32 0.0, %v1051
        %v1053 = vpop.f32.mrf.mxu0
        %1054 = vmatprep.mubr.bf16.mxu0 0
        %1055 = vmatmul.mubr.bf16.gmra.mxu0 %v892
        %v1056 = vpop.f32.mrf.mxu0
        %v1057 = vadd.f32 0.0, %v1056
        %v1058 = vpop.f32.mrf.mxu0
        %v1059 = vpop.f32.mrf.mxu0
        %v1060 = vadd.f32 0.0, %v1059
        %v1061 = vpop.f32.mrf.mxu0
        %1062 = vmatprep.mubr.bf16.mxu0 0
        %1063 = vmatmul.mubr.bf16.gmra.mxu0 %v893
        %v1064 = vpop.f32.mrf.mxu0
        %v1065 = vadd.f32 0.0, %v1064
        %v1066 = vpop.f32.mrf.mxu0
        %v1067 = vpop.f32.mrf.mxu0
        %v1068 = vadd.f32 0.0, %v1067
        %v1069 = vpop.f32.mrf.mxu0
        %1070 = vmatprep.mubr.bf16.mxu0 0
        %1071 = vmatmul.mubr.bf16.gmra.mxu0 %v894
        %v1072 = vpop.f32.mrf.mxu0
        %v1073 = vadd.f32 0.0, %v1072
        %v1074 = vpop.f32.mrf.mxu0
        %v1075 = vpop.f32.mrf.mxu0
        %v1076 = vadd.f32 0.0, %v1075
        %v1077 = vpop.f32.mrf.mxu0
        %1078 = vmatprep.mubr.bf16.mxu0 0
        %1079 = vmatmul.mubr.bf16.gmra.mxu0 %v895
        %v1080 = vpop.f32.mrf.mxu0
        %v1081 = vadd.f32 0.0, %v1080
        %v1082 = vpop.f32.mrf.mxu0
        %v1083 = vpop.f32.mrf.mxu0
        %v1084 = vadd.f32 0.0, %v1083
        %v1085 = vpop.f32.mrf.mxu0
        %1086 = vmatprep.mubr.bf16.mxu0 0
        %1087 = vmatmul.mubr.bf16.gmra.mxu0 %v896
        %v1088 = vpop.f32.mrf.mxu0
        %v1089 = vadd.f32 0.0, %v1088
        %v1090 = vpop.f32.mrf.mxu0
        %v1091 = vpop.f32.mrf.mxu0
        %v1092 = vadd.f32 0.0, %v1091
        %v1093 = vpop.f32.mrf.mxu0
        %1094 = vmatprep.mubr.bf16.mxu0 0
        %1095 = vmatmul.mubr.bf16.gmra.mxu0 %v897
        %v1096 = vpop.f32.mrf.mxu0
        %v1097 = vadd.f32 0.0, %v1096
        %v1098 = vpop.f32.mrf.mxu0
        %v1099 = vpop.f32.mrf.mxu0
        %v1100 = vadd.f32 0.0, %v1099
        %v1101 = vpop.f32.mrf.mxu0
        %1102 = vmatprep.mubr.bf16.mxu0 0
        %1103 = vmatmul.mubr.bf16.gmra.mxu0 %v898
        %v1104 = vpop.f32.mrf.mxu0
        %v1105 = vadd.f32 0.0, %v1104
        %v1106 = vpop.f32.mrf.mxu0
        %v1107 = vpop.f32.mrf.mxu0
        %v1108 = vadd.f32 0.0, %v1107
        %v1109 = vpop.f32.mrf.mxu0
        %1110 = vmatprep.mubr.bf16.mxu0 0
        %1111 = vmatmul.mubr.bf16.gmra.mxu0 %v899
        %v1112 = vpop.f32.mrf.mxu0
        %v1113 = vadd.f32 0.0, %v1112
        %v1114 = vpop.f32.mrf.mxu0
        %v1115 = vpop.f32.mrf.mxu0
        %v1116 = vadd.f32 0.0, %v1115
        %v1117 = vpop.f32.mrf.mxu0
        %1118 = vmatprep.mubr.bf16.mxu0 0
        %1119 = vmatmul.mubr.bf16.gmra.mxu0 %v900
        %v1120 = vpop.f32.mrf.mxu0
        %v1121 = vadd.f32 0.0, %v1120
        %v1122 = vpop.f32.mrf.mxu0
        %v1123 = vpop.f32.mrf.mxu0
        %v1124 = vadd.f32 0.0, %v1123
        %v1125 = vpop.f32.mrf.mxu0
        %1126 = vdwg.mxu0
        %v1143 = vunpack.c.l.b16 %v837
        %v1144 = vunpack.c.l.b16 %v838
        %v1145 = vunpack.c.l.b16 %v839
        %v1146 = vunpack.c.l.b16 %v840
        %v1147 = vunpack.c.l.b16 %v841
        %v1148 = vunpack.c.l.b16 %v842
        %v1149 = vunpack.c.l.b16 %v843
        %v1150 = vunpack.c.l.b16 %v844
        %v1151 = vunpack.c.l.b16 %v845
        %v1152 = vunpack.c.l.b16 %v846
        %v1153 = vunpack.c.l.b16 %v847
        %v1154 = vunpack.c.l.b16 %v848
        %v1155 = vunpack.c.l.b16 %v849
        %v1156 = vunpack.c.l.b16 %v850
        %v1157 = vunpack.c.l.b16 %v851
        %v1158 = vunpack.c.l.b16 %v852
        %v1159 = vpack.c.b16 %v1144, %v1143
        %v1160 = vpack.c.b16 %v1146, %v1145
        %v1161 = vpack.c.b16 %v1148, %v1147
        %v1162 = vpack.c.b16 %v1150, %v1149
        %v1163 = vpack.c.b16 %v1152, %v1151
        %v1164 = vpack.c.b16 %v1154, %v1153
        %v1165 = vpack.c.b16 %v1156, %v1155
        %v1166 = vpack.c.b16 %v1158, %v1157
        %1175 = vmatprep.subr.bf16.mxu0 0
        %1176 = vmatpush1.bf16.msra.mxu0 %v1166
        %1177 = vmatprep.subr.bf16.mxu0 0
        %1178 = vmatpush1.bf16.msra.mxu0 %v1165
        %1179 = vmatprep.subr.bf16.mxu0 0
        %1180 = vmatpush1.bf16.msra.mxu0 %v1164
        %1181 = vmatprep.subr.bf16.mxu0 0
        %1182 = vmatpush1.bf16.msra.mxu0 %v1163
        %1183 = vmatprep.subr.bf16.mxu0 0
        %1184 = vmatpush1.bf16.msra.mxu0 %v1162
        %1185 = vmatprep.subr.bf16.mxu0 0
        %1186 = vmatpush1.bf16.msra.mxu0 %v1161
        %1187 = vmatprep.subr.bf16.mxu0 0
        %1188 = vmatpush1.bf16.msra.mxu0 %v1160
        %1189 = vmatprep.subr.bf16.mxu0 0
        %1190 = vmatpush1.bf16.msra.mxu0 %v1159
        %1191 = vmatprep.subr.bf16.mxu0 0
        %1192 = vmatpush2.bf16.msra.mxu0 0
        %1193 = vmatprep.subr.bf16.mxu0 0
        %1194 = vmatpush2.bf16.msra.mxu0 0
        %1195 = vmatprep.subr.bf16.mxu0 0
        %1196 = vmatpush2.bf16.msra.mxu0 0
        %1197 = vmatprep.subr.bf16.mxu0 0
        %1198 = vmatpush2.bf16.msra.mxu0 0
        %1199 = vmatprep.subr.bf16.mxu0 0
        %1200 = vmatpush2.bf16.msra.mxu0 0
        %1201 = vmatprep.subr.bf16.mxu0 0
        %1202 = vmatpush2.bf16.msra.mxu0 0
        %1203 = vmatprep.subr.bf16.mxu0 0
        %1204 = vmatpush2.bf16.msra.mxu0 0
        %1205 = vmatprep.subr.bf16.mxu0 0
        %1206 = vmatpush2.bf16.msra.mxu0 0
        %1207 = vmatprep.mubr.bf16.mxu0 0
        %1208 = vmatmul.mubr.bf16.gmra.mxu0 %v821
        %v1209 = vpop.f32.mrf.mxu0
        %v1210 = vadd.f32 %v1001, %v1209
        %v1211 = vpop.f32.mrf.mxu0
        %v1212 = vpop.f32.mrf.mxu0
        %v1213 = vadd.f32 %v1004, %v1212
        %v1214 = vpop.f32.mrf.mxu0
        %1215 = vmatprep.mubr.bf16.mxu0 0
        %1216 = vmatmul.mubr.bf16.gmra.mxu0 %v822
        %v1217 = vpop.f32.mrf.mxu0
        %v1218 = vadd.f32 %v1009, %v1217
        %v1219 = vpop.f32.mrf.mxu0
        %v1220 = vpop.f32.mrf.mxu0
        %v1221 = vadd.f32 %v1012, %v1220
        %v1222 = vpop.f32.mrf.mxu0
        %1223 = vmatprep.mubr.bf16.mxu0 0
        %1224 = vmatmul.mubr.bf16.gmra.mxu0 %v823
        %v1225 = vpop.f32.mrf.mxu0
        %v1226 = vadd.f32 %v1017, %v1225
        %v1227 = vpop.f32.mrf.mxu0
        %v1228 = vpop.f32.mrf.mxu0
        %v1229 = vadd.f32 %v1020, %v1228
        %v1230 = vpop.f32.mrf.mxu0
        %1231 = vmatprep.mubr.bf16.mxu0 0
        %1232 = vmatmul.mubr.bf16.gmra.mxu0 %v824
        %v1233 = vpop.f32.mrf.mxu0
        %v1234 = vadd.f32 %v1025, %v1233
        %v1235 = vpop.f32.mrf.mxu0
        %v1236 = vpop.f32.mrf.mxu0
        %v1237 = vadd.f32 %v1028, %v1236
        %v1238 = vpop.f32.mrf.mxu0
        %1239 = vmatprep.mubr.bf16.mxu0 0
        %1240 = vmatmul.mubr.bf16.gmra.mxu0 %v825
        %v1241 = vpop.f32.mrf.mxu0
        %v1242 = vadd.f32 %v1033, %v1241
        %v1243 = vpop.f32.mrf.mxu0
        %v1244 = vpop.f32.mrf.mxu0
        %v1245 = vadd.f32 %v1036, %v1244
        %v1246 = vpop.f32.mrf.mxu0
        %1247 = vmatprep.mubr.bf16.mxu0 0
        %1248 = vmatmul.mubr.bf16.gmra.mxu0 %v826
        %v1249 = vpop.f32.mrf.mxu0
        %v1250 = vadd.f32 %v1041, %v1249
        %v1251 = vpop.f32.mrf.mxu0
        %v1252 = vpop.f32.mrf.mxu0
        %v1253 = vadd.f32 %v1044, %v1252
        %v1254 = vpop.f32.mrf.mxu0
        %1255 = vmatprep.mubr.bf16.mxu0 0
        %1256 = vmatmul.mubr.bf16.gmra.mxu0 %v827
        %v1257 = vpop.f32.mrf.mxu0
        %v1258 = vadd.f32 %v1049, %v1257
        %v1259 = vpop.f32.mrf.mxu0
        %v1260 = vpop.f32.mrf.mxu0
        %v1261 = vadd.f32 %v1052, %v1260
        %v1262 = vpop.f32.mrf.mxu0
        %1263 = vmatprep.mubr.bf16.mxu0 0
        %1264 = vmatmul.mubr.bf16.gmra.mxu0 %v828
        %v1265 = vpop.f32.mrf.mxu0
        %v1266 = vadd.f32 %v1057, %v1265
        %v1267 = vpop.f32.mrf.mxu0
        %v1268 = vpop.f32.mrf.mxu0
        %v1269 = vadd.f32 %v1060, %v1268
        %v1270 = vpop.f32.mrf.mxu0
        %1271 = vmatprep.mubr.bf16.mxu0 0
        %1272 = vmatmul.mubr.bf16.gmra.mxu0 %v829
        %v1273 = vpop.f32.mrf.mxu0
        %v1274 = vadd.f32 %v1065, %v1273
        %v1275 = vpop.f32.mrf.mxu0
        %v1276 = vpop.f32.mrf.mxu0
        %v1277 = vadd.f32 %v1068, %v1276
        %v1278 = vpop.f32.mrf.mxu0
        %1279 = vmatprep.mubr.bf16.mxu0 0
        %1280 = vmatmul.mubr.bf16.gmra.mxu0 %v830
        %v1281 = vpop.f32.mrf.mxu0
        %v1282 = vadd.f32 %v1073, %v1281
        %v1283 = vpop.f32.mrf.mxu0
        %v1284 = vpop.f32.mrf.mxu0
        %v1285 = vadd.f32 %v1076, %v1284
        %v1286 = vpop.f32.mrf.mxu0
        %1287 = vmatprep.mubr.bf16.mxu0 0
        %1288 = vmatmul.mubr.bf16.gmra.mxu0 %v831
        %v1289 = vpop.f32.mrf.mxu0
        %v1290 = vadd.f32 %v1081, %v1289
        %v1291 = vpop.f32.mrf.mxu0
        %v1292 = vpop.f32.mrf.mxu0
        %v1293 = vadd.f32 %v1084, %v1292
        %v1294 = vpop.f32.mrf.mxu0
        %1295 = vmatprep.mubr.bf16.mxu0 0
        %1296 = vmatmul.mubr.bf16.gmra.mxu0 %v832
        %v1297 = vpop.f32.mrf.mxu0
        %v1298 = vadd.f32 %v1089, %v1297
        %v1299 = vpop.f32.mrf.mxu0
        %v1300 = vpop.f32.mrf.mxu0
        %v1301 = vadd.f32 %v1092, %v1300
        %v1302 = vpop.f32.mrf.mxu0
        %1303 = vmatprep.mubr.bf16.mxu0 0
        %1304 = vmatmul.mubr.bf16.gmra.mxu0 %v833
        %v1305 = vpop.f32.mrf.mxu0
        %v1306 = vadd.f32 %v1097, %v1305
        %v1307 = vpop.f32.mrf.mxu0
        %v1308 = vpop.f32.mrf.mxu0
        %v1309 = vadd.f32 %v1100, %v1308
        %v1310 = vpop.f32.mrf.mxu0
        %1311 = vmatprep.mubr.bf16.mxu0 0
        %1312 = vmatmul.mubr.bf16.gmra.mxu0 %v834
        %v1313 = vpop.f32.mrf.mxu0
        %v1314 = vadd.f32 %v1105, %v1313
        %v1315 = vpop.f32.mrf.mxu0
        %v1316 = vpop.f32.mrf.mxu0
        %v1317 = vadd.f32 %v1108, %v1316
        %v1318 = vpop.f32.mrf.mxu0
        %1319 = vmatprep.mubr.bf16.mxu0 0
        %1320 = vmatmul.mubr.bf16.gmra.mxu0 %v835
        %v1321 = vpop.f32.mrf.mxu0
        %v1322 = vadd.f32 %v1113, %v1321
        %v1323 = vpop.f32.mrf.mxu0
        %v1324 = vpop.f32.mrf.mxu0
        %v1325 = vadd.f32 %v1116, %v1324
        %v1326 = vpop.f32.mrf.mxu0
        %1327 = vmatprep.mubr.bf16.mxu0 0
        %1328 = vmatmul.mubr.bf16.gmra.mxu0 %v836
        %v1329 = vpop.f32.mrf.mxu0
        %v1330 = vadd.f32 %v1121, %v1329
        %v1331 = vpop.f32.mrf.mxu0
        %v1332 = vpop.f32.mrf.mxu0
        %v1333 = vadd.f32 %v1124, %v1332
        %v1334 = vpop.f32.mrf.mxu0
        %1335 = vdwg.mxu0
        %v1336 = vld [vmem:[#allocation2 + $0x2] sm:$0xff]
        %v1337 = vld [vmem:[#allocation2 + $0xa] sm:$0xff]
        %v1338 = vld [vmem:[#allocation2 + $0x1a] sm:$0xff]
        %v1339 = vld [vmem:[#allocation2 + $0x22] sm:$0xff]
        %v1340 = vld [vmem:[#allocation2 + $0x32] sm:$0xff]
        %v1341 = vld [vmem:[#allocation2 + $0x3a] sm:$0xff]
        %v1342 = vld [vmem:[#allocation2 + $0x4a] sm:$0xff]
        %v1343 = vld [vmem:[#allocation2 + $0x52] sm:$0xff]
        %v1344 = vld [vmem:[#allocation2 + $0x62] sm:$0xff]
        %v1345 = vld [vmem:[#allocation2 + $0x6a] sm:$0xff]
        %v1346 = vld [vmem:[#allocation2 + $0x7a] sm:$0xff]
        %v1347 = vld [vmem:[#allocation2 + $0x82] sm:$0xff]
        %v1348 = vld [vmem:[#allocation2 + $0x92] sm:$0xff]
        %v1349 = vld [vmem:[#allocation2 + $0x9a] sm:$0xff]
        %v1350 = vld [vmem:[#allocation2 + $0xaa] sm:$0xff]
        %v1351 = vld [vmem:[#allocation2 + $0xb2] sm:$0xff]
        %v1352 = vld [vmem:[#allocation2 + $0xc2] sm:$0xff]
        %v1353 = vld [vmem:[#allocation2 + $0xca] sm:$0xff]
        %v1354 = vld [vmem:[#allocation2 + $0xda] sm:$0xff]
        %v1355 = vld [vmem:[#allocation2 + $0xe2] sm:$0xff]
        %v1356 = vld [vmem:[#allocation2 + $0xf2] sm:$0xff]
        %v1357 = vld [vmem:[#allocation2 + $0xfa] sm:$0xff]
        %v1358 = vld [vmem:[#allocation2 + $0x10a] sm:$0xff]
        %v1359 = vld [vmem:[#allocation2 + $0x112] sm:$0xff]
        %v1360 = vld [vmem:[#allocation2 + $0x122] sm:$0xff]
        %v1361 = vld [vmem:[#allocation2 + $0x12a] sm:$0xff]
        %v1362 = vld [vmem:[#allocation2 + $0x13a] sm:$0xff]
        %v1363 = vld [vmem:[#allocation2 + $0x142] sm:$0xff]
        %v1364 = vld [vmem:[#allocation2 + $0x152] sm:$0xff]
        %v1365 = vld [vmem:[#allocation2 + $0x15a] sm:$0xff]
        %v1366 = vld [vmem:[#allocation2 + $0x16a] sm:$0xff]
        %v1367 = vld [vmem:[#allocation2 + $0x172] sm:$0xff]
        %v1368 = vpack.c.bf16 %v1337, %v1336
        %v1369 = vpack.c.bf16 %v1339, %v1338
        %v1370 = vpack.c.bf16 %v1341, %v1340
        %v1371 = vpack.c.bf16 %v1343, %v1342
        %v1372 = vpack.c.bf16 %v1345, %v1344
        %v1373 = vpack.c.bf16 %v1347, %v1346
        %v1374 = vpack.c.bf16 %v1349, %v1348
        %v1375 = vpack.c.bf16 %v1351, %v1350
        %v1376 = vpack.c.bf16 %v1353, %v1352
        %v1377 = vpack.c.bf16 %v1355, %v1354
        %v1378 = vpack.c.bf16 %v1357, %v1356
        %v1379 = vpack.c.bf16 %v1359, %v1358
        %v1380 = vpack.c.bf16 %v1361, %v1360
        %v1381 = vpack.c.bf16 %v1363, %v1362
        %v1382 = vpack.c.bf16 %v1365, %v1364
        %v1383 = vpack.c.bf16 %v1367, %v1366
        %s1384 = scalar_lea.vmem %s3, 128
        %v1385 = vld [vmem:[%s1384] sm:$0xf]
        %v1386 = vld [vmem:[%s1384 + $0x4] sm:$0xf]
        %v1387 = vld [vmem:[%s1384 + $0x8] sm:$0xf]
        %v1388 = vld [vmem:[%s1384 + $0xc] sm:$0xf]
        %v1389 = vld [vmem:[%s1384 + $0x10] sm:$0xf]
        %v1390 = vld [vmem:[%s1384 + $0x14] sm:$0xf]
        %v1391 = vld [vmem:[%s1384 + $0x18] sm:$0xf]
        %v1392 = vld [vmem:[%s1384 + $0x1c] sm:$0xf]
        %v1393 = vld [vmem:[%s1384 + $0x20] sm:$0xf]
        %v1394 = vld [vmem:[%s1384 + $0x24] sm:$0xf]
        %v1395 = vld [vmem:[%s1384 + $0x28] sm:$0xf]
        %v1396 = vld [vmem:[%s1384 + $0x2c] sm:$0xf]
        %v1397 = vld [vmem:[%s1384 + $0x30] sm:$0xf]
        %v1398 = vld [vmem:[%s1384 + $0x34] sm:$0xf]
        %v1399 = vld [vmem:[%s1384 + $0x38] sm:$0xf]
        %v1400 = vld [vmem:[%s1384 + $0x3c] sm:$0xf]
        %v1417 = vunpack.c.l.b16 %v1385
        %v1418 = vunpack.c.l.b16 %v1386
        %v1419 = vunpack.c.l.b16 %v1387
        %v1420 = vunpack.c.l.b16 %v1388
        %v1421 = vunpack.c.l.b16 %v1389
        %v1422 = vunpack.c.l.b16 %v1390
        %v1423 = vunpack.c.l.b16 %v1391
        %v1424 = vunpack.c.l.b16 %v1392
        %v1425 = vunpack.c.l.b16 %v1393
        %v1426 = vunpack.c.l.b16 %v1394
        %v1427 = vunpack.c.l.b16 %v1395
        %v1428 = vunpack.c.l.b16 %v1396
        %v1429 = vunpack.c.l.b16 %v1397
        %v1430 = vunpack.c.l.b16 %v1398
        %v1431 = vunpack.c.l.b16 %v1399
        %v1432 = vunpack.c.l.b16 %v1400
        %v1433 = vpack.c.b16 %v1418, %v1417
        %v1434 = vpack.c.b16 %v1420, %v1419
        %v1435 = vpack.c.b16 %v1422, %v1421
        %v1436 = vpack.c.b16 %v1424, %v1423
        %v1437 = vpack.c.b16 %v1426, %v1425
        %v1438 = vpack.c.b16 %v1428, %v1427
        %v1439 = vpack.c.b16 %v1430, %v1429
        %v1440 = vpack.c.b16 %v1432, %v1431
        %1449 = vmatprep.subr.bf16.mxu0 0
        %1450 = vmatpush1.bf16.msra.mxu0 %v1440
        %1451 = vmatprep.subr.bf16.mxu0 0
        %1452 = vmatpush1.bf16.msra.mxu0 %v1439
        %1453 = vmatprep.subr.bf16.mxu0 0
        %1454 = vmatpush1.bf16.msra.mxu0 %v1438
        %1455 = vmatprep.subr.bf16.mxu0 0
        %1456 = vmatpush1.bf16.msra.mxu0 %v1437
        %1457 = vmatprep.subr.bf16.mxu0 0
        %1458 = vmatpush1.bf16.msra.mxu0 %v1436
        %1459 = vmatprep.subr.bf16.mxu0 0
        %1460 = vmatpush1.bf16.msra.mxu0 %v1435
        %1461 = vmatprep.subr.bf16.mxu0 0
        %1462 = vmatpush1.bf16.msra.mxu0 %v1434
        %1463 = vmatprep.subr.bf16.mxu0 0
        %1464 = vmatpush1.bf16.msra.mxu0 %v1433
        %1465 = vmatprep.subr.bf16.mxu0 0
        %1466 = vmatpush2.bf16.msra.mxu0 0
        %1467 = vmatprep.subr.bf16.mxu0 0
        %1468 = vmatpush2.bf16.msra.mxu0 0
        %1469 = vmatprep.subr.bf16.mxu0 0
        %1470 = vmatpush2.bf16.msra.mxu0 0
        %1471 = vmatprep.subr.bf16.mxu0 0
        %1472 = vmatpush2.bf16.msra.mxu0 0
        %1473 = vmatprep.subr.bf16.mxu0 0
        %1474 = vmatpush2.bf16.msra.mxu0 0
        %1475 = vmatprep.subr.bf16.mxu0 0
        %1476 = vmatpush2.bf16.msra.mxu0 0
        %1477 = vmatprep.subr.bf16.mxu0 0
        %1478 = vmatpush2.bf16.msra.mxu0 0
        %1479 = vmatprep.subr.bf16.mxu0 0
        %1480 = vmatpush2.bf16.msra.mxu0 0
        %1481 = vmatprep.mubr.bf16.mxu0 0
        %1482 = vmatmul.mubr.bf16.gmra.mxu0 %v1368
        %v1483 = vpop.f32.mrf.mxu0
        %v1484 = vadd.f32 0.0, %v1483
        %v1485 = vpop.f32.mrf.mxu0
        %v1486 = vpop.f32.mrf.mxu0
        %v1487 = vadd.f32 0.0, %v1486
        %v1488 = vpop.f32.mrf.mxu0
        %1489 = vmatprep.mubr.bf16.mxu0 0
        %1490 = vmatmul.mubr.bf16.gmra.mxu0 %v1369
        %v1491 = vpop.f32.mrf.mxu0
        %v1492 = vadd.f32 0.0, %v1491
        %v1493 = vpop.f32.mrf.mxu0
        %v1494 = vpop.f32.mrf.mxu0
        %v1495 = vadd.f32 0.0, %v1494
        %v1496 = vpop.f32.mrf.mxu0
        %1497 = vmatprep.mubr.bf16.mxu0 0
        %1498 = vmatmul.mubr.bf16.gmra.mxu0 %v1370
        %v1499 = vpop.f32.mrf.mxu0
        %v1500 = vadd.f32 0.0, %v1499
        %v1501 = vpop.f32.mrf.mxu0
        %v1502 = vpop.f32.mrf.mxu0
        %v1503 = vadd.f32 0.0, %v1502
        %v1504 = vpop.f32.mrf.mxu0
        %1505 = vmatprep.mubr.bf16.mxu0 0
        %1506 = vmatmul.mubr.bf16.gmra.mxu0 %v1371
        %v1507 = vpop.f32.mrf.mxu0
        %v1508 = vadd.f32 0.0, %v1507
        %v1509 = vpop.f32.mrf.mxu0
        %v1510 = vpop.f32.mrf.mxu0
        %v1511 = vadd.f32 0.0, %v1510
        %v1512 = vpop.f32.mrf.mxu0
        %1513 = vmatprep.mubr.bf16.mxu0 0
        %1514 = vmatmul.mubr.bf16.gmra.mxu0 %v1372
        %v1515 = vpop.f32.mrf.mxu0
        %v1516 = vadd.f32 0.0, %v1515
        %v1517 = vpop.f32.mrf.mxu0
        %v1518 = vpop.f32.mrf.mxu0
        %v1519 = vadd.f32 0.0, %v1518
        %v1520 = vpop.f32.mrf.mxu0
        %1521 = vmatprep.mubr.bf16.mxu0 0
        %1522 = vmatmul.mubr.bf16.gmra.mxu0 %v1373
        %v1523 = vpop.f32.mrf.mxu0
        %v1524 = vadd.f32 0.0, %v1523
        %v1525 = vpop.f32.mrf.mxu0
        %v1526 = vpop.f32.mrf.mxu0
        %v1527 = vadd.f32 0.0, %v1526
        %v1528 = vpop.f32.mrf.mxu0
        %1529 = vmatprep.mubr.bf16.mxu0 0
        %1530 = vmatmul.mubr.bf16.gmra.mxu0 %v1374
        %v1531 = vpop.f32.mrf.mxu0
        %v1532 = vadd.f32 0.0, %v1531
        %v1533 = vpop.f32.mrf.mxu0
        %v1534 = vpop.f32.mrf.mxu0
        %v1535 = vadd.f32 0.0, %v1534
        %v1536 = vpop.f32.mrf.mxu0
        %1537 = vmatprep.mubr.bf16.mxu0 0
        %1538 = vmatmul.mubr.bf16.gmra.mxu0 %v1375
        %v1539 = vpop.f32.mrf.mxu0
        %v1540 = vadd.f32 0.0, %v1539
        %v1541 = vpop.f32.mrf.mxu0
        %v1542 = vpop.f32.mrf.mxu0
        %v1543 = vadd.f32 0.0, %v1542
        %v1544 = vpop.f32.mrf.mxu0
        %1545 = vmatprep.mubr.bf16.mxu0 0
        %1546 = vmatmul.mubr.bf16.gmra.mxu0 %v1376
        %v1547 = vpop.f32.mrf.mxu0
        %v1548 = vadd.f32 0.0, %v1547
        %v1549 = vpop.f32.mrf.mxu0
        %v1550 = vpop.f32.mrf.mxu0
        %v1551 = vadd.f32 0.0, %v1550
        %v1552 = vpop.f32.mrf.mxu0
        %1553 = vmatprep.mubr.bf16.mxu0 0
        %1554 = vmatmul.mubr.bf16.gmra.mxu0 %v1377
        %v1555 = vpop.f32.mrf.mxu0
        %v1556 = vadd.f32 0.0, %v1555
        %v1557 = vpop.f32.mrf.mxu0
        %v1558 = vpop.f32.mrf.mxu0
        %v1559 = vadd.f32 0.0, %v1558
        %v1560 = vpop.f32.mrf.mxu0
        %1561 = vmatprep.mubr.bf16.mxu0 0
        %1562 = vmatmul.mubr.bf16.gmra.mxu0 %v1378
        %v1563 = vpop.f32.mrf.mxu0
        %v1564 = vadd.f32 0.0, %v1563
        %v1565 = vpop.f32.mrf.mxu0
        %v1566 = vpop.f32.mrf.mxu0
        %v1567 = vadd.f32 0.0, %v1566
        %v1568 = vpop.f32.mrf.mxu0
        %1569 = vmatprep.mubr.bf16.mxu0 0
        %1570 = vmatmul.mubr.bf16.gmra.mxu0 %v1379
        %v1571 = vpop.f32.mrf.mxu0
        %v1572 = vadd.f32 0.0, %v1571
        %v1573 = vpop.f32.mrf.mxu0
        %v1574 = vpop.f32.mrf.mxu0
        %v1575 = vadd.f32 0.0, %v1574
        %v1576 = vpop.f32.mrf.mxu0
        %1577 = vmatprep.mubr.bf16.mxu0 0
        %1578 = vmatmul.mubr.bf16.gmra.mxu0 %v1380
        %v1579 = vpop.f32.mrf.mxu0
        %v1580 = vadd.f32 0.0, %v1579
        %v1581 = vpop.f32.mrf.mxu0
        %v1582 = vpop.f32.mrf.mxu0
        %v1583 = vadd.f32 0.0, %v1582
        %v1584 = vpop.f32.mrf.mxu0
        %1585 = vmatprep.mubr.bf16.mxu0 0
        %1586 = vmatmul.mubr.bf16.gmra.mxu0 %v1381
        %v1587 = vpop.f32.mrf.mxu0
        %v1588 = vadd.f32 0.0, %v1587
        %v1589 = vpop.f32.mrf.mxu0
        %v1590 = vpop.f32.mrf.mxu0
        %v1591 = vadd.f32 0.0, %v1590
        %v1592 = vpop.f32.mrf.mxu0
        %1593 = vmatprep.mubr.bf16.mxu0 0
        %1594 = vmatmul.mubr.bf16.gmra.mxu0 %v1382
        %v1595 = vpop.f32.mrf.mxu0
        %v1596 = vadd.f32 0.0, %v1595
        %v1597 = vpop.f32.mrf.mxu0
        %v1598 = vpop.f32.mrf.mxu0
        %v1599 = vadd.f32 0.0, %v1598
        %v1600 = vpop.f32.mrf.mxu0
        %1601 = vmatprep.mubr.bf16.mxu0 0
        %1602 = vmatmul.mubr.bf16.gmra.mxu0 %v1383
        %v1603 = vpop.f32.mrf.mxu0
        %v1604 = vadd.f32 0.0, %v1603
        %v1605 = vpop.f32.mrf.mxu0
        %v1606 = vpop.f32.mrf.mxu0
        %v1607 = vadd.f32 0.0, %v1606
        %v1608 = vpop.f32.mrf.mxu0
        %1609 = vdwg.mxu0
        %v1610 = vadd.f32 %v1210, %v1484
        %v1611 = vadd.f32 %v1213, %v1487
        %v1612 = vadd.f32 %v1218, %v1492
        %v1613 = vadd.f32 %v1221, %v1495
        %v1614 = vadd.f32 %v1226, %v1500
        %v1615 = vadd.f32 %v1229, %v1503
        %v1616 = vadd.f32 %v1234, %v1508
        %v1617 = vadd.f32 %v1237, %v1511
        %v1618 = vadd.f32 %v1242, %v1516
        %v1619 = vadd.f32 %v1245, %v1519
        %v1620 = vadd.f32 %v1250, %v1524
        %v1621 = vadd.f32 %v1253, %v1527
        %v1622 = vadd.f32 %v1258, %v1532
        %v1623 = vadd.f32 %v1261, %v1535
        %v1624 = vadd.f32 %v1266, %v1540
        %v1625 = vadd.f32 %v1269, %v1543
        %v1626 = vadd.f32 %v1274, %v1548
        %v1627 = vadd.f32 %v1277, %v1551
        %v1628 = vadd.f32 %v1282, %v1556
        %v1629 = vadd.f32 %v1285, %v1559
        %v1630 = vadd.f32 %v1290, %v1564
        %v1631 = vadd.f32 %v1293, %v1567
        %v1632 = vadd.f32 %v1298, %v1572
        %v1633 = vadd.f32 %v1301, %v1575
        %v1634 = vadd.f32 %v1306, %v1580
        %v1635 = vadd.f32 %v1309, %v1583
        %v1636 = vadd.f32 %v1314, %v1588
        %v1637 = vadd.f32 %v1317, %v1591
        %v1638 = vadd.f32 %v1322, %v1596
        %v1639 = vadd.f32 %v1325, %v1599
        %v1640 = vadd.f32 %v1330, %v1604
        %v1641 = vadd.f32 %v1333, %v1607
        %v1642 = vld [vmem:[%s756] sm:$0xff]
        %v1643 = vld [vmem:[%s756 + $0x8] sm:$0xff]
        %v1644 = vld [vmem:[%s756 + $0x18] sm:$0xff]
        %v1645 = vld [vmem:[%s756 + $0x20] sm:$0xff]
        %v1646 = vld [vmem:[%s756 + $0x30] sm:$0xff]
        %v1647 = vld [vmem:[%s756 + $0x38] sm:$0xff]
        %v1648 = vld [vmem:[%s756 + $0x48] sm:$0xff]
        %v1649 = vld [vmem:[%s756 + $0x50] sm:$0xff]
        %v1650 = vld [vmem:[%s756 + $0x60] sm:$0xff]
        %v1651 = vld [vmem:[%s756 + $0x68] sm:$0xff]
        %v1652 = vld [vmem:[%s756 + $0x78] sm:$0xff]
        %v1653 = vld [vmem:[%s756 + $0x80] sm:$0xff]
        %v1654 = vld [vmem:[%s756 + $0x90] sm:$0xff]
        %v1655 = vld [vmem:[%s756 + $0x98] sm:$0xff]
        %v1656 = vld [vmem:[%s756 + $0xa8] sm:$0xff]
        %v1657 = vld [vmem:[%s756 + $0xb0] sm:$0xff]
        %v1658 = vld [vmem:[%s756 + $0xc0] sm:$0xff]
        %v1659 = vld [vmem:[%s756 + $0xc8] sm:$0xff]
        %v1660 = vld [vmem:[%s756 + $0xd8] sm:$0xff]
        %v1661 = vld [vmem:[%s756 + $0xe0] sm:$0xff]
        %v1662 = vld [vmem:[%s756 + $0xf0] sm:$0xff]
        %v1663 = vld [vmem:[%s756 + $0xf8] sm:$0xff]
        %v1664 = vld [vmem:[%s756 + $0x108] sm:$0xff]
        %v1665 = vld [vmem:[%s756 + $0x110] sm:$0xff]
        %v1666 = vld [vmem:[%s756 + $0x120] sm:$0xff]
        %v1667 = vld [vmem:[%s756 + $0x128] sm:$0xff]
        %v1668 = vld [vmem:[%s756 + $0x138] sm:$0xff]
        %v1669 = vld [vmem:[%s756 + $0x140] sm:$0xff]
        %v1670 = vld [vmem:[%s756 + $0x150] sm:$0xff]
        %v1671 = vld [vmem:[%s756 + $0x158] sm:$0xff]
        %v1672 = vld [vmem:[%s756 + $0x168] sm:$0xff]
        %v1673 = vld [vmem:[%s756 + $0x170] sm:$0xff]
        %v1674 = vpack.c.bf16 %v1643, %v1642
        %v1675 = vpack.c.bf16 %v1645, %v1644
        %v1676 = vpack.c.bf16 %v1647, %v1646
        %v1677 = vpack.c.bf16 %v1649, %v1648
        %v1678 = vpack.c.bf16 %v1651, %v1650
        %v1679 = vpack.c.bf16 %v1653, %v1652
        %v1680 = vpack.c.bf16 %v1655, %v1654
        %v1681 = vpack.c.bf16 %v1657, %v1656
        %v1682 = vpack.c.bf16 %v1659, %v1658
        %v1683 = vpack.c.bf16 %v1661, %v1660
        %v1684 = vpack.c.bf16 %v1663, %v1662
        %v1685 = vpack.c.bf16 %v1665, %v1664
        %v1686 = vpack.c.bf16 %v1667, %v1666
        %v1687 = vpack.c.bf16 %v1669, %v1668
        %v1688 = vpack.c.bf16 %v1671, %v1670
        %v1689 = vpack.c.bf16 %v1673, %v1672
        %s1690 = scalar_lea.vmem %s3, 192
        %v1691 = vld [vmem:[%s1690] sm:$0xf]
        %v1692 = vld [vmem:[%s1690 + $0x4] sm:$0xf]
        %v1693 = vld [vmem:[%s1690 + $0x8] sm:$0xf]
        %v1694 = vld [vmem:[%s1690 + $0xc] sm:$0xf]
        %v1695 = vld [vmem:[%s1690 + $0x10] sm:$0xf]
        %v1696 = vld [vmem:[%s1690 + $0x14] sm:$0xf]
        %v1697 = vld [vmem:[%s1690 + $0x18] sm:$0xf]
        %v1698 = vld [vmem:[%s1690 + $0x1c] sm:$0xf]
        %v1699 = vld [vmem:[%s1690 + $0x20] sm:$0xf]
        %v1700 = vld [vmem:[%s1690 + $0x24] sm:$0xf]
        %v1701 = vld [vmem:[%s1690 + $0x28] sm:$0xf]
        %v1702 = vld [vmem:[%s1690 + $0x2c] sm:$0xf]
        %v1703 = vld [vmem:[%s1690 + $0x30] sm:$0xf]
        %v1704 = vld [vmem:[%s1690 + $0x34] sm:$0xf]
        %v1705 = vld [vmem:[%s1690 + $0x38] sm:$0xf]
        %v1706 = vld [vmem:[%s1690 + $0x3c] sm:$0xf]
        %v1723 = vunpack.c.l.b16 %v1691
        %v1724 = vunpack.c.l.b16 %v1692
        %v1725 = vunpack.c.l.b16 %v1693
        %v1726 = vunpack.c.l.b16 %v1694
        %v1727 = vunpack.c.l.b16 %v1695
        %v1728 = vunpack.c.l.b16 %v1696
        %v1729 = vunpack.c.l.b16 %v1697
        %v1730 = vunpack.c.l.b16 %v1698
        %v1731 = vunpack.c.l.b16 %v1699
        %v1732 = vunpack.c.l.b16 %v1700
        %v1733 = vunpack.c.l.b16 %v1701
        %v1734 = vunpack.c.l.b16 %v1702
        %v1735 = vunpack.c.l.b16 %v1703
        %v1736 = vunpack.c.l.b16 %v1704
        %v1737 = vunpack.c.l.b16 %v1705
        %v1738 = vunpack.c.l.b16 %v1706
        %v1739 = vpack.c.b16 %v1724, %v1723
        %v1740 = vpack.c.b16 %v1726, %v1725
        %v1741 = vpack.c.b16 %v1728, %v1727
        %v1742 = vpack.c.b16 %v1730, %v1729
        %v1743 = vpack.c.b16 %v1732, %v1731
        %v1744 = vpack.c.b16 %v1734, %v1733
        %v1745 = vpack.c.b16 %v1736, %v1735
        %v1746 = vpack.c.b16 %v1738, %v1737
        %1755 = vmatprep.subr.bf16.mxu0 0
        %1756 = vmatpush1.bf16.msra.mxu0 %v1746
        %1757 = vmatprep.subr.bf16.mxu0 0
        %1758 = vmatpush1.bf16.msra.mxu0 %v1745
        %1759 = vmatprep.subr.bf16.mxu0 0
        %1760 = vmatpush1.bf16.msra.mxu0 %v1744
        %1761 = vmatprep.subr.bf16.mxu0 0
        %1762 = vmatpush1.bf16.msra.mxu0 %v1743
        %1763 = vmatprep.subr.bf16.mxu0 0
        %1764 = vmatpush1.bf16.msra.mxu0 %v1742
        %1765 = vmatprep.subr.bf16.mxu0 0
        %1766 = vmatpush1.bf16.msra.mxu0 %v1741
        %1767 = vmatprep.subr.bf16.mxu0 0
        %1768 = vmatpush1.bf16.msra.mxu0 %v1740
        %1769 = vmatprep.subr.bf16.mxu0 0
        %1770 = vmatpush1.bf16.msra.mxu0 %v1739
        %1771 = vmatprep.subr.bf16.mxu0 0
        %1772 = vmatpush2.bf16.msra.mxu0 0
        %1773 = vmatprep.subr.bf16.mxu0 0
        %1774 = vmatpush2.bf16.msra.mxu0 0
        %1775 = vmatprep.subr.bf16.mxu0 0
        %1776 = vmatpush2.bf16.msra.mxu0 0
        %1777 = vmatprep.subr.bf16.mxu0 0
        %1778 = vmatpush2.bf16.msra.mxu0 0
        %1779 = vmatprep.subr.bf16.mxu0 0
        %1780 = vmatpush2.bf16.msra.mxu0 0
        %1781 = vmatprep.subr.bf16.mxu0 0
        %1782 = vmatpush2.bf16.msra.mxu0 0
        %1783 = vmatprep.subr.bf16.mxu0 0
        %1784 = vmatpush2.bf16.msra.mxu0 0
        %1785 = vmatprep.subr.bf16.mxu0 0
        %1786 = vmatpush2.bf16.msra.mxu0 0
        %1787 = vmatprep.mubr.bf16.mxu0 0
        %1788 = vmatmul.mubr.bf16.gmra.mxu0 %v1674
        %v1789 = vpop.f32.mrf.mxu0
        %v1790 = vadd.f32 0.0, %v1789
        %v1791 = vpop.f32.mrf.mxu0
        %v1792 = vpop.f32.mrf.mxu0
        %v1793 = vadd.f32 0.0, %v1792
        %v1794 = vpop.f32.mrf.mxu0
        %1795 = vmatprep.mubr.bf16.mxu0 0
        %1796 = vmatmul.mubr.bf16.gmra.mxu0 %v1675
        %v1797 = vpop.f32.mrf.mxu0
        %v1798 = vadd.f32 0.0, %v1797
        %v1799 = vpop.f32.mrf.mxu0
        %v1800 = vpop.f32.mrf.mxu0
        %v1801 = vadd.f32 0.0, %v1800
        %v1802 = vpop.f32.mrf.mxu0
        %1803 = vmatprep.mubr.bf16.mxu0 0
        %1804 = vmatmul.mubr.bf16.gmra.mxu0 %v1676
        %v1805 = vpop.f32.mrf.mxu0
        %v1806 = vadd.f32 0.0, %v1805
        %v1807 = vpop.f32.mrf.mxu0
        %v1808 = vpop.f32.mrf.mxu0
        %v1809 = vadd.f32 0.0, %v1808
        %v1810 = vpop.f32.mrf.mxu0
        %1811 = vmatprep.mubr.bf16.mxu0 0
        %1812 = vmatmul.mubr.bf16.gmra.mxu0 %v1677
        %v1813 = vpop.f32.mrf.mxu0
        %v1814 = vadd.f32 0.0, %v1813
        %v1815 = vpop.f32.mrf.mxu0
        %v1816 = vpop.f32.mrf.mxu0
        %v1817 = vadd.f32 0.0, %v1816
        %v1818 = vpop.f32.mrf.mxu0
        %1819 = vmatprep.mubr.bf16.mxu0 0
        %1820 = vmatmul.mubr.bf16.gmra.mxu0 %v1678
        %v1821 = vpop.f32.mrf.mxu0
        %v1822 = vadd.f32 0.0, %v1821
        %v1823 = vpop.f32.mrf.mxu0
        %v1824 = vpop.f32.mrf.mxu0
        %v1825 = vadd.f32 0.0, %v1824
        %v1826 = vpop.f32.mrf.mxu0
        %1827 = vmatprep.mubr.bf16.mxu0 0
        %1828 = vmatmul.mubr.bf16.gmra.mxu0 %v1679
        %v1829 = vpop.f32.mrf.mxu0
        %v1830 = vadd.f32 0.0, %v1829
        %v1831 = vpop.f32.mrf.mxu0
        %v1832 = vpop.f32.mrf.mxu0
        %v1833 = vadd.f32 0.0, %v1832
        %v1834 = vpop.f32.mrf.mxu0
        %1835 = vmatprep.mubr.bf16.mxu0 0
        %1836 = vmatmul.mubr.bf16.gmra.mxu0 %v1680
        %v1837 = vpop.f32.mrf.mxu0
        %v1838 = vadd.f32 0.0, %v1837
        %v1839 = vpop.f32.mrf.mxu0
        %v1840 = vpop.f32.mrf.mxu0
        %v1841 = vadd.f32 0.0, %v1840
        %v1842 = vpop.f32.mrf.mxu0
        %1843 = vmatprep.mubr.bf16.mxu0 0
        %1844 = vmatmul.mubr.bf16.gmra.mxu0 %v1681
        %v1845 = vpop.f32.mrf.mxu0
        %v1846 = vadd.f32 0.0, %v1845
        %v1847 = vpop.f32.mrf.mxu0
        %v1848 = vpop.f32.mrf.mxu0
        %v1849 = vadd.f32 0.0, %v1848
        %v1850 = vpop.f32.mrf.mxu0
        %1851 = vmatprep.mubr.bf16.mxu0 0
        %1852 = vmatmul.mubr.bf16.gmra.mxu0 %v1682
        %v1853 = vpop.f32.mrf.mxu0
        %v1854 = vadd.f32 0.0, %v1853
        %v1855 = vpop.f32.mrf.mxu0
        %v1856 = vpop.f32.mrf.mxu0
        %v1857 = vadd.f32 0.0, %v1856
        %v1858 = vpop.f32.mrf.mxu0
        %1859 = vmatprep.mubr.bf16.mxu0 0
        %1860 = vmatmul.mubr.bf16.gmra.mxu0 %v1683
        %v1861 = vpop.f32.mrf.mxu0
        %v1862 = vadd.f32 0.0, %v1861
        %v1863 = vpop.f32.mrf.mxu0
        %v1864 = vpop.f32.mrf.mxu0
        %v1865 = vadd.f32 0.0, %v1864
        %v1866 = vpop.f32.mrf.mxu0
        %1867 = vmatprep.mubr.bf16.mxu0 0
        %1868 = vmatmul.mubr.bf16.gmra.mxu0 %v1684
        %v1869 = vpop.f32.mrf.mxu0
        %v1870 = vadd.f32 0.0, %v1869
        %v1871 = vpop.f32.mrf.mxu0
        %v1872 = vpop.f32.mrf.mxu0
        %v1873 = vadd.f32 0.0, %v1872
        %v1874 = vpop.f32.mrf.mxu0
        %1875 = vmatprep.mubr.bf16.mxu0 0
        %1876 = vmatmul.mubr.bf16.gmra.mxu0 %v1685
        %v1877 = vpop.f32.mrf.mxu0
        %v1878 = vadd.f32 0.0, %v1877
        %v1879 = vpop.f32.mrf.mxu0
        %v1880 = vpop.f32.mrf.mxu0
        %v1881 = vadd.f32 0.0, %v1880
        %v1882 = vpop.f32.mrf.mxu0
        %1883 = vmatprep.mubr.bf16.mxu0 0
        %1884 = vmatmul.mubr.bf16.gmra.mxu0 %v1686
        %v1885 = vpop.f32.mrf.mxu0
        %v1886 = vadd.f32 0.0, %v1885
        %v1887 = vpop.f32.mrf.mxu0
        %v1888 = vpop.f32.mrf.mxu0
        %v1889 = vadd.f32 0.0, %v1888
        %v1890 = vpop.f32.mrf.mxu0
        %1891 = vmatprep.mubr.bf16.mxu0 0
        %1892 = vmatmul.mubr.bf16.gmra.mxu0 %v1687
        %v1893 = vpop.f32.mrf.mxu0
        %v1894 = vadd.f32 0.0, %v1893
        %v1895 = vpop.f32.mrf.mxu0
        %v1896 = vpop.f32.mrf.mxu0
        %v1897 = vadd.f32 0.0, %v1896
        %v1898 = vpop.f32.mrf.mxu0
        %1899 = vmatprep.mubr.bf16.mxu0 0
        %1900 = vmatmul.mubr.bf16.gmra.mxu0 %v1688
        %v1901 = vpop.f32.mrf.mxu0
        %v1902 = vadd.f32 0.0, %v1901
        %v1903 = vpop.f32.mrf.mxu0
        %v1904 = vpop.f32.mrf.mxu0
        %v1905 = vadd.f32 0.0, %v1904
        %v1906 = vpop.f32.mrf.mxu0
        %1907 = vmatprep.mubr.bf16.mxu0 0
        %1908 = vmatmul.mubr.bf16.gmra.mxu0 %v1689
        %v1909 = vpop.f32.mrf.mxu0
        %v1910 = vadd.f32 0.0, %v1909
        %v1911 = vpop.f32.mrf.mxu0
        %v1912 = vpop.f32.mrf.mxu0
        %v1913 = vadd.f32 0.0, %v1912
        %v1914 = vpop.f32.mrf.mxu0
        %1915 = vdwg.mxu0
        %v1916 = vadd.f32 %v1610, %v1790
        %v1917 = vadd.f32 %v1611, %v1793
        %v1918 = vadd.f32 %v1612, %v1798
        %v1919 = vadd.f32 %v1613, %v1801
        %v1920 = vadd.f32 %v1614, %v1806
        %v1921 = vadd.f32 %v1615, %v1809
        %v1922 = vadd.f32 %v1616, %v1814
        %v1923 = vadd.f32 %v1617, %v1817
        %v1924 = vadd.f32 %v1618, %v1822
        %v1925 = vadd.f32 %v1619, %v1825
        %v1926 = vadd.f32 %v1620, %v1830
        %v1927 = vadd.f32 %v1621, %v1833
        %v1928 = vadd.f32 %v1622, %v1838
        %v1929 = vadd.f32 %v1623, %v1841
        %v1930 = vadd.f32 %v1624, %v1846
        %v1931 = vadd.f32 %v1625, %v1849
        %v1932 = vadd.f32 %v1626, %v1854
        %v1933 = vadd.f32 %v1627, %v1857
        %v1934 = vadd.f32 %v1628, %v1862
        %v1935 = vadd.f32 %v1629, %v1865
        %v1936 = vadd.f32 %v1630, %v1870
        %v1937 = vadd.f32 %v1631, %v1873
        %v1938 = vadd.f32 %v1632, %v1878
        %v1939 = vadd.f32 %v1633, %v1881
        %v1940 = vadd.f32 %v1634, %v1886
        %v1941 = vadd.f32 %v1635, %v1889
        %v1942 = vadd.f32 %v1636, %v1894
        %v1943 = vadd.f32 %v1637, %v1897
        %v1944 = vadd.f32 %v1638, %v1902
        %v1945 = vadd.f32 %v1639, %v1905
        %v1946 = vadd.f32 %v1640, %v1910
        %v1947 = vadd.f32 %v1641, %v1913
        %v1948 = vld [vmem:[%s756 + $0x1] sm:$0xff]
        %v1949 = vld [vmem:[%s756 + $0x9] sm:$0xff]
        %v1950 = vld [vmem:[%s756 + $0x19] sm:$0xff]
        %v1951 = vld [vmem:[%s756 + $0x21] sm:$0xff]
        %v1952 = vld [vmem:[%s756 + $0x31] sm:$0xff]
        %v1953 = vld [vmem:[%s756 + $0x39] sm:$0xff]
        %v1954 = vld [vmem:[%s756 + $0x49] sm:$0xff]
        %v1955 = vld [vmem:[%s756 + $0x51] sm:$0xff]
        %v1956 = vld [vmem:[%s756 + $0x61] sm:$0xff]
        %v1957 = vld [vmem:[%s756 + $0x69] sm:$0xff]
        %v1958 = vld [vmem:[%s756 + $0x79] sm:$0xff]
        %v1959 = vld [vmem:[%s756 + $0x81] sm:$0xff]
        %v1960 = vld [vmem:[%s756 + $0x91] sm:$0xff]
        %v1961 = vld [vmem:[%s756 + $0x99] sm:$0xff]
        %v1962 = vld [vmem:[%s756 + $0xa9] sm:$0xff]
        %v1963 = vld [vmem:[%s756 + $0xb1] sm:$0xff]
        %v1964 = vld [vmem:[%s756 + $0xc1] sm:$0xff]
        %v1965 = vld [vmem:[%s756 + $0xc9] sm:$0xff]
        %v1966 = vld [vmem:[%s756 + $0xd9] sm:$0xff]
        %v1967 = vld [vmem:[%s756 + $0xe1] sm:$0xff]
        %v1968 = vld [vmem:[%s756 + $0xf1] sm:$0xff]
        %v1969 = vld [vmem:[%s756 + $0xf9] sm:$0xff]
        %v1970 = vld [vmem:[%s756 + $0x109] sm:$0xff]
        %v1971 = vld [vmem:[%s756 + $0x111] sm:$0xff]
        %v1972 = vld [vmem:[%s756 + $0x121] sm:$0xff]
        %v1973 = vld [vmem:[%s756 + $0x129] sm:$0xff]
        %v1974 = vld [vmem:[%s756 + $0x139] sm:$0xff]
        %v1975 = vld [vmem:[%s756 + $0x141] sm:$0xff]
        %v1976 = vld [vmem:[%s756 + $0x151] sm:$0xff]
        %v1977 = vld [vmem:[%s756 + $0x159] sm:$0xff]
        %v1978 = vld [vmem:[%s756 + $0x169] sm:$0xff]
        %v1979 = vld [vmem:[%s756 + $0x171] sm:$0xff]
        %v1980 = vpack.c.bf16 %v1949, %v1948
        %v1981 = vpack.c.bf16 %v1951, %v1950
        %v1982 = vpack.c.bf16 %v1953, %v1952
        %v1983 = vpack.c.bf16 %v1955, %v1954
        %v1984 = vpack.c.bf16 %v1957, %v1956
        %v1985 = vpack.c.bf16 %v1959, %v1958
        %v1986 = vpack.c.bf16 %v1961, %v1960
        %v1987 = vpack.c.bf16 %v1963, %v1962
        %v1988 = vpack.c.bf16 %v1965, %v1964
        %v1989 = vpack.c.bf16 %v1967, %v1966
        %v1990 = vpack.c.bf16 %v1969, %v1968
        %v1991 = vpack.c.bf16 %v1971, %v1970
        %v1992 = vpack.c.bf16 %v1973, %v1972
        %v1993 = vpack.c.bf16 %v1975, %v1974
        %v1994 = vpack.c.bf16 %v1977, %v1976
        %v1995 = vpack.c.bf16 %v1979, %v1978
        %s1996 = scalar_lea.vmem %s3, 256
        %v1997 = vld [vmem:[%s1996] sm:$0xf]
        %v1998 = vld [vmem:[%s1996 + $0x4] sm:$0xf]
        %v1999 = vld [vmem:[%s1996 + $0x8] sm:$0xf]
        %v2000 = vld [vmem:[%s1996 + $0xc] sm:$0xf]
        %v2001 = vld [vmem:[%s1996 + $0x10] sm:$0xf]
        %v2002 = vld [vmem:[%s1996 + $0x14] sm:$0xf]
        %v2003 = vld [vmem:[%s1996 + $0x18] sm:$0xf]
        %v2004 = vld [vmem:[%s1996 + $0x1c] sm:$0xf]
        %v2005 = vld [vmem:[%s1996 + $0x20] sm:$0xf]
        %v2006 = vld [vmem:[%s1996 + $0x24] sm:$0xf]
        %v2007 = vld [vmem:[%s1996 + $0x28] sm:$0xf]
        %v2008 = vld [vmem:[%s1996 + $0x2c] sm:$0xf]
        %v2009 = vld [vmem:[%s1996 + $0x30] sm:$0xf]
        %v2010 = vld [vmem:[%s1996 + $0x34] sm:$0xf]
        %v2011 = vld [vmem:[%s1996 + $0x38] sm:$0xf]
        %v2012 = vld [vmem:[%s1996 + $0x3c] sm:$0xf]
        %v2029 = vunpack.c.l.b16 %v1997
        %v2030 = vunpack.c.l.b16 %v1998
        %v2031 = vunpack.c.l.b16 %v1999
        %v2032 = vunpack.c.l.b16 %v2000
        %v2033 = vunpack.c.l.b16 %v2001
        %v2034 = vunpack.c.l.b16 %v2002
        %v2035 = vunpack.c.l.b16 %v2003
        %v2036 = vunpack.c.l.b16 %v2004
        %v2037 = vunpack.c.l.b16 %v2005
        %v2038 = vunpack.c.l.b16 %v2006
        %v2039 = vunpack.c.l.b16 %v2007
        %v2040 = vunpack.c.l.b16 %v2008
        %v2041 = vunpack.c.l.b16 %v2009
        %v2042 = vunpack.c.l.b16 %v2010
        %v2043 = vunpack.c.l.b16 %v2011
        %v2044 = vunpack.c.l.b16 %v2012
        %v2045 = vpack.c.b16 %v2030, %v2029
        %v2046 = vpack.c.b16 %v2032, %v2031
        %v2047 = vpack.c.b16 %v2034, %v2033
        %v2048 = vpack.c.b16 %v2036, %v2035
        %v2049 = vpack.c.b16 %v2038, %v2037
        %v2050 = vpack.c.b16 %v2040, %v2039
        %v2051 = vpack.c.b16 %v2042, %v2041
        %v2052 = vpack.c.b16 %v2044, %v2043
        %2061 = vmatprep.subr.bf16.mxu0 0
        %2062 = vmatpush1.bf16.msra.mxu0 %v2052
        %2063 = vmatprep.subr.bf16.mxu0 0
        %2064 = vmatpush1.bf16.msra.mxu0 %v2051
        %2065 = vmatprep.subr.bf16.mxu0 0
        %2066 = vmatpush1.bf16.msra.mxu0 %v2050
        %2067 = vmatprep.subr.bf16.mxu0 0
        %2068 = vmatpush1.bf16.msra.mxu0 %v2049
        %2069 = vmatprep.subr.bf16.mxu0 0
        %2070 = vmatpush1.bf16.msra.mxu0 %v2048
        %2071 = vmatprep.subr.bf16.mxu0 0
        %2072 = vmatpush1.bf16.msra.mxu0 %v2047
        %2073 = vmatprep.subr.bf16.mxu0 0
        %2074 = vmatpush1.bf16.msra.mxu0 %v2046
        %2075 = vmatprep.subr.bf16.mxu0 0
        %2076 = vmatpush1.bf16.msra.mxu0 %v2045
        %2077 = vmatprep.subr.bf16.mxu0 0
        %2078 = vmatpush2.bf16.msra.mxu0 0
        %2079 = vmatprep.subr.bf16.mxu0 0
        %2080 = vmatpush2.bf16.msra.mxu0 0
        %2081 = vmatprep.subr.bf16.mxu0 0
        %2082 = vmatpush2.bf16.msra.mxu0 0
        %2083 = vmatprep.subr.bf16.mxu0 0
        %2084 = vmatpush2.bf16.msra.mxu0 0
        %2085 = vmatprep.subr.bf16.mxu0 0
        %2086 = vmatpush2.bf16.msra.mxu0 0
        %2087 = vmatprep.subr.bf16.mxu0 0
        %2088 = vmatpush2.bf16.msra.mxu0 0
        %2089 = vmatprep.subr.bf16.mxu0 0
        %2090 = vmatpush2.bf16.msra.mxu0 0
        %2091 = vmatprep.subr.bf16.mxu0 0
        %2092 = vmatpush2.bf16.msra.mxu0 0
        %2093 = vmatprep.mubr.bf16.mxu0 0
        %2094 = vmatmul.mubr.bf16.gmra.mxu0 %v1980
        %v2095 = vpop.f32.mrf.mxu0
        %v2096 = vadd.f32 0.0, %v2095
        %v2097 = vpop.f32.mrf.mxu0
        %v2098 = vpop.f32.mrf.mxu0
        %v2099 = vadd.f32 0.0, %v2098
        %v2100 = vpop.f32.mrf.mxu0
        %2101 = vmatprep.mubr.bf16.mxu0 0
        %2102 = vmatmul.mubr.bf16.gmra.mxu0 %v1981
        %v2103 = vpop.f32.mrf.mxu0
        %v2104 = vadd.f32 0.0, %v2103
        %v2105 = vpop.f32.mrf.mxu0
        %v2106 = vpop.f32.mrf.mxu0
        %v2107 = vadd.f32 0.0, %v2106
        %v2108 = vpop.f32.mrf.mxu0
        %2109 = vmatprep.mubr.bf16.mxu0 0
        %2110 = vmatmul.mubr.bf16.gmra.mxu0 %v1982
        %v2111 = vpop.f32.mrf.mxu0
        %v2112 = vadd.f32 0.0, %v2111
        %v2113 = vpop.f32.mrf.mxu0
        %v2114 = vpop.f32.mrf.mxu0
        %v2115 = vadd.f32 0.0, %v2114
        %v2116 = vpop.f32.mrf.mxu0
        %2117 = vmatprep.mubr.bf16.mxu0 0
        %2118 = vmatmul.mubr.bf16.gmra.mxu0 %v1983
        %v2119 = vpop.f32.mrf.mxu0
        %v2120 = vadd.f32 0.0, %v2119
        %v2121 = vpop.f32.mrf.mxu0
        %v2122 = vpop.f32.mrf.mxu0
        %v2123 = vadd.f32 0.0, %v2122
        %v2124 = vpop.f32.mrf.mxu0
        %2125 = vmatprep.mubr.bf16.mxu0 0
        %2126 = vmatmul.mubr.bf16.gmra.mxu0 %v1984
        %v2127 = vpop.f32.mrf.mxu0
        %v2128 = vadd.f32 0.0, %v2127
        %v2129 = vpop.f32.mrf.mxu0
        %v2130 = vpop.f32.mrf.mxu0
        %v2131 = vadd.f32 0.0, %v2130
        %v2132 = vpop.f32.mrf.mxu0
        %2133 = vmatprep.mubr.bf16.mxu0 0
        %2134 = vmatmul.mubr.bf16.gmra.mxu0 %v1985
        %v2135 = vpop.f32.mrf.mxu0
        %v2136 = vadd.f32 0.0, %v2135
        %v2137 = vpop.f32.mrf.mxu0
        %v2138 = vpop.f32.mrf.mxu0
        %v2139 = vadd.f32 0.0, %v2138
        %v2140 = vpop.f32.mrf.mxu0
        %2141 = vmatprep.mubr.bf16.mxu0 0
        %2142 = vmatmul.mubr.bf16.gmra.mxu0 %v1986
        %v2143 = vpop.f32.mrf.mxu0
        %v2144 = vadd.f32 0.0, %v2143
        %v2145 = vpop.f32.mrf.mxu0
        %v2146 = vpop.f32.mrf.mxu0
        %v2147 = vadd.f32 0.0, %v2146
        %v2148 = vpop.f32.mrf.mxu0
        %2149 = vmatprep.mubr.bf16.mxu0 0
        %2150 = vmatmul.mubr.bf16.gmra.mxu0 %v1987
        %v2151 = vpop.f32.mrf.mxu0
        %v2152 = vadd.f32 0.0, %v2151
        %v2153 = vpop.f32.mrf.mxu0
        %v2154 = vpop.f32.mrf.mxu0
        %v2155 = vadd.f32 0.0, %v2154
        %v2156 = vpop.f32.mrf.mxu0
        %2157 = vmatprep.mubr.bf16.mxu0 0
        %2158 = vmatmul.mubr.bf16.gmra.mxu0 %v1988
        %v2159 = vpop.f32.mrf.mxu0
        %v2160 = vadd.f32 0.0, %v2159
        %v2161 = vpop.f32.mrf.mxu0
        %v2162 = vpop.f32.mrf.mxu0
        %v2163 = vadd.f32 0.0, %v2162
        %v2164 = vpop.f32.mrf.mxu0
        %2165 = vmatprep.mubr.bf16.mxu0 0
        %2166 = vmatmul.mubr.bf16.gmra.mxu0 %v1989
        %v2167 = vpop.f32.mrf.mxu0
        %v2168 = vadd.f32 0.0, %v2167
        %v2169 = vpop.f32.mrf.mxu0
        %v2170 = vpop.f32.mrf.mxu0
        %v2171 = vadd.f32 0.0, %v2170
        %v2172 = vpop.f32.mrf.mxu0
        %2173 = vmatprep.mubr.bf16.mxu0 0
        %2174 = vmatmul.mubr.bf16.gmra.mxu0 %v1990
        %v2175 = vpop.f32.mrf.mxu0
        %v2176 = vadd.f32 0.0, %v2175
        %v2177 = vpop.f32.mrf.mxu0
        %v2178 = vpop.f32.mrf.mxu0
        %v2179 = vadd.f32 0.0, %v2178
        %v2180 = vpop.f32.mrf.mxu0
        %2181 = vmatprep.mubr.bf16.mxu0 0
        %2182 = vmatmul.mubr.bf16.gmra.mxu0 %v1991
        %v2183 = vpop.f32.mrf.mxu0
        %v2184 = vadd.f32 0.0, %v2183
        %v2185 = vpop.f32.mrf.mxu0
        %v2186 = vpop.f32.mrf.mxu0
        %v2187 = vadd.f32 0.0, %v2186
        %v2188 = vpop.f32.mrf.mxu0
        %2189 = vmatprep.mubr.bf16.mxu0 0
        %2190 = vmatmul.mubr.bf16.gmra.mxu0 %v1992
        %v2191 = vpop.f32.mrf.mxu0
        %v2192 = vadd.f32 0.0, %v2191
        %v2193 = vpop.f32.mrf.mxu0
        %v2194 = vpop.f32.mrf.mxu0
        %v2195 = vadd.f32 0.0, %v2194
        %v2196 = vpop.f32.mrf.mxu0
        %2197 = vmatprep.mubr.bf16.mxu0 0
        %2198 = vmatmul.mubr.bf16.gmra.mxu0 %v1993
        %v2199 = vpop.f32.mrf.mxu0
        %v2200 = vadd.f32 0.0, %v2199
        %v2201 = vpop.f32.mrf.mxu0
        %v2202 = vpop.f32.mrf.mxu0
        %v2203 = vadd.f32 0.0, %v2202
        %v2204 = vpop.f32.mrf.mxu0
        %2205 = vmatprep.mubr.bf16.mxu0 0
        %2206 = vmatmul.mubr.bf16.gmra.mxu0 %v1994
        %v2207 = vpop.f32.mrf.mxu0
        %v2208 = vadd.f32 0.0, %v2207
        %v2209 = vpop.f32.mrf.mxu0
        %v2210 = vpop.f32.mrf.mxu0
        %v2211 = vadd.f32 0.0, %v2210
        %v2212 = vpop.f32.mrf.mxu0
        %2213 = vmatprep.mubr.bf16.mxu0 0
        %2214 = vmatmul.mubr.bf16.gmra.mxu0 %v1995
        %v2215 = vpop.f32.mrf.mxu0
        %v2216 = vadd.f32 0.0, %v2215
        %v2217 = vpop.f32.mrf.mxu0
        %v2218 = vpop.f32.mrf.mxu0
        %v2219 = vadd.f32 0.0, %v2218
        %v2220 = vpop.f32.mrf.mxu0
        %2221 = vdwg.mxu0
        %v2222 = vadd.f32 %v1916, %v2096
        %v2223 = vadd.f32 %v1917, %v2099
        %v2224 = vadd.f32 %v1918, %v2104
        %v2225 = vadd.f32 %v1919, %v2107
        %v2226 = vadd.f32 %v1920, %v2112
        %v2227 = vadd.f32 %v1921, %v2115
        %v2228 = vadd.f32 %v1922, %v2120
        %v2229 = vadd.f32 %v1923, %v2123
        %v2230 = vadd.f32 %v1924, %v2128
        %v2231 = vadd.f32 %v1925, %v2131
        %v2232 = vadd.f32 %v1926, %v2136
        %v2233 = vadd.f32 %v1927, %v2139
        %v2234 = vadd.f32 %v1928, %v2144
        %v2235 = vadd.f32 %v1929, %v2147
        %v2236 = vadd.f32 %v1930, %v2152
        %v2237 = vadd.f32 %v1931, %v2155
        %v2238 = vadd.f32 %v1932, %v2160
        %v2239 = vadd.f32 %v1933, %v2163
        %v2240 = vadd.f32 %v1934, %v2168
        %v2241 = vadd.f32 %v1935, %v2171
        %v2242 = vadd.f32 %v1936, %v2176
        %v2243 = vadd.f32 %v1937, %v2179
        %v2244 = vadd.f32 %v1938, %v2184
        %v2245 = vadd.f32 %v1939, %v2187
        %v2246 = vadd.f32 %v1940, %v2192
        %v2247 = vadd.f32 %v1941, %v2195
        %v2248 = vadd.f32 %v1942, %v2200
        %v2249 = vadd.f32 %v1943, %v2203
        %v2250 = vadd.f32 %v1944, %v2208
        %v2251 = vadd.f32 %v1945, %v2211
        %v2252 = vadd.f32 %v1946, %v2216
        %v2253 = vadd.f32 %v1947, %v2219
        %v2254 = vld [vmem:[%s756 + $0x2] sm:$0xff]
        %v2255 = vld [vmem:[%s756 + $0xa] sm:$0xff]
        %v2256 = vld [vmem:[%s756 + $0x1a] sm:$0xff]
        %v2257 = vld [vmem:[%s756 + $0x22] sm:$0xff]
        %v2258 = vld [vmem:[%s756 + $0x32] sm:$0xff]
        %v2259 = vld [vmem:[%s756 + $0x3a] sm:$0xff]
        %v2260 = vld [vmem:[%s756 + $0x4a] sm:$0xff]
        %v2261 = vld [vmem:[%s756 + $0x52] sm:$0xff]
        %v2262 = vld [vmem:[%s756 + $0x62] sm:$0xff]
        %v2263 = vld [vmem:[%s756 + $0x6a] sm:$0xff]
        %v2264 = vld [vmem:[%s756 + $0x7a] sm:$0xff]
        %v2265 = vld [vmem:[%s756 + $0x82] sm:$0xff]
        %v2266 = vld [vmem:[%s756 + $0x92] sm:$0xff]
        %v2267 = vld [vmem:[%s756 + $0x9a] sm:$0xff]
        %v2268 = vld [vmem:[%s756 + $0xaa] sm:$0xff]
        %v2269 = vld [vmem:[%s756 + $0xb2] sm:$0xff]
        %v2270 = vld [vmem:[%s756 + $0xc2] sm:$0xff]
        %v2271 = vld [vmem:[%s756 + $0xca] sm:$0xff]
        %v2272 = vld [vmem:[%s756 + $0xda] sm:$0xff]
        %v2273 = vld [vmem:[%s756 + $0xe2] sm:$0xff]
        %v2274 = vld [vmem:[%s756 + $0xf2] sm:$0xff]
        %v2275 = vld [vmem:[%s756 + $0xfa] sm:$0xff]
        %v2276 = vld [vmem:[%s756 + $0x10a] sm:$0xff]
        %v2277 = vld [vmem:[%s756 + $0x112] sm:$0xff]
        %v2278 = vld [vmem:[%s756 + $0x122] sm:$0xff]
        %v2279 = vld [vmem:[%s756 + $0x12a] sm:$0xff]
        %v2280 = vld [vmem:[%s756 + $0x13a] sm:$0xff]
        %v2281 = vld [vmem:[%s756 + $0x142] sm:$0xff]
        %v2282 = vld [vmem:[%s756 + $0x152] sm:$0xff]
        %v2283 = vld [vmem:[%s756 + $0x15a] sm:$0xff]
        %v2284 = vld [vmem:[%s756 + $0x16a] sm:$0xff]
        %v2285 = vld [vmem:[%s756 + $0x172] sm:$0xff]
        %v2286 = vpack.c.bf16 %v2255, %v2254
        %v2287 = vpack.c.bf16 %v2257, %v2256
        %v2288 = vpack.c.bf16 %v2259, %v2258
        %v2289 = vpack.c.bf16 %v2261, %v2260
        %v2290 = vpack.c.bf16 %v2263, %v2262
        %v2291 = vpack.c.bf16 %v2265, %v2264
        %v2292 = vpack.c.bf16 %v2267, %v2266
        %v2293 = vpack.c.bf16 %v2269, %v2268
        %v2294 = vpack.c.bf16 %v2271, %v2270
        %v2295 = vpack.c.bf16 %v2273, %v2272
        %v2296 = vpack.c.bf16 %v2275, %v2274
        %v2297 = vpack.c.bf16 %v2277, %v2276
        %v2298 = vpack.c.bf16 %v2279, %v2278
        %v2299 = vpack.c.bf16 %v2281, %v2280
        %v2300 = vpack.c.bf16 %v2283, %v2282
        %v2301 = vpack.c.bf16 %v2285, %v2284
        %s2302 = scalar_lea.vmem %s3, 320
        %v2303 = vld [vmem:[%s2302] sm:$0xf]
        %v2304 = vld [vmem:[%s2302 + $0x4] sm:$0xf]
        %v2305 = vld [vmem:[%s2302 + $0x8] sm:$0xf]
        %v2306 = vld [vmem:[%s2302 + $0xc] sm:$0xf]
        %v2307 = vld [vmem:[%s2302 + $0x10] sm:$0xf]
        %v2308 = vld [vmem:[%s2302 + $0x14] sm:$0xf]
        %v2309 = vld [vmem:[%s2302 + $0x18] sm:$0xf]
        %v2310 = vld [vmem:[%s2302 + $0x1c] sm:$0xf]
        %v2311 = vld [vmem:[%s2302 + $0x20] sm:$0xf]
        %v2312 = vld [vmem:[%s2302 + $0x24] sm:$0xf]
        %v2313 = vld [vmem:[%s2302 + $0x28] sm:$0xf]
        %v2314 = vld [vmem:[%s2302 + $0x2c] sm:$0xf]
        %v2315 = vld [vmem:[%s2302 + $0x30] sm:$0xf]
        %v2316 = vld [vmem:[%s2302 + $0x34] sm:$0xf]
        %v2317 = vld [vmem:[%s2302 + $0x38] sm:$0xf]
        %v2318 = vld [vmem:[%s2302 + $0x3c] sm:$0xf]
        %v2335 = vunpack.c.l.b16 %v2303
        %v2336 = vunpack.c.l.b16 %v2304
        %v2337 = vunpack.c.l.b16 %v2305
        %v2338 = vunpack.c.l.b16 %v2306
        %v2339 = vunpack.c.l.b16 %v2307
        %v2340 = vunpack.c.l.b16 %v2308
        %v2341 = vunpack.c.l.b16 %v2309
        %v2342 = vunpack.c.l.b16 %v2310
        %v2343 = vunpack.c.l.b16 %v2311
        %v2344 = vunpack.c.l.b16 %v2312
        %v2345 = vunpack.c.l.b16 %v2313
        %v2346 = vunpack.c.l.b16 %v2314
        %v2347 = vunpack.c.l.b16 %v2315
        %v2348 = vunpack.c.l.b16 %v2316
        %v2349 = vunpack.c.l.b16 %v2317
        %v2350 = vunpack.c.l.b16 %v2318
        %v2351 = vpack.c.b16 %v2336, %v2335
        %v2352 = vpack.c.b16 %v2338, %v2337
        %v2353 = vpack.c.b16 %v2340, %v2339
        %v2354 = vpack.c.b16 %v2342, %v2341
        %v2355 = vpack.c.b16 %v2344, %v2343
        %v2356 = vpack.c.b16 %v2346, %v2345
        %v2357 = vpack.c.b16 %v2348, %v2347
        %v2358 = vpack.c.b16 %v2350, %v2349
        %2367 = vmatprep.subr.bf16.mxu0 0
        %2368 = vmatpush1.bf16.msra.mxu0 %v2358
        %2369 = vmatprep.subr.bf16.mxu0 0
        %2370 = vmatpush1.bf16.msra.mxu0 %v2357
        %2371 = vmatprep.subr.bf16.mxu0 0
        %2372 = vmatpush1.bf16.msra.mxu0 %v2356
        %2373 = vmatprep.subr.bf16.mxu0 0
        %2374 = vmatpush1.bf16.msra.mxu0 %v2355
        %2375 = vmatprep.subr.bf16.mxu0 0
        %2376 = vmatpush1.bf16.msra.mxu0 %v2354
        %2377 = vmatprep.subr.bf16.mxu0 0
        %2378 = vmatpush1.bf16.msra.mxu0 %v2353
        %2379 = vmatprep.subr.bf16.mxu0 0
        %2380 = vmatpush1.bf16.msra.mxu0 %v2352
        %2381 = vmatprep.subr.bf16.mxu0 0
        %2382 = vmatpush1.bf16.msra.mxu0 %v2351
        %2383 = vmatprep.subr.bf16.mxu0 0
        %2384 = vmatpush2.bf16.msra.mxu0 0
        %2385 = vmatprep.subr.bf16.mxu0 0
        %2386 = vmatpush2.bf16.msra.mxu0 0
        %2387 = vmatprep.subr.bf16.mxu0 0
        %2388 = vmatpush2.bf16.msra.mxu0 0
        %2389 = vmatprep.subr.bf16.mxu0 0
        %2390 = vmatpush2.bf16.msra.mxu0 0
        %2391 = vmatprep.subr.bf16.mxu0 0
        %2392 = vmatpush2.bf16.msra.mxu0 0
        %2393 = vmatprep.subr.bf16.mxu0 0
        %2394 = vmatpush2.bf16.msra.mxu0 0
        %2395 = vmatprep.subr.bf16.mxu0 0
        %2396 = vmatpush2.bf16.msra.mxu0 0
        %2397 = vmatprep.subr.bf16.mxu0 0
        %2398 = vmatpush2.bf16.msra.mxu0 0
        %2399 = vmatprep.mubr.bf16.mxu0 0
        %2400 = vmatmul.mubr.bf16.gmra.mxu0 %v2286
        %v2401 = vpop.f32.mrf.mxu0
        %v2402 = vadd.f32 0.0, %v2401
        %v2403 = vpop.f32.mrf.mxu0
        %v2404 = vpop.f32.mrf.mxu0
        %v2405 = vadd.f32 0.0, %v2404
        %v2406 = vpop.f32.mrf.mxu0
        %2407 = vmatprep.mubr.bf16.mxu0 0
        %2408 = vmatmul.mubr.bf16.gmra.mxu0 %v2287
        %v2409 = vpop.f32.mrf.mxu0
        %v2410 = vadd.f32 0.0, %v2409
        %v2411 = vpop.f32.mrf.mxu0
        %v2412 = vpop.f32.mrf.mxu0
        %v2413 = vadd.f32 0.0, %v2412
        %v2414 = vpop.f32.mrf.mxu0
        %2415 = vmatprep.mubr.bf16.mxu0 0
        %2416 = vmatmul.mubr.bf16.gmra.mxu0 %v2288
        %v2417 = vpop.f32.mrf.mxu0
        %v2418 = vadd.f32 0.0, %v2417
        %v2419 = vpop.f32.mrf.mxu0
        %v2420 = vpop.f32.mrf.mxu0
        %v2421 = vadd.f32 0.0, %v2420
        %v2422 = vpop.f32.mrf.mxu0
        %2423 = vmatprep.mubr.bf16.mxu0 0
        %2424 = vmatmul.mubr.bf16.gmra.mxu0 %v2289
        %v2425 = vpop.f32.mrf.mxu0
        %v2426 = vadd.f32 0.0, %v2425
        %v2427 = vpop.f32.mrf.mxu0
        %v2428 = vpop.f32.mrf.mxu0
        %v2429 = vadd.f32 0.0, %v2428
        %v2430 = vpop.f32.mrf.mxu0
        %2431 = vmatprep.mubr.bf16.mxu0 0
        %2432 = vmatmul.mubr.bf16.gmra.mxu0 %v2290
        %v2433 = vpop.f32.mrf.mxu0
        %v2434 = vadd.f32 0.0, %v2433
        %v2435 = vpop.f32.mrf.mxu0
        %v2436 = vpop.f32.mrf.mxu0
        %v2437 = vadd.f32 0.0, %v2436
        %v2438 = vpop.f32.mrf.mxu0
        %2439 = vmatprep.mubr.bf16.mxu0 0
        %2440 = vmatmul.mubr.bf16.gmra.mxu0 %v2291
        %v2441 = vpop.f32.mrf.mxu0
        %v2442 = vadd.f32 0.0, %v2441
        %v2443 = vpop.f32.mrf.mxu0
        %v2444 = vpop.f32.mrf.mxu0
        %v2445 = vadd.f32 0.0, %v2444
        %v2446 = vpop.f32.mrf.mxu0
        %2447 = vmatprep.mubr.bf16.mxu0 0
        %2448 = vmatmul.mubr.bf16.gmra.mxu0 %v2292
        %v2449 = vpop.f32.mrf.mxu0
        %v2450 = vadd.f32 0.0, %v2449
        %v2451 = vpop.f32.mrf.mxu0
        %v2452 = vpop.f32.mrf.mxu0
        %v2453 = vadd.f32 0.0, %v2452
        %v2454 = vpop.f32.mrf.mxu0
        %2455 = vmatprep.mubr.bf16.mxu0 0
        %2456 = vmatmul.mubr.bf16.gmra.mxu0 %v2293
        %v2457 = vpop.f32.mrf.mxu0
        %v2458 = vadd.f32 0.0, %v2457
        %v2459 = vpop.f32.mrf.mxu0
        %v2460 = vpop.f32.mrf.mxu0
        %v2461 = vadd.f32 0.0, %v2460
        %v2462 = vpop.f32.mrf.mxu0
        %2463 = vmatprep.mubr.bf16.mxu0 0
        %2464 = vmatmul.mubr.bf16.gmra.mxu0 %v2294
        %v2465 = vpop.f32.mrf.mxu0
        %v2466 = vadd.f32 0.0, %v2465
        %v2467 = vpop.f32.mrf.mxu0
        %v2468 = vpop.f32.mrf.mxu0
        %v2469 = vadd.f32 0.0, %v2468
        %v2470 = vpop.f32.mrf.mxu0
        %2471 = vmatprep.mubr.bf16.mxu0 0
        %2472 = vmatmul.mubr.bf16.gmra.mxu0 %v2295
        %v2473 = vpop.f32.mrf.mxu0
        %v2474 = vadd.f32 0.0, %v2473
        %v2475 = vpop.f32.mrf.mxu0
        %v2476 = vpop.f32.mrf.mxu0
        %v2477 = vadd.f32 0.0, %v2476
        %v2478 = vpop.f32.mrf.mxu0
        %2479 = vmatprep.mubr.bf16.mxu0 0
        %2480 = vmatmul.mubr.bf16.gmra.mxu0 %v2296
        %v2481 = vpop.f32.mrf.mxu0
        %v2482 = vadd.f32 0.0, %v2481
        %v2483 = vpop.f32.mrf.mxu0
        %v2484 = vpop.f32.mrf.mxu0
        %v2485 = vadd.f32 0.0, %v2484
        %v2486 = vpop.f32.mrf.mxu0
        %2487 = vmatprep.mubr.bf16.mxu0 0
        %2488 = vmatmul.mubr.bf16.gmra.mxu0 %v2297
        %v2489 = vpop.f32.mrf.mxu0
        %v2490 = vadd.f32 0.0, %v2489
        %v2491 = vpop.f32.mrf.mxu0
        %v2492 = vpop.f32.mrf.mxu0
        %v2493 = vadd.f32 0.0, %v2492
        %v2494 = vpop.f32.mrf.mxu0
        %2495 = vmatprep.mubr.bf16.mxu0 0
        %2496 = vmatmul.mubr.bf16.gmra.mxu0 %v2298
        %v2497 = vpop.f32.mrf.mxu0
        %v2498 = vadd.f32 0.0, %v2497
        %v2499 = vpop.f32.mrf.mxu0
        %v2500 = vpop.f32.mrf.mxu0
        %v2501 = vadd.f32 0.0, %v2500
        %v2502 = vpop.f32.mrf.mxu0
        %2503 = vmatprep.mubr.bf16.mxu0 0
        %2504 = vmatmul.mubr.bf16.gmra.mxu0 %v2299
        %v2505 = vpop.f32.mrf.mxu0
        %v2506 = vadd.f32 0.0, %v2505
        %v2507 = vpop.f32.mrf.mxu0
        %v2508 = vpop.f32.mrf.mxu0
        %v2509 = vadd.f32 0.0, %v2508
        %v2510 = vpop.f32.mrf.mxu0
        %2511 = vmatprep.mubr.bf16.mxu0 0
        %2512 = vmatmul.mubr.bf16.gmra.mxu0 %v2300
        %v2513 = vpop.f32.mrf.mxu0
        %v2514 = vadd.f32 0.0, %v2513
        %v2515 = vpop.f32.mrf.mxu0
        %v2516 = vpop.f32.mrf.mxu0
        %v2517 = vadd.f32 0.0, %v2516
        %v2518 = vpop.f32.mrf.mxu0
        %2519 = vmatprep.mubr.bf16.mxu0 0
        %2520 = vmatmul.mubr.bf16.gmra.mxu0 %v2301
        %v2521 = vpop.f32.mrf.mxu0
        %v2522 = vadd.f32 0.0, %v2521
        %v2523 = vpop.f32.mrf.mxu0
        %v2524 = vpop.f32.mrf.mxu0
        %v2525 = vadd.f32 0.0, %v2524
        %v2526 = vpop.f32.mrf.mxu0
        %2527 = vdwg.mxu0
        %v2528 = vadd.f32 %v2222, %v2402
        %v2529 = vadd.f32 %v2223, %v2405
        %v2530 = vadd.f32 %v2224, %v2410
        %v2531 = vadd.f32 %v2225, %v2413
        %v2532 = vadd.f32 %v2226, %v2418
        %v2533 = vadd.f32 %v2227, %v2421
        %v2534 = vadd.f32 %v2228, %v2426
        %v2535 = vadd.f32 %v2229, %v2429
        %v2536 = vadd.f32 %v2230, %v2434
        %v2537 = vadd.f32 %v2231, %v2437
        %v2538 = vadd.f32 %v2232, %v2442
        %v2539 = vadd.f32 %v2233, %v2445
        %v2540 = vadd.f32 %v2234, %v2450
        %v2541 = vadd.f32 %v2235, %v2453
        %v2542 = vadd.f32 %v2236, %v2458
        %v2543 = vadd.f32 %v2237, %v2461
        %v2544 = vadd.f32 %v2238, %v2466
        %v2545 = vadd.f32 %v2239, %v2469
        %v2546 = vadd.f32 %v2240, %v2474
        %v2547 = vadd.f32 %v2241, %v2477
        %v2548 = vadd.f32 %v2242, %v2482
        %v2549 = vadd.f32 %v2243, %v2485
        %v2550 = vadd.f32 %v2244, %v2490
        %v2551 = vadd.f32 %v2245, %v2493
        %v2552 = vadd.f32 %v2246, %v2498
        %v2553 = vadd.f32 %v2247, %v2501
        %v2554 = vadd.f32 %v2248, %v2506
        %v2555 = vadd.f32 %v2249, %v2509
        %v2556 = vadd.f32 %v2250, %v2514
        %v2557 = vadd.f32 %v2251, %v2517
        %v2558 = vadd.f32 %v2252, %v2522
        %v2559 = vadd.f32 %v2253, %v2525
        %s2560 = scalar_lea.vmem [#allocation2], 48
        %v2561 = vld [vmem:[%s2560] sm:$0xff]
        %v2562 = vld [vmem:[%s2560 + $0x8] sm:$0xff]
        %v2563 = vld [vmem:[%s2560 + $0x18] sm:$0xff]
        %v2564 = vld [vmem:[%s2560 + $0x20] sm:$0xff]
        %v2565 = vld [vmem:[%s2560 + $0x30] sm:$0xff]
        %v2566 = vld [vmem:[%s2560 + $0x38] sm:$0xff]
        %v2567 = vld [vmem:[%s2560 + $0x48] sm:$0xff]
        %v2568 = vld [vmem:[%s2560 + $0x50] sm:$0xff]
        %v2569 = vld [vmem:[%s2560 + $0x60] sm:$0xff]
        %v2570 = vld [vmem:[%s2560 + $0x68] sm:$0xff]
        %v2571 = vld [vmem:[%s2560 + $0x78] sm:$0xff]
        %v2572 = vld [vmem:[%s2560 + $0x80] sm:$0xff]
        %v2573 = vld [vmem:[%s2560 + $0x90] sm:$0xff]
        %v2574 = vld [vmem:[%s2560 + $0x98] sm:$0xff]
        %v2575 = vld [vmem:[%s2560 + $0xa8] sm:$0xff]
        %v2576 = vld [vmem:[%s2560 + $0xb0] sm:$0xff]
        %v2577 = vld [vmem:[%s2560 + $0xc0] sm:$0xff]
        %v2578 = vld [vmem:[%s2560 + $0xc8] sm:$0xff]
        %v2579 = vld [vmem:[%s2560 + $0xd8] sm:$0xff]
        %v2580 = vld [vmem:[%s2560 + $0xe0] sm:$0xff]
        %v2581 = vld [vmem:[%s2560 + $0xf0] sm:$0xff]
        %v2582 = vld [vmem:[%s2560 + $0xf8] sm:$0xff]
        %v2583 = vld [vmem:[%s2560 + $0x108] sm:$0xff]
        %v2584 = vld [vmem:[%s2560 + $0x110] sm:$0xff]
        %v2585 = vld [vmem:[%s2560 + $0x120] sm:$0xff]
        %v2586 = vld [vmem:[%s2560 + $0x128] sm:$0xff]
        %v2587 = vld [vmem:[%s2560 + $0x138] sm:$0xff]
        %v2588 = vld [vmem:[%s2560 + $0x140] sm:$0xff]
        %v2589 = vld [vmem:[%s2560 + $0x150] sm:$0xff]
        %v2590 = vld [vmem:[%s2560 + $0x158] sm:$0xff]
        %v2591 = vld [vmem:[%s2560 + $0x168] sm:$0xff]
        %v2592 = vld [vmem:[%s2560 + $0x170] sm:$0xff]
        %v2593 = vpack.c.bf16 %v2562, %v2561
        %v2594 = vpack.c.bf16 %v2564, %v2563
        %v2595 = vpack.c.bf16 %v2566, %v2565
        %v2596 = vpack.c.bf16 %v2568, %v2567
        %v2597 = vpack.c.bf16 %v2570, %v2569
        %v2598 = vpack.c.bf16 %v2572, %v2571
        %v2599 = vpack.c.bf16 %v2574, %v2573
        %v2600 = vpack.c.bf16 %v2576, %v2575
        %v2601 = vpack.c.bf16 %v2578, %v2577
        %v2602 = vpack.c.bf16 %v2580, %v2579
        %v2603 = vpack.c.bf16 %v2582, %v2581
        %v2604 = vpack.c.bf16 %v2584, %v2583
        %v2605 = vpack.c.bf16 %v2586, %v2585
        %v2606 = vpack.c.bf16 %v2588, %v2587
        %v2607 = vpack.c.bf16 %v2590, %v2589
        %v2608 = vpack.c.bf16 %v2592, %v2591
        %s2609 = scalar_lea.vmem %s3, 384
        %v2610 = vld [vmem:[%s2609] sm:$0xf]
        %v2611 = vld [vmem:[%s2609 + $0x4] sm:$0xf]
        %v2612 = vld [vmem:[%s2609 + $0x8] sm:$0xf]
        %v2613 = vld [vmem:[%s2609 + $0xc] sm:$0xf]
        %v2614 = vld [vmem:[%s2609 + $0x10] sm:$0xf]
        %v2615 = vld [vmem:[%s2609 + $0x14] sm:$0xf]
        %v2616 = vld [vmem:[%s2609 + $0x18] sm:$0xf]
        %v2617 = vld [vmem:[%s2609 + $0x1c] sm:$0xf]
        %v2618 = vld [vmem:[%s2609 + $0x20] sm:$0xf]
        %v2619 = vld [vmem:[%s2609 + $0x24] sm:$0xf]
        %v2620 = vld [vmem:[%s2609 + $0x28] sm:$0xf]
        %v2621 = vld [vmem:[%s2609 + $0x2c] sm:$0xf]
        %v2622 = vld [vmem:[%s2609 + $0x30] sm:$0xf]
        %v2623 = vld [vmem:[%s2609 + $0x34] sm:$0xf]
        %v2624 = vld [vmem:[%s2609 + $0x38] sm:$0xf]
        %v2625 = vld [vmem:[%s2609 + $0x3c] sm:$0xf]
        %v2642 = vunpack.c.l.b16 %v2610
        %v2643 = vunpack.c.l.b16 %v2611
        %v2644 = vunpack.c.l.b16 %v2612
        %v2645 = vunpack.c.l.b16 %v2613
        %v2646 = vunpack.c.l.b16 %v2614
        %v2647 = vunpack.c.l.b16 %v2615
        %v2648 = vunpack.c.l.b16 %v2616
        %v2649 = vunpack.c.l.b16 %v2617
        %v2650 = vunpack.c.l.b16 %v2618
        %v2651 = vunpack.c.l.b16 %v2619
        %v2652 = vunpack.c.l.b16 %v2620
        %v2653 = vunpack.c.l.b16 %v2621
        %v2654 = vunpack.c.l.b16 %v2622
        %v2655 = vunpack.c.l.b16 %v2623
        %v2656 = vunpack.c.l.b16 %v2624
        %v2657 = vunpack.c.l.b16 %v2625
        %v2658 = vpack.c.b16 %v2643, %v2642
        %v2659 = vpack.c.b16 %v2645, %v2644
        %v2660 = vpack.c.b16 %v2647, %v2646
        %v2661 = vpack.c.b16 %v2649, %v2648
        %v2662 = vpack.c.b16 %v2651, %v2650
        %v2663 = vpack.c.b16 %v2653, %v2652
        %v2664 = vpack.c.b16 %v2655, %v2654
        %v2665 = vpack.c.b16 %v2657, %v2656
        %2674 = vmatprep.subr.bf16.mxu0 0
        %2675 = vmatpush1.bf16.msra.mxu0 %v2665
        %2676 = vmatprep.subr.bf16.mxu0 0
        %2677 = vmatpush1.bf16.msra.mxu0 %v2664
        %2678 = vmatprep.subr.bf16.mxu0 0
        %2679 = vmatpush1.bf16.msra.mxu0 %v2663
        %2680 = vmatprep.subr.bf16.mxu0 0
        %2681 = vmatpush1.bf16.msra.mxu0 %v2662
        %2682 = vmatprep.subr.bf16.mxu0 0
        %2683 = vmatpush1.bf16.msra.mxu0 %v2661
        %2684 = vmatprep.subr.bf16.mxu0 0
        %2685 = vmatpush1.bf16.msra.mxu0 %v2660
        %2686 = vmatprep.subr.bf16.mxu0 0
        %2687 = vmatpush1.bf16.msra.mxu0 %v2659
        %2688 = vmatprep.subr.bf16.mxu0 0
        %2689 = vmatpush1.bf16.msra.mxu0 %v2658
        %2690 = vmatprep.subr.bf16.mxu0 0
        %2691 = vmatpush2.bf16.msra.mxu0 0
        %2692 = vmatprep.subr.bf16.mxu0 0
        %2693 = vmatpush2.bf16.msra.mxu0 0
        %2694 = vmatprep.subr.bf16.mxu0 0
        %2695 = vmatpush2.bf16.msra.mxu0 0
        %2696 = vmatprep.subr.bf16.mxu0 0
        %2697 = vmatpush2.bf16.msra.mxu0 0
        %2698 = vmatprep.subr.bf16.mxu0 0
        %2699 = vmatpush2.bf16.msra.mxu0 0
        %2700 = vmatprep.subr.bf16.mxu0 0
        %2701 = vmatpush2.bf16.msra.mxu0 0
        %2702 = vmatprep.subr.bf16.mxu0 0
        %2703 = vmatpush2.bf16.msra.mxu0 0
        %2704 = vmatprep.subr.bf16.mxu0 0
        %2705 = vmatpush2.bf16.msra.mxu0 0
        %2706 = vmatprep.mubr.bf16.mxu0 0
        %2707 = vmatmul.mubr.bf16.gmra.mxu0 %v2593
        %v2708 = vpop.f32.mrf.mxu0
        %v2709 = vadd.f32 0.0, %v2708
        %v2710 = vpop.f32.mrf.mxu0
        %v2711 = vpop.f32.mrf.mxu0
        %v2712 = vadd.f32 0.0, %v2711
        %v2713 = vpop.f32.mrf.mxu0
        %2714 = vmatprep.mubr.bf16.mxu0 0
        %2715 = vmatmul.mubr.bf16.gmra.mxu0 %v2594
        %v2716 = vpop.f32.mrf.mxu0
        %v2717 = vadd.f32 0.0, %v2716
        %v2718 = vpop.f32.mrf.mxu0
        %v2719 = vpop.f32.mrf.mxu0
        %v2720 = vadd.f32 0.0, %v2719
        %v2721 = vpop.f32.mrf.mxu0
        %2722 = vmatprep.mubr.bf16.mxu0 0
        %2723 = vmatmul.mubr.bf16.gmra.mxu0 %v2595
        %v2724 = vpop.f32.mrf.mxu0
        %v2725 = vadd.f32 0.0, %v2724
        %v2726 = vpop.f32.mrf.mxu0
        %v2727 = vpop.f32.mrf.mxu0
        %v2728 = vadd.f32 0.0, %v2727
        %v2729 = vpop.f32.mrf.mxu0
        %2730 = vmatprep.mubr.bf16.mxu0 0
        %2731 = vmatmul.mubr.bf16.gmra.mxu0 %v2596
        %v2732 = vpop.f32.mrf.mxu0
        %v2733 = vadd.f32 0.0, %v2732
        %v2734 = vpop.f32.mrf.mxu0
        %v2735 = vpop.f32.mrf.mxu0
        %v2736 = vadd.f32 0.0, %v2735
        %v2737 = vpop.f32.mrf.mxu0
        %2738 = vmatprep.mubr.bf16.mxu0 0
        %2739 = vmatmul.mubr.bf16.gmra.mxu0 %v2597
        %v2740 = vpop.f32.mrf.mxu0
        %v2741 = vadd.f32 0.0, %v2740
        %v2742 = vpop.f32.mrf.mxu0
        %v2743 = vpop.f32.mrf.mxu0
        %v2744 = vadd.f32 0.0, %v2743
        %v2745 = vpop.f32.mrf.mxu0
        %2746 = vmatprep.mubr.bf16.mxu0 0
        %2747 = vmatmul.mubr.bf16.gmra.mxu0 %v2598
        %v2748 = vpop.f32.mrf.mxu0
        %v2749 = vadd.f32 0.0, %v2748
        %v2750 = vpop.f32.mrf.mxu0
        %v2751 = vpop.f32.mrf.mxu0
        %v2752 = vadd.f32 0.0, %v2751
        %v2753 = vpop.f32.mrf.mxu0
        %2754 = vmatprep.mubr.bf16.mxu0 0
        %2755 = vmatmul.mubr.bf16.gmra.mxu0 %v2599
        %v2756 = vpop.f32.mrf.mxu0
        %v2757 = vadd.f32 0.0, %v2756
        %v2758 = vpop.f32.mrf.mxu0
        %v2759 = vpop.f32.mrf.mxu0
        %v2760 = vadd.f32 0.0, %v2759
        %v2761 = vpop.f32.mrf.mxu0
        %2762 = vmatprep.mubr.bf16.mxu0 0
        %2763 = vmatmul.mubr.bf16.gmra.mxu0 %v2600
        %v2764 = vpop.f32.mrf.mxu0
        %v2765 = vadd.f32 0.0, %v2764
        %v2766 = vpop.f32.mrf.mxu0
        %v2767 = vpop.f32.mrf.mxu0
        %v2768 = vadd.f32 0.0, %v2767
        %v2769 = vpop.f32.mrf.mxu0
        %2770 = vmatprep.mubr.bf16.mxu0 0
        %2771 = vmatmul.mubr.bf16.gmra.mxu0 %v2601
        %v2772 = vpop.f32.mrf.mxu0
        %v2773 = vadd.f32 0.0, %v2772
        %v2774 = vpop.f32.mrf.mxu0
        %v2775 = vpop.f32.mrf.mxu0
        %v2776 = vadd.f32 0.0, %v2775
        %v2777 = vpop.f32.mrf.mxu0
        %2778 = vmatprep.mubr.bf16.mxu0 0
        %2779 = vmatmul.mubr.bf16.gmra.mxu0 %v2602
        %v2780 = vpop.f32.mrf.mxu0
        %v2781 = vadd.f32 0.0, %v2780
        %v2782 = vpop.f32.mrf.mxu0
        %v2783 = vpop.f32.mrf.mxu0
        %v2784 = vadd.f32 0.0, %v2783
        %v2785 = vpop.f32.mrf.mxu0
        %2786 = vmatprep.mubr.bf16.mxu0 0
        %2787 = vmatmul.mubr.bf16.gmra.mxu0 %v2603
        %v2788 = vpop.f32.mrf.mxu0
        %v2789 = vadd.f32 0.0, %v2788
        %v2790 = vpop.f32.mrf.mxu0
        %v2791 = vpop.f32.mrf.mxu0
        %v2792 = vadd.f32 0.0, %v2791
        %v2793 = vpop.f32.mrf.mxu0
        %2794 = vmatprep.mubr.bf16.mxu0 0
        %2795 = vmatmul.mubr.bf16.gmra.mxu0 %v2604
        %v2796 = vpop.f32.mrf.mxu0
        %v2797 = vadd.f32 0.0, %v2796
        %v2798 = vpop.f32.mrf.mxu0
        %v2799 = vpop.f32.mrf.mxu0
        %v2800 = vadd.f32 0.0, %v2799
        %v2801 = vpop.f32.mrf.mxu0
        %2802 = vmatprep.mubr.bf16.mxu0 0
        %2803 = vmatmul.mubr.bf16.gmra.mxu0 %v2605
        %v2804 = vpop.f32.mrf.mxu0
        %v2805 = vadd.f32 0.0, %v2804
        %v2806 = vpop.f32.mrf.mxu0
        %v2807 = vpop.f32.mrf.mxu0
        %v2808 = vadd.f32 0.0, %v2807
        %v2809 = vpop.f32.mrf.mxu0
        %2810 = vmatprep.mubr.bf16.mxu0 0
        %2811 = vmatmul.mubr.bf16.gmra.mxu0 %v2606
        %v2812 = vpop.f32.mrf.mxu0
        %v2813 = vadd.f32 0.0, %v2812
        %v2814 = vpop.f32.mrf.mxu0
        %v2815 = vpop.f32.mrf.mxu0
        %v2816 = vadd.f32 0.0, %v2815
        %v2817 = vpop.f32.mrf.mxu0
        %2818 = vmatprep.mubr.bf16.mxu0 0
        %2819 = vmatmul.mubr.bf16.gmra.mxu0 %v2607
        %v2820 = vpop.f32.mrf.mxu0
        %v2821 = vadd.f32 0.0, %v2820
        %v2822 = vpop.f32.mrf.mxu0
        %v2823 = vpop.f32.mrf.mxu0
        %v2824 = vadd.f32 0.0, %v2823
        %v2825 = vpop.f32.mrf.mxu0
        %2826 = vmatprep.mubr.bf16.mxu0 0
        %2827 = vmatmul.mubr.bf16.gmra.mxu0 %v2608
        %v2828 = vpop.f32.mrf.mxu0
        %v2829 = vadd.f32 0.0, %v2828
        %v2830 = vpop.f32.mrf.mxu0
        %v2831 = vpop.f32.mrf.mxu0
        %v2832 = vadd.f32 0.0, %v2831
        %v2833 = vpop.f32.mrf.mxu0
        %2834 = vdwg.mxu0
        %v2835 = vadd.f32 %v2528, %v2709
        %v2836 = vadd.f32 %v2529, %v2712
        %v2837 = vadd.f32 %v2530, %v2717
        %v2838 = vadd.f32 %v2531, %v2720
        %v2839 = vadd.f32 %v2532, %v2725
        %v2840 = vadd.f32 %v2533, %v2728
        %v2841 = vadd.f32 %v2534, %v2733
        %v2842 = vadd.f32 %v2535, %v2736
        %v2843 = vadd.f32 %v2536, %v2741
        %v2844 = vadd.f32 %v2537, %v2744
        %v2845 = vadd.f32 %v2538, %v2749
        %v2846 = vadd.f32 %v2539, %v2752
        %v2847 = vadd.f32 %v2540, %v2757
        %v2848 = vadd.f32 %v2541, %v2760
        %v2849 = vadd.f32 %v2542, %v2765
        %v2850 = vadd.f32 %v2543, %v2768
        %v2851 = vadd.f32 %v2544, %v2773
        %v2852 = vadd.f32 %v2545, %v2776
        %v2853 = vadd.f32 %v2546, %v2781
        %v2854 = vadd.f32 %v2547, %v2784
        %v2855 = vadd.f32 %v2548, %v2789
        %v2856 = vadd.f32 %v2549, %v2792
        %v2857 = vadd.f32 %v2550, %v2797
        %v2858 = vadd.f32 %v2551, %v2800
        %v2859 = vadd.f32 %v2552, %v2805
        %v2860 = vadd.f32 %v2553, %v2808
        %v2861 = vadd.f32 %v2554, %v2813
        %v2862 = vadd.f32 %v2555, %v2816
        %v2863 = vadd.f32 %v2556, %v2821
        %v2864 = vadd.f32 %v2557, %v2824
        %v2865 = vadd.f32 %v2558, %v2829
        %v2866 = vadd.f32 %v2559, %v2832
        %v2867 = vld [vmem:[%s2560 + $0x1] sm:$0xff]
        %v2868 = vld [vmem:[%s2560 + $0x9] sm:$0xff]
        %v2869 = vld [vmem:[%s2560 + $0x19] sm:$0xff]
        %v2870 = vld [vmem:[%s2560 + $0x21] sm:$0xff]
        %v2871 = vld [vmem:[%s2560 + $0x31] sm:$0xff]
        %v2872 = vld [vmem:[%s2560 + $0x39] sm:$0xff]
        %v2873 = vld [vmem:[%s2560 + $0x49] sm:$0xff]
        %v2874 = vld [vmem:[%s2560 + $0x51] sm:$0xff]
        %v2875 = vld [vmem:[%s2560 + $0x61] sm:$0xff]
        %v2876 = vld [vmem:[%s2560 + $0x69] sm:$0xff]
        %v2877 = vld [vmem:[%s2560 + $0x79] sm:$0xff]
        %v2878 = vld [vmem:[%s2560 + $0x81] sm:$0xff]
        %v2879 = vld [vmem:[%s2560 + $0x91] sm:$0xff]
        %v2880 = vld [vmem:[%s2560 + $0x99] sm:$0xff]
        %v2881 = vld [vmem:[%s2560 + $0xa9] sm:$0xff]
        %v2882 = vld [vmem:[%s2560 + $0xb1] sm:$0xff]
        %v2883 = vld [vmem:[%s2560 + $0xc1] sm:$0xff]
        %v2884 = vld [vmem:[%s2560 + $0xc9] sm:$0xff]
        %v2885 = vld [vmem:[%s2560 + $0xd9] sm:$0xff]
        %v2886 = vld [vmem:[%s2560 + $0xe1] sm:$0xff]
        %v2887 = vld [vmem:[%s2560 + $0xf1] sm:$0xff]
        %v2888 = vld [vmem:[%s2560 + $0xf9] sm:$0xff]
        %v2889 = vld [vmem:[%s2560 + $0x109] sm:$0xff]
        %v2890 = vld [vmem:[%s2560 + $0x111] sm:$0xff]
        %v2891 = vld [vmem:[%s2560 + $0x121] sm:$0xff]
        %v2892 = vld [vmem:[%s2560 + $0x129] sm:$0xff]
        %v2893 = vld [vmem:[%s2560 + $0x139] sm:$0xff]
        %v2894 = vld [vmem:[%s2560 + $0x141] sm:$0xff]
        %v2895 = vld [vmem:[%s2560 + $0x151] sm:$0xff]
        %v2896 = vld [vmem:[%s2560 + $0x159] sm:$0xff]
        %v2897 = vld [vmem:[%s2560 + $0x169] sm:$0xff]
        %v2898 = vld [vmem:[%s2560 + $0x171] sm:$0xff]
        %v2899 = vpack.c.bf16 %v2868, %v2867
        %v2900 = vpack.c.bf16 %v2870, %v2869
        %v2901 = vpack.c.bf16 %v2872, %v2871
        %v2902 = vpack.c.bf16 %v2874, %v2873
        %v2903 = vpack.c.bf16 %v2876, %v2875
        %v2904 = vpack.c.bf16 %v2878, %v2877
        %v2905 = vpack.c.bf16 %v2880, %v2879
        %v2906 = vpack.c.bf16 %v2882, %v2881
        %v2907 = vpack.c.bf16 %v2884, %v2883
        %v2908 = vpack.c.bf16 %v2886, %v2885
        %v2909 = vpack.c.bf16 %v2888, %v2887
        %v2910 = vpack.c.bf16 %v2890, %v2889
        %v2911 = vpack.c.bf16 %v2892, %v2891
        %v2912 = vpack.c.bf16 %v2894, %v2893
        %v2913 = vpack.c.bf16 %v2896, %v2895
        %v2914 = vpack.c.bf16 %v2898, %v2897
        %s2915 = scalar_lea.vmem %s3, 448
        %v2916 = vld [vmem:[%s2915] sm:$0xf]
        %v2917 = vld [vmem:[%s2915 + $0x4] sm:$0xf]
        %v2918 = vld [vmem:[%s2915 + $0x8] sm:$0xf]
        %v2919 = vld [vmem:[%s2915 + $0xc] sm:$0xf]
        %v2920 = vld [vmem:[%s2915 + $0x10] sm:$0xf]
        %v2921 = vld [vmem:[%s2915 + $0x14] sm:$0xf]
        %v2922 = vld [vmem:[%s2915 + $0x18] sm:$0xf]
        %v2923 = vld [vmem:[%s2915 + $0x1c] sm:$0xf]
        %v2924 = vld [vmem:[%s2915 + $0x20] sm:$0xf]
        %v2925 = vld [vmem:[%s2915 + $0x24] sm:$0xf]
        %v2926 = vld [vmem:[%s2915 + $0x28] sm:$0xf]
        %v2927 = vld [vmem:[%s2915 + $0x2c] sm:$0xf]
        %v2928 = vld [vmem:[%s2915 + $0x30] sm:$0xf]
        %v2929 = vld [vmem:[%s2915 + $0x34] sm:$0xf]
        %v2930 = vld [vmem:[%s2915 + $0x38] sm:$0xf]
        %v2931 = vld [vmem:[%s2915 + $0x3c] sm:$0xf]
        %v2948 = vunpack.c.l.b16 %v2916
        %v2949 = vunpack.c.l.b16 %v2917
        %v2950 = vunpack.c.l.b16 %v2918
        %v2951 = vunpack.c.l.b16 %v2919
        %v2952 = vunpack.c.l.b16 %v2920
        %v2953 = vunpack.c.l.b16 %v2921
        %v2954 = vunpack.c.l.b16 %v2922
        %v2955 = vunpack.c.l.b16 %v2923
        %v2956 = vunpack.c.l.b16 %v2924
        %v2957 = vunpack.c.l.b16 %v2925
        %v2958 = vunpack.c.l.b16 %v2926
        %v2959 = vunpack.c.l.b16 %v2927
        %v2960 = vunpack.c.l.b16 %v2928
        %v2961 = vunpack.c.l.b16 %v2929
        %v2962 = vunpack.c.l.b16 %v2930
        %v2963 = vunpack.c.l.b16 %v2931
        %v2964 = vpack.c.b16 %v2949, %v2948
        %v2965 = vpack.c.b16 %v2951, %v2950
        %v2966 = vpack.c.b16 %v2953, %v2952
        %v2967 = vpack.c.b16 %v2955, %v2954
        %v2968 = vpack.c.b16 %v2957, %v2956
        %v2969 = vpack.c.b16 %v2959, %v2958
        %v2970 = vpack.c.b16 %v2961, %v2960
        %v2971 = vpack.c.b16 %v2963, %v2962
        %2980 = vmatprep.subr.bf16.mxu0 0
        %2981 = vmatpush1.bf16.msra.mxu0 %v2971
        %2982 = vmatprep.subr.bf16.mxu0 0
        %2983 = vmatpush1.bf16.msra.mxu0 %v2970
        %2984 = vmatprep.subr.bf16.mxu0 0
        %2985 = vmatpush1.bf16.msra.mxu0 %v2969
        %2986 = vmatprep.subr.bf16.mxu0 0
        %2987 = vmatpush1.bf16.msra.mxu0 %v2968
        %2988 = vmatprep.subr.bf16.mxu0 0
        %2989 = vmatpush1.bf16.msra.mxu0 %v2967
        %2990 = vmatprep.subr.bf16.mxu0 0
        %2991 = vmatpush1.bf16.msra.mxu0 %v2966
        %2992 = vmatprep.subr.bf16.mxu0 0
        %2993 = vmatpush1.bf16.msra.mxu0 %v2965
        %2994 = vmatprep.subr.bf16.mxu0 0
        %2995 = vmatpush1.bf16.msra.mxu0 %v2964
        %2996 = vmatprep.subr.bf16.mxu0 0
        %2997 = vmatpush2.bf16.msra.mxu0 0
        %2998 = vmatprep.subr.bf16.mxu0 0
        %2999 = vmatpush2.bf16.msra.mxu0 0
        %3000 = vmatprep.subr.bf16.mxu0 0
        %3001 = vmatpush2.bf16.msra.mxu0 0
        %3002 = vmatprep.subr.bf16.mxu0 0
        %3003 = vmatpush2.bf16.msra.mxu0 0
        %3004 = vmatprep.subr.bf16.mxu0 0
        %3005 = vmatpush2.bf16.msra.mxu0 0
        %3006 = vmatprep.subr.bf16.mxu0 0
        %3007 = vmatpush2.bf16.msra.mxu0 0
        %3008 = vmatprep.subr.bf16.mxu0 0
        %3009 = vmatpush2.bf16.msra.mxu0 0
        %3010 = vmatprep.subr.bf16.mxu0 0
        %3011 = vmatpush2.bf16.msra.mxu0 0
        %3012 = vmatprep.mubr.bf16.mxu0 0
        %3013 = vmatmul.mubr.bf16.gmra.mxu0 %v2899
        %v3014 = vpop.f32.mrf.mxu0
        %v3015 = vadd.f32 0.0, %v3014
        %v3016 = vpop.f32.mrf.mxu0
        %v3017 = vpop.f32.mrf.mxu0
        %v3018 = vadd.f32 0.0, %v3017
        %v3019 = vpop.f32.mrf.mxu0
        %3020 = vmatprep.mubr.bf16.mxu0 0
        %3021 = vmatmul.mubr.bf16.gmra.mxu0 %v2900
        %v3022 = vpop.f32.mrf.mxu0
        %v3023 = vadd.f32 0.0, %v3022
        %v3024 = vpop.f32.mrf.mxu0
        %v3025 = vpop.f32.mrf.mxu0
        %v3026 = vadd.f32 0.0, %v3025
        %v3027 = vpop.f32.mrf.mxu0
        %3028 = vmatprep.mubr.bf16.mxu0 0
        %3029 = vmatmul.mubr.bf16.gmra.mxu0 %v2901
        %v3030 = vpop.f32.mrf.mxu0
        %v3031 = vadd.f32 0.0, %v3030
        %v3032 = vpop.f32.mrf.mxu0
        %v3033 = vpop.f32.mrf.mxu0
        %v3034 = vadd.f32 0.0, %v3033
        %v3035 = vpop.f32.mrf.mxu0
        %3036 = vmatprep.mubr.bf16.mxu0 0
        %3037 = vmatmul.mubr.bf16.gmra.mxu0 %v2902
        %v3038 = vpop.f32.mrf.mxu0
        %v3039 = vadd.f32 0.0, %v3038
        %v3040 = vpop.f32.mrf.mxu0
        %v3041 = vpop.f32.mrf.mxu0
        %v3042 = vadd.f32 0.0, %v3041
        %v3043 = vpop.f32.mrf.mxu0
        %3044 = vmatprep.mubr.bf16.mxu0 0
        %3045 = vmatmul.mubr.bf16.gmra.mxu0 %v2903
        %v3046 = vpop.f32.mrf.mxu0
        %v3047 = vadd.f32 0.0, %v3046
        %v3048 = vpop.f32.mrf.mxu0
        %v3049 = vpop.f32.mrf.mxu0
        %v3050 = vadd.f32 0.0, %v3049
        %v3051 = vpop.f32.mrf.mxu0
        %3052 = vmatprep.mubr.bf16.mxu0 0
        %3053 = vmatmul.mubr.bf16.gmra.mxu0 %v2904
        %v3054 = vpop.f32.mrf.mxu0
        %v3055 = vadd.f32 0.0, %v3054
        %v3056 = vpop.f32.mrf.mxu0
        %v3057 = vpop.f32.mrf.mxu0
        %v3058 = vadd.f32 0.0, %v3057
        %v3059 = vpop.f32.mrf.mxu0
        %3060 = vmatprep.mubr.bf16.mxu0 0
        %3061 = vmatmul.mubr.bf16.gmra.mxu0 %v2905
        %v3062 = vpop.f32.mrf.mxu0
        %v3063 = vadd.f32 0.0, %v3062
        %v3064 = vpop.f32.mrf.mxu0
        %v3065 = vpop.f32.mrf.mxu0
        %v3066 = vadd.f32 0.0, %v3065
        %v3067 = vpop.f32.mrf.mxu0
        %3068 = vmatprep.mubr.bf16.mxu0 0
        %3069 = vmatmul.mubr.bf16.gmra.mxu0 %v2906
        %v3070 = vpop.f32.mrf.mxu0
        %v3071 = vadd.f32 0.0, %v3070
        %v3072 = vpop.f32.mrf.mxu0
        %v3073 = vpop.f32.mrf.mxu0
        %v3074 = vadd.f32 0.0, %v3073
        %v3075 = vpop.f32.mrf.mxu0
        %3076 = vmatprep.mubr.bf16.mxu0 0
        %3077 = vmatmul.mubr.bf16.gmra.mxu0 %v2907
        %v3078 = vpop.f32.mrf.mxu0
        %v3079 = vadd.f32 0.0, %v3078
        %v3080 = vpop.f32.mrf.mxu0
        %v3081 = vpop.f32.mrf.mxu0
        %v3082 = vadd.f32 0.0, %v3081
        %v3083 = vpop.f32.mrf.mxu0
        %3084 = vmatprep.mubr.bf16.mxu0 0
        %3085 = vmatmul.mubr.bf16.gmra.mxu0 %v2908
        %v3086 = vpop.f32.mrf.mxu0
        %v3087 = vadd.f32 0.0, %v3086
        %v3088 = vpop.f32.mrf.mxu0
        %v3089 = vpop.f32.mrf.mxu0
        %v3090 = vadd.f32 0.0, %v3089
        %v3091 = vpop.f32.mrf.mxu0
        %3092 = vmatprep.mubr.bf16.mxu0 0
        %3093 = vmatmul.mubr.bf16.gmra.mxu0 %v2909
        %v3094 = vpop.f32.mrf.mxu0
        %v3095 = vadd.f32 0.0, %v3094
        %v3096 = vpop.f32.mrf.mxu0
        %v3097 = vpop.f32.mrf.mxu0
        %v3098 = vadd.f32 0.0, %v3097
        %v3099 = vpop.f32.mrf.mxu0
        %3100 = vmatprep.mubr.bf16.mxu0 0
        %3101 = vmatmul.mubr.bf16.gmra.mxu0 %v2910
        %v3102 = vpop.f32.mrf.mxu0
        %v3103 = vadd.f32 0.0, %v3102
        %v3104 = vpop.f32.mrf.mxu0
        %v3105 = vpop.f32.mrf.mxu0
        %v3106 = vadd.f32 0.0, %v3105
        %v3107 = vpop.f32.mrf.mxu0
        %3108 = vmatprep.mubr.bf16.mxu0 0
        %3109 = vmatmul.mubr.bf16.gmra.mxu0 %v2911
        %v3110 = vpop.f32.mrf.mxu0
        %v3111 = vadd.f32 0.0, %v3110
        %v3112 = vpop.f32.mrf.mxu0
        %v3113 = vpop.f32.mrf.mxu0
        %v3114 = vadd.f32 0.0, %v3113
        %v3115 = vpop.f32.mrf.mxu0
        %3116 = vmatprep.mubr.bf16.mxu0 0
        %3117 = vmatmul.mubr.bf16.gmra.mxu0 %v2912
        %v3118 = vpop.f32.mrf.mxu0
        %v3119 = vadd.f32 0.0, %v3118
        %v3120 = vpop.f32.mrf.mxu0
        %v3121 = vpop.f32.mrf.mxu0
        %v3122 = vadd.f32 0.0, %v3121
        %v3123 = vpop.f32.mrf.mxu0
        %3124 = vmatprep.mubr.bf16.mxu0 0
        %3125 = vmatmul.mubr.bf16.gmra.mxu0 %v2913
        %v3126 = vpop.f32.mrf.mxu0
        %v3127 = vadd.f32 0.0, %v3126
        %v3128 = vpop.f32.mrf.mxu0
        %v3129 = vpop.f32.mrf.mxu0
        %v3130 = vadd.f32 0.0, %v3129
        %v3131 = vpop.f32.mrf.mxu0
        %3132 = vmatprep.mubr.bf16.mxu0 0
        %3133 = vmatmul.mubr.bf16.gmra.mxu0 %v2914
        %v3134 = vpop.f32.mrf.mxu0
        %v3135 = vadd.f32 0.0, %v3134
        %v3136 = vpop.f32.mrf.mxu0
        %v3137 = vpop.f32.mrf.mxu0
        %v3138 = vadd.f32 0.0, %v3137
        %v3139 = vpop.f32.mrf.mxu0
        %3140 = vdwg.mxu0
        %v3141 = vadd.f32 %v2835, %v3015
        %v3142 = vadd.f32 %v2836, %v3018
        %v3143 = vadd.f32 %v2837, %v3023
        %v3144 = vadd.f32 %v2838, %v3026
        %v3145 = vadd.f32 %v2839, %v3031
        %v3146 = vadd.f32 %v2840, %v3034
        %v3147 = vadd.f32 %v2841, %v3039
        %v3148 = vadd.f32 %v2842, %v3042
        %v3149 = vadd.f32 %v2843, %v3047
        %v3150 = vadd.f32 %v2844, %v3050
        %v3151 = vadd.f32 %v2845, %v3055
        %v3152 = vadd.f32 %v2846, %v3058
        %v3153 = vadd.f32 %v2847, %v3063
        %v3154 = vadd.f32 %v2848, %v3066
        %v3155 = vadd.f32 %v2849, %v3071
        %v3156 = vadd.f32 %v2850, %v3074
        %v3157 = vadd.f32 %v2851, %v3079
        %v3158 = vadd.f32 %v2852, %v3082
        %v3159 = vadd.f32 %v2853, %v3087
        %v3160 = vadd.f32 %v2854, %v3090
        %v3161 = vadd.f32 %v2855, %v3095
        %v3162 = vadd.f32 %v2856, %v3098
        %v3163 = vadd.f32 %v2857, %v3103
        %v3164 = vadd.f32 %v2858, %v3106
        %v3165 = vadd.f32 %v2859, %v3111
        %v3166 = vadd.f32 %v2860, %v3114
        %v3167 = vadd.f32 %v2861, %v3119
        %v3168 = vadd.f32 %v2862, %v3122
        %v3169 = vadd.f32 %v2863, %v3127
        %v3170 = vadd.f32 %v2864, %v3130
        %v3171 = vadd.f32 %v2865, %v3135
        %v3172 = vadd.f32 %v2866, %v3138
        %v3173 = vld [vmem:[%s2560 + $0x2] sm:$0xff]
        %v3174 = vld [vmem:[%s2560 + $0xa] sm:$0xff]
        %v3175 = vld [vmem:[%s2560 + $0x1a] sm:$0xff]
        %v3176 = vld [vmem:[%s2560 + $0x22] sm:$0xff]
        %v3177 = vld [vmem:[%s2560 + $0x32] sm:$0xff]
        %v3178 = vld [vmem:[%s2560 + $0x3a] sm:$0xff]
        %v3179 = vld [vmem:[%s2560 + $0x4a] sm:$0xff]
        %v3180 = vld [vmem:[%s2560 + $0x52] sm:$0xff]
        %v3181 = vld [vmem:[%s2560 + $0x62] sm:$0xff]
        %v3182 = vld [vmem:[%s2560 + $0x6a] sm:$0xff]
        %v3183 = vld [vmem:[%s2560 + $0x7a] sm:$0xff]
        %v3184 = vld [vmem:[%s2560 + $0x82] sm:$0xff]
        %v3185 = vld [vmem:[%s2560 + $0x92] sm:$0xff]
        %v3186 = vld [vmem:[%s2560 + $0x9a] sm:$0xff]
        %v3187 = vld [vmem:[%s2560 + $0xaa] sm:$0xff]
        %v3188 = vld [vmem:[%s2560 + $0xb2] sm:$0xff]
        %v3189 = vld [vmem:[%s2560 + $0xc2] sm:$0xff]
        %v3190 = vld [vmem:[%s2560 + $0xca] sm:$0xff]
        %v3191 = vld [vmem:[%s2560 + $0xda] sm:$0xff]
        %v3192 = vld [vmem:[%s2560 + $0xe2] sm:$0xff]
        %v3193 = vld [vmem:[%s2560 + $0xf2] sm:$0xff]
        %v3194 = vld [vmem:[%s2560 + $0xfa] sm:$0xff]
        %v3195 = vld [vmem:[%s2560 + $0x10a] sm:$0xff]
        %v3196 = vld [vmem:[%s2560 + $0x112] sm:$0xff]
        %v3197 = vld [vmem:[%s2560 + $0x122] sm:$0xff]
        %v3198 = vld [vmem:[%s2560 + $0x12a] sm:$0xff]
        %v3199 = vld [vmem:[%s2560 + $0x13a] sm:$0xff]
        %v3200 = vld [vmem:[%s2560 + $0x142] sm:$0xff]
        %v3201 = vld [vmem:[%s2560 + $0x152] sm:$0xff]
        %v3202 = vld [vmem:[%s2560 + $0x15a] sm:$0xff]
        %v3203 = vld [vmem:[%s2560 + $0x16a] sm:$0xff]
        %v3204 = vld [vmem:[%s2560 + $0x172] sm:$0xff]
        %v3205 = vpack.c.bf16 %v3174, %v3173
        %v3206 = vpack.c.bf16 %v3176, %v3175
        %v3207 = vpack.c.bf16 %v3178, %v3177
        %v3208 = vpack.c.bf16 %v3180, %v3179
        %v3209 = vpack.c.bf16 %v3182, %v3181
        %v3210 = vpack.c.bf16 %v3184, %v3183
        %v3211 = vpack.c.bf16 %v3186, %v3185
        %v3212 = vpack.c.bf16 %v3188, %v3187
        %v3213 = vpack.c.bf16 %v3190, %v3189
        %v3214 = vpack.c.bf16 %v3192, %v3191
        %v3215 = vpack.c.bf16 %v3194, %v3193
        %v3216 = vpack.c.bf16 %v3196, %v3195
        %v3217 = vpack.c.bf16 %v3198, %v3197
        %v3218 = vpack.c.bf16 %v3200, %v3199
        %v3219 = vpack.c.bf16 %v3202, %v3201
        %v3220 = vpack.c.bf16 %v3204, %v3203
        %s3221 = scalar_lea.vmem %s3, 512
        %v3222 = vld [vmem:[%s3221] sm:$0xf]
        %v3223 = vld [vmem:[%s3221 + $0x4] sm:$0xf]
        %v3224 = vld [vmem:[%s3221 + $0x8] sm:$0xf]
        %v3225 = vld [vmem:[%s3221 + $0xc] sm:$0xf]
        %v3226 = vld [vmem:[%s3221 + $0x10] sm:$0xf]
        %v3227 = vld [vmem:[%s3221 + $0x14] sm:$0xf]
        %v3228 = vld [vmem:[%s3221 + $0x18] sm:$0xf]
        %v3229 = vld [vmem:[%s3221 + $0x1c] sm:$0xf]
        %v3230 = vld [vmem:[%s3221 + $0x20] sm:$0xf]
        %v3231 = vld [vmem:[%s3221 + $0x24] sm:$0xf]
        %v3232 = vld [vmem:[%s3221 + $0x28] sm:$0xf]
        %v3233 = vld [vmem:[%s3221 + $0x2c] sm:$0xf]
        %v3234 = vld [vmem:[%s3221 + $0x30] sm:$0xf]
        %v3235 = vld [vmem:[%s3221 + $0x34] sm:$0xf]
        %v3236 = vld [vmem:[%s3221 + $0x38] sm:$0xf]
        %v3237 = vld [vmem:[%s3221 + $0x3c] sm:$0xf]
        %v3254 = vunpack.c.l.b16 %v3222
        %v3255 = vunpack.c.l.b16 %v3223
        %v3256 = vunpack.c.l.b16 %v3224
        %v3257 = vunpack.c.l.b16 %v3225
        %v3258 = vunpack.c.l.b16 %v3226
        %v3259 = vunpack.c.l.b16 %v3227
        %v3260 = vunpack.c.l.b16 %v3228
        %v3261 = vunpack.c.l.b16 %v3229
        %v3262 = vunpack.c.l.b16 %v3230
        %v3263 = vunpack.c.l.b16 %v3231
        %v3264 = vunpack.c.l.b16 %v3232
        %v3265 = vunpack.c.l.b16 %v3233
        %v3266 = vunpack.c.l.b16 %v3234
        %v3267 = vunpack.c.l.b16 %v3235
        %v3268 = vunpack.c.l.b16 %v3236
        %v3269 = vunpack.c.l.b16 %v3237
        %v3270 = vpack.c.b16 %v3255, %v3254
        %v3271 = vpack.c.b16 %v3257, %v3256
        %v3272 = vpack.c.b16 %v3259, %v3258
        %v3273 = vpack.c.b16 %v3261, %v3260
        %v3274 = vpack.c.b16 %v3263, %v3262
        %v3275 = vpack.c.b16 %v3265, %v3264
        %v3276 = vpack.c.b16 %v3267, %v3266
        %v3277 = vpack.c.b16 %v3269, %v3268
        %3286 = vmatprep.subr.bf16.mxu0 0
        %3287 = vmatpush1.bf16.msra.mxu0 %v3277
        %3288 = vmatprep.subr.bf16.mxu0 0
        %3289 = vmatpush1.bf16.msra.mxu0 %v3276
        %3290 = vmatprep.subr.bf16.mxu0 0
        %3291 = vmatpush1.bf16.msra.mxu0 %v3275
        %3292 = vmatprep.subr.bf16.mxu0 0
        %3293 = vmatpush1.bf16.msra.mxu0 %v3274
        %3294 = vmatprep.subr.bf16.mxu0 0
        %3295 = vmatpush1.bf16.msra.mxu0 %v3273
        %3296 = vmatprep.subr.bf16.mxu0 0
        %3297 = vmatpush1.bf16.msra.mxu0 %v3272
        %3298 = vmatprep.subr.bf16.mxu0 0
        %3299 = vmatpush1.bf16.msra.mxu0 %v3271
        %3300 = vmatprep.subr.bf16.mxu0 0
        %3301 = vmatpush1.bf16.msra.mxu0 %v3270
        %3302 = vmatprep.subr.bf16.mxu0 0
        %3303 = vmatpush2.bf16.msra.mxu0 0
        %3304 = vmatprep.subr.bf16.mxu0 0
        %3305 = vmatpush2.bf16.msra.mxu0 0
        %3306 = vmatprep.subr.bf16.mxu0 0
        %3307 = vmatpush2.bf16.msra.mxu0 0
        %3308 = vmatprep.subr.bf16.mxu0 0
        %3309 = vmatpush2.bf16.msra.mxu0 0
        %3310 = vmatprep.subr.bf16.mxu0 0
        %3311 = vmatpush2.bf16.msra.mxu0 0
        %3312 = vmatprep.subr.bf16.mxu0 0
        %3313 = vmatpush2.bf16.msra.mxu0 0
        %3314 = vmatprep.subr.bf16.mxu0 0
        %3315 = vmatpush2.bf16.msra.mxu0 0
        %3316 = vmatprep.subr.bf16.mxu0 0
        %3317 = vmatpush2.bf16.msra.mxu0 0
        %3318 = vmatprep.mubr.bf16.mxu0 0
        %3319 = vmatmul.mubr.bf16.gmra.mxu0 %v3205
        %v3320 = vpop.f32.mrf.mxu0
        %v3321 = vadd.f32 0.0, %v3320
        %v3322 = vpop.f32.mrf.mxu0
        %v3323 = vpop.f32.mrf.mxu0
        %v3324 = vadd.f32 0.0, %v3323
        %v3325 = vpop.f32.mrf.mxu0
        %3326 = vmatprep.mubr.bf16.mxu0 0
        %3327 = vmatmul.mubr.bf16.gmra.mxu0 %v3206
        %v3328 = vpop.f32.mrf.mxu0
        %v3329 = vadd.f32 0.0, %v3328
        %v3330 = vpop.f32.mrf.mxu0
        %v3331 = vpop.f32.mrf.mxu0
        %v3332 = vadd.f32 0.0, %v3331
        %v3333 = vpop.f32.mrf.mxu0
        %3334 = vmatprep.mubr.bf16.mxu0 0
        %3335 = vmatmul.mubr.bf16.gmra.mxu0 %v3207
        %v3336 = vpop.f32.mrf.mxu0
        %v3337 = vadd.f32 0.0, %v3336
        %v3338 = vpop.f32.mrf.mxu0
        %v3339 = vpop.f32.mrf.mxu0
        %v3340 = vadd.f32 0.0, %v3339
        %v3341 = vpop.f32.mrf.mxu0
        %3342 = vmatprep.mubr.bf16.mxu0 0
        %3343 = vmatmul.mubr.bf16.gmra.mxu0 %v3208
        %v3344 = vpop.f32.mrf.mxu0
        %v3345 = vadd.f32 0.0, %v3344
        %v3346 = vpop.f32.mrf.mxu0
        %v3347 = vpop.f32.mrf.mxu0
        %v3348 = vadd.f32 0.0, %v3347
        %v3349 = vpop.f32.mrf.mxu0
        %3350 = vmatprep.mubr.bf16.mxu0 0
        %3351 = vmatmul.mubr.bf16.gmra.mxu0 %v3209
        %v3352 = vpop.f32.mrf.mxu0
        %v3353 = vadd.f32 0.0, %v3352
        %v3354 = vpop.f32.mrf.mxu0
        %v3355 = vpop.f32.mrf.mxu0
        %v3356 = vadd.f32 0.0, %v3355
        %v3357 = vpop.f32.mrf.mxu0
        %3358 = vmatprep.mubr.bf16.mxu0 0
        %3359 = vmatmul.mubr.bf16.gmra.mxu0 %v3210
        %v3360 = vpop.f32.mrf.mxu0
        %v3361 = vadd.f32 0.0, %v3360
        %v3362 = vpop.f32.mrf.mxu0
        %v3363 = vpop.f32.mrf.mxu0
        %v3364 = vadd.f32 0.0, %v3363
        %v3365 = vpop.f32.mrf.mxu0
        %3366 = vmatprep.mubr.bf16.mxu0 0
        %3367 = vmatmul.mubr.bf16.gmra.mxu0 %v3211
        %v3368 = vpop.f32.mrf.mxu0
        %v3369 = vadd.f32 0.0, %v3368
        %v3370 = vpop.f32.mrf.mxu0
        %v3371 = vpop.f32.mrf.mxu0
        %v3372 = vadd.f32 0.0, %v3371
        %v3373 = vpop.f32.mrf.mxu0
        %3374 = vmatprep.mubr.bf16.mxu0 0
        %3375 = vmatmul.mubr.bf16.gmra.mxu0 %v3212
        %v3376 = vpop.f32.mrf.mxu0
        %v3377 = vadd.f32 0.0, %v3376
        %v3378 = vpop.f32.mrf.mxu0
        %v3379 = vpop.f32.mrf.mxu0
        %v3380 = vadd.f32 0.0, %v3379
        %v3381 = vpop.f32.mrf.mxu0
        %3382 = vmatprep.mubr.bf16.mxu0 0
        %3383 = vmatmul.mubr.bf16.gmra.mxu0 %v3213
        %v3384 = vpop.f32.mrf.mxu0
        %v3385 = vadd.f32 0.0, %v3384
        %v3386 = vpop.f32.mrf.mxu0
        %v3387 = vpop.f32.mrf.mxu0
        %v3388 = vadd.f32 0.0, %v3387
        %v3389 = vpop.f32.mrf.mxu0
        %3390 = vmatprep.mubr.bf16.mxu0 0
        %3391 = vmatmul.mubr.bf16.gmra.mxu0 %v3214
        %v3392 = vpop.f32.mrf.mxu0
        %v3393 = vadd.f32 0.0, %v3392
        %v3394 = vpop.f32.mrf.mxu0
        %v3395 = vpop.f32.mrf.mxu0
        %v3396 = vadd.f32 0.0, %v3395
        %v3397 = vpop.f32.mrf.mxu0
        %3398 = vmatprep.mubr.bf16.mxu0 0
        %3399 = vmatmul.mubr.bf16.gmra.mxu0 %v3215
        %v3400 = vpop.f32.mrf.mxu0
        %v3401 = vadd.f32 0.0, %v3400
        %v3402 = vpop.f32.mrf.mxu0
        %v3403 = vpop.f32.mrf.mxu0
        %v3404 = vadd.f32 0.0, %v3403
        %v3405 = vpop.f32.mrf.mxu0
        %3406 = vmatprep.mubr.bf16.mxu0 0
        %3407 = vmatmul.mubr.bf16.gmra.mxu0 %v3216
        %v3408 = vpop.f32.mrf.mxu0
        %v3409 = vadd.f32 0.0, %v3408
        %v3410 = vpop.f32.mrf.mxu0
        %v3411 = vpop.f32.mrf.mxu0
        %v3412 = vadd.f32 0.0, %v3411
        %v3413 = vpop.f32.mrf.mxu0
        %3414 = vmatprep.mubr.bf16.mxu0 0
        %3415 = vmatmul.mubr.bf16.gmra.mxu0 %v3217
        %v3416 = vpop.f32.mrf.mxu0
        %v3417 = vadd.f32 0.0, %v3416
        %v3418 = vpop.f32.mrf.mxu0
        %v3419 = vpop.f32.mrf.mxu0
        %v3420 = vadd.f32 0.0, %v3419
        %v3421 = vpop.f32.mrf.mxu0
        %3422 = vmatprep.mubr.bf16.mxu0 0
        %3423 = vmatmul.mubr.bf16.gmra.mxu0 %v3218
        %v3424 = vpop.f32.mrf.mxu0
        %v3425 = vadd.f32 0.0, %v3424
        %v3426 = vpop.f32.mrf.mxu0
        %v3427 = vpop.f32.mrf.mxu0
        %v3428 = vadd.f32 0.0, %v3427
        %v3429 = vpop.f32.mrf.mxu0
        %3430 = vmatprep.mubr.bf16.mxu0 0
        %3431 = vmatmul.mubr.bf16.gmra.mxu0 %v3219
        %v3432 = vpop.f32.mrf.mxu0
        %v3433 = vadd.f32 0.0, %v3432
        %v3434 = vpop.f32.mrf.mxu0
        %v3435 = vpop.f32.mrf.mxu0
        %v3436 = vadd.f32 0.0, %v3435
        %v3437 = vpop.f32.mrf.mxu0
        %3438 = vmatprep.mubr.bf16.mxu0 0
        %3439 = vmatmul.mubr.bf16.gmra.mxu0 %v3220
        %v3440 = vpop.f32.mrf.mxu0
        %v3441 = vadd.f32 0.0, %v3440
        %v3442 = vpop.f32.mrf.mxu0
        %v3443 = vpop.f32.mrf.mxu0
        %v3444 = vadd.f32 0.0, %v3443
        %v3445 = vpop.f32.mrf.mxu0
        %3446 = vdwg.mxu0
        %v3447 = vadd.f32 %v3141, %v3321
        %v3448 = vadd.f32 %v3142, %v3324
        %v3449 = vadd.f32 %v3143, %v3329
        %v3450 = vadd.f32 %v3144, %v3332
        %v3451 = vadd.f32 %v3145, %v3337
        %v3452 = vadd.f32 %v3146, %v3340
        %v3453 = vadd.f32 %v3147, %v3345
        %v3454 = vadd.f32 %v3148, %v3348
        %v3455 = vadd.f32 %v3149, %v3353
        %v3456 = vadd.f32 %v3150, %v3356
        %v3457 = vadd.f32 %v3151, %v3361
        %v3458 = vadd.f32 %v3152, %v3364
        %v3459 = vadd.f32 %v3153, %v3369
        %v3460 = vadd.f32 %v3154, %v3372
        %v3461 = vadd.f32 %v3155, %v3377
        %v3462 = vadd.f32 %v3156, %v3380
        %v3463 = vadd.f32 %v3157, %v3385
        %v3464 = vadd.f32 %v3158, %v3388
        %v3465 = vadd.f32 %v3159, %v3393
        %v3466 = vadd.f32 %v3160, %v3396
        %v3467 = vadd.f32 %v3161, %v3401
        %v3468 = vadd.f32 %v3162, %v3404
        %v3469 = vadd.f32 %v3163, %v3409
        %v3470 = vadd.f32 %v3164, %v3412
        %v3471 = vadd.f32 %v3165, %v3417
        %v3472 = vadd.f32 %v3166, %v3420
        %v3473 = vadd.f32 %v3167, %v3425
        %v3474 = vadd.f32 %v3168, %v3428
        %v3475 = vadd.f32 %v3169, %v3433
        %v3476 = vadd.f32 %v3170, %v3436
        %v3477 = vadd.f32 %v3171, %v3441
        %v3478 = vadd.f32 %v3172, %v3444
        %v3479 = vld [vmem:[%s4] sm:$0x1]
        %v3481 = vlaneseq
        %v3482 = vshrl.u32 %v3481, 7
        %v3483 = vsub.s32 0, %v3482
        %v3484 = vrot.slane %v3479, %v3483
        %v3486 = vadd.f32 %v3447, %v3484
        %v3487 = vadd.f32 %v3448, %v3484
        %v3488 = vadd.f32 %v3449, %v3484
        %v3489 = vadd.f32 %v3450, %v3484
        %v3490 = vadd.f32 %v3451, %v3484
        %v3491 = vadd.f32 %v3452, %v3484
        %v3492 = vadd.f32 %v3453, %v3484
        %v3493 = vadd.f32 %v3454, %v3484
        %v3494 = vadd.f32 %v3455, %v3484
        %v3495 = vadd.f32 %v3456, %v3484
        %v3496 = vadd.f32 %v3457, %v3484
        %v3497 = vadd.f32 %v3458, %v3484
        %v3498 = vadd.f32 %v3459, %v3484
        %v3499 = vadd.f32 %v3460, %v3484
        %v3500 = vadd.f32 %v3461, %v3484
        %v3501 = vadd.f32 %v3462, %v3484
        %v3502 = vadd.f32 %v3463, %v3484
        %v3503 = vadd.f32 %v3464, %v3484
        %v3504 = vadd.f32 %v3465, %v3484
        %v3505 = vadd.f32 %v3466, %v3484
        %v3506 = vadd.f32 %v3467, %v3484
        %v3507 = vadd.f32 %v3468, %v3484
        %v3508 = vadd.f32 %v3469, %v3484
        %v3509 = vadd.f32 %v3470, %v3484
        %v3510 = vadd.f32 %v3471, %v3484
        %v3511 = vadd.f32 %v3472, %v3484
        %v3512 = vadd.f32 %v3473, %v3484
        %v3513 = vadd.f32 %v3474, %v3484
        %v3514 = vadd.f32 %v3475, %v3484
        %v3515 = vadd.f32 %v3476, %v3484
        %v3516 = vadd.f32 %v3477, %v3484
        %v3517 = vadd.f32 %v3478, %v3484
        %v3518 = vmax.f32 %v3486, 0.0
        %v3519 = vmax.f32 %v3487, 0.0
        %v3520 = vmax.f32 %v3488, 0.0
        %v3521 = vmax.f32 %v3489, 0.0
        %v3522 = vmax.f32 %v3490, 0.0
        %v3523 = vmax.f32 %v3491, 0.0
        %v3524 = vmax.f32 %v3492, 0.0
        %v3525 = vmax.f32 %v3493, 0.0
        %v3526 = vmax.f32 %v3494, 0.0
        %v3527 = vmax.f32 %v3495, 0.0
        %v3528 = vmax.f32 %v3496, 0.0
        %v3529 = vmax.f32 %v3497, 0.0
        %v3530 = vmax.f32 %v3498, 0.0
        %v3531 = vmax.f32 %v3499, 0.0
        %v3532 = vmax.f32 %v3500, 0.0
        %v3533 = vmax.f32 %v3501, 0.0
        %v3534 = vmax.f32 %v3502, 0.0
        %v3535 = vmax.f32 %v3503, 0.0
        %v3536 = vmax.f32 %v3504, 0.0
        %v3537 = vmax.f32 %v3505, 0.0
        %v3538 = vmax.f32 %v3506, 0.0
        %v3539 = vmax.f32 %v3507, 0.0
        %v3540 = vmax.f32 %v3508, 0.0
        %v3541 = vmax.f32 %v3509, 0.0
        %v3542 = vmax.f32 %v3510, 0.0
        %v3543 = vmax.f32 %v3511, 0.0
        %v3544 = vmax.f32 %v3512, 0.0
        %v3545 = vmax.f32 %v3513, 0.0
        %v3546 = vmax.f32 %v3514, 0.0
        %v3547 = vmax.f32 %v3515, 0.0
        %v3548 = vmax.f32 %v3516, 0.0
        %v3549 = vmax.f32 %v3517, 0.0
        %v3550 = vpack.c.bf16 %v3519, %v3518
        %v3551 = vpack.c.bf16 %v3521, %v3520
        %v3552 = vpack.c.bf16 %v3523, %v3522
        %v3553 = vpack.c.bf16 %v3525, %v3524
        %v3554 = vpack.c.bf16 %v3527, %v3526
        %v3555 = vpack.c.bf16 %v3529, %v3528
        %v3556 = vpack.c.bf16 %v3531, %v3530
        %v3557 = vpack.c.bf16 %v3533, %v3532
        %v3558 = vpack.c.bf16 %v3535, %v3534
        %v3559 = vpack.c.bf16 %v3537, %v3536
        %v3560 = vpack.c.bf16 %v3539, %v3538
        %v3561 = vpack.c.bf16 %v3541, %v3540
        %v3562 = vpack.c.bf16 %v3543, %v3542
        %v3563 = vpack.c.bf16 %v3545, %v3544
        %v3564 = vpack.c.bf16 %v3547, %v3546
        %v3565 = vpack.c.bf16 %v3549, %v3548
        %v3566 = vld [vmem:[%s5] sm:$0xff]
        %v3567 = vld [vmem:[%s5 + $0x8] sm:$0xff]
        %v3568 = vld [vmem:[%s5 + $0x10] sm:$0xff]
        %v3569 = vld [vmem:[%s5 + $0x18] sm:$0xff]
        %v3570 = vld [vmem:[%s5 + $0x20] sm:$0xff]
        %v3571 = vld [vmem:[%s5 + $0x28] sm:$0xff]
        %v3572 = vld [vmem:[%s5 + $0x30] sm:$0xff]
        %v3573 = vld [vmem:[%s5 + $0x38] sm:$0xff]
        %v3574 = vld [vmem:[%s5 + $0x40] sm:$0xff]
        %v3575 = vld [vmem:[%s5 + $0x48] sm:$0xff]
        %v3576 = vld [vmem:[%s5 + $0x50] sm:$0xff]
        %v3577 = vld [vmem:[%s5 + $0x58] sm:$0xff]
        %v3578 = vld [vmem:[%s5 + $0x60] sm:$0xff]
        %v3579 = vld [vmem:[%s5 + $0x68] sm:$0xff]
        %v3580 = vld [vmem:[%s5 + $0x70] sm:$0xff]
        %v3581 = vld [vmem:[%s5 + $0x78] sm:$0xff]
        %v3582 = vld [vmem:[%s6] sm:$0x3]
        %v3584 = vlaneseq
        %v3585 = vshrl.u32 %v3584, 7
        %v3586 = vsub.s32 0, %v3585
        %v3587 = vrot.slane %v3582, %v3586
        %v3588 = vlaneseq
        %v3589 = vshrl.u32 %v3588, 7
        %v3590 = vsub.s32 1, %v3589
        %v3591 = vrot.slane %v3582, %v3590
        %v3610 = vunpack.c.l.b16 %v3566
        %v3611 = vunpack.c.h.b16 %v3566
        %v3612 = vunpack.c.l.b16 %v3567
        %v3613 = vunpack.c.h.b16 %v3567
        %v3614 = vunpack.c.l.b16 %v3568
        %v3615 = vunpack.c.h.b16 %v3568
        %v3616 = vunpack.c.l.b16 %v3569
        %v3617 = vunpack.c.h.b16 %v3569
        %v3618 = vunpack.c.l.b16 %v3570
        %v3619 = vunpack.c.h.b16 %v3570
        %v3620 = vunpack.c.l.b16 %v3571
        %v3621 = vunpack.c.h.b16 %v3571
        %v3622 = vunpack.c.l.b16 %v3572
        %v3623 = vunpack.c.h.b16 %v3572
        %v3624 = vunpack.c.l.b16 %v3573
        %v3625 = vunpack.c.h.b16 %v3573
        %v3626 = vunpack.c.l.b16 %v3574
        %v3627 = vunpack.c.h.b16 %v3574
        %v3628 = vunpack.c.l.b16 %v3575
        %v3629 = vunpack.c.h.b16 %v3575
        %v3630 = vunpack.c.l.b16 %v3576
        %v3631 = vunpack.c.h.b16 %v3576
        %v3632 = vunpack.c.l.b16 %v3577
        %v3633 = vunpack.c.h.b16 %v3577
        %v3634 = vunpack.c.l.b16 %v3578
        %v3635 = vunpack.c.h.b16 %v3578
        %v3636 = vunpack.c.l.b16 %v3579
        %v3637 = vunpack.c.h.b16 %v3579
        %v3638 = vunpack.c.l.b16 %v3580
        %v3639 = vunpack.c.h.b16 %v3580
        %v3640 = vunpack.c.l.b16 %v3581
        %v3641 = vunpack.c.h.b16 %v3581
        %v3642 = vpack.c.b16 %v3612, %v3610
        %v3643 = vpack.c.b16 %v3613, %v3611
        %v3644 = vpack.c.b16 %v3616, %v3614
        %v3645 = vpack.c.b16 %v3617, %v3615
        %v3646 = vpack.c.b16 %v3620, %v3618
        %v3647 = vpack.c.b16 %v3621, %v3619
        %v3648 = vpack.c.b16 %v3624, %v3622
        %v3649 = vpack.c.b16 %v3625, %v3623
        %v3650 = vpack.c.b16 %v3628, %v3626
        %v3651 = vpack.c.b16 %v3629, %v3627
        %v3652 = vpack.c.b16 %v3632, %v3630
        %v3653 = vpack.c.b16 %v3633, %v3631
        %v3654 = vpack.c.b16 %v3636, %v3634
        %v3655 = vpack.c.b16 %v3637, %v3635
        %v3656 = vpack.c.b16 %v3640, %v3638
        %v3657 = vpack.c.b16 %v3641, %v3639
        %3674 = vmatprep.subr.bf16.mxu0 %v3657
        %3675 = vmatpush1.bf16.msra.mxu0 %v3656
        %3676 = vmatprep.subr.bf16.mxu0 %v3655
        %3677 = vmatpush1.bf16.msra.mxu0 %v3654
        %3678 = vmatprep.subr.bf16.mxu0 %v3653
        %3679 = vmatpush1.bf16.msra.mxu0 %v3652
        %3680 = vmatprep.subr.bf16.mxu0 %v3651
        %3681 = vmatpush1.bf16.msra.mxu0 %v3650
        %3682 = vmatprep.subr.bf16.mxu0 %v3649
        %3683 = vmatpush1.bf16.msra.mxu0 %v3648
        %3684 = vmatprep.subr.bf16.mxu0 %v3647
        %3685 = vmatpush1.bf16.msra.mxu0 %v3646
        %3686 = vmatprep.subr.bf16.mxu0 %v3645
        %3687 = vmatpush1.bf16.msra.mxu0 %v3644
        %3688 = vmatprep.subr.bf16.mxu0 %v3643
        %3689 = vmatpush1.bf16.msra.mxu0 %v3642
        %3690 = vmatprep.subr.bf16.mxu0 0
        %3691 = vmatpush2.bf16.msra.mxu0 0
        %3692 = vmatprep.subr.bf16.mxu0 0
        %3693 = vmatpush2.bf16.msra.mxu0 0
        %3694 = vmatprep.subr.bf16.mxu0 0
        %3695 = vmatpush2.bf16.msra.mxu0 0
        %3696 = vmatprep.subr.bf16.mxu0 0
        %3697 = vmatpush2.bf16.msra.mxu0 0
        %3698 = vmatprep.subr.bf16.mxu0 0
        %3699 = vmatpush2.bf16.msra.mxu0 0
        %3700 = vmatprep.subr.bf16.mxu0 0
        %3701 = vmatpush2.bf16.msra.mxu0 0
        %3702 = vmatprep.subr.bf16.mxu0 0
        %3703 = vmatpush2.bf16.msra.mxu0 0
        %3704 = vmatprep.subr.bf16.mxu0 0
        %3705 = vmatpush2.bf16.msra.mxu0 0
        %3706 = vmatprep.mubr.bf16.mxu0 0
        %3707 = vmatmul.mubr.bf16.gmra.mxu0 %v3550
        %v3708 = vpop.f32.mrf.mxu0
        %v3709 = vadd.f32 %v3587, %v3708
        %v3710 = vpop.f32.mrf.mxu0
        %v3711 = vadd.f32 %v3591, %v3710
        %v3712 = vpop.f32.mrf.mxu0
        %v3713 = vadd.f32 %v3587, %v3712
        %v3714 = vpop.f32.mrf.mxu0
        %v3715 = vadd.f32 %v3591, %v3714
        %3716 = vmatprep.mubr.bf16.mxu0 0
        %3717 = vmatmul.mubr.bf16.gmra.mxu0 %v3551
        %v3718 = vpop.f32.mrf.mxu0
        %v3719 = vadd.f32 %v3587, %v3718
        %v3720 = vpop.f32.mrf.mxu0
        %v3721 = vadd.f32 %v3591, %v3720
        %v3722 = vpop.f32.mrf.mxu0
        %v3723 = vadd.f32 %v3587, %v3722
        %v3724 = vpop.f32.mrf.mxu0
        %v3725 = vadd.f32 %v3591, %v3724
        %3726 = vmatprep.mubr.bf16.mxu0 0
        %3727 = vmatmul.mubr.bf16.gmra.mxu0 %v3552
        %v3728 = vpop.f32.mrf.mxu0
        %v3729 = vadd.f32 %v3587, %v3728
        %v3730 = vpop.f32.mrf.mxu0
        %v3731 = vadd.f32 %v3591, %v3730
        %v3732 = vpop.f32.mrf.mxu0
        %v3733 = vadd.f32 %v3587, %v3732
        %v3734 = vpop.f32.mrf.mxu0
        %v3735 = vadd.f32 %v3591, %v3734
        %3736 = vmatprep.mubr.bf16.mxu0 0
        %3737 = vmatmul.mubr.bf16.gmra.mxu0 %v3553
        %v3738 = vpop.f32.mrf.mxu0
        %v3739 = vadd.f32 %v3587, %v3738
        %v3740 = vpop.f32.mrf.mxu0
        %v3741 = vadd.f32 %v3591, %v3740
        %v3742 = vpop.f32.mrf.mxu0
        %v3743 = vadd.f32 %v3587, %v3742
        %v3744 = vpop.f32.mrf.mxu0
        %v3745 = vadd.f32 %v3591, %v3744
        %3746 = vmatprep.mubr.bf16.mxu0 0
        %3747 = vmatmul.mubr.bf16.gmra.mxu0 %v3554
        %v3748 = vpop.f32.mrf.mxu0
        %v3749 = vadd.f32 %v3587, %v3748
        %v3750 = vpop.f32.mrf.mxu0
        %v3751 = vadd.f32 %v3591, %v3750
        %v3752 = vpop.f32.mrf.mxu0
        %v3753 = vadd.f32 %v3587, %v3752
        %v3754 = vpop.f32.mrf.mxu0
        %v3755 = vadd.f32 %v3591, %v3754
        %3756 = vmatprep.mubr.bf16.mxu0 0
        %3757 = vmatmul.mubr.bf16.gmra.mxu0 %v3555
        %v3758 = vpop.f32.mrf.mxu0
        %v3759 = vadd.f32 %v3587, %v3758
        %v3760 = vpop.f32.mrf.mxu0
        %v3761 = vadd.f32 %v3591, %v3760
        %v3762 = vpop.f32.mrf.mxu0
        %v3763 = vadd.f32 %v3587, %v3762
        %v3764 = vpop.f32.mrf.mxu0
        %v3765 = vadd.f32 %v3591, %v3764
        %3766 = vmatprep.mubr.bf16.mxu0 0
        %3767 = vmatmul.mubr.bf16.gmra.mxu0 %v3556
        %v3768 = vpop.f32.mrf.mxu0
        %v3769 = vadd.f32 %v3587, %v3768
        %v3770 = vpop.f32.mrf.mxu0
        %v3771 = vadd.f32 %v3591, %v3770
        %v3772 = vpop.f32.mrf.mxu0
        %v3773 = vadd.f32 %v3587, %v3772
        %v3774 = vpop.f32.mrf.mxu0
        %v3775 = vadd.f32 %v3591, %v3774
        %3776 = vmatprep.mubr.bf16.mxu0 0
        %3777 = vmatmul.mubr.bf16.gmra.mxu0 %v3557
        %v3778 = vpop.f32.mrf.mxu0
        %v3779 = vadd.f32 %v3587, %v3778
        %v3780 = vpop.f32.mrf.mxu0
        %v3781 = vadd.f32 %v3591, %v3780
        %v3782 = vpop.f32.mrf.mxu0
        %v3783 = vadd.f32 %v3587, %v3782
        %v3784 = vpop.f32.mrf.mxu0
        %v3785 = vadd.f32 %v3591, %v3784
        %3786 = vmatprep.mubr.bf16.mxu0 0
        %3787 = vmatmul.mubr.bf16.gmra.mxu0 %v3558
        %v3788 = vpop.f32.mrf.mxu0
        %v3789 = vadd.f32 %v3587, %v3788
        %v3790 = vpop.f32.mrf.mxu0
        %v3791 = vadd.f32 %v3591, %v3790
        %v3792 = vpop.f32.mrf.mxu0
        %v3793 = vadd.f32 %v3587, %v3792
        %v3794 = vpop.f32.mrf.mxu0
        %v3795 = vadd.f32 %v3591, %v3794
        %3796 = vmatprep.mubr.bf16.mxu0 0
        %3797 = vmatmul.mubr.bf16.gmra.mxu0 %v3559
        %v3798 = vpop.f32.mrf.mxu0
        %v3799 = vadd.f32 %v3587, %v3798
        %v3800 = vpop.f32.mrf.mxu0
        %v3801 = vadd.f32 %v3591, %v3800
        %v3802 = vpop.f32.mrf.mxu0
        %v3803 = vadd.f32 %v3587, %v3802
        %v3804 = vpop.f32.mrf.mxu0
        %v3805 = vadd.f32 %v3591, %v3804
        %3806 = vmatprep.mubr.bf16.mxu0 0
        %3807 = vmatmul.mubr.bf16.gmra.mxu0 %v3560
        %v3808 = vpop.f32.mrf.mxu0
        %v3809 = vadd.f32 %v3587, %v3808
        %v3810 = vpop.f32.mrf.mxu0
        %v3811 = vadd.f32 %v3591, %v3810
        %v3812 = vpop.f32.mrf.mxu0
        %v3813 = vadd.f32 %v3587, %v3812
        %v3814 = vpop.f32.mrf.mxu0
        %v3815 = vadd.f32 %v3591, %v3814
        %3816 = vmatprep.mubr.bf16.mxu0 0
        %3817 = vmatmul.mubr.bf16.gmra.mxu0 %v3561
        %v3818 = vpop.f32.mrf.mxu0
        %v3819 = vadd.f32 %v3587, %v3818
        %v3820 = vpop.f32.mrf.mxu0
        %v3821 = vadd.f32 %v3591, %v3820
        %v3822 = vpop.f32.mrf.mxu0
        %v3823 = vadd.f32 %v3587, %v3822
        %v3824 = vpop.f32.mrf.mxu0
        %v3825 = vadd.f32 %v3591, %v3824
        %3826 = vmatprep.mubr.bf16.mxu0 0
        %3827 = vmatmul.mubr.bf16.gmra.mxu0 %v3562
        %v3828 = vpop.f32.mrf.mxu0
        %v3829 = vadd.f32 %v3587, %v3828
        %v3830 = vpop.f32.mrf.mxu0
        %v3831 = vadd.f32 %v3591, %v3830
        %v3832 = vpop.f32.mrf.mxu0
        %v3833 = vadd.f32 %v3587, %v3832
        %v3834 = vpop.f32.mrf.mxu0
        %v3835 = vadd.f32 %v3591, %v3834
        %3836 = vmatprep.mubr.bf16.mxu0 0
        %3837 = vmatmul.mubr.bf16.gmra.mxu0 %v3563
        %v3838 = vpop.f32.mrf.mxu0
        %v3839 = vadd.f32 %v3587, %v3838
        %v3840 = vpop.f32.mrf.mxu0
        %v3841 = vadd.f32 %v3591, %v3840
        %v3842 = vpop.f32.mrf.mxu0
        %v3843 = vadd.f32 %v3587, %v3842
        %v3844 = vpop.f32.mrf.mxu0
        %v3845 = vadd.f32 %v3591, %v3844
        %3846 = vmatprep.mubr.bf16.mxu0 0
        %3847 = vmatmul.mubr.bf16.gmra.mxu0 %v3564
        %v3848 = vpop.f32.mrf.mxu0
        %v3849 = vadd.f32 %v3587, %v3848
        %v3850 = vpop.f32.mrf.mxu0
        %v3851 = vadd.f32 %v3591, %v3850
        %v3852 = vpop.f32.mrf.mxu0
        %v3853 = vadd.f32 %v3587, %v3852
        %v3854 = vpop.f32.mrf.mxu0
        %v3855 = vadd.f32 %v3591, %v3854
        %3856 = vmatprep.mubr.bf16.mxu0 0
        %3857 = vmatmul.mubr.bf16.gmra.mxu0 %v3565
        %v3858 = vpop.f32.mrf.mxu0
        %v3859 = vadd.f32 %v3587, %v3858
        %v3860 = vpop.f32.mrf.mxu0
        %v3861 = vadd.f32 %v3591, %v3860
        %v3862 = vpop.f32.mrf.mxu0
        %v3863 = vadd.f32 %v3587, %v3862
        %v3864 = vpop.f32.mrf.mxu0
        %v3865 = vadd.f32 %v3591, %v3864
        %3866 = vdwg.mxu0
        %v3867 = vadd.f32 %v3709, %v278
        %v3868 = vadd.f32 %v3711, %v279
        %v3869 = vadd.f32 %v3713, %v280
        %v3870 = vadd.f32 %v3715, %v281
        %v3871 = vadd.f32 %v3719, %v282
        %v3872 = vadd.f32 %v3721, %v283
        %v3873 = vadd.f32 %v3723, %v284
        %v3874 = vadd.f32 %v3725, %v285
        %v3875 = vadd.f32 %v3729, %v286
        %v3876 = vadd.f32 %v3731, %v287
        %v3877 = vadd.f32 %v3733, %v288
        %v3878 = vadd.f32 %v3735, %v289
        %v3879 = vadd.f32 %v3739, %v290
        %v3880 = vadd.f32 %v3741, %v291
        %v3881 = vadd.f32 %v3743, %v292
        %v3882 = vadd.f32 %v3745, %v293
        %v3883 = vadd.f32 %v3749, %v294
        %v3884 = vadd.f32 %v3751, %v295
        %v3885 = vadd.f32 %v3753, %v296
        %v3886 = vadd.f32 %v3755, %v297
        %v3887 = vadd.f32 %v3759, %v298
        %v3888 = vadd.f32 %v3761, %v299
        %v3889 = vadd.f32 %v3763, %v300
        %v3890 = vadd.f32 %v3765, %v301
        %v3891 = vadd.f32 %v3769, %v302
        %v3892 = vadd.f32 %v3771, %v303
        %v3893 = vadd.f32 %v3773, %v304
        %v3894 = vadd.f32 %v3775, %v305
        %v3895 = vadd.f32 %v3779, %v306
        %v3896 = vadd.f32 %v3781, %v307
        %v3897 = vadd.f32 %v3783, %v308
        %v3898 = vadd.f32 %v3785, %v309
        %v3899 = vadd.f32 %v3789, %v310
        %v3900 = vadd.f32 %v3791, %v311
        %v3901 = vadd.f32 %v3793, %v312
        %v3902 = vadd.f32 %v3795, %v313
        %v3903 = vadd.f32 %v3799, %v314
        %v3904 = vadd.f32 %v3801, %v315
        %v3905 = vadd.f32 %v3803, %v316
        %v3906 = vadd.f32 %v3805, %v317
        %v3907 = vadd.f32 %v3809, %v318
        %v3908 = vadd.f32 %v3811, %v319
        %v3909 = vadd.f32 %v3813, %v320
        %v3910 = vadd.f32 %v3815, %v321
        %v3911 = vadd.f32 %v3819, %v322
        %v3912 = vadd.f32 %v3821, %v323
        %v3913 = vadd.f32 %v3823, %v324
        %v3914 = vadd.f32 %v3825, %v325
        %v3915 = vadd.f32 %v3829, %v326
        %v3916 = vadd.f32 %v3831, %v327
        %v3917 = vadd.f32 %v3833, %v328
        %v3918 = vadd.f32 %v3835, %v329
        %v3919 = vadd.f32 %v3839, %v330
        %v3920 = vadd.f32 %v3841, %v331
        %v3921 = vadd.f32 %v3843, %v332
        %v3922 = vadd.f32 %v3845, %v333
        %v3923 = vadd.f32 %v3849, %v334
        %v3924 = vadd.f32 %v3851, %v335
        %v3925 = vadd.f32 %v3853, %v336
        %v3926 = vadd.f32 %v3855, %v337
        %v3927 = vadd.f32 %v3859, %v338
        %v3928 = vadd.f32 %v3861, %v339
        %v3929 = vadd.f32 %v3863, %v340
        %v3930 = vadd.f32 %v3865, %v341
        %v3931 = vmax.f32 %v3867, 0.0
        %v3932 = vmax.f32 %v3868, 0.0
        %v3933 = vmax.f32 %v3869, 0.0
        %v3934 = vmax.f32 %v3870, 0.0
        %v3935 = vmax.f32 %v3871, 0.0
        %v3936 = vmax.f32 %v3872, 0.0
        %v3937 = vmax.f32 %v3873, 0.0
        %v3938 = vmax.f32 %v3874, 0.0
        %v3939 = vmax.f32 %v3875, 0.0
        %v3940 = vmax.f32 %v3876, 0.0
        %v3941 = vmax.f32 %v3877, 0.0
        %v3942 = vmax.f32 %v3878, 0.0
        %v3943 = vmax.f32 %v3879, 0.0
        %v3944 = vmax.f32 %v3880, 0.0
        %v3945 = vmax.f32 %v3881, 0.0
        %v3946 = vmax.f32 %v3882, 0.0
        %v3947 = vmax.f32 %v3883, 0.0
        %v3948 = vmax.f32 %v3884, 0.0
        %v3949 = vmax.f32 %v3885, 0.0
        %v3950 = vmax.f32 %v3886, 0.0
        %v3951 = vmax.f32 %v3887, 0.0
        %v3952 = vmax.f32 %v3888, 0.0
        %v3953 = vmax.f32 %v3889, 0.0
        %v3954 = vmax.f32 %v3890, 0.0
        %v3955 = vmax.f32 %v3891, 0.0
        %v3956 = vmax.f32 %v3892, 0.0
        %v3957 = vmax.f32 %v3893, 0.0
        %v3958 = vmax.f32 %v3894, 0.0
        %v3959 = vmax.f32 %v3895, 0.0
        %v3960 = vmax.f32 %v3896, 0.0
        %v3961 = vmax.f32 %v3897, 0.0
        %v3962 = vmax.f32 %v3898, 0.0
        %v3963 = vmax.f32 %v3899, 0.0
        %v3964 = vmax.f32 %v3900, 0.0
        %v3965 = vmax.f32 %v3901, 0.0
        %v3966 = vmax.f32 %v3902, 0.0
        %v3967 = vmax.f32 %v3903, 0.0
        %v3968 = vmax.f32 %v3904, 0.0
        %v3969 = vmax.f32 %v3905, 0.0
        %v3970 = vmax.f32 %v3906, 0.0
        %v3971 = vmax.f32 %v3907, 0.0
        %v3972 = vmax.f32 %v3908, 0.0
        %v3973 = vmax.f32 %v3909, 0.0
        %v3974 = vmax.f32 %v3910, 0.0
        %v3975 = vmax.f32 %v3911, 0.0
        %v3976 = vmax.f32 %v3912, 0.0
        %v3977 = vmax.f32 %v3913, 0.0
        %v3978 = vmax.f32 %v3914, 0.0
        %v3979 = vmax.f32 %v3915, 0.0
        %v3980 = vmax.f32 %v3916, 0.0
        %v3981 = vmax.f32 %v3917, 0.0
        %v3982 = vmax.f32 %v3918, 0.0
        %v3983 = vmax.f32 %v3919, 0.0
        %v3984 = vmax.f32 %v3920, 0.0
        %v3985 = vmax.f32 %v3921, 0.0
        %v3986 = vmax.f32 %v3922, 0.0
        %v3987 = vmax.f32 %v3923, 0.0
        %v3988 = vmax.f32 %v3924, 0.0
        %v3989 = vmax.f32 %v3925, 0.0
        %v3990 = vmax.f32 %v3926, 0.0
        %v3991 = vmax.f32 %v3927, 0.0
        %v3992 = vmax.f32 %v3928, 0.0
        %v3993 = vmax.f32 %v3929, 0.0
        %v3994 = vmax.f32 %v3930, 0.0
        %3995 = vst [vmem:[%s271] sm:$0xff] %v3931
        %3996 = vst [vmem:[%s271 + $0x8] sm:$0xff] %v3932
        %3997 = vst [vmem:[%s271 + $0x10] sm:$0xff] %v3933
        %3998 = vst [vmem:[%s271 + $0x18] sm:$0xff] %v3934
        %3999 = vst [vmem:[%s271 + $0x20] sm:$0xff] %v3935
        %4000 = vst [vmem:[%s271 + $0x28] sm:$0xff] %v3936
        %4001 = vst [vmem:[%s271 + $0x30] sm:$0xff] %v3937
        %4002 = vst [vmem:[%s271 + $0x38] sm:$0xff] %v3938
        %4003 = vst [vmem:[%s271 + $0x40] sm:$0xff] %v3939
        %4004 = vst [vmem:[%s271 + $0x48] sm:$0xff] %v3940
        %4005 = vst [vmem:[%s271 + $0x50] sm:$0xff] %v3941
        %4006 = vst [vmem:[%s271 + $0x58] sm:$0xff] %v3942
        %4007 = vst [vmem:[%s271 + $0x60] sm:$0xff] %v3943
        %4008 = vst [vmem:[%s271 + $0x68] sm:$0xff] %v3944
        %4009 = vst [vmem:[%s271 + $0x70] sm:$0xff] %v3945
        %4010 = vst [vmem:[%s271 + $0x78] sm:$0xff] %v3946
        %4011 = vst [vmem:[%s271 + $0x80] sm:$0xff] %v3947
        %4012 = vst [vmem:[%s271 + $0x88] sm:$0xff] %v3948
        %4013 = vst [vmem:[%s271 + $0x90] sm:$0xff] %v3949
        %4014 = vst [vmem:[%s271 + $0x98] sm:$0xff] %v3950
        %4015 = vst [vmem:[%s271 + $0xa0] sm:$0xff] %v3951
        %4016 = vst [vmem:[%s271 + $0xa8] sm:$0xff] %v3952
        %4017 = vst [vmem:[%s271 + $0xb0] sm:$0xff] %v3953
        %4018 = vst [vmem:[%s271 + $0xb8] sm:$0xff] %v3954
        %4019 = vst [vmem:[%s271 + $0xc0] sm:$0xff] %v3955
        %4020 = vst [vmem:[%s271 + $0xc8] sm:$0xff] %v3956
        %4021 = vst [vmem:[%s271 + $0xd0] sm:$0xff] %v3957
        %4022 = vst [vmem:[%s271 + $0xd8] sm:$0xff] %v3958
        %4023 = vst [vmem:[%s271 + $0xe0] sm:$0xff] %v3959
        %4024 = vst [vmem:[%s271 + $0xe8] sm:$0xff] %v3960
        %4025 = vst [vmem:[%s271 + $0xf0] sm:$0xff] %v3961
        %4026 = vst [vmem:[%s271 + $0xf8] sm:$0xff] %v3962
        %4027 = vst [vmem:[%s271 + $0x100] sm:$0xff] %v3963
        %4028 = vst [vmem:[%s271 + $0x108] sm:$0xff] %v3964
        %4029 = vst [vmem:[%s271 + $0x110] sm:$0xff] %v3965
        %4030 = vst [vmem:[%s271 + $0x118] sm:$0xff] %v3966
        %4031 = vst [vmem:[%s271 + $0x120] sm:$0xff] %v3967
        %4032 = vst [vmem:[%s271 + $0x128] sm:$0xff] %v3968
        %4033 = vst [vmem:[%s271 + $0x130] sm:$0xff] %v3969
        %4034 = vst [vmem:[%s271 + $0x138] sm:$0xff] %v3970
        %4035 = vst [vmem:[%s271 + $0x140] sm:$0xff] %v3971
        %4036 = vst [vmem:[%s271 + $0x148] sm:$0xff] %v3972
        %4037 = vst [vmem:[%s271 + $0x150] sm:$0xff] %v3973
        %4038 = vst [vmem:[%s271 + $0x158] sm:$0xff] %v3974
        %4039 = vst [vmem:[%s271 + $0x160] sm:$0xff] %v3975
        %4040 = vst [vmem:[%s271 + $0x168] sm:$0xff] %v3976
        %4041 = vst [vmem:[%s271 + $0x170] sm:$0xff] %v3977
        %4042 = vst [vmem:[%s271 + $0x178] sm:$0xff] %v3978
        %4043 = vst [vmem:[%s271 + $0x180] sm:$0xff] %v3979
        %4044 = vst [vmem:[%s271 + $0x188] sm:$0xff] %v3980
        %4045 = vst [vmem:[%s271 + $0x190] sm:$0xff] %v3981
        %4046 = vst [vmem:[%s271 + $0x198] sm:$0xff] %v3982
        %4047 = vst [vmem:[%s271 + $0x1a0] sm:$0xff] %v3983
        %4048 = vst [vmem:[%s271 + $0x1a8] sm:$0xff] %v3984
        %4049 = vst [vmem:[%s271 + $0x1b0] sm:$0xff] %v3985
        %4050 = vst [vmem:[%s271 + $0x1b8] sm:$0xff] %v3986
        %4051 = vst [vmem:[%s271 + $0x1c0] sm:$0xff] %v3987
        %4052 = vst [vmem:[%s271 + $0x1c8] sm:$0xff] %v3988
        %4053 = vst [vmem:[%s271 + $0x1d0] sm:$0xff] %v3989
        %4054 = vst [vmem:[%s271 + $0x1d8] sm:$0xff] %v3990
        %4055 = vst [vmem:[%s271 + $0x1e0] sm:$0xff] %v3991
        %4056 = vst [vmem:[%s271 + $0x1e8] sm:$0xff] %v3992
        %4057 = vst [vmem:[%s271 + $0x1f0] sm:$0xff] %v3993
        %4058 = vst [vmem:[%s271 + $0x1f8] sm:$0xff] %v3994
        %s4059 = sand.u32 %s181, 1
        %s4060 = scalar_lea.sflag [#allocation4], %s4059
        %s4061 = sand.u32 %s181, 1
        %s4062 = smul.addr %s4061, 512
        %s4063 = scalar_lea.vmem [#allocation3], %s4062
        // Predicated region
        $region49: #{_lambda_.3} parent=47 // pred_check
          %p4064 = pneg %p191
        $region50: #{_lambda_.3} parent=47 // pred_check_branch
          %4066 = sbr.rel (%p4064) target = $region52
        $region51: #{_lambda_.3} parent=47 // pred_region
          %s4068 = ssub.s32 8192, 8192
          %4069 = vsyncadd %s4060, %s4068
          %s4070 = smul.addr %s21, 64
          %s4071 = smul.addr %s4070, 128
          %s4072 = scalar_lea.hbm %s7, %s4071
          %s4073 = sshll.u32 %s4063, 4
          %s4074 = int_to_ptr.vmem [resolvable:$true] %s4073
          %4079 = dma.vmem_to_hbm [thread:$0]  %s4074, 8192, %s4072, %s4060, 256, 256, 16
        $region52: #{_lambda_.3} parent=47 // pred_fallthru
          _
      $region48: #{_lambda_.3} parent=5 // pred_fallthru
        _
      %p4080 = scmp.le.s32.totalorder 2, %s16
      // Predicated region
      $region53: #{_lambda_.3} parent=5 // pred_check
        %p4081 = pneg %p4080
      $region54: #{_lambda_.3} parent=5 // pred_check_branch
        %4083 = sbr.rel (%p4081) target = $region56
      $region55: #{_lambda_.3} parent=5 // pred_region
        %s4084 = ssub.s32 %s16, 2
        // Predicated region
        $region57: #{_lambda_.3} parent=55 // pred_check
          %p4085 = pneg %p197
        $region58: #{_lambda_.3} parent=55 // pred_check_branch
          %4087 = sbr.rel (%p4085) target = $region60
        $region59: #{_lambda_.3} parent=55 // pred_region
          %s4088 = sand.u32 %s182, 1
          %s4089 = scalar_lea.sflag [#allocation4], %s4088
          %s4090 = sand.u32 %s182, 1
          %s4091 = smul.addr %s4090, 512
          %s4092 = scalar_lea.vmem [#allocation3], %s4091
          %4093 = dma.done %s4089, 8192
        $region60: #{_lambda_.3} parent=55 // pred_fallthru
          _
      $region56: #{_lambda_.3} parent=5 // pred_fallthru
        _
    $region6: #{_lambda_.3} parent=1 // loop_footer
      %s20 = sadd.s32 1, %s16
    $region7: #{_lambda_.3} parent=1 // loop_footer_branch
      %15 = sbr.rel target = $region3
    $region8: #{_lambda_.3} parent=1 // loop_exit
      _
    %4094 = vsyncpa [#allocation4], 1
    %s4095 = scalar_lea.sflag [#allocation4], 1
    %4096 = vsyncpa %s4095, 1

// kernel: _lambda_.2
$region0: #{_lambda_.2}
  #allocation0 [shape = 'u32[]', space=smem, size = 0x4, offset = 0x4, fixed_abs, tag = 'smem constant byte address 0x4 - core index']
  #allocation1 [shape = 'u32[144,128]{1,0:T(1,128)}', space=vmem, size = 0x12000, scoped, tag = 'internal scratch']
  #allocation2 [shape = 'f32[18,18,128]{2,1,0:T(8,128)}', space=vmem, size = 0x36000, scoped, tag = 'scratch operand']
  %s0 = inlined_call_operand.hbm [shape: f32[2,16,16,64], index: 0, kind: input, shape index: {}]
  %s1 = inlined_call_operand.hbm [shape: bf16[64,128], index: 1, kind: input, shape index: {}]
  %s2 = inlined_call_operand.vmem [shape: f32[1,128], index: 2, kind: input, shape index: {}, may-alias: {2,4}]
  %s3 = inlined_call_operand.hbm [shape: bf16[9,128,128], index: 3, kind: input, shape index: {}]
  %s4 = inlined_call_operand.vmem [shape: f32[1,128], index: 4, kind: input, shape index: {}, may-alias: {2,4}]
  %s5 = inlined_call_operand.hbm [shape: bf16[128,256], index: 5, kind: input, shape index: {}]
  %s6 = inlined_call_operand.vmem [shape: f32[1,256], index: 6, kind: input, shape index: {}, may-alias: {6,8}]
  %s7 = inlined_call_operand.hbm [shape: bf16[64,256], index: 7, kind: input, shape index: {}]
  %s8 = inlined_call_operand.vmem [shape: f32[1,256], index: 8, kind: input, shape index: {}, may-alias: {6,8}]
  %s9 = inlined_call_operand.vmem [shape: f32[2,16,16,256], index: 9, kind: output, shape index: {}]
  %s10 = sld [smem:[#allocation0]]
  $region89: #{_lambda_.2} parent=0
    _
  %s12 = ssub.s32 1, %s10
  %s13 = scalar_select 0, %s12, %s10
  $region1: #{_lambda_.2} parent=0
    #allocation3 [shape = 'u8[262144]{0}', space=vmem, size = 0x40000, scoped, tag = 'input window, operand 0']
    #allocation4 [shape = 's32[2]{0}', space=sflag, size = 0x8, scoped, tag = 'scoped memory for _lambda_.2']
    #allocation5 [shape = 'u8[16384]{0}', space=vmem, size = 0x4000, scoped, tag = 'input window, operand 1, single buffered']
    #allocation6 [shape = 's32[1]{0}', space=sflag, size = 0x4, scoped, tag = 'scoped memory for _lambda_.2']
    #allocation7 [shape = 'u8[294912]{0}', space=vmem, size = 0x48000, scoped, tag = 'input window, operand 3, single buffered']
    #allocation8 [shape = 'u8[65536]{0}', space=vmem, size = 0x10000, scoped, tag = 'input window, operand 5, single buffered']
    #allocation9 [shape = 's32[1]{0}', space=sflag, size = 0x4, scoped, tag = 'scoped memory for _lambda_.2']
    #allocation10 [shape = 'u8[32768]{0}', space=vmem, size = 0x8000, scoped, tag = 'input window, operand 7, single buffered']
    %14 = vsyncpa [#allocation4], 0
    %s15 = scalar_lea.sflag [#allocation4], 1
    %16 = vsyncpa %s15, 0
    %17 = vsyncpa [#allocation6], 0
    %18 = vsyncpa [#allocation9], 0
    loop: start=0, step=1, limit=4
    $region2: #{_lambda_.2} parent=1 // loop_pre_header
      _
    $region3: #{_lambda_.2} parent=1 // loop_header
      %s20 = sphi 0, %s24
      %p21 = scmp.ge.s32.totalorder %s20, 4
      %s30 = sphi 0, %s32
      %s33 = sphi 0, %s30
      %s34 = sphi 0, %s33
      %s50 = sphi 0, %s34
      %s54 = sphi 0, %s54
      %s56 = sphi 0, %s54
      %s57 = sphi 0, %s56
      %s71 = sphi 0, %s57
      %s75 = sphi 0, %s75
      %s77 = sphi 0, %s75
      %s78 = sphi 0, %s77
      %s92 = sphi 0, %s78
      %s96 = sphi 0, %s96
      %s98 = sphi 0, %s96
      %s99 = sphi 0, %s98
      %s113 = sphi 0, %s99
      %s117 = sphi 0, %s117
      %s119 = sphi 0, %s117
      %s120 = sphi 0, %s119
      %s134 = sphi 0, %s120
      %s138 = sphi 0, %s138
      %s140 = sphi 0, %s138
      %s141 = sphi 0, %s140
      %s155 = sphi 0, %s141
      %s159 = sphi 0, %s159
      %s161 = sphi 0, %s159
      %s162 = sphi 0, %s161
      %s176 = sphi 0, %s162
      %s180 = sphi 0, %s180
      %s182 = sphi 0, %s180
      %s183 = sphi 0, %s182
      %s197 = sphi 0, %s183
      %s201 = sphi 0, %s201
      %s203 = sphi 0, %s201
      %s204 = sphi 0, %s203
      %s218 = sphi 0, %s204
      %s224 = sphi 0, %s226
      %s227 = sphi 0, %s224
      %s228 = sphi 0, %s227
      %s244 = sphi 0, %s228
    $region4: #{_lambda_.2} parent=1 // loop_header_branch
      %23 = sbr.rel (%p21) target = $region8
    $region5: #{_lambda_.2} parent=1 // loop_body
      %s25 = ssub.s32 %s20, 1
      %s26 = ssub.s32 %s20, 2
      %s27 = sadd.s32 %s20, 1
      %s28 = ssub.s32 %s20, %s27
      %p29 = scmp.eq.s32.totalorder %s28, 0
      %s31 = sadd.s32 %s30, 1
      %s32 = scalar_select %p29, %s30, %s31
      %p35 = pneg %p29
      %p36 = scmp.eq.s32.totalorder %s20, 1
      %p37 = por %p35, %p36
      %p38 = scmp.ne.s32.totalorder %s30, %s33
      %p39 = scmp.eq.s32.totalorder %s20, 0
      %p40 = por %p38, %p39
      %p41 = scmp.ne.s32.totalorder %s30, %s33
      %p42 = scmp.eq.s32.totalorder %s25, 1
      %p43 = por %p41, %p42
      %p44 = scmp.ne.s32.totalorder %s33, %s34
      %p45 = scmp.eq.s32.totalorder %s25, 0
      %p46 = por %p44, %p45
      %p47 = scmp.ne.s32.totalorder %s33, %s34
      %p48 = scmp.eq.s32.totalorder %s26, 1
      %p49 = por %p47, %p48
      %p51 = scmp.ne.s32.totalorder %s34, %s50
      %p52 = scmp.eq.s32.totalorder %s26, 0
      %p53 = por %p51, %p52
      %s55 = sadd.s32 %s54, 1
      %p58 = scmp.eq.s32.totalorder %s20, 1
      %p59 = scmp.ne.s32.totalorder %s54, %s56
      %p60 = scmp.eq.s32.totalorder %s20, 0
      %p61 = por %p59, %p60
      %p62 = scmp.ne.s32.totalorder %s54, %s56
      %p63 = scmp.eq.s32.totalorder %s25, 1
      %p64 = por %p62, %p63
      %p65 = scmp.ne.s32.totalorder %s56, %s57
      %p66 = scmp.eq.s32.totalorder %s25, 0
      %p67 = por %p65, %p66
      %p68 = scmp.ne.s32.totalorder %s56, %s57
      %p69 = scmp.eq.s32.totalorder %s26, 1
      %p70 = por %p68, %p69
      %p72 = scmp.ne.s32.totalorder %s57, %s71
      %p73 = scmp.eq.s32.totalorder %s26, 0
      %p74 = por %p72, %p73
      %s76 = sadd.s32 %s75, 1
      %p79 = scmp.eq.s32.totalorder %s20, 1
      %p80 = scmp.ne.s32.totalorder %s75, %s77
      %p81 = scmp.eq.s32.totalorder %s20, 0
      %p82 = por %p80, %p81
      %p83 = scmp.ne.s32.totalorder %s75, %s77
      %p84 = scmp.eq.s32.totalorder %s25, 1
      %p85 = por %p83, %p84
      %p86 = scmp.ne.s32.totalorder %s77, %s78
      %p87 = scmp.eq.s32.totalorder %s25, 0
      %p88 = por %p86, %p87
      %p89 = scmp.ne.s32.totalorder %s77, %s78
      %p90 = scmp.eq.s32.totalorder %s26, 1
      %p91 = por %p89, %p90
      %p93 = scmp.ne.s32.totalorder %s78, %s92
      %p94 = scmp.eq.s32.totalorder %s26, 0
      %p95 = por %p93, %p94
      %s97 = sadd.s32 %s96, 1
      %p100 = scmp.eq.s32.totalorder %s20, 1
      %p101 = scmp.ne.s32.totalorder %s96, %s98
      %p102 = scmp.eq.s32.totalorder %s20, 0
      %p103 = por %p101, %p102
      %p104 = scmp.ne.s32.totalorder %s96, %s98
      %p105 = scmp.eq.s32.totalorder %s25, 1
      %p106 = por %p104, %p105
      %p107 = scmp.ne.s32.totalorder %s98, %s99
      %p108 = scmp.eq.s32.totalorder %s25, 0
      %p109 = por %p107, %p108
      %p110 = scmp.ne.s32.totalorder %s98, %s99
      %p111 = scmp.eq.s32.totalorder %s26, 1
      %p112 = por %p110, %p111
      %p114 = scmp.ne.s32.totalorder %s99, %s113
      %p115 = scmp.eq.s32.totalorder %s26, 0
      %p116 = por %p114, %p115
      %s118 = sadd.s32 %s117, 1
      %p121 = scmp.eq.s32.totalorder %s20, 1
      %p122 = scmp.ne.s32.totalorder %s117, %s119
      %p123 = scmp.eq.s32.totalorder %s20, 0
      %p124 = por %p122, %p123
      %p125 = scmp.ne.s32.totalorder %s117, %s119
      %p126 = scmp.eq.s32.totalorder %s25, 1
      %p127 = por %p125, %p126
      %p128 = scmp.ne.s32.totalorder %s119, %s120
      %p129 = scmp.eq.s32.totalorder %s25, 0
      %p130 = por %p128, %p129
      %p131 = scmp.ne.s32.totalorder %s119, %s120
      %p132 = scmp.eq.s32.totalorder %s26, 1
      %p133 = por %p131, %p132
      %p135 = scmp.ne.s32.totalorder %s120, %s134
      %p136 = scmp.eq.s32.totalorder %s26, 0
      %p137 = por %p135, %p136
      %s139 = sadd.s32 %s138, 1
      %p142 = scmp.eq.s32.totalorder %s20, 1
      %p143 = scmp.ne.s32.totalorder %s138, %s140
      %p144 = scmp.eq.s32.totalorder %s20, 0
      %p145 = por %p143, %p144
      %p146 = scmp.ne.s32.totalorder %s138, %s140
      %p147 = scmp.eq.s32.totalorder %s25, 1
      %p148 = por %p146, %p147
      %p149 = scmp.ne.s32.totalorder %s140, %s141
      %p150 = scmp.eq.s32.totalorder %s25, 0
      %p151 = por %p149, %p150
      %p152 = scmp.ne.s32.totalorder %s140, %s141
      %p153 = scmp.eq.s32.totalorder %s26, 1
      %p154 = por %p152, %p153
      %p156 = scmp.ne.s32.totalorder %s141, %s155
      %p157 = scmp.eq.s32.totalorder %s26, 0
      %p158 = por %p156, %p157
      %s160 = sadd.s32 %s159, 1
      %p163 = scmp.eq.s32.totalorder %s20, 1
      %p164 = scmp.ne.s32.totalorder %s159, %s161
      %p165 = scmp.eq.s32.totalorder %s20, 0
      %p166 = por %p164, %p165
      %p167 = scmp.ne.s32.totalorder %s159, %s161
      %p168 = scmp.eq.s32.totalorder %s25, 1
      %p169 = por %p167, %p168
      %p170 = scmp.ne.s32.totalorder %s161, %s162
      %p171 = scmp.eq.s32.totalorder %s25, 0
      %p172 = por %p170, %p171
      %p173 = scmp.ne.s32.totalorder %s161, %s162
      %p174 = scmp.eq.s32.totalorder %s26, 1
      %p175 = por %p173, %p174
      %p177 = scmp.ne.s32.totalorder %s162, %s176
      %p178 = scmp.eq.s32.totalorder %s26, 0
      %p179 = por %p177, %p178
      %s181 = sadd.s32 %s180, 1
      %p184 = scmp.eq.s32.totalorder %s20, 1
      %p185 = scmp.ne.s32.totalorder %s180, %s182
      %p186 = scmp.eq.s32.totalorder %s20, 0
      %p187 = por %p185, %p186
      %p188 = scmp.ne.s32.totalorder %s180, %s182
      %p189 = scmp.eq.s32.totalorder %s25, 1
      %p190 = por %p188, %p189
      %p191 = scmp.ne.s32.totalorder %s182, %s183
      %p192 = scmp.eq.s32.totalorder %s25, 0
      %p193 = por %p191, %p192
      %p194 = scmp.ne.s32.totalorder %s182, %s183
      %p195 = scmp.eq.s32.totalorder %s26, 1
      %p196 = por %p194, %p195
      %p198 = scmp.ne.s32.totalorder %s183, %s197
      %p199 = scmp.eq.s32.totalorder %s26, 0
      %p200 = por %p198, %p199
      %s202 = sadd.s32 %s201, 1
      %p205 = scmp.eq.s32.totalorder %s20, 1
      %p206 = scmp.ne.s32.totalorder %s201, %s203
      %p207 = scmp.eq.s32.totalorder %s20, 0
      %p208 = por %p206, %p207
      %p209 = scmp.ne.s32.totalorder %s201, %s203
      %p210 = scmp.eq.s32.totalorder %s25, 1
      %p211 = por %p209, %p210
      %p212 = scmp.ne.s32.totalorder %s203, %s204
      %p213 = scmp.eq.s32.totalorder %s25, 0
      %p214 = por %p212, %p213
      %p215 = scmp.ne.s32.totalorder %s203, %s204
      %p216 = scmp.eq.s32.totalorder %s26, 1
      %p217 = por %p215, %p216
      %p219 = scmp.ne.s32.totalorder %s204, %s218
      %p220 = scmp.eq.s32.totalorder %s26, 0
      %p221 = por %p219, %p220
      %s222 = ssub.s32 %s20, %s27
      %p223 = scmp.eq.s32.totalorder %s222, 0
      %s225 = sadd.s32 %s224, 1
      %s226 = scalar_select %p223, %s224, %s225
      %p229 = pneg %p223
      %p230 = scmp.eq.s32.totalorder %s20, 1
      %p231 = por %p229, %p230
      %p232 = scmp.ne.s32.totalorder %s224, %s227
      %p233 = scmp.eq.s32.totalorder %s20, 0
      %p234 = por %p232, %p233
      %p235 = scmp.ne.s32.totalorder %s224, %s227
      %p236 = scmp.eq.s32.totalorder %s25, 1
      %p237 = por %p235, %p236
      %p238 = scmp.ne.s32.totalorder %s227, %s228
      %p239 = scmp.eq.s32.totalorder %s25, 0
      %p240 = por %p238, %p239
      %p241 = scmp.ne.s32.totalorder %s227, %s228
      %p242 = scmp.eq.s32.totalorder %s26, 1
      %p243 = por %p241, %p242
      %p245 = scmp.ne.s32.totalorder %s228, %s244
      %p246 = scmp.eq.s32.totalorder %s26, 0
      %p247 = por %p245, %p246
      %p248 = scmp.le.s32.totalorder 1, %s20
      %p249 = scmp.lt.s32.totalorder %s20, 3
      %p250 = pnand %p248, %p249
      %p251 = pneg %p250
      // Predicated region
      $region9: #{_lambda_.2} parent=5 // pred_check
        _
      $region10: #{_lambda_.2} parent=5 // pred_check_branch
        %253 = sbr.rel (%p250) target = $region12
      $region11: #{_lambda_.2} parent=5 // pred_region
        %s254 = ssub.s32 %s20, 1
        // Predicated region
        $region13: #{_lambda_.2} parent=11 // pred_check
          %p255 = pneg %p67
        $region14: #{_lambda_.2} parent=11 // pred_check_branch
          %257 = sbr.rel (%p255) target = $region16
        $region15: #{_lambda_.2} parent=11 // pred_region
          %s259 = ssub.s32 512, 512
          %260 = vsyncadd [#allocation6], %s259
          %s261 = sshll.u32 [#allocation5], 4
          %s262 = int_to_ptr.vmem [resolvable:$true] %s261
          %267 = dma.hbm_to_vmem [thread:$0]  %s1, 512, %s262, [#allocation6], 64, 64, 4
        $region16: #{_lambda_.2} parent=11 // pred_fallthru
          _
        // Predicated region
        $region17: #{_lambda_.2} parent=11 // pred_check
          %p268 = pneg %p88
        $region18: #{_lambda_.2} parent=11 // pred_check_branch
          %270 = sbr.rel (%p268) target = $region20
        $region19: #{_lambda_.2} parent=11 // pred_region
          _
        $region20: #{_lambda_.2} parent=11 // pred_fallthru
          _
        // Predicated region
        $region21: #{_lambda_.2} parent=11 // pred_check
          %p271 = pneg %p109
        $region22: #{_lambda_.2} parent=11 // pred_check_branch
          %273 = sbr.rel (%p271) target = $region24
        $region23: #{_lambda_.2} parent=11 // pred_region
          %s275 = ssub.s32 9216, 9216
          %276 = vsyncadd [#allocation6], %s275
          %s277 = sshll.u32 [#allocation7], 4
          %s278 = int_to_ptr.vmem [resolvable:$true] %s277
          %283 = dma.hbm_to_vmem [thread:$0]  %s3, 9216, %s278, [#allocation6], 64, 64, 4
        $region24: #{_lambda_.2} parent=11 // pred_fallthru
          _
        // Predicated region
        $region25: #{_lambda_.2} parent=11 // pred_check
          %p284 = pneg %p130
        $region26: #{_lambda_.2} parent=11 // pred_check_branch
          %286 = sbr.rel (%p284) target = $region28
        $region27: #{_lambda_.2} parent=11 // pred_region
          _
        $region28: #{_lambda_.2} parent=11 // pred_fallthru
          _
        // Predicated region
        $region29: #{_lambda_.2} parent=11 // pred_check
          %p287 = pneg %p151
        $region30: #{_lambda_.2} parent=11 // pred_check_branch
          %289 = sbr.rel (%p287) target = $region32
        $region31: #{_lambda_.2} parent=11 // pred_region
          %s291 = ssub.s32 2048, 2048
          %292 = vsyncadd [#allocation9], %s291
          %s293 = sshll.u32 [#allocation8], 4
          %s294 = int_to_ptr.vmem [resolvable:$true] %s293
          %299 = dma.hbm_to_vmem [thread:$0]  %s5, 2048, %s294, [#allocation9], 128, 128, 8
        $region32: #{_lambda_.2} parent=11 // pred_fallthru
          _
        // Predicated region
        $region33: #{_lambda_.2} parent=11 // pred_check
          %p300 = pneg %p172
        $region34: #{_lambda_.2} parent=11 // pred_check_branch
          %302 = sbr.rel (%p300) target = $region36
        $region35: #{_lambda_.2} parent=11 // pred_region
          _
        $region36: #{_lambda_.2} parent=11 // pred_fallthru
          _
        // Predicated region
        $region37: #{_lambda_.2} parent=11 // pred_check
          %p303 = pneg %p193
        $region38: #{_lambda_.2} parent=11 // pred_check_branch
          %305 = sbr.rel (%p303) target = $region40
        $region39: #{_lambda_.2} parent=11 // pred_region
          %s307 = ssub.s32 1024, 1024
          %308 = vsyncadd [#allocation9], %s307
          %s309 = sshll.u32 [#allocation10], 4
          %s310 = int_to_ptr.vmem [resolvable:$true] %s309
          %315 = dma.hbm_to_vmem [thread:$0]  %s7, 1024, %s310, [#allocation9], 128, 128, 8
        $region40: #{_lambda_.2} parent=11 // pred_fallthru
          _
        // Predicated region
        $region41: #{_lambda_.2} parent=11 // pred_check
          %p316 = pneg %p214
        $region42: #{_lambda_.2} parent=11 // pred_check_branch
          %318 = sbr.rel (%p316) target = $region44
        $region43: #{_lambda_.2} parent=11 // pred_region
          _
        $region44: #{_lambda_.2} parent=11 // pred_fallthru
          _
      $region12: #{_lambda_.2} parent=5 // pred_fallthru
        _
      %p319 = scmp.lt.s32.totalorder %s20, 2
      // Predicated region
      $region45: #{_lambda_.2} parent=5 // pred_check
        %p320 = pneg %p319
      $region46: #{_lambda_.2} parent=5 // pred_check_branch
        %322 = sbr.rel (%p320) target = $region48
      $region47: #{_lambda_.2} parent=5 // pred_region
        // Predicated region
        $region49: #{_lambda_.2} parent=47 // pred_check
          %p323 = pneg %p40
        $region50: #{_lambda_.2} parent=47 // pred_check_branch
          %325 = sbr.rel (%p323) target = $region52
        $region51: #{_lambda_.2} parent=47 // pred_region
          %s326 = sand.u32 %s30, 1
          %s327 = scalar_lea.sflag [#allocation4], %s326
          %s328 = sand.u32 %s30, 1
          %s329 = smul.addr %s328, 256
          %s330 = scalar_lea.vmem [#allocation3], %s329
          %s332 = ssub.s32 4096, 4096
          %333 = vsyncadd %s327, %s332
          %s334 = smul.addr %s20, 32
          %s335 = smul.addr %s334, 128
          %s336 = scalar_lea.hbm %s0, %s335
          %s337 = sshll.u32 %s330, 4
          %s338 = int_to_ptr.vmem [resolvable:$true] %s337
          %343 = dma.hbm_to_vmem [thread:$0]  %s336, 4096, %s338, %s327, 128, 128, 8
        $region52: #{_lambda_.2} parent=47 // pred_fallthru
          _
      $region48: #{_lambda_.2} parent=5 // pred_fallthru
        _
      %p344 = scmp.le.s32.totalorder 1, %s20
      %p345 = scmp.lt.s32.totalorder %s20, 3
      %p346 = pnand %p344, %p345
      %p347 = pneg %p346
      // Predicated region
      $region53: #{_lambda_.2} parent=5 // pred_check
        _
      $region54: #{_lambda_.2} parent=5 // pred_check_branch
        %349 = sbr.rel (%p346) target = $region56
      $region55: #{_lambda_.2} parent=5 // pred_region
        %s350 = ssub.s32 %s20, 1
        %s351 = sand.u32 %s33, 1
        %s352 = scalar_lea.sflag [#allocation4], %s351
        %s353 = sand.u32 %s33, 1
        %s354 = smul.addr %s353, 256
        %s355 = scalar_lea.vmem [#allocation3], %s354
        // Predicated region
        $region57: #{_lambda_.2} parent=55 // pred_check
          %p356 = pneg %p46
        $region58: #{_lambda_.2} parent=55 // pred_check_branch
          %358 = sbr.rel (%p356) target = $region60
        $region59: #{_lambda_.2} parent=55 // pred_region
          %359 = dma.done %s352, 4096
        $region60: #{_lambda_.2} parent=55 // pred_fallthru
          _
        // Predicated region
        $region61: #{_lambda_.2} parent=55 // pred_check
          %p360 = pneg %p67
        $region62: #{_lambda_.2} parent=55 // pred_check_branch
          %362 = sbr.rel (%p360) target = $region64
        $region63: #{_lambda_.2} parent=55 // pred_region
          %363 = dma.done [#allocation6], 512
        $region64: #{_lambda_.2} parent=55 // pred_fallthru
          _
        // Predicated region
        $region65: #{_lambda_.2} parent=55 // pred_check
          %p364 = pneg %p109
        $region66: #{_lambda_.2} parent=55 // pred_check_branch
          %366 = sbr.rel (%p364) target = $region68
        $region67: #{_lambda_.2} parent=55 // pred_region
          %367 = dma.done [#allocation6], 9216
        $region68: #{_lambda_.2} parent=55 // pred_fallthru
          _
        // Predicated region
        $region69: #{_lambda_.2} parent=55 // pred_check
          %p368 = pneg %p151
        $region70: #{_lambda_.2} parent=55 // pred_check_branch
          %370 = sbr.rel (%p368) target = $region72
        $region71: #{_lambda_.2} parent=55 // pred_region
          %371 = dma.done [#allocation9], 2048
        $region72: #{_lambda_.2} parent=55 // pred_fallthru
          _
        // Predicated region
        $region73: #{_lambda_.2} parent=55 // pred_check
          %p372 = pneg %p193
        $region74: #{_lambda_.2} parent=55 // pred_check_branch
          %374 = sbr.rel (%p372) target = $region76
        $region75: #{_lambda_.2} parent=55 // pred_region
          %375 = dma.done [#allocation9], 1024
        $region76: #{_lambda_.2} parent=55 // pred_fallthru
          _
        %s376 = sand.u32 %s33, 1
        %s377 = scalar_lea.sflag [#allocation4], %s376
        %s378 = sand.u32 %s33, 1
        %s379 = smul.addr %s378, 256
        %s380 = scalar_lea.vmem [#allocation3], %s379
        %p381 = pneg %p46
        %p382 = pneg %p43
        %p383 = pneg %p67
        %p384 = pneg %p64
        %p385 = pneg %p88
        %p386 = pneg %p85
        %p387 = pneg %p109
        %p388 = pneg %p106
        %p389 = pneg %p130
        %p390 = pneg %p127
        %p391 = pneg %p151
        %p392 = pneg %p148
        %p393 = pneg %p172
        %p394 = pneg %p169
        %p395 = pneg %p193
        %p396 = pneg %p190
        %p397 = pneg %p214
        %p398 = pneg %p211
        %p399 = pneg %p240
        %p400 = pneg %p237
        %p401 = scmp.lt.s32.totalorder %s25, 1
        %s402 = scalar_select %p401, %s25, 1
        %s403 = smul.addr %s402, 64
        %s404 = smul.addr %s403, 8
        %s405 = scalar_lea.vmem %s9, %s404
        %p406 = scmp.lt.s32.totalorder %s25, 1
        %s407 = scalar_select %p406, %s25, 1
        %s408 = smul.addr %s407, 64
        %s409 = smul.addr %s408, 8
        %s410 = scalar_lea.vmem %s9, %s409
        %v412 = vld [vmem:[%s355] sm:$0xff]
        %v413 = vld [vmem:[%s355 + $0x8] sm:$0xff]
        %v414 = vld [vmem:[%s355 + $0x10] sm:$0xff]
        %v415 = vld [vmem:[%s355 + $0x18] sm:$0xff]
        %v416 = vld [vmem:[%s355 + $0x20] sm:$0xff]
        %v417 = vld [vmem:[%s355 + $0x28] sm:$0xff]
        %v418 = vld [vmem:[%s355 + $0x30] sm:$0xff]
        %v419 = vld [vmem:[%s355 + $0x38] sm:$0xff]
        %v420 = vld [vmem:[%s355 + $0x40] sm:$0xff]
        %v421 = vld [vmem:[%s355 + $0x48] sm:$0xff]
        %v422 = vld [vmem:[%s355 + $0x50] sm:$0xff]
        %v423 = vld [vmem:[%s355 + $0x58] sm:$0xff]
        %v424 = vld [vmem:[%s355 + $0x60] sm:$0xff]
        %v425 = vld [vmem:[%s355 + $0x68] sm:$0xff]
        %v426 = vld [vmem:[%s355 + $0x70] sm:$0xff]
        %v427 = vld [vmem:[%s355 + $0x78] sm:$0xff]
        %v428 = vld [vmem:[%s355 + $0x80] sm:$0xff]
        %v429 = vld [vmem:[%s355 + $0x88] sm:$0xff]
        %v430 = vld [vmem:[%s355 + $0x90] sm:$0xff]
        %v431 = vld [vmem:[%s355 + $0x98] sm:$0xff]
        %v432 = vld [vmem:[%s355 + $0xa0] sm:$0xff]
        %v433 = vld [vmem:[%s355 + $0xa8] sm:$0xff]
        %v434 = vld [vmem:[%s355 + $0xb0] sm:$0xff]
        %v435 = vld [vmem:[%s355 + $0xb8] sm:$0xff]
        %v436 = vld [vmem:[%s355 + $0xc0] sm:$0xff]
        %v437 = vld [vmem:[%s355 + $0xc8] sm:$0xff]
        %v438 = vld [vmem:[%s355 + $0xd0] sm:$0xff]
        %v439 = vld [vmem:[%s355 + $0xd8] sm:$0xff]
        %v440 = vld [vmem:[%s355 + $0xe0] sm:$0xff]
        %v441 = vld [vmem:[%s355 + $0xe8] sm:$0xff]
        %v442 = vld [vmem:[%s355 + $0xf0] sm:$0xff]
        %v443 = vld [vmem:[%s355 + $0xf8] sm:$0xff]
        %v444 = vpack.c.bf16 %v413, %v412
        %v445 = vpack.c.bf16 %v415, %v414
        %v446 = vpack.c.bf16 %v417, %v416
        %v447 = vpack.c.bf16 %v419, %v418
        %v448 = vpack.c.bf16 %v421, %v420
        %v449 = vpack.c.bf16 %v423, %v422
        %v450 = vpack.c.bf16 %v425, %v424
        %v451 = vpack.c.bf16 %v427, %v426
        %v452 = vpack.c.bf16 %v429, %v428
        %v453 = vpack.c.bf16 %v431, %v430
        %v454 = vpack.c.bf16 %v433, %v432
        %v455 = vpack.c.bf16 %v435, %v434
        %v456 = vpack.c.bf16 %v437, %v436
        %v457 = vpack.c.bf16 %v439, %v438
        %v458 = vpack.c.bf16 %v441, %v440
        %v459 = vpack.c.bf16 %v443, %v442
        %v460 = vld [vmem:[#allocation5] sm:$0xf]
        %v461 = vld [vmem:[#allocation5 + $0x4] sm:$0xf]
        %v462 = vld [vmem:[#allocation5 + $0x8] sm:$0xf]
        %v463 = vld [vmem:[#allocation5 + $0xc] sm:$0xf]
        %v464 = vld [vmem:[#allocation5 + $0x10] sm:$0xf]
        %v465 = vld [vmem:[#allocation5 + $0x14] sm:$0xf]
        %v466 = vld [vmem:[#allocation5 + $0x18] sm:$0xf]
        %v467 = vld [vmem:[#allocation5 + $0x1c] sm:$0xf]
        %v468 = vld [vmem:[%s2] sm:$0x1]
        %v470 = vlaneseq
        %v471 = vshrl.u32 %v470, 7
        %v472 = vsub.s32 0, %v471
        %v473 = vrot.slane %v468, %v472
        %v483 = vunpack.c.l.b16 %v460
        %v484 = vunpack.c.l.b16 %v461
        %v485 = vunpack.c.l.b16 %v462
        %v486 = vunpack.c.l.b16 %v463
        %v487 = vunpack.c.l.b16 %v464
        %v488 = vunpack.c.l.b16 %v465
        %v489 = vunpack.c.l.b16 %v466
        %v490 = vunpack.c.l.b16 %v467
        %v491 = vpack.c.b16 %v484, %v483
        %v492 = vpack.c.b16 %v486, %v485
        %v493 = vpack.c.b16 %v488, %v487
        %v494 = vpack.c.b16 %v490, %v489
        %vm499 = vcmask 523264
        %v501 = vsel %vm499, %v444, 0
        %v504 = vsel %vm499, %v445, 0
        %v507 = vsel %vm499, %v446, 0
        %v510 = vsel %vm499, %v447, 0
        %v513 = vsel %vm499, %v448, 0
        %v516 = vsel %vm499, %v449, 0
        %v519 = vsel %vm499, %v450, 0
        %v522 = vsel %vm499, %v451, 0
        %v525 = vsel %vm499, %v452, 0
        %v528 = vsel %vm499, %v453, 0
        %v531 = vsel %vm499, %v454, 0
        %v534 = vsel %vm499, %v455, 0
        %v537 = vsel %vm499, %v456, 0
        %v540 = vsel %vm499, %v457, 0
        %v543 = vsel %vm499, %v458, 0
        %v546 = vsel %vm499, %v459, 0
        %548 = vmatprep.subr.bf16.mxu0 0
        %549 = vmatpush1.bf16.msra.mxu0 0
        %550 = vmatprep.subr.bf16.mxu0 0
        %551 = vmatpush1.bf16.msra.mxu0 0
        %552 = vmatprep.subr.bf16.mxu0 0
        %553 = vmatpush1.bf16.msra.mxu0 0
        %554 = vmatprep.subr.bf16.mxu0 0
        %555 = vmatpush1.bf16.msra.mxu0 0
        %556 = vmatprep.subr.bf16.mxu0 0
        %557 = vmatpush1.bf16.msra.mxu0 %v494
        %558 = vmatprep.subr.bf16.mxu0 0
        %559 = vmatpush1.bf16.msra.mxu0 %v493
        %560 = vmatprep.subr.bf16.mxu0 0
        %561 = vmatpush1.bf16.msra.mxu0 %v492
        %562 = vmatprep.subr.bf16.mxu0 0
        %563 = vmatpush1.bf16.msra.mxu0 %v491
        %564 = vmatprep.subr.bf16.mxu0 0
        %565 = vmatpush2.bf16.msra.mxu0 0
        %566 = vmatprep.subr.bf16.mxu0 0
        %567 = vmatpush2.bf16.msra.mxu0 0
        %568 = vmatprep.subr.bf16.mxu0 0
        %569 = vmatpush2.bf16.msra.mxu0 0
        %570 = vmatprep.subr.bf16.mxu0 0
        %571 = vmatpush2.bf16.msra.mxu0 0
        %572 = vmatprep.subr.bf16.mxu0 0
        %573 = vmatpush2.bf16.msra.mxu0 0
        %574 = vmatprep.subr.bf16.mxu0 0
        %575 = vmatpush2.bf16.msra.mxu0 0
        %576 = vmatprep.subr.bf16.mxu0 0
        %577 = vmatpush2.bf16.msra.mxu0 0
        %578 = vmatprep.subr.bf16.mxu0 0
        %579 = vmatpush2.bf16.msra.mxu0 0
        %580 = vmatprep.mubr.bf16.mxu0 0
        %581 = vmatmul.mubr.bf16.gmra.mxu0 %v501
        %v582 = vpop.f32.mrf.mxu0
        %v583 = vadd.f32 %v473, %v582
        %v584 = vpop.f32.mrf.mxu0
        %v585 = vpop.f32.mrf.mxu0
        %v586 = vadd.f32 %v473, %v585
        %v587 = vpop.f32.mrf.mxu0
        %588 = vmatprep.mubr.bf16.mxu0 0
        %589 = vmatmul.mubr.bf16.gmra.mxu0 %v504
        %v590 = vpop.f32.mrf.mxu0
        %v591 = vadd.f32 %v473, %v590
        %v592 = vpop.f32.mrf.mxu0
        %v593 = vpop.f32.mrf.mxu0
        %v594 = vadd.f32 %v473, %v593
        %v595 = vpop.f32.mrf.mxu0
        %596 = vmatprep.mubr.bf16.mxu0 0
        %597 = vmatmul.mubr.bf16.gmra.mxu0 %v507
        %v598 = vpop.f32.mrf.mxu0
        %v599 = vadd.f32 %v473, %v598
        %v600 = vpop.f32.mrf.mxu0
        %v601 = vpop.f32.mrf.mxu0
        %v602 = vadd.f32 %v473, %v601
        %v603 = vpop.f32.mrf.mxu0
        %604 = vmatprep.mubr.bf16.mxu0 0
        %605 = vmatmul.mubr.bf16.gmra.mxu0 %v510
        %v606 = vpop.f32.mrf.mxu0
        %v607 = vadd.f32 %v473, %v606
        %v608 = vpop.f32.mrf.mxu0
        %v609 = vpop.f32.mrf.mxu0
        %v610 = vadd.f32 %v473, %v609
        %v611 = vpop.f32.mrf.mxu0
        %612 = vmatprep.mubr.bf16.mxu0 0
        %613 = vmatmul.mubr.bf16.gmra.mxu0 %v513
        %v614 = vpop.f32.mrf.mxu0
        %v615 = vadd.f32 %v473, %v614
        %v616 = vpop.f32.mrf.mxu0
        %v617 = vpop.f32.mrf.mxu0
        %v618 = vadd.f32 %v473, %v617
        %v619 = vpop.f32.mrf.mxu0
        %620 = vmatprep.mubr.bf16.mxu0 0
        %621 = vmatmul.mubr.bf16.gmra.mxu0 %v516
        %v622 = vpop.f32.mrf.mxu0
        %v623 = vadd.f32 %v473, %v622
        %v624 = vpop.f32.mrf.mxu0
        %v625 = vpop.f32.mrf.mxu0
        %v626 = vadd.f32 %v473, %v625
        %v627 = vpop.f32.mrf.mxu0
        %628 = vmatprep.mubr.bf16.mxu0 0
        %629 = vmatmul.mubr.bf16.gmra.mxu0 %v519
        %v630 = vpop.f32.mrf.mxu0
        %v631 = vadd.f32 %v473, %v630
        %v632 = vpop.f32.mrf.mxu0
        %v633 = vpop.f32.mrf.mxu0
        %v634 = vadd.f32 %v473, %v633
        %v635 = vpop.f32.mrf.mxu0
        %636 = vmatprep.mubr.bf16.mxu0 0
        %637 = vmatmul.mubr.bf16.gmra.mxu0 %v522
        %v638 = vpop.f32.mrf.mxu0
        %v639 = vadd.f32 %v473, %v638
        %v640 = vpop.f32.mrf.mxu0
        %v641 = vpop.f32.mrf.mxu0
        %v642 = vadd.f32 %v473, %v641
        %v643 = vpop.f32.mrf.mxu0
        %644 = vmatprep.mubr.bf16.mxu0 0
        %645 = vmatmul.mubr.bf16.gmra.mxu0 %v525
        %v646 = vpop.f32.mrf.mxu0
        %v647 = vadd.f32 %v473, %v646
        %v648 = vpop.f32.mrf.mxu0
        %v649 = vpop.f32.mrf.mxu0
        %v650 = vadd.f32 %v473, %v649
        %v651 = vpop.f32.mrf.mxu0
        %652 = vmatprep.mubr.bf16.mxu0 0
        %653 = vmatmul.mubr.bf16.gmra.mxu0 %v528
        %v654 = vpop.f32.mrf.mxu0
        %v655 = vadd.f32 %v473, %v654
        %v656 = vpop.f32.mrf.mxu0
        %v657 = vpop.f32.mrf.mxu0
        %v658 = vadd.f32 %v473, %v657
        %v659 = vpop.f32.mrf.mxu0
        %660 = vmatprep.mubr.bf16.mxu0 0
        %661 = vmatmul.mubr.bf16.gmra.mxu0 %v531
        %v662 = vpop.f32.mrf.mxu0
        %v663 = vadd.f32 %v473, %v662
        %v664 = vpop.f32.mrf.mxu0
        %v665 = vpop.f32.mrf.mxu0
        %v666 = vadd.f32 %v473, %v665
        %v667 = vpop.f32.mrf.mxu0
        %668 = vmatprep.mubr.bf16.mxu0 0
        %669 = vmatmul.mubr.bf16.gmra.mxu0 %v534
        %v670 = vpop.f32.mrf.mxu0
        %v671 = vadd.f32 %v473, %v670
        %v672 = vpop.f32.mrf.mxu0
        %v673 = vpop.f32.mrf.mxu0
        %v674 = vadd.f32 %v473, %v673
        %v675 = vpop.f32.mrf.mxu0
        %676 = vmatprep.mubr.bf16.mxu0 0
        %677 = vmatmul.mubr.bf16.gmra.mxu0 %v537
        %v678 = vpop.f32.mrf.mxu0
        %v679 = vadd.f32 %v473, %v678
        %v680 = vpop.f32.mrf.mxu0
        %v681 = vpop.f32.mrf.mxu0
        %v682 = vadd.f32 %v473, %v681
        %v683 = vpop.f32.mrf.mxu0
        %684 = vmatprep.mubr.bf16.mxu0 0
        %685 = vmatmul.mubr.bf16.gmra.mxu0 %v540
        %v686 = vpop.f32.mrf.mxu0
        %v687 = vadd.f32 %v473, %v686
        %v688 = vpop.f32.mrf.mxu0
        %v689 = vpop.f32.mrf.mxu0
        %v690 = vadd.f32 %v473, %v689
        %v691 = vpop.f32.mrf.mxu0
        %692 = vmatprep.mubr.bf16.mxu0 0
        %693 = vmatmul.mubr.bf16.gmra.mxu0 %v543
        %v694 = vpop.f32.mrf.mxu0
        %v695 = vadd.f32 %v473, %v694
        %v696 = vpop.f32.mrf.mxu0
        %v697 = vpop.f32.mrf.mxu0
        %v698 = vadd.f32 %v473, %v697
        %v699 = vpop.f32.mrf.mxu0
        %700 = vmatprep.mubr.bf16.mxu0 0
        %701 = vmatmul.mubr.bf16.gmra.mxu0 %v546
        %v702 = vpop.f32.mrf.mxu0
        %v703 = vadd.f32 %v473, %v702
        %v704 = vpop.f32.mrf.mxu0
        %v705 = vpop.f32.mrf.mxu0
        %v706 = vadd.f32 %v473, %v705
        %v707 = vpop.f32.mrf.mxu0
        %708 = vdwg.mxu0
        %v709 = vmax.f32 %v583, 0.0
        %v710 = vmax.f32 %v586, 0.0
        %v711 = vmax.f32 %v591, 0.0
        %v712 = vmax.f32 %v594, 0.0
        %v713 = vmax.f32 %v599, 0.0
        %v714 = vmax.f32 %v602, 0.0
        %v715 = vmax.f32 %v607, 0.0
        %v716 = vmax.f32 %v610, 0.0
        %v717 = vmax.f32 %v615, 0.0
        %v718 = vmax.f32 %v618, 0.0
        %v719 = vmax.f32 %v623, 0.0
        %v720 = vmax.f32 %v626, 0.0
        %v721 = vmax.f32 %v631, 0.0
        %v722 = vmax.f32 %v634, 0.0
        %v723 = vmax.f32 %v639, 0.0
        %v724 = vmax.f32 %v642, 0.0
        %v725 = vmax.f32 %v647, 0.0
        %v726 = vmax.f32 %v650, 0.0
        %v727 = vmax.f32 %v655, 0.0
        %v728 = vmax.f32 %v658, 0.0
        %v729 = vmax.f32 %v663, 0.0
        %v730 = vmax.f32 %v666, 0.0
        %v731 = vmax.f32 %v671, 0.0
        %v732 = vmax.f32 %v674, 0.0
        %v733 = vmax.f32 %v679, 0.0
        %v734 = vmax.f32 %v682, 0.0
        %v735 = vmax.f32 %v687, 0.0
        %v736 = vmax.f32 %v690, 0.0
        %v737 = vmax.f32 %v695, 0.0
        %v738 = vmax.f32 %v698, 0.0
        %v739 = vmax.f32 %v703, 0.0
        %v740 = vmax.f32 %v706, 0.0
        %741 = vst [vmem:[#allocation2] sm:$0xff] 0.0
        %742 = vst [vmem:[#allocation2 + $0x8] sm:$0xff] 0.0
        %743 = vst [vmem:[#allocation2 + $0x10] sm:$0x3] 0.0
        %744 = vst [vmem:[#allocation2 + $0x18] sm:$0xff] 0.0
        %745 = vst [vmem:[#allocation2 + $0x20] sm:$0xff] 0.0
        %746 = vst [vmem:[#allocation2 + $0x28] sm:$0x3] 0.0
        %747 = vst [vmem:[#allocation2 + $0x30] sm:$0xff] 0.0
        %748 = vst [vmem:[#allocation2 + $0x38] sm:$0xff] 0.0
        %749 = vst [vmem:[#allocation2 + $0x40] sm:$0x3] 0.0
        %750 = vst [vmem:[#allocation2 + $0x48] sm:$0xff] 0.0
        %751 = vst [vmem:[#allocation2 + $0x50] sm:$0xff] 0.0
        %752 = vst [vmem:[#allocation2 + $0x58] sm:$0x3] 0.0
        %753 = vst [vmem:[#allocation2 + $0x60] sm:$0xff] 0.0
        %754 = vst [vmem:[#allocation2 + $0x68] sm:$0xff] 0.0
        %755 = vst [vmem:[#allocation2 + $0x70] sm:$0x3] 0.0
        %756 = vst [vmem:[#allocation2 + $0x78] sm:$0xff] 0.0
        %757 = vst [vmem:[#allocation2 + $0x80] sm:$0xff] 0.0
        %758 = vst [vmem:[#allocation2 + $0x88] sm:$0x3] 0.0
        %759 = vst [vmem:[#allocation2 + $0x90] sm:$0xff] 0.0
        %760 = vst [vmem:[#allocation2 + $0x98] sm:$0xff] 0.0
        %761 = vst [vmem:[#allocation2 + $0xa0] sm:$0x3] 0.0
        %762 = vst [vmem:[#allocation2 + $0xa8] sm:$0xff] 0.0
        %763 = vst [vmem:[#allocation2 + $0xb0] sm:$0xff] 0.0
        %764 = vst [vmem:[#allocation2 + $0xb8] sm:$0x3] 0.0
        %765 = vst [vmem:[#allocation2 + $0xc0] sm:$0xff] 0.0
        %766 = vst [vmem:[#allocation2 + $0xc8] sm:$0xff] 0.0
        %767 = vst [vmem:[#allocation2 + $0xd0] sm:$0x3] 0.0
        %768 = vst [vmem:[#allocation2 + $0xd8] sm:$0xff] 0.0
        %769 = vst [vmem:[#allocation2 + $0xe0] sm:$0xff] 0.0
        %770 = vst [vmem:[#allocation2 + $0xe8] sm:$0x3] 0.0
        %771 = vst [vmem:[#allocation2 + $0xf0] sm:$0xff] 0.0
        %772 = vst [vmem:[#allocation2 + $0xf8] sm:$0xff] 0.0
        %773 = vst [vmem:[#allocation2 + $0x100] sm:$0x3] 0.0
        %774 = vst [vmem:[#allocation2 + $0x108] sm:$0xff] 0.0
        %775 = vst [vmem:[#allocation2 + $0x110] sm:$0xff] 0.0
        %776 = vst [vmem:[#allocation2 + $0x118] sm:$0x3] 0.0
        %777 = vst [vmem:[#allocation2 + $0x120] sm:$0xff] 0.0
        %778 = vst [vmem:[#allocation2 + $0x128] sm:$0xff] 0.0
        %779 = vst [vmem:[#allocation2 + $0x130] sm:$0x3] 0.0
        %780 = vst [vmem:[#allocation2 + $0x138] sm:$0xff] 0.0
        %781 = vst [vmem:[#allocation2 + $0x140] sm:$0xff] 0.0
        %782 = vst [vmem:[#allocation2 + $0x148] sm:$0x3] 0.0
        %783 = vst [vmem:[#allocation2 + $0x150] sm:$0xff] 0.0
        %784 = vst [vmem:[#allocation2 + $0x158] sm:$0xff] 0.0
        %785 = vst [vmem:[#allocation2 + $0x160] sm:$0x3] 0.0
        %786 = vst [vmem:[#allocation2 + $0x168] sm:$0xff] 0.0
        %787 = vst [vmem:[#allocation2 + $0x170] sm:$0xff] 0.0
        %788 = vst [vmem:[#allocation2 + $0x178] sm:$0x3] 0.0
        %789 = vst [vmem:[#allocation2 + $0x180] sm:$0xff] 0.0
        %790 = vst [vmem:[#allocation2 + $0x188] sm:$0xff] 0.0
        %791 = vst [vmem:[#allocation2 + $0x190] sm:$0x3] 0.0
        %792 = vst [vmem:[#allocation2 + $0x198] sm:$0xff] 0.0
        %793 = vst [vmem:[#allocation2 + $0x1a0] sm:$0xff] 0.0
        %794 = vst [vmem:[#allocation2 + $0x1a8] sm:$0x3] 0.0
        %s795 = scalar_lea.vmem [#allocation2], 24
        %796 = vst [vmem:[%s795 + $0x1] sm:$0xff] %v709
        %797 = vst [vmem:[%s795 + $0x9] sm:$0xff] %v710
        %798 = vst [vmem:[%s795 + $0x19] sm:$0xff] %v711
        %799 = vst [vmem:[%s795 + $0x21] sm:$0xff] %v712
        %800 = vst [vmem:[%s795 + $0x31] sm:$0xff] %v713
        %801 = vst [vmem:[%s795 + $0x39] sm:$0xff] %v714
        %802 = vst [vmem:[%s795 + $0x49] sm:$0xff] %v715
        %803 = vst [vmem:[%s795 + $0x51] sm:$0xff] %v716
        %804 = vst [vmem:[%s795 + $0x61] sm:$0xff] %v717
        %805 = vst [vmem:[%s795 + $0x69] sm:$0xff] %v718
        %806 = vst [vmem:[%s795 + $0x79] sm:$0xff] %v719
        %807 = vst [vmem:[%s795 + $0x81] sm:$0xff] %v720
        %808 = vst [vmem:[%s795 + $0x91] sm:$0xff] %v721
        %809 = vst [vmem:[%s795 + $0x99] sm:$0xff] %v722
        %810 = vst [vmem:[%s795 + $0xa9] sm:$0xff] %v723
        %811 = vst [vmem:[%s795 + $0xb1] sm:$0xff] %v724
        %812 = vst [vmem:[%s795 + $0xc1] sm:$0xff] %v725
        %813 = vst [vmem:[%s795 + $0xc9] sm:$0xff] %v726
        %814 = vst [vmem:[%s795 + $0xd9] sm:$0xff] %v727
        %815 = vst [vmem:[%s795 + $0xe1] sm:$0xff] %v728
        %816 = vst [vmem:[%s795 + $0xf1] sm:$0xff] %v729
        %817 = vst [vmem:[%s795 + $0xf9] sm:$0xff] %v730
        %818 = vst [vmem:[%s795 + $0x109] sm:$0xff] %v731
        %819 = vst [vmem:[%s795 + $0x111] sm:$0xff] %v732
        %820 = vst [vmem:[%s795 + $0x121] sm:$0xff] %v733
        %821 = vst [vmem:[%s795 + $0x129] sm:$0xff] %v734
        %822 = vst [vmem:[%s795 + $0x139] sm:$0xff] %v735
        %823 = vst [vmem:[%s795 + $0x141] sm:$0xff] %v736
        %824 = vst [vmem:[%s795 + $0x151] sm:$0xff] %v737
        %825 = vst [vmem:[%s795 + $0x159] sm:$0xff] %v738
        %826 = vst [vmem:[%s795 + $0x169] sm:$0xff] %v739
        %827 = vst [vmem:[%s795 + $0x171] sm:$0xff] %v740
        %v828 = vld [vmem:[#allocation2] sm:$0xff]
        %v829 = vld [vmem:[#allocation2 + $0x8] sm:$0xff]
        %v830 = vld [vmem:[#allocation2 + $0x18] sm:$0xff]
        %v831 = vld [vmem:[#allocation2 + $0x20] sm:$0xff]
        %v832 = vld [vmem:[#allocation2 + $0x30] sm:$0xff]
        %v833 = vld [vmem:[#allocation2 + $0x38] sm:$0xff]
        %v834 = vld [vmem:[#allocation2 + $0x48] sm:$0xff]
        %v835 = vld [vmem:[#allocation2 + $0x50] sm:$0xff]
        %v836 = vld [vmem:[#allocation2 + $0x60] sm:$0xff]
        %v837 = vld [vmem:[#allocation2 + $0x68] sm:$0xff]
        %v838 = vld [vmem:[#allocation2 + $0x78] sm:$0xff]
        %v839 = vld [vmem:[#allocation2 + $0x80] sm:$0xff]
        %v840 = vld [vmem:[#allocation2 + $0x90] sm:$0xff]
        %v841 = vld [vmem:[#allocation2 + $0x98] sm:$0xff]
        %v842 = vld [vmem:[#allocation2 + $0xa8] sm:$0xff]
        %v843 = vld [vmem:[#allocation2 + $0xb0] sm:$0xff]
        %v844 = vld [vmem:[#allocation2 + $0xc0] sm:$0xff]
        %v845 = vld [vmem:[#allocation2 + $0xc8] sm:$0xff]
        %v846 = vld [vmem:[#allocation2 + $0xd8] sm:$0xff]
        %v847 = vld [vmem:[#allocation2 + $0xe0] sm:$0xff]
        %v848 = vld [vmem:[#allocation2 + $0xf0] sm:$0xff]
        %v849 = vld [vmem:[#allocation2 + $0xf8] sm:$0xff]
        %v850 = vld [vmem:[#allocation2 + $0x108] sm:$0xff]
        %v851 = vld [vmem:[#allocation2 + $0x110] sm:$0xff]
        %v852 = vld [vmem:[#allocation2 + $0x120] sm:$0xff]
        %v853 = vld [vmem:[#allocation2 + $0x128] sm:$0xff]
        %v854 = vld [vmem:[#allocation2 + $0x138] sm:$0xff]
        %v855 = vld [vmem:[#allocation2 + $0x140] sm:$0xff]
        %v856 = vld [vmem:[#allocation2 + $0x150] sm:$0xff]
        %v857 = vld [vmem:[#allocation2 + $0x158] sm:$0xff]
        %v858 = vld [vmem:[#allocation2 + $0x168] sm:$0xff]
        %v859 = vld [vmem:[#allocation2 + $0x170] sm:$0xff]
        %v860 = vpack.c.bf16 %v829, %v828
        %v861 = vpack.c.bf16 %v831, %v830
        %v862 = vpack.c.bf16 %v833, %v832
        %v863 = vpack.c.bf16 %v835, %v834
        %v864 = vpack.c.bf16 %v837, %v836
        %v865 = vpack.c.bf16 %v839, %v838
        %v866 = vpack.c.bf16 %v841, %v840
        %v867 = vpack.c.bf16 %v843, %v842
        %v868 = vpack.c.bf16 %v845, %v844
        %v869 = vpack.c.bf16 %v847, %v846
        %v870 = vpack.c.bf16 %v849, %v848
        %v871 = vpack.c.bf16 %v851, %v850
        %v872 = vpack.c.bf16 %v853, %v852
        %v873 = vpack.c.bf16 %v855, %v854
        %v874 = vpack.c.bf16 %v857, %v856
        %v875 = vpack.c.bf16 %v859, %v858
        %v876 = vld [vmem:[#allocation7] sm:$0xf]
        %v877 = vld [vmem:[#allocation7 + $0x4] sm:$0xf]
        %v878 = vld [vmem:[#allocation7 + $0x8] sm:$0xf]
        %v879 = vld [vmem:[#allocation7 + $0xc] sm:$0xf]
        %v880 = vld [vmem:[#allocation7 + $0x10] sm:$0xf]
        %v881 = vld [vmem:[#allocation7 + $0x14] sm:$0xf]
        %v882 = vld [vmem:[#allocation7 + $0x18] sm:$0xf]
        %v883 = vld [vmem:[#allocation7 + $0x1c] sm:$0xf]
        %v884 = vld [vmem:[#allocation7 + $0x20] sm:$0xf]
        %v885 = vld [vmem:[#allocation7 + $0x24] sm:$0xf]
        %v886 = vld [vmem:[#allocation7 + $0x28] sm:$0xf]
        %v887 = vld [vmem:[#allocation7 + $0x2c] sm:$0xf]
        %v888 = vld [vmem:[#allocation7 + $0x30] sm:$0xf]
        %v889 = vld [vmem:[#allocation7 + $0x34] sm:$0xf]
        %v890 = vld [vmem:[#allocation7 + $0x38] sm:$0xf]
        %v891 = vld [vmem:[#allocation7 + $0x3c] sm:$0xf]
        %v892 = vld [vmem:[#allocation2 + $0x1] sm:$0xff]
        %v893 = vld [vmem:[#allocation2 + $0x9] sm:$0xff]
        %v894 = vld [vmem:[#allocation2 + $0x19] sm:$0xff]
        %v895 = vld [vmem:[#allocation2 + $0x21] sm:$0xff]
        %v896 = vld [vmem:[#allocation2 + $0x31] sm:$0xff]
        %v897 = vld [vmem:[#allocation2 + $0x39] sm:$0xff]
        %v898 = vld [vmem:[#allocation2 + $0x49] sm:$0xff]
        %v899 = vld [vmem:[#allocation2 + $0x51] sm:$0xff]
        %v900 = vld [vmem:[#allocation2 + $0x61] sm:$0xff]
        %v901 = vld [vmem:[#allocation2 + $0x69] sm:$0xff]
        %v902 = vld [vmem:[#allocation2 + $0x79] sm:$0xff]
        %v903 = vld [vmem:[#allocation2 + $0x81] sm:$0xff]
        %v904 = vld [vmem:[#allocation2 + $0x91] sm:$0xff]
        %v905 = vld [vmem:[#allocation2 + $0x99] sm:$0xff]
        %v906 = vld [vmem:[#allocation2 + $0xa9] sm:$0xff]
        %v907 = vld [vmem:[#allocation2 + $0xb1] sm:$0xff]
        %v908 = vld [vmem:[#allocation2 + $0xc1] sm:$0xff]
        %v909 = vld [vmem:[#allocation2 + $0xc9] sm:$0xff]
        %v910 = vld [vmem:[#allocation2 + $0xd9] sm:$0xff]
        %v911 = vld [vmem:[#allocation2 + $0xe1] sm:$0xff]
        %v912 = vld [vmem:[#allocation2 + $0xf1] sm:$0xff]
        %v913 = vld [vmem:[#allocation2 + $0xf9] sm:$0xff]
        %v914 = vld [vmem:[#allocation2 + $0x109] sm:$0xff]
        %v915 = vld [vmem:[#allocation2 + $0x111] sm:$0xff]
        %v916 = vld [vmem:[#allocation2 + $0x121] sm:$0xff]
        %v917 = vld [vmem:[#allocation2 + $0x129] sm:$0xff]
        %v918 = vld [vmem:[#allocation2 + $0x139] sm:$0xff]
        %v919 = vld [vmem:[#allocation2 + $0x141] sm:$0xff]
        %v920 = vld [vmem:[#allocation2 + $0x151] sm:$0xff]
        %v921 = vld [vmem:[#allocation2 + $0x159] sm:$0xff]
        %v922 = vld [vmem:[#allocation2 + $0x169] sm:$0xff]
        %v923 = vld [vmem:[#allocation2 + $0x171] sm:$0xff]
        %v924 = vpack.c.bf16 %v893, %v892
        %v925 = vpack.c.bf16 %v895, %v894
        %v926 = vpack.c.bf16 %v897, %v896
        %v927 = vpack.c.bf16 %v899, %v898
        %v928 = vpack.c.bf16 %v901, %v900
        %v929 = vpack.c.bf16 %v903, %v902
        %v930 = vpack.c.bf16 %v905, %v904
        %v931 = vpack.c.bf16 %v907, %v906
        %v932 = vpack.c.bf16 %v909, %v908
        %v933 = vpack.c.bf16 %v911, %v910
        %v934 = vpack.c.bf16 %v913, %v912
        %v935 = vpack.c.bf16 %v915, %v914
        %v936 = vpack.c.bf16 %v917, %v916
        %v937 = vpack.c.bf16 %v919, %v918
        %v938 = vpack.c.bf16 %v921, %v920
        %v939 = vpack.c.bf16 %v923, %v922
        %s940 = scalar_lea.vmem [#allocation7], 64
        %v941 = vld [vmem:[%s940] sm:$0xf]
        %v942 = vld [vmem:[%s940 + $0x4] sm:$0xf]
        %v943 = vld [vmem:[%s940 + $0x8] sm:$0xf]
        %v944 = vld [vmem:[%s940 + $0xc] sm:$0xf]
        %v945 = vld [vmem:[%s940 + $0x10] sm:$0xf]
        %v946 = vld [vmem:[%s940 + $0x14] sm:$0xf]
        %v947 = vld [vmem:[%s940 + $0x18] sm:$0xf]
        %v948 = vld [vmem:[%s940 + $0x1c] sm:$0xf]
        %v949 = vld [vmem:[%s940 + $0x20] sm:$0xf]
        %v950 = vld [vmem:[%s940 + $0x24] sm:$0xf]
        %v951 = vld [vmem:[%s940 + $0x28] sm:$0xf]
        %v952 = vld [vmem:[%s940 + $0x2c] sm:$0xf]
        %v953 = vld [vmem:[%s940 + $0x30] sm:$0xf]
        %v954 = vld [vmem:[%s940 + $0x34] sm:$0xf]
        %v955 = vld [vmem:[%s940 + $0x38] sm:$0xf]
        %v956 = vld [vmem:[%s940 + $0x3c] sm:$0xf]
        %v973 = vunpack.c.l.b16 %v941
        %v974 = vunpack.c.l.b16 %v942
        %v975 = vunpack.c.l.b16 %v943
        %v976 = vunpack.c.l.b16 %v944
        %v977 = vunpack.c.l.b16 %v945
        %v978 = vunpack.c.l.b16 %v946
        %v979 = vunpack.c.l.b16 %v947
        %v980 = vunpack.c.l.b16 %v948
        %v981 = vunpack.c.l.b16 %v949
        %v982 = vunpack.c.l.b16 %v950
        %v983 = vunpack.c.l.b16 %v951
        %v984 = vunpack.c.l.b16 %v952
        %v985 = vunpack.c.l.b16 %v953
        %v986 = vunpack.c.l.b16 %v954
        %v987 = vunpack.c.l.b16 %v955
        %v988 = vunpack.c.l.b16 %v956
        %v989 = vpack.c.b16 %v974, %v973
        %v990 = vpack.c.b16 %v976, %v975
        %v991 = vpack.c.b16 %v978, %v977
        %v992 = vpack.c.b16 %v980, %v979
        %v993 = vpack.c.b16 %v982, %v981
        %v994 = vpack.c.b16 %v984, %v983
        %v995 = vpack.c.b16 %v986, %v985
        %v996 = vpack.c.b16 %v988, %v987
        %1005 = vmatprep.subr.bf16.mxu0 0
        %1006 = vmatpush1.bf16.msra.mxu0 %v996
        %1007 = vmatprep.subr.bf16.mxu0 0
        %1008 = vmatpush1.bf16.msra.mxu0 %v995
        %1009 = vmatprep.subr.bf16.mxu0 0
        %1010 = vmatpush1.bf16.msra.mxu0 %v994
        %1011 = vmatprep.subr.bf16.mxu0 0
        %1012 = vmatpush1.bf16.msra.mxu0 %v993
        %1013 = vmatprep.subr.bf16.mxu0 0
        %1014 = vmatpush1.bf16.msra.mxu0 %v992
        %1015 = vmatprep.subr.bf16.mxu0 0
        %1016 = vmatpush1.bf16.msra.mxu0 %v991
        %1017 = vmatprep.subr.bf16.mxu0 0
        %1018 = vmatpush1.bf16.msra.mxu0 %v990
        %1019 = vmatprep.subr.bf16.mxu0 0
        %1020 = vmatpush1.bf16.msra.mxu0 %v989
        %1021 = vmatprep.subr.bf16.mxu0 0
        %1022 = vmatpush2.bf16.msra.mxu0 0
        %1023 = vmatprep.subr.bf16.mxu0 0
        %1024 = vmatpush2.bf16.msra.mxu0 0
        %1025 = vmatprep.subr.bf16.mxu0 0
        %1026 = vmatpush2.bf16.msra.mxu0 0
        %1027 = vmatprep.subr.bf16.mxu0 0
        %1028 = vmatpush2.bf16.msra.mxu0 0
        %1029 = vmatprep.subr.bf16.mxu0 0
        %1030 = vmatpush2.bf16.msra.mxu0 0
        %1031 = vmatprep.subr.bf16.mxu0 0
        %1032 = vmatpush2.bf16.msra.mxu0 0
        %1033 = vmatprep.subr.bf16.mxu0 0
        %1034 = vmatpush2.bf16.msra.mxu0 0
        %1035 = vmatprep.subr.bf16.mxu0 0
        %1036 = vmatpush2.bf16.msra.mxu0 0
        %1037 = vmatprep.mubr.bf16.mxu0 0
        %1038 = vmatmul.mubr.bf16.gmra.mxu0 %v924
        %v1039 = vpop.f32.mrf.mxu0
        %v1040 = vadd.f32 0.0, %v1039
        %v1041 = vpop.f32.mrf.mxu0
        %v1042 = vpop.f32.mrf.mxu0
        %v1043 = vadd.f32 0.0, %v1042
        %v1044 = vpop.f32.mrf.mxu0
        %1045 = vmatprep.mubr.bf16.mxu0 0
        %1046 = vmatmul.mubr.bf16.gmra.mxu0 %v925
        %v1047 = vpop.f32.mrf.mxu0
        %v1048 = vadd.f32 0.0, %v1047
        %v1049 = vpop.f32.mrf.mxu0
        %v1050 = vpop.f32.mrf.mxu0
        %v1051 = vadd.f32 0.0, %v1050
        %v1052 = vpop.f32.mrf.mxu0
        %1053 = vmatprep.mubr.bf16.mxu0 0
        %1054 = vmatmul.mubr.bf16.gmra.mxu0 %v926
        %v1055 = vpop.f32.mrf.mxu0
        %v1056 = vadd.f32 0.0, %v1055
        %v1057 = vpop.f32.mrf.mxu0
        %v1058 = vpop.f32.mrf.mxu0
        %v1059 = vadd.f32 0.0, %v1058
        %v1060 = vpop.f32.mrf.mxu0
        %1061 = vmatprep.mubr.bf16.mxu0 0
        %1062 = vmatmul.mubr.bf16.gmra.mxu0 %v927
        %v1063 = vpop.f32.mrf.mxu0
        %v1064 = vadd.f32 0.0, %v1063
        %v1065 = vpop.f32.mrf.mxu0
        %v1066 = vpop.f32.mrf.mxu0
        %v1067 = vadd.f32 0.0, %v1066
        %v1068 = vpop.f32.mrf.mxu0
        %1069 = vmatprep.mubr.bf16.mxu0 0
        %1070 = vmatmul.mubr.bf16.gmra.mxu0 %v928
        %v1071 = vpop.f32.mrf.mxu0
        %v1072 = vadd.f32 0.0, %v1071
        %v1073 = vpop.f32.mrf.mxu0
        %v1074 = vpop.f32.mrf.mxu0
        %v1075 = vadd.f32 0.0, %v1074
        %v1076 = vpop.f32.mrf.mxu0
        %1077 = vmatprep.mubr.bf16.mxu0 0
        %1078 = vmatmul.mubr.bf16.gmra.mxu0 %v929
        %v1079 = vpop.f32.mrf.mxu0
        %v1080 = vadd.f32 0.0, %v1079
        %v1081 = vpop.f32.mrf.mxu0
        %v1082 = vpop.f32.mrf.mxu0
        %v1083 = vadd.f32 0.0, %v1082
        %v1084 = vpop.f32.mrf.mxu0
        %1085 = vmatprep.mubr.bf16.mxu0 0
        %1086 = vmatmul.mubr.bf16.gmra.mxu0 %v930
        %v1087 = vpop.f32.mrf.mxu0
        %v1088 = vadd.f32 0.0, %v1087
        %v1089 = vpop.f32.mrf.mxu0
        %v1090 = vpop.f32.mrf.mxu0
        %v1091 = vadd.f32 0.0, %v1090
        %v1092 = vpop.f32.mrf.mxu0
        %1093 = vmatprep.mubr.bf16.mxu0 0
        %1094 = vmatmul.mubr.bf16.gmra.mxu0 %v931
        %v1095 = vpop.f32.mrf.mxu0
        %v1096 = vadd.f32 0.0, %v1095
        %v1097 = vpop.f32.mrf.mxu0
        %v1098 = vpop.f32.mrf.mxu0
        %v1099 = vadd.f32 0.0, %v1098
        %v1100 = vpop.f32.mrf.mxu0
        %1101 = vmatprep.mubr.bf16.mxu0 0
        %1102 = vmatmul.mubr.bf16.gmra.mxu0 %v932
        %v1103 = vpop.f32.mrf.mxu0
        %v1104 = vadd.f32 0.0, %v1103
        %v1105 = vpop.f32.mrf.mxu0
        %v1106 = vpop.f32.mrf.mxu0
        %v1107 = vadd.f32 0.0, %v1106
        %v1108 = vpop.f32.mrf.mxu0
        %1109 = vmatprep.mubr.bf16.mxu0 0
        %1110 = vmatmul.mubr.bf16.gmra.mxu0 %v933
        %v1111 = vpop.f32.mrf.mxu0
        %v1112 = vadd.f32 0.0, %v1111
        %v1113 = vpop.f32.mrf.mxu0
        %v1114 = vpop.f32.mrf.mxu0
        %v1115 = vadd.f32 0.0, %v1114
        %v1116 = vpop.f32.mrf.mxu0
        %1117 = vmatprep.mubr.bf16.mxu0 0
        %1118 = vmatmul.mubr.bf16.gmra.mxu0 %v934
        %v1119 = vpop.f32.mrf.mxu0
        %v1120 = vadd.f32 0.0, %v1119
        %v1121 = vpop.f32.mrf.mxu0
        %v1122 = vpop.f32.mrf.mxu0
        %v1123 = vadd.f32 0.0, %v1122
        %v1124 = vpop.f32.mrf.mxu0
        %1125 = vmatprep.mubr.bf16.mxu0 0
        %1126 = vmatmul.mubr.bf16.gmra.mxu0 %v935
        %v1127 = vpop.f32.mrf.mxu0
        %v1128 = vadd.f32 0.0, %v1127
        %v1129 = vpop.f32.mrf.mxu0
        %v1130 = vpop.f32.mrf.mxu0
        %v1131 = vadd.f32 0.0, %v1130
        %v1132 = vpop.f32.mrf.mxu0
        %1133 = vmatprep.mubr.bf16.mxu0 0
        %1134 = vmatmul.mubr.bf16.gmra.mxu0 %v936
        %v1135 = vpop.f32.mrf.mxu0
        %v1136 = vadd.f32 0.0, %v1135
        %v1137 = vpop.f32.mrf.mxu0
        %v1138 = vpop.f32.mrf.mxu0
        %v1139 = vadd.f32 0.0, %v1138
        %v1140 = vpop.f32.mrf.mxu0
        %1141 = vmatprep.mubr.bf16.mxu0 0
        %1142 = vmatmul.mubr.bf16.gmra.mxu0 %v937
        %v1143 = vpop.f32.mrf.mxu0
        %v1144 = vadd.f32 0.0, %v1143
        %v1145 = vpop.f32.mrf.mxu0
        %v1146 = vpop.f32.mrf.mxu0
        %v1147 = vadd.f32 0.0, %v1146
        %v1148 = vpop.f32.mrf.mxu0
        %1149 = vmatprep.mubr.bf16.mxu0 0
        %1150 = vmatmul.mubr.bf16.gmra.mxu0 %v938
        %v1151 = vpop.f32.mrf.mxu0
        %v1152 = vadd.f32 0.0, %v1151
        %v1153 = vpop.f32.mrf.mxu0
        %v1154 = vpop.f32.mrf.mxu0
        %v1155 = vadd.f32 0.0, %v1154
        %v1156 = vpop.f32.mrf.mxu0
        %1157 = vmatprep.mubr.bf16.mxu0 0
        %1158 = vmatmul.mubr.bf16.gmra.mxu0 %v939
        %v1159 = vpop.f32.mrf.mxu0
        %v1160 = vadd.f32 0.0, %v1159
        %v1161 = vpop.f32.mrf.mxu0
        %v1162 = vpop.f32.mrf.mxu0
        %v1163 = vadd.f32 0.0, %v1162
        %v1164 = vpop.f32.mrf.mxu0
        %1165 = vdwg.mxu0
        %v1182 = vunpack.c.l.b16 %v876
        %v1183 = vunpack.c.l.b16 %v877
        %v1184 = vunpack.c.l.b16 %v878
        %v1185 = vunpack.c.l.b16 %v879
        %v1186 = vunpack.c.l.b16 %v880
        %v1187 = vunpack.c.l.b16 %v881
        %v1188 = vunpack.c.l.b16 %v882
        %v1189 = vunpack.c.l.b16 %v883
        %v1190 = vunpack.c.l.b16 %v884
        %v1191 = vunpack.c.l.b16 %v885
        %v1192 = vunpack.c.l.b16 %v886
        %v1193 = vunpack.c.l.b16 %v887
        %v1194 = vunpack.c.l.b16 %v888
        %v1195 = vunpack.c.l.b16 %v889
        %v1196 = vunpack.c.l.b16 %v890
        %v1197 = vunpack.c.l.b16 %v891
        %v1198 = vpack.c.b16 %v1183, %v1182
        %v1199 = vpack.c.b16 %v1185, %v1184
        %v1200 = vpack.c.b16 %v1187, %v1186
        %v1201 = vpack.c.b16 %v1189, %v1188
        %v1202 = vpack.c.b16 %v1191, %v1190
        %v1203 = vpack.c.b16 %v1193, %v1192
        %v1204 = vpack.c.b16 %v1195, %v1194
        %v1205 = vpack.c.b16 %v1197, %v1196
        %1214 = vmatprep.subr.bf16.mxu0 0
        %1215 = vmatpush1.bf16.msra.mxu0 %v1205
        %1216 = vmatprep.subr.bf16.mxu0 0
        %1217 = vmatpush1.bf16.msra.mxu0 %v1204
        %1218 = vmatprep.subr.bf16.mxu0 0
        %1219 = vmatpush1.bf16.msra.mxu0 %v1203
        %1220 = vmatprep.subr.bf16.mxu0 0
        %1221 = vmatpush1.bf16.msra.mxu0 %v1202
        %1222 = vmatprep.subr.bf16.mxu0 0
        %1223 = vmatpush1.bf16.msra.mxu0 %v1201
        %1224 = vmatprep.subr.bf16.mxu0 0
        %1225 = vmatpush1.bf16.msra.mxu0 %v1200
        %1226 = vmatprep.subr.bf16.mxu0 0
        %1227 = vmatpush1.bf16.msra.mxu0 %v1199
        %1228 = vmatprep.subr.bf16.mxu0 0
        %1229 = vmatpush1.bf16.msra.mxu0 %v1198
        %1230 = vmatprep.subr.bf16.mxu0 0
        %1231 = vmatpush2.bf16.msra.mxu0 0
        %1232 = vmatprep.subr.bf16.mxu0 0
        %1233 = vmatpush2.bf16.msra.mxu0 0
        %1234 = vmatprep.subr.bf16.mxu0 0
        %1235 = vmatpush2.bf16.msra.mxu0 0
        %1236 = vmatprep.subr.bf16.mxu0 0
        %1237 = vmatpush2.bf16.msra.mxu0 0
        %1238 = vmatprep.subr.bf16.mxu0 0
        %1239 = vmatpush2.bf16.msra.mxu0 0
        %1240 = vmatprep.subr.bf16.mxu0 0
        %1241 = vmatpush2.bf16.msra.mxu0 0
        %1242 = vmatprep.subr.bf16.mxu0 0
        %1243 = vmatpush2.bf16.msra.mxu0 0
        %1244 = vmatprep.subr.bf16.mxu0 0
        %1245 = vmatpush2.bf16.msra.mxu0 0
        %1246 = vmatprep.mubr.bf16.mxu0 0
        %1247 = vmatmul.mubr.bf16.gmra.mxu0 %v860
        %v1248 = vpop.f32.mrf.mxu0
        %v1249 = vadd.f32 %v1040, %v1248
        %v1250 = vpop.f32.mrf.mxu0
        %v1251 = vpop.f32.mrf.mxu0
        %v1252 = vadd.f32 %v1043, %v1251
        %v1253 = vpop.f32.mrf.mxu0
        %1254 = vmatprep.mubr.bf16.mxu0 0
        %1255 = vmatmul.mubr.bf16.gmra.mxu0 %v861
        %v1256 = vpop.f32.mrf.mxu0
        %v1257 = vadd.f32 %v1048, %v1256
        %v1258 = vpop.f32.mrf.mxu0
        %v1259 = vpop.f32.mrf.mxu0
        %v1260 = vadd.f32 %v1051, %v1259
        %v1261 = vpop.f32.mrf.mxu0
        %1262 = vmatprep.mubr.bf16.mxu0 0
        %1263 = vmatmul.mubr.bf16.gmra.mxu0 %v862
        %v1264 = vpop.f32.mrf.mxu0
        %v1265 = vadd.f32 %v1056, %v1264
        %v1266 = vpop.f32.mrf.mxu0
        %v1267 = vpop.f32.mrf.mxu0
        %v1268 = vadd.f32 %v1059, %v1267
        %v1269 = vpop.f32.mrf.mxu0
        %1270 = vmatprep.mubr.bf16.mxu0 0
        %1271 = vmatmul.mubr.bf16.gmra.mxu0 %v863
        %v1272 = vpop.f32.mrf.mxu0
        %v1273 = vadd.f32 %v1064, %v1272
        %v1274 = vpop.f32.mrf.mxu0
        %v1275 = vpop.f32.mrf.mxu0
        %v1276 = vadd.f32 %v1067, %v1275
        %v1277 = vpop.f32.mrf.mxu0
        %1278 = vmatprep.mubr.bf16.mxu0 0
        %1279 = vmatmul.mubr.bf16.gmra.mxu0 %v864
        %v1280 = vpop.f32.mrf.mxu0
        %v1281 = vadd.f32 %v1072, %v1280
        %v1282 = vpop.f32.mrf.mxu0
        %v1283 = vpop.f32.mrf.mxu0
        %v1284 = vadd.f32 %v1075, %v1283
        %v1285 = vpop.f32.mrf.mxu0
        %1286 = vmatprep.mubr.bf16.mxu0 0
        %1287 = vmatmul.mubr.bf16.gmra.mxu0 %v865
        %v1288 = vpop.f32.mrf.mxu0
        %v1289 = vadd.f32 %v1080, %v1288
        %v1290 = vpop.f32.mrf.mxu0
        %v1291 = vpop.f32.mrf.mxu0
        %v1292 = vadd.f32 %v1083, %v1291
        %v1293 = vpop.f32.mrf.mxu0
        %1294 = vmatprep.mubr.bf16.mxu0 0
        %1295 = vmatmul.mubr.bf16.gmra.mxu0 %v866
        %v1296 = vpop.f32.mrf.mxu0
        %v1297 = vadd.f32 %v1088, %v1296
        %v1298 = vpop.f32.mrf.mxu0
        %v1299 = vpop.f32.mrf.mxu0
        %v1300 = vadd.f32 %v1091, %v1299
        %v1301 = vpop.f32.mrf.mxu0
        %1302 = vmatprep.mubr.bf16.mxu0 0
        %1303 = vmatmul.mubr.bf16.gmra.mxu0 %v867
        %v1304 = vpop.f32.mrf.mxu0
        %v1305 = vadd.f32 %v1096, %v1304
        %v1306 = vpop.f32.mrf.mxu0
        %v1307 = vpop.f32.mrf.mxu0
        %v1308 = vadd.f32 %v1099, %v1307
        %v1309 = vpop.f32.mrf.mxu0
        %1310 = vmatprep.mubr.bf16.mxu0 0
        %1311 = vmatmul.mubr.bf16.gmra.mxu0 %v868
        %v1312 = vpop.f32.mrf.mxu0
        %v1313 = vadd.f32 %v1104, %v1312
        %v1314 = vpop.f32.mrf.mxu0
        %v1315 = vpop.f32.mrf.mxu0
        %v1316 = vadd.f32 %v1107, %v1315
        %v1317 = vpop.f32.mrf.mxu0
        %1318 = vmatprep.mubr.bf16.mxu0 0
        %1319 = vmatmul.mubr.bf16.gmra.mxu0 %v869
        %v1320 = vpop.f32.mrf.mxu0
        %v1321 = vadd.f32 %v1112, %v1320
        %v1322 = vpop.f32.mrf.mxu0
        %v1323 = vpop.f32.mrf.mxu0
        %v1324 = vadd.f32 %v1115, %v1323
        %v1325 = vpop.f32.mrf.mxu0
        %1326 = vmatprep.mubr.bf16.mxu0 0
        %1327 = vmatmul.mubr.bf16.gmra.mxu0 %v870
        %v1328 = vpop.f32.mrf.mxu0
        %v1329 = vadd.f32 %v1120, %v1328
        %v1330 = vpop.f32.mrf.mxu0
        %v1331 = vpop.f32.mrf.mxu0
        %v1332 = vadd.f32 %v1123, %v1331
        %v1333 = vpop.f32.mrf.mxu0
        %1334 = vmatprep.mubr.bf16.mxu0 0
        %1335 = vmatmul.mubr.bf16.gmra.mxu0 %v871
        %v1336 = vpop.f32.mrf.mxu0
        %v1337 = vadd.f32 %v1128, %v1336
        %v1338 = vpop.f32.mrf.mxu0
        %v1339 = vpop.f32.mrf.mxu0
        %v1340 = vadd.f32 %v1131, %v1339
        %v1341 = vpop.f32.mrf.mxu0
        %1342 = vmatprep.mubr.bf16.mxu0 0
        %1343 = vmatmul.mubr.bf16.gmra.mxu0 %v872
        %v1344 = vpop.f32.mrf.mxu0
        %v1345 = vadd.f32 %v1136, %v1344
        %v1346 = vpop.f32.mrf.mxu0
        %v1347 = vpop.f32.mrf.mxu0
        %v1348 = vadd.f32 %v1139, %v1347
        %v1349 = vpop.f32.mrf.mxu0
        %1350 = vmatprep.mubr.bf16.mxu0 0
        %1351 = vmatmul.mubr.bf16.gmra.mxu0 %v873
        %v1352 = vpop.f32.mrf.mxu0
        %v1353 = vadd.f32 %v1144, %v1352
        %v1354 = vpop.f32.mrf.mxu0
        %v1355 = vpop.f32.mrf.mxu0
        %v1356 = vadd.f32 %v1147, %v1355
        %v1357 = vpop.f32.mrf.mxu0
        %1358 = vmatprep.mubr.bf16.mxu0 0
        %1359 = vmatmul.mubr.bf16.gmra.mxu0 %v874
        %v1360 = vpop.f32.mrf.mxu0
        %v1361 = vadd.f32 %v1152, %v1360
        %v1362 = vpop.f32.mrf.mxu0
        %v1363 = vpop.f32.mrf.mxu0
        %v1364 = vadd.f32 %v1155, %v1363
        %v1365 = vpop.f32.mrf.mxu0
        %1366 = vmatprep.mubr.bf16.mxu0 0
        %1367 = vmatmul.mubr.bf16.gmra.mxu0 %v875
        %v1368 = vpop.f32.mrf.mxu0
        %v1369 = vadd.f32 %v1160, %v1368
        %v1370 = vpop.f32.mrf.mxu0
        %v1371 = vpop.f32.mrf.mxu0
        %v1372 = vadd.f32 %v1163, %v1371
        %v1373 = vpop.f32.mrf.mxu0
        %1374 = vdwg.mxu0
        %v1375 = vld [vmem:[#allocation2 + $0x2] sm:$0xff]
        %v1376 = vld [vmem:[#allocation2 + $0xa] sm:$0xff]
        %v1377 = vld [vmem:[#allocation2 + $0x1a] sm:$0xff]
        %v1378 = vld [vmem:[#allocation2 + $0x22] sm:$0xff]
        %v1379 = vld [vmem:[#allocation2 + $0x32] sm:$0xff]
        %v1380 = vld [vmem:[#allocation2 + $0x3a] sm:$0xff]
        %v1381 = vld [vmem:[#allocation2 + $0x4a] sm:$0xff]
        %v1382 = vld [vmem:[#allocation2 + $0x52] sm:$0xff]
        %v1383 = vld [vmem:[#allocation2 + $0x62] sm:$0xff]
        %v1384 = vld [vmem:[#allocation2 + $0x6a] sm:$0xff]
        %v1385 = vld [vmem:[#allocation2 + $0x7a] sm:$0xff]
        %v1386 = vld [vmem:[#allocation2 + $0x82] sm:$0xff]
        %v1387 = vld [vmem:[#allocation2 + $0x92] sm:$0xff]
        %v1388 = vld [vmem:[#allocation2 + $0x9a] sm:$0xff]
        %v1389 = vld [vmem:[#allocation2 + $0xaa] sm:$0xff]
        %v1390 = vld [vmem:[#allocation2 + $0xb2] sm:$0xff]
        %v1391 = vld [vmem:[#allocation2 + $0xc2] sm:$0xff]
        %v1392 = vld [vmem:[#allocation2 + $0xca] sm:$0xff]
        %v1393 = vld [vmem:[#allocation2 + $0xda] sm:$0xff]
        %v1394 = vld [vmem:[#allocation2 + $0xe2] sm:$0xff]
        %v1395 = vld [vmem:[#allocation2 + $0xf2] sm:$0xff]
        %v1396 = vld [vmem:[#allocation2 + $0xfa] sm:$0xff]
        %v1397 = vld [vmem:[#allocation2 + $0x10a] sm:$0xff]
        %v1398 = vld [vmem:[#allocation2 + $0x112] sm:$0xff]
        %v1399 = vld [vmem:[#allocation2 + $0x122] sm:$0xff]
        %v1400 = vld [vmem:[#allocation2 + $0x12a] sm:$0xff]
        %v1401 = vld [vmem:[#allocation2 + $0x13a] sm:$0xff]
        %v1402 = vld [vmem:[#allocation2 + $0x142] sm:$0xff]
        %v1403 = vld [vmem:[#allocation2 + $0x152] sm:$0xff]
        %v1404 = vld [vmem:[#allocation2 + $0x15a] sm:$0xff]
        %v1405 = vld [vmem:[#allocation2 + $0x16a] sm:$0xff]
        %v1406 = vld [vmem:[#allocation2 + $0x172] sm:$0xff]
        %v1407 = vpack.c.bf16 %v1376, %v1375
        %v1408 = vpack.c.bf16 %v1378, %v1377
        %v1409 = vpack.c.bf16 %v1380, %v1379
        %v1410 = vpack.c.bf16 %v1382, %v1381
        %v1411 = vpack.c.bf16 %v1384, %v1383
        %v1412 = vpack.c.bf16 %v1386, %v1385
        %v1413 = vpack.c.bf16 %v1388, %v1387
        %v1414 = vpack.c.bf16 %v1390, %v1389
        %v1415 = vpack.c.bf16 %v1392, %v1391
        %v1416 = vpack.c.bf16 %v1394, %v1393
        %v1417 = vpack.c.bf16 %v1396, %v1395
        %v1418 = vpack.c.bf16 %v1398, %v1397
        %v1419 = vpack.c.bf16 %v1400, %v1399
        %v1420 = vpack.c.bf16 %v1402, %v1401
        %v1421 = vpack.c.bf16 %v1404, %v1403
        %v1422 = vpack.c.bf16 %v1406, %v1405
        %s1423 = scalar_lea.vmem [#allocation7], 128
        %v1424 = vld [vmem:[%s1423] sm:$0xf]
        %v1425 = vld [vmem:[%s1423 + $0x4] sm:$0xf]
        %v1426 = vld [vmem:[%s1423 + $0x8] sm:$0xf]
        %v1427 = vld [vmem:[%s1423 + $0xc] sm:$0xf]
        %v1428 = vld [vmem:[%s1423 + $0x10] sm:$0xf]
        %v1429 = vld [vmem:[%s1423 + $0x14] sm:$0xf]
        %v1430 = vld [vmem:[%s1423 + $0x18] sm:$0xf]
        %v1431 = vld [vmem:[%s1423 + $0x1c] sm:$0xf]
        %v1432 = vld [vmem:[%s1423 + $0x20] sm:$0xf]
        %v1433 = vld [vmem:[%s1423 + $0x24] sm:$0xf]
        %v1434 = vld [vmem:[%s1423 + $0x28] sm:$0xf]
        %v1435 = vld [vmem:[%s1423 + $0x2c] sm:$0xf]
        %v1436 = vld [vmem:[%s1423 + $0x30] sm:$0xf]
        %v1437 = vld [vmem:[%s1423 + $0x34] sm:$0xf]
        %v1438 = vld [vmem:[%s1423 + $0x38] sm:$0xf]
        %v1439 = vld [vmem:[%s1423 + $0x3c] sm:$0xf]
        %v1456 = vunpack.c.l.b16 %v1424
        %v1457 = vunpack.c.l.b16 %v1425
        %v1458 = vunpack.c.l.b16 %v1426
        %v1459 = vunpack.c.l.b16 %v1427
        %v1460 = vunpack.c.l.b16 %v1428
        %v1461 = vunpack.c.l.b16 %v1429
        %v1462 = vunpack.c.l.b16 %v1430
        %v1463 = vunpack.c.l.b16 %v1431
        %v1464 = vunpack.c.l.b16 %v1432
        %v1465 = vunpack.c.l.b16 %v1433
        %v1466 = vunpack.c.l.b16 %v1434
        %v1467 = vunpack.c.l.b16 %v1435
        %v1468 = vunpack.c.l.b16 %v1436
        %v1469 = vunpack.c.l.b16 %v1437
        %v1470 = vunpack.c.l.b16 %v1438
        %v1471 = vunpack.c.l.b16 %v1439
        %v1472 = vpack.c.b16 %v1457, %v1456
        %v1473 = vpack.c.b16 %v1459, %v1458
        %v1474 = vpack.c.b16 %v1461, %v1460
        %v1475 = vpack.c.b16 %v1463, %v1462
        %v1476 = vpack.c.b16 %v1465, %v1464
        %v1477 = vpack.c.b16 %v1467, %v1466
        %v1478 = vpack.c.b16 %v1469, %v1468
        %v1479 = vpack.c.b16 %v1471, %v1470
        %1488 = vmatprep.subr.bf16.mxu0 0
        %1489 = vmatpush1.bf16.msra.mxu0 %v1479
        %1490 = vmatprep.subr.bf16.mxu0 0
        %1491 = vmatpush1.bf16.msra.mxu0 %v1478
        %1492 = vmatprep.subr.bf16.mxu0 0
        %1493 = vmatpush1.bf16.msra.mxu0 %v1477
        %1494 = vmatprep.subr.bf16.mxu0 0
        %1495 = vmatpush1.bf16.msra.mxu0 %v1476
        %1496 = vmatprep.subr.bf16.mxu0 0
        %1497 = vmatpush1.bf16.msra.mxu0 %v1475
        %1498 = vmatprep.subr.bf16.mxu0 0
        %1499 = vmatpush1.bf16.msra.mxu0 %v1474
        %1500 = vmatprep.subr.bf16.mxu0 0
        %1501 = vmatpush1.bf16.msra.mxu0 %v1473
        %1502 = vmatprep.subr.bf16.mxu0 0
        %1503 = vmatpush1.bf16.msra.mxu0 %v1472
        %1504 = vmatprep.subr.bf16.mxu0 0
        %1505 = vmatpush2.bf16.msra.mxu0 0
        %1506 = vmatprep.subr.bf16.mxu0 0
        %1507 = vmatpush2.bf16.msra.mxu0 0
        %1508 = vmatprep.subr.bf16.mxu0 0
        %1509 = vmatpush2.bf16.msra.mxu0 0
        %1510 = vmatprep.subr.bf16.mxu0 0
        %1511 = vmatpush2.bf16.msra.mxu0 0
        %1512 = vmatprep.subr.bf16.mxu0 0
        %1513 = vmatpush2.bf16.msra.mxu0 0
        %1514 = vmatprep.subr.bf16.mxu0 0
        %1515 = vmatpush2.bf16.msra.mxu0 0
        %1516 = vmatprep.subr.bf16.mxu0 0
        %1517 = vmatpush2.bf16.msra.mxu0 0
        %1518 = vmatprep.subr.bf16.mxu0 0
        %1519 = vmatpush2.bf16.msra.mxu0 0
        %1520 = vmatprep.mubr.bf16.mxu0 0
        %1521 = vmatmul.mubr.bf16.gmra.mxu0 %v1407
        %v1522 = vpop.f32.mrf.mxu0
        %v1523 = vadd.f32 0.0, %v1522
        %v1524 = vpop.f32.mrf.mxu0
        %v1525 = vpop.f32.mrf.mxu0
        %v1526 = vadd.f32 0.0, %v1525
        %v1527 = vpop.f32.mrf.mxu0
        %1528 = vmatprep.mubr.bf16.mxu0 0
        %1529 = vmatmul.mubr.bf16.gmra.mxu0 %v1408
        %v1530 = vpop.f32.mrf.mxu0
        %v1531 = vadd.f32 0.0, %v1530
        %v1532 = vpop.f32.mrf.mxu0
        %v1533 = vpop.f32.mrf.mxu0
        %v1534 = vadd.f32 0.0, %v1533
        %v1535 = vpop.f32.mrf.mxu0
        %1536 = vmatprep.mubr.bf16.mxu0 0
        %1537 = vmatmul.mubr.bf16.gmra.mxu0 %v1409
        %v1538 = vpop.f32.mrf.mxu0
        %v1539 = vadd.f32 0.0, %v1538
        %v1540 = vpop.f32.mrf.mxu0
        %v1541 = vpop.f32.mrf.mxu0
        %v1542 = vadd.f32 0.0, %v1541
        %v1543 = vpop.f32.mrf.mxu0
        %1544 = vmatprep.mubr.bf16.mxu0 0
        %1545 = vmatmul.mubr.bf16.gmra.mxu0 %v1410
        %v1546 = vpop.f32.mrf.mxu0
        %v1547 = vadd.f32 0.0, %v1546
        %v1548 = vpop.f32.mrf.mxu0
        %v1549 = vpop.f32.mrf.mxu0
        %v1550 = vadd.f32 0.0, %v1549
        %v1551 = vpop.f32.mrf.mxu0
        %1552 = vmatprep.mubr.bf16.mxu0 0
        %1553 = vmatmul.mubr.bf16.gmra.mxu0 %v1411
        %v1554 = vpop.f32.mrf.mxu0
        %v1555 = vadd.f32 0.0, %v1554
        %v1556 = vpop.f32.mrf.mxu0
        %v1557 = vpop.f32.mrf.mxu0
        %v1558 = vadd.f32 0.0, %v1557
        %v1559 = vpop.f32.mrf.mxu0
        %1560 = vmatprep.mubr.bf16.mxu0 0
        %1561 = vmatmul.mubr.bf16.gmra.mxu0 %v1412
        %v1562 = vpop.f32.mrf.mxu0
        %v1563 = vadd.f32 0.0, %v1562
        %v1564 = vpop.f32.mrf.mxu0
        %v1565 = vpop.f32.mrf.mxu0
        %v1566 = vadd.f32 0.0, %v1565
        %v1567 = vpop.f32.mrf.mxu0
        %1568 = vmatprep.mubr.bf16.mxu0 0
        %1569 = vmatmul.mubr.bf16.gmra.mxu0 %v1413
        %v1570 = vpop.f32.mrf.mxu0
        %v1571 = vadd.f32 0.0, %v1570
        %v1572 = vpop.f32.mrf.mxu0
        %v1573 = vpop.f32.mrf.mxu0
        %v1574 = vadd.f32 0.0, %v1573
        %v1575 = vpop.f32.mrf.mxu0
        %1576 = vmatprep.mubr.bf16.mxu0 0
        %1577 = vmatmul.mubr.bf16.gmra.mxu0 %v1414
        %v1578 = vpop.f32.mrf.mxu0
        %v1579 = vadd.f32 0.0, %v1578
        %v1580 = vpop.f32.mrf.mxu0
        %v1581 = vpop.f32.mrf.mxu0
        %v1582 = vadd.f32 0.0, %v1581
        %v1583 = vpop.f32.mrf.mxu0
        %1584 = vmatprep.mubr.bf16.mxu0 0
        %1585 = vmatmul.mubr.bf16.gmra.mxu0 %v1415
        %v1586 = vpop.f32.mrf.mxu0
        %v1587 = vadd.f32 0.0, %v1586
        %v1588 = vpop.f32.mrf.mxu0
        %v1589 = vpop.f32.mrf.mxu0
        %v1590 = vadd.f32 0.0, %v1589
        %v1591 = vpop.f32.mrf.mxu0
        %1592 = vmatprep.mubr.bf16.mxu0 0
        %1593 = vmatmul.mubr.bf16.gmra.mxu0 %v1416
        %v1594 = vpop.f32.mrf.mxu0
        %v1595 = vadd.f32 0.0, %v1594
        %v1596 = vpop.f32.mrf.mxu0
        %v1597 = vpop.f32.mrf.mxu0
        %v1598 = vadd.f32 0.0, %v1597
        %v1599 = vpop.f32.mrf.mxu0
        %1600 = vmatprep.mubr.bf16.mxu0 0
        %1601 = vmatmul.mubr.bf16.gmra.mxu0 %v1417
        %v1602 = vpop.f32.mrf.mxu0
        %v1603 = vadd.f32 0.0, %v1602
        %v1604 = vpop.f32.mrf.mxu0
        %v1605 = vpop.f32.mrf.mxu0
        %v1606 = vadd.f32 0.0, %v1605
        %v1607 = vpop.f32.mrf.mxu0
        %1608 = vmatprep.mubr.bf16.mxu0 0
        %1609 = vmatmul.mubr.bf16.gmra.mxu0 %v1418
        %v1610 = vpop.f32.mrf.mxu0
        %v1611 = vadd.f32 0.0, %v1610
        %v1612 = vpop.f32.mrf.mxu0
        %v1613 = vpop.f32.mrf.mxu0
        %v1614 = vadd.f32 0.0, %v1613
        %v1615 = vpop.f32.mrf.mxu0
        %1616 = vmatprep.mubr.bf16.mxu0 0
        %1617 = vmatmul.mubr.bf16.gmra.mxu0 %v1419
        %v1618 = vpop.f32.mrf.mxu0
        %v1619 = vadd.f32 0.0, %v1618
        %v1620 = vpop.f32.mrf.mxu0
        %v1621 = vpop.f32.mrf.mxu0
        %v1622 = vadd.f32 0.0, %v1621
        %v1623 = vpop.f32.mrf.mxu0
        %1624 = vmatprep.mubr.bf16.mxu0 0
        %1625 = vmatmul.mubr.bf16.gmra.mxu0 %v1420
        %v1626 = vpop.f32.mrf.mxu0
        %v1627 = vadd.f32 0.0, %v1626
        %v1628 = vpop.f32.mrf.mxu0
        %v1629 = vpop.f32.mrf.mxu0
        %v1630 = vadd.f32 0.0, %v1629
        %v1631 = vpop.f32.mrf.mxu0
        %1632 = vmatprep.mubr.bf16.mxu0 0
        %1633 = vmatmul.mubr.bf16.gmra.mxu0 %v1421
        %v1634 = vpop.f32.mrf.mxu0
        %v1635 = vadd.f32 0.0, %v1634
        %v1636 = vpop.f32.mrf.mxu0
        %v1637 = vpop.f32.mrf.mxu0
        %v1638 = vadd.f32 0.0, %v1637
        %v1639 = vpop.f32.mrf.mxu0
        %1640 = vmatprep.mubr.bf16.mxu0 0
        %1641 = vmatmul.mubr.bf16.gmra.mxu0 %v1422
        %v1642 = vpop.f32.mrf.mxu0
        %v1643 = vadd.f32 0.0, %v1642
        %v1644 = vpop.f32.mrf.mxu0
        %v1645 = vpop.f32.mrf.mxu0
        %v1646 = vadd.f32 0.0, %v1645
        %v1647 = vpop.f32.mrf.mxu0
        %1648 = vdwg.mxu0
        %v1649 = vadd.f32 %v1249, %v1523
        %v1650 = vadd.f32 %v1252, %v1526
        %v1651 = vadd.f32 %v1257, %v1531
        %v1652 = vadd.f32 %v1260, %v1534
        %v1653 = vadd.f32 %v1265, %v1539
        %v1654 = vadd.f32 %v1268, %v1542
        %v1655 = vadd.f32 %v1273, %v1547
        %v1656 = vadd.f32 %v1276, %v1550
        %v1657 = vadd.f32 %v1281, %v1555
        %v1658 = vadd.f32 %v1284, %v1558
        %v1659 = vadd.f32 %v1289, %v1563
        %v1660 = vadd.f32 %v1292, %v1566
        %v1661 = vadd.f32 %v1297, %v1571
        %v1662 = vadd.f32 %v1300, %v1574
        %v1663 = vadd.f32 %v1305, %v1579
        %v1664 = vadd.f32 %v1308, %v1582
        %v1665 = vadd.f32 %v1313, %v1587
        %v1666 = vadd.f32 %v1316, %v1590
        %v1667 = vadd.f32 %v1321, %v1595
        %v1668 = vadd.f32 %v1324, %v1598
        %v1669 = vadd.f32 %v1329, %v1603
        %v1670 = vadd.f32 %v1332, %v1606
        %v1671 = vadd.f32 %v1337, %v1611
        %v1672 = vadd.f32 %v1340, %v1614
        %v1673 = vadd.f32 %v1345, %v1619
        %v1674 = vadd.f32 %v1348, %v1622
        %v1675 = vadd.f32 %v1353, %v1627
        %v1676 = vadd.f32 %v1356, %v1630
        %v1677 = vadd.f32 %v1361, %v1635
        %v1678 = vadd.f32 %v1364, %v1638
        %v1679 = vadd.f32 %v1369, %v1643
        %v1680 = vadd.f32 %v1372, %v1646
        %v1681 = vld [vmem:[%s795] sm:$0xff]
        %v1682 = vld [vmem:[%s795 + $0x8] sm:$0xff]
        %v1683 = vld [vmem:[%s795 + $0x18] sm:$0xff]
        %v1684 = vld [vmem:[%s795 + $0x20] sm:$0xff]
        %v1685 = vld [vmem:[%s795 + $0x30] sm:$0xff]
        %v1686 = vld [vmem:[%s795 + $0x38] sm:$0xff]
        %v1687 = vld [vmem:[%s795 + $0x48] sm:$0xff]
        %v1688 = vld [vmem:[%s795 + $0x50] sm:$0xff]
        %v1689 = vld [vmem:[%s795 + $0x60] sm:$0xff]
        %v1690 = vld [vmem:[%s795 + $0x68] sm:$0xff]
        %v1691 = vld [vmem:[%s795 + $0x78] sm:$0xff]
        %v1692 = vld [vmem:[%s795 + $0x80] sm:$0xff]
        %v1693 = vld [vmem:[%s795 + $0x90] sm:$0xff]
        %v1694 = vld [vmem:[%s795 + $0x98] sm:$0xff]
        %v1695 = vld [vmem:[%s795 + $0xa8] sm:$0xff]
        %v1696 = vld [vmem:[%s795 + $0xb0] sm:$0xff]
        %v1697 = vld [vmem:[%s795 + $0xc0] sm:$0xff]
        %v1698 = vld [vmem:[%s795 + $0xc8] sm:$0xff]
        %v1699 = vld [vmem:[%s795 + $0xd8] sm:$0xff]
        %v1700 = vld [vmem:[%s795 + $0xe0] sm:$0xff]
        %v1701 = vld [vmem:[%s795 + $0xf0] sm:$0xff]
        %v1702 = vld [vmem:[%s795 + $0xf8] sm:$0xff]
        %v1703 = vld [vmem:[%s795 + $0x108] sm:$0xff]
        %v1704 = vld [vmem:[%s795 + $0x110] sm:$0xff]
        %v1705 = vld [vmem:[%s795 + $0x120] sm:$0xff]
        %v1706 = vld [vmem:[%s795 + $0x128] sm:$0xff]
        %v1707 = vld [vmem:[%s795 + $0x138] sm:$0xff]
        %v1708 = vld [vmem:[%s795 + $0x140] sm:$0xff]
        %v1709 = vld [vmem:[%s795 + $0x150] sm:$0xff]
        %v1710 = vld [vmem:[%s795 + $0x158] sm:$0xff]
        %v1711 = vld [vmem:[%s795 + $0x168] sm:$0xff]
        %v1712 = vld [vmem:[%s795 + $0x170] sm:$0xff]
        %v1713 = vpack.c.bf16 %v1682, %v1681
        %v1714 = vpack.c.bf16 %v1684, %v1683
        %v1715 = vpack.c.bf16 %v1686, %v1685
        %v1716 = vpack.c.bf16 %v1688, %v1687
        %v1717 = vpack.c.bf16 %v1690, %v1689
        %v1718 = vpack.c.bf16 %v1692, %v1691
        %v1719 = vpack.c.bf16 %v1694, %v1693
        %v1720 = vpack.c.bf16 %v1696, %v1695
        %v1721 = vpack.c.bf16 %v1698, %v1697
        %v1722 = vpack.c.bf16 %v1700, %v1699
        %v1723 = vpack.c.bf16 %v1702, %v1701
        %v1724 = vpack.c.bf16 %v1704, %v1703
        %v1725 = vpack.c.bf16 %v1706, %v1705
        %v1726 = vpack.c.bf16 %v1708, %v1707
        %v1727 = vpack.c.bf16 %v1710, %v1709
        %v1728 = vpack.c.bf16 %v1712, %v1711
        %s1729 = scalar_lea.vmem [#allocation7], 192
        %v1730 = vld [vmem:[%s1729] sm:$0xf]
        %v1731 = vld [vmem:[%s1729 + $0x4] sm:$0xf]
        %v1732 = vld [vmem:[%s1729 + $0x8] sm:$0xf]
        %v1733 = vld [vmem:[%s1729 + $0xc] sm:$0xf]
        %v1734 = vld [vmem:[%s1729 + $0x10] sm:$0xf]
        %v1735 = vld [vmem:[%s1729 + $0x14] sm:$0xf]
        %v1736 = vld [vmem:[%s1729 + $0x18] sm:$0xf]
        %v1737 = vld [vmem:[%s1729 + $0x1c] sm:$0xf]
        %v1738 = vld [vmem:[%s1729 + $0x20] sm:$0xf]
        %v1739 = vld [vmem:[%s1729 + $0x24] sm:$0xf]
        %v1740 = vld [vmem:[%s1729 + $0x28] sm:$0xf]
        %v1741 = vld [vmem:[%s1729 + $0x2c] sm:$0xf]
        %v1742 = vld [vmem:[%s1729 + $0x30] sm:$0xf]
        %v1743 = vld [vmem:[%s1729 + $0x34] sm:$0xf]
        %v1744 = vld [vmem:[%s1729 + $0x38] sm:$0xf]
        %v1745 = vld [vmem:[%s1729 + $0x3c] sm:$0xf]
        %v1762 = vunpack.c.l.b16 %v1730
        %v1763 = vunpack.c.l.b16 %v1731
        %v1764 = vunpack.c.l.b16 %v1732
        %v1765 = vunpack.c.l.b16 %v1733
        %v1766 = vunpack.c.l.b16 %v1734
        %v1767 = vunpack.c.l.b16 %v1735
        %v1768 = vunpack.c.l.b16 %v1736
        %v1769 = vunpack.c.l.b16 %v1737
        %v1770 = vunpack.c.l.b16 %v1738
        %v1771 = vunpack.c.l.b16 %v1739
        %v1772 = vunpack.c.l.b16 %v1740
        %v1773 = vunpack.c.l.b16 %v1741
        %v1774 = vunpack.c.l.b16 %v1742
        %v1775 = vunpack.c.l.b16 %v1743
        %v1776 = vunpack.c.l.b16 %v1744
        %v1777 = vunpack.c.l.b16 %v1745
        %v1778 = vpack.c.b16 %v1763, %v1762
        %v1779 = vpack.c.b16 %v1765, %v1764
        %v1780 = vpack.c.b16 %v1767, %v1766
        %v1781 = vpack.c.b16 %v1769, %v1768
        %v1782 = vpack.c.b16 %v1771, %v1770
        %v1783 = vpack.c.b16 %v1773, %v1772
        %v1784 = vpack.c.b16 %v1775, %v1774
        %v1785 = vpack.c.b16 %v1777, %v1776
        %1794 = vmatprep.subr.bf16.mxu0 0
        %1795 = vmatpush1.bf16.msra.mxu0 %v1785
        %1796 = vmatprep.subr.bf16.mxu0 0
        %1797 = vmatpush1.bf16.msra.mxu0 %v1784
        %1798 = vmatprep.subr.bf16.mxu0 0
        %1799 = vmatpush1.bf16.msra.mxu0 %v1783
        %1800 = vmatprep.subr.bf16.mxu0 0
        %1801 = vmatpush1.bf16.msra.mxu0 %v1782
        %1802 = vmatprep.subr.bf16.mxu0 0
        %1803 = vmatpush1.bf16.msra.mxu0 %v1781
        %1804 = vmatprep.subr.bf16.mxu0 0
        %1805 = vmatpush1.bf16.msra.mxu0 %v1780
        %1806 = vmatprep.subr.bf16.mxu0 0
        %1807 = vmatpush1.bf16.msra.mxu0 %v1779
        %1808 = vmatprep.subr.bf16.mxu0 0
        %1809 = vmatpush1.bf16.msra.mxu0 %v1778
        %1810 = vmatprep.subr.bf16.mxu0 0
        %1811 = vmatpush2.bf16.msra.mxu0 0
        %1812 = vmatprep.subr.bf16.mxu0 0
        %1813 = vmatpush2.bf16.msra.mxu0 0
        %1814 = vmatprep.subr.bf16.mxu0 0
        %1815 = vmatpush2.bf16.msra.mxu0 0
        %1816 = vmatprep.subr.bf16.mxu0 0
        %1817 = vmatpush2.bf16.msra.mxu0 0
        %1818 = vmatprep.subr.bf16.mxu0 0
        %1819 = vmatpush2.bf16.msra.mxu0 0
        %1820 = vmatprep.subr.bf16.mxu0 0
        %1821 = vmatpush2.bf16.msra.mxu0 0
        %1822 = vmatprep.subr.bf16.mxu0 0
        %1823 = vmatpush2.bf16.msra.mxu0 0
        %1824 = vmatprep.subr.bf16.mxu0 0
        %1825 = vmatpush2.bf16.msra.mxu0 0
        %1826 = vmatprep.mubr.bf16.mxu0 0
        %1827 = vmatmul.mubr.bf16.gmra.mxu0 %v1713
        %v1828 = vpop.f32.mrf.mxu0
        %v1829 = vadd.f32 0.0, %v1828
        %v1830 = vpop.f32.mrf.mxu0
        %v1831 = vpop.f32.mrf.mxu0
        %v1832 = vadd.f32 0.0, %v1831
        %v1833 = vpop.f32.mrf.mxu0
        %1834 = vmatprep.mubr.bf16.mxu0 0
        %1835 = vmatmul.mubr.bf16.gmra.mxu0 %v1714
        %v1836 = vpop.f32.mrf.mxu0
        %v1837 = vadd.f32 0.0, %v1836
        %v1838 = vpop.f32.mrf.mxu0
        %v1839 = vpop.f32.mrf.mxu0
        %v1840 = vadd.f32 0.0, %v1839
        %v1841 = vpop.f32.mrf.mxu0
        %1842 = vmatprep.mubr.bf16.mxu0 0
        %1843 = vmatmul.mubr.bf16.gmra.mxu0 %v1715
        %v1844 = vpop.f32.mrf.mxu0
        %v1845 = vadd.f32 0.0, %v1844
        %v1846 = vpop.f32.mrf.mxu0
        %v1847 = vpop.f32.mrf.mxu0
        %v1848 = vadd.f32 0.0, %v1847
        %v1849 = vpop.f32.mrf.mxu0
        %1850 = vmatprep.mubr.bf16.mxu0 0
        %1851 = vmatmul.mubr.bf16.gmra.mxu0 %v1716
        %v1852 = vpop.f32.mrf.mxu0
        %v1853 = vadd.f32 0.0, %v1852
        %v1854 = vpop.f32.mrf.mxu0
        %v1855 = vpop.f32.mrf.mxu0
        %v1856 = vadd.f32 0.0, %v1855
        %v1857 = vpop.f32.mrf.mxu0
        %1858 = vmatprep.mubr.bf16.mxu0 0
        %1859 = vmatmul.mubr.bf16.gmra.mxu0 %v1717
        %v1860 = vpop.f32.mrf.mxu0
        %v1861 = vadd.f32 0.0, %v1860
        %v1862 = vpop.f32.mrf.mxu0
        %v1863 = vpop.f32.mrf.mxu0
        %v1864 = vadd.f32 0.0, %v1863
        %v1865 = vpop.f32.mrf.mxu0
        %1866 = vmatprep.mubr.bf16.mxu0 0
        %1867 = vmatmul.mubr.bf16.gmra.mxu0 %v1718
        %v1868 = vpop.f32.mrf.mxu0
        %v1869 = vadd.f32 0.0, %v1868
        %v1870 = vpop.f32.mrf.mxu0
        %v1871 = vpop.f32.mrf.mxu0
        %v1872 = vadd.f32 0.0, %v1871
        %v1873 = vpop.f32.mrf.mxu0
        %1874 = vmatprep.mubr.bf16.mxu0 0
        %1875 = vmatmul.mubr.bf16.gmra.mxu0 %v1719
        %v1876 = vpop.f32.mrf.mxu0
        %v1877 = vadd.f32 0.0, %v1876
        %v1878 = vpop.f32.mrf.mxu0
        %v1879 = vpop.f32.mrf.mxu0
        %v1880 = vadd.f32 0.0, %v1879
        %v1881 = vpop.f32.mrf.mxu0
        %1882 = vmatprep.mubr.bf16.mxu0 0
        %1883 = vmatmul.mubr.bf16.gmra.mxu0 %v1720
        %v1884 = vpop.f32.mrf.mxu0
        %v1885 = vadd.f32 0.0, %v1884
        %v1886 = vpop.f32.mrf.mxu0
        %v1887 = vpop.f32.mrf.mxu0
        %v1888 = vadd.f32 0.0, %v1887
        %v1889 = vpop.f32.mrf.mxu0
        %1890 = vmatprep.mubr.bf16.mxu0 0
        %1891 = vmatmul.mubr.bf16.gmra.mxu0 %v1721
        %v1892 = vpop.f32.mrf.mxu0
        %v1893 = vadd.f32 0.0, %v1892
        %v1894 = vpop.f32.mrf.mxu0
        %v1895 = vpop.f32.mrf.mxu0
        %v1896 = vadd.f32 0.0, %v1895
        %v1897 = vpop.f32.mrf.mxu0
        %1898 = vmatprep.mubr.bf16.mxu0 0
        %1899 = vmatmul.mubr.bf16.gmra.mxu0 %v1722
        %v1900 = vpop.f32.mrf.mxu0
        %v1901 = vadd.f32 0.0, %v1900
        %v1902 = vpop.f32.mrf.mxu0
        %v1903 = vpop.f32.mrf.mxu0
        %v1904 = vadd.f32 0.0, %v1903
        %v1905 = vpop.f32.mrf.mxu0
        %1906 = vmatprep.mubr.bf16.mxu0 0
        %1907 = vmatmul.mubr.bf16.gmra.mxu0 %v1723
        %v1908 = vpop.f32.mrf.mxu0
        %v1909 = vadd.f32 0.0, %v1908
        %v1910 = vpop.f32.mrf.mxu0
        %v1911 = vpop.f32.mrf.mxu0
        %v1912 = vadd.f32 0.0, %v1911
        %v1913 = vpop.f32.mrf.mxu0
        %1914 = vmatprep.mubr.bf16.mxu0 0
        %1915 = vmatmul.mubr.bf16.gmra.mxu0 %v1724
        %v1916 = vpop.f32.mrf.mxu0
        %v1917 = vadd.f32 0.0, %v1916
        %v1918 = vpop.f32.mrf.mxu0
        %v1919 = vpop.f32.mrf.mxu0
        %v1920 = vadd.f32 0.0, %v1919
        %v1921 = vpop.f32.mrf.mxu0
        %1922 = vmatprep.mubr.bf16.mxu0 0
        %1923 = vmatmul.mubr.bf16.gmra.mxu0 %v1725
        %v1924 = vpop.f32.mrf.mxu0
        %v1925 = vadd.f32 0.0, %v1924
        %v1926 = vpop.f32.mrf.mxu0
        %v1927 = vpop.f32.mrf.mxu0
        %v1928 = vadd.f32 0.0, %v1927
        %v1929 = vpop.f32.mrf.mxu0
        %1930 = vmatprep.mubr.bf16.mxu0 0
        %1931 = vmatmul.mubr.bf16.gmra.mxu0 %v1726
        %v1932 = vpop.f32.mrf.mxu0
        %v1933 = vadd.f32 0.0, %v1932
        %v1934 = vpop.f32.mrf.mxu0
        %v1935 = vpop.f32.mrf.mxu0
        %v1936 = vadd.f32 0.0, %v1935
        %v1937 = vpop.f32.mrf.mxu0
        %1938 = vmatprep.mubr.bf16.mxu0 0
        %1939 = vmatmul.mubr.bf16.gmra.mxu0 %v1727
        %v1940 = vpop.f32.mrf.mxu0
        %v1941 = vadd.f32 0.0, %v1940
        %v1942 = vpop.f32.mrf.mxu0
        %v1943 = vpop.f32.mrf.mxu0
        %v1944 = vadd.f32 0.0, %v1943
        %v1945 = vpop.f32.mrf.mxu0
        %1946 = vmatprep.mubr.bf16.mxu0 0
        %1947 = vmatmul.mubr.bf16.gmra.mxu0 %v1728
        %v1948 = vpop.f32.mrf.mxu0
        %v1949 = vadd.f32 0.0, %v1948
        %v1950 = vpop.f32.mrf.mxu0
        %v1951 = vpop.f32.mrf.mxu0
        %v1952 = vadd.f32 0.0, %v1951
        %v1953 = vpop.f32.mrf.mxu0
        %1954 = vdwg.mxu0
        %v1955 = vadd.f32 %v1649, %v1829
        %v1956 = vadd.f32 %v1650, %v1832
        %v1957 = vadd.f32 %v1651, %v1837
        %v1958 = vadd.f32 %v1652, %v1840
        %v1959 = vadd.f32 %v1653, %v1845
        %v1960 = vadd.f32 %v1654, %v1848
        %v1961 = vadd.f32 %v1655, %v1853
        %v1962 = vadd.f32 %v1656, %v1856
        %v1963 = vadd.f32 %v1657, %v1861
        %v1964 = vadd.f32 %v1658, %v1864
        %v1965 = vadd.f32 %v1659, %v1869
        %v1966 = vadd.f32 %v1660, %v1872
        %v1967 = vadd.f32 %v1661, %v1877
        %v1968 = vadd.f32 %v1662, %v1880
        %v1969 = vadd.f32 %v1663, %v1885
        %v1970 = vadd.f32 %v1664, %v1888
        %v1971 = vadd.f32 %v1665, %v1893
        %v1972 = vadd.f32 %v1666, %v1896
        %v1973 = vadd.f32 %v1667, %v1901
        %v1974 = vadd.f32 %v1668, %v1904
        %v1975 = vadd.f32 %v1669, %v1909
        %v1976 = vadd.f32 %v1670, %v1912
        %v1977 = vadd.f32 %v1671, %v1917
        %v1978 = vadd.f32 %v1672, %v1920
        %v1979 = vadd.f32 %v1673, %v1925
        %v1980 = vadd.f32 %v1674, %v1928
        %v1981 = vadd.f32 %v1675, %v1933
        %v1982 = vadd.f32 %v1676, %v1936
        %v1983 = vadd.f32 %v1677, %v1941
        %v1984 = vadd.f32 %v1678, %v1944
        %v1985 = vadd.f32 %v1679, %v1949
        %v1986 = vadd.f32 %v1680, %v1952
        %v1987 = vld [vmem:[%s795 + $0x1] sm:$0xff]
        %v1988 = vld [vmem:[%s795 + $0x9] sm:$0xff]
        %v1989 = vld [vmem:[%s795 + $0x19] sm:$0xff]
        %v1990 = vld [vmem:[%s795 + $0x21] sm:$0xff]
        %v1991 = vld [vmem:[%s795 + $0x31] sm:$0xff]
        %v1992 = vld [vmem:[%s795 + $0x39] sm:$0xff]
        %v1993 = vld [vmem:[%s795 + $0x49] sm:$0xff]
        %v1994 = vld [vmem:[%s795 + $0x51] sm:$0xff]
        %v1995 = vld [vmem:[%s795 + $0x61] sm:$0xff]
        %v1996 = vld [vmem:[%s795 + $0x69] sm:$0xff]
        %v1997 = vld [vmem:[%s795 + $0x79] sm:$0xff]
        %v1998 = vld [vmem:[%s795 + $0x81] sm:$0xff]
        %v1999 = vld [vmem:[%s795 + $0x91] sm:$0xff]
        %v2000 = vld [vmem:[%s795 + $0x99] sm:$0xff]
        %v2001 = vld [vmem:[%s795 + $0xa9] sm:$0xff]
        %v2002 = vld [vmem:[%s795 + $0xb1] sm:$0xff]
        %v2003 = vld [vmem:[%s795 + $0xc1] sm:$0xff]
        %v2004 = vld [vmem:[%s795 + $0xc9] sm:$0xff]
        %v2005 = vld [vmem:[%s795 + $0xd9] sm:$0xff]
        %v2006 = vld [vmem:[%s795 + $0xe1] sm:$0xff]
        %v2007 = vld [vmem:[%s795 + $0xf1] sm:$0xff]
        %v2008 = vld [vmem:[%s795 + $0xf9] sm:$0xff]
        %v2009 = vld [vmem:[%s795 + $0x109] sm:$0xff]
        %v2010 = vld [vmem:[%s795 + $0x111] sm:$0xff]
        %v2011 = vld [vmem:[%s795 + $0x121] sm:$0xff]
        %v2012 = vld [vmem:[%s795 + $0x129] sm:$0xff]
        %v2013 = vld [vmem:[%s795 + $0x139] sm:$0xff]
        %v2014 = vld [vmem:[%s795 + $0x141] sm:$0xff]
        %v2015 = vld [vmem:[%s795 + $0x151] sm:$0xff]
        %v2016 = vld [vmem:[%s795 + $0x159] sm:$0xff]
        %v2017 = vld [vmem:[%s795 + $0x169] sm:$0xff]
        %v2018 = vld [vmem:[%s795 + $0x171] sm:$0xff]
        %v2019 = vpack.c.bf16 %v1988, %v1987
        %v2020 = vpack.c.bf16 %v1990, %v1989
        %v2021 = vpack.c.bf16 %v1992, %v1991
        %v2022 = vpack.c.bf16 %v1994, %v1993
        %v2023 = vpack.c.bf16 %v1996, %v1995
        %v2024 = vpack.c.bf16 %v1998, %v1997
        %v2025 = vpack.c.bf16 %v2000, %v1999
        %v2026 = vpack.c.bf16 %v2002, %v2001
        %v2027 = vpack.c.bf16 %v2004, %v2003
        %v2028 = vpack.c.bf16 %v2006, %v2005
        %v2029 = vpack.c.bf16 %v2008, %v2007
        %v2030 = vpack.c.bf16 %v2010, %v2009
        %v2031 = vpack.c.bf16 %v2012, %v2011
        %v2032 = vpack.c.bf16 %v2014, %v2013
        %v2033 = vpack.c.bf16 %v2016, %v2015
        %v2034 = vpack.c.bf16 %v2018, %v2017
        %s2035 = scalar_lea.vmem [#allocation7], 256
        %v2036 = vld [vmem:[%s2035] sm:$0xf]
        %v2037 = vld [vmem:[%s2035 + $0x4] sm:$0xf]
        %v2038 = vld [vmem:[%s2035 + $0x8] sm:$0xf]
        %v2039 = vld [vmem:[%s2035 + $0xc] sm:$0xf]
        %v2040 = vld [vmem:[%s2035 + $0x10] sm:$0xf]
        %v2041 = vld [vmem:[%s2035 + $0x14] sm:$0xf]
        %v2042 = vld [vmem:[%s2035 + $0x18] sm:$0xf]
        %v2043 = vld [vmem:[%s2035 + $0x1c] sm:$0xf]
        %v2044 = vld [vmem:[%s2035 + $0x20] sm:$0xf]
        %v2045 = vld [vmem:[%s2035 + $0x24] sm:$0xf]
        %v2046 = vld [vmem:[%s2035 + $0x28] sm:$0xf]
        %v2047 = vld [vmem:[%s2035 + $0x2c] sm:$0xf]
        %v2048 = vld [vmem:[%s2035 + $0x30] sm:$0xf]
        %v2049 = vld [vmem:[%s2035 + $0x34] sm:$0xf]
        %v2050 = vld [vmem:[%s2035 + $0x38] sm:$0xf]
        %v2051 = vld [vmem:[%s2035 + $0x3c] sm:$0xf]
        %v2068 = vunpack.c.l.b16 %v2036
        %v2069 = vunpack.c.l.b16 %v2037
        %v2070 = vunpack.c.l.b16 %v2038
        %v2071 = vunpack.c.l.b16 %v2039
        %v2072 = vunpack.c.l.b16 %v2040
        %v2073 = vunpack.c.l.b16 %v2041
        %v2074 = vunpack.c.l.b16 %v2042
        %v2075 = vunpack.c.l.b16 %v2043
        %v2076 = vunpack.c.l.b16 %v2044
        %v2077 = vunpack.c.l.b16 %v2045
        %v2078 = vunpack.c.l.b16 %v2046
        %v2079 = vunpack.c.l.b16 %v2047
        %v2080 = vunpack.c.l.b16 %v2048
        %v2081 = vunpack.c.l.b16 %v2049
        %v2082 = vunpack.c.l.b16 %v2050
        %v2083 = vunpack.c.l.b16 %v2051
        %v2084 = vpack.c.b16 %v2069, %v2068
        %v2085 = vpack.c.b16 %v2071, %v2070
        %v2086 = vpack.c.b16 %v2073, %v2072
        %v2087 = vpack.c.b16 %v2075, %v2074
        %v2088 = vpack.c.b16 %v2077, %v2076
        %v2089 = vpack.c.b16 %v2079, %v2078
        %v2090 = vpack.c.b16 %v2081, %v2080
        %v2091 = vpack.c.b16 %v2083, %v2082
        %2100 = vmatprep.subr.bf16.mxu0 0
        %2101 = vmatpush1.bf16.msra.mxu0 %v2091
        %2102 = vmatprep.subr.bf16.mxu0 0
        %2103 = vmatpush1.bf16.msra.mxu0 %v2090
        %2104 = vmatprep.subr.bf16.mxu0 0
        %2105 = vmatpush1.bf16.msra.mxu0 %v2089
        %2106 = vmatprep.subr.bf16.mxu0 0
        %2107 = vmatpush1.bf16.msra.mxu0 %v2088
        %2108 = vmatprep.subr.bf16.mxu0 0
        %2109 = vmatpush1.bf16.msra.mxu0 %v2087
        %2110 = vmatprep.subr.bf16.mxu0 0
        %2111 = vmatpush1.bf16.msra.mxu0 %v2086
        %2112 = vmatprep.subr.bf16.mxu0 0
        %2113 = vmatpush1.bf16.msra.mxu0 %v2085
        %2114 = vmatprep.subr.bf16.mxu0 0
        %2115 = vmatpush1.bf16.msra.mxu0 %v2084
        %2116 = vmatprep.subr.bf16.mxu0 0
        %2117 = vmatpush2.bf16.msra.mxu0 0
        %2118 = vmatprep.subr.bf16.mxu0 0
        %2119 = vmatpush2.bf16.msra.mxu0 0
        %2120 = vmatprep.subr.bf16.mxu0 0
        %2121 = vmatpush2.bf16.msra.mxu0 0
        %2122 = vmatprep.subr.bf16.mxu0 0
        %2123 = vmatpush2.bf16.msra.mxu0 0
        %2124 = vmatprep.subr.bf16.mxu0 0
        %2125 = vmatpush2.bf16.msra.mxu0 0
        %2126 = vmatprep.subr.bf16.mxu0 0
        %2127 = vmatpush2.bf16.msra.mxu0 0
        %2128 = vmatprep.subr.bf16.mxu0 0
        %2129 = vmatpush2.bf16.msra.mxu0 0
        %2130 = vmatprep.subr.bf16.mxu0 0
        %2131 = vmatpush2.bf16.msra.mxu0 0
        %2132 = vmatprep.mubr.bf16.mxu0 0
        %2133 = vmatmul.mubr.bf16.gmra.mxu0 %v2019
        %v2134 = vpop.f32.mrf.mxu0
        %v2135 = vadd.f32 0.0, %v2134
        %v2136 = vpop.f32.mrf.mxu0
        %v2137 = vpop.f32.mrf.mxu0
        %v2138 = vadd.f32 0.0, %v2137
        %v2139 = vpop.f32.mrf.mxu0
        %2140 = vmatprep.mubr.bf16.mxu0 0
        %2141 = vmatmul.mubr.bf16.gmra.mxu0 %v2020
        %v2142 = vpop.f32.mrf.mxu0
        %v2143 = vadd.f32 0.0, %v2142
        %v2144 = vpop.f32.mrf.mxu0
        %v2145 = vpop.f32.mrf.mxu0
        %v2146 = vadd.f32 0.0, %v2145
        %v2147 = vpop.f32.mrf.mxu0
        %2148 = vmatprep.mubr.bf16.mxu0 0
        %2149 = vmatmul.mubr.bf16.gmra.mxu0 %v2021
        %v2150 = vpop.f32.mrf.mxu0
        %v2151 = vadd.f32 0.0, %v2150
        %v2152 = vpop.f32.mrf.mxu0
        %v2153 = vpop.f32.mrf.mxu0
        %v2154 = vadd.f32 0.0, %v2153
        %v2155 = vpop.f32.mrf.mxu0
        %2156 = vmatprep.mubr.bf16.mxu0 0
        %2157 = vmatmul.mubr.bf16.gmra.mxu0 %v2022
        %v2158 = vpop.f32.mrf.mxu0
        %v2159 = vadd.f32 0.0, %v2158
        %v2160 = vpop.f32.mrf.mxu0
        %v2161 = vpop.f32.mrf.mxu0
        %v2162 = vadd.f32 0.0, %v2161
        %v2163 = vpop.f32.mrf.mxu0
        %2164 = vmatprep.mubr.bf16.mxu0 0
        %2165 = vmatmul.mubr.bf16.gmra.mxu0 %v2023
        %v2166 = vpop.f32.mrf.mxu0
        %v2167 = vadd.f32 0.0, %v2166
        %v2168 = vpop.f32.mrf.mxu0
        %v2169 = vpop.f32.mrf.mxu0
        %v2170 = vadd.f32 0.0, %v2169
        %v2171 = vpop.f32.mrf.mxu0
        %2172 = vmatprep.mubr.bf16.mxu0 0
        %2173 = vmatmul.mubr.bf16.gmra.mxu0 %v2024
        %v2174 = vpop.f32.mrf.mxu0
        %v2175 = vadd.f32 0.0, %v2174
        %v2176 = vpop.f32.mrf.mxu0
        %v2177 = vpop.f32.mrf.mxu0
        %v2178 = vadd.f32 0.0, %v2177
        %v2179 = vpop.f32.mrf.mxu0
        %2180 = vmatprep.mubr.bf16.mxu0 0
        %2181 = vmatmul.mubr.bf16.gmra.mxu0 %v2025
        %v2182 = vpop.f32.mrf.mxu0
        %v2183 = vadd.f32 0.0, %v2182
        %v2184 = vpop.f32.mrf.mxu0
        %v2185 = vpop.f32.mrf.mxu0
        %v2186 = vadd.f32 0.0, %v2185
        %v2187 = vpop.f32.mrf.mxu0
        %2188 = vmatprep.mubr.bf16.mxu0 0
        %2189 = vmatmul.mubr.bf16.gmra.mxu0 %v2026
        %v2190 = vpop.f32.mrf.mxu0
        %v2191 = vadd.f32 0.0, %v2190
        %v2192 = vpop.f32.mrf.mxu0
        %v2193 = vpop.f32.mrf.mxu0
        %v2194 = vadd.f32 0.0, %v2193
        %v2195 = vpop.f32.mrf.mxu0
        %2196 = vmatprep.mubr.bf16.mxu0 0
        %2197 = vmatmul.mubr.bf16.gmra.mxu0 %v2027
        %v2198 = vpop.f32.mrf.mxu0
        %v2199 = vadd.f32 0.0, %v2198
        %v2200 = vpop.f32.mrf.mxu0
        %v2201 = vpop.f32.mrf.mxu0
        %v2202 = vadd.f32 0.0, %v2201
        %v2203 = vpop.f32.mrf.mxu0
        %2204 = vmatprep.mubr.bf16.mxu0 0
        %2205 = vmatmul.mubr.bf16.gmra.mxu0 %v2028
        %v2206 = vpop.f32.mrf.mxu0
        %v2207 = vadd.f32 0.0, %v2206
        %v2208 = vpop.f32.mrf.mxu0
        %v2209 = vpop.f32.mrf.mxu0
        %v2210 = vadd.f32 0.0, %v2209
        %v2211 = vpop.f32.mrf.mxu0
        %2212 = vmatprep.mubr.bf16.mxu0 0
        %2213 = vmatmul.mubr.bf16.gmra.mxu0 %v2029
        %v2214 = vpop.f32.mrf.mxu0
        %v2215 = vadd.f32 0.0, %v2214
        %v2216 = vpop.f32.mrf.mxu0
        %v2217 = vpop.f32.mrf.mxu0
        %v2218 = vadd.f32 0.0, %v2217
        %v2219 = vpop.f32.mrf.mxu0
        %2220 = vmatprep.mubr.bf16.mxu0 0
        %2221 = vmatmul.mubr.bf16.gmra.mxu0 %v2030
        %v2222 = vpop.f32.mrf.mxu0
        %v2223 = vadd.f32 0.0, %v2222
        %v2224 = vpop.f32.mrf.mxu0
        %v2225 = vpop.f32.mrf.mxu0
        %v2226 = vadd.f32 0.0, %v2225
        %v2227 = vpop.f32.mrf.mxu0
        %2228 = vmatprep.mubr.bf16.mxu0 0
        %2229 = vmatmul.mubr.bf16.gmra.mxu0 %v2031
        %v2230 = vpop.f32.mrf.mxu0
        %v2231 = vadd.f32 0.0, %v2230
        %v2232 = vpop.f32.mrf.mxu0
        %v2233 = vpop.f32.mrf.mxu0
        %v2234 = vadd.f32 0.0, %v2233
        %v2235 = vpop.f32.mrf.mxu0
        %2236 = vmatprep.mubr.bf16.mxu0 0
        %2237 = vmatmul.mubr.bf16.gmra.mxu0 %v2032
        %v2238 = vpop.f32.mrf.mxu0
        %v2239 = vadd.f32 0.0, %v2238
        %v2240 = vpop.f32.mrf.mxu0
        %v2241 = vpop.f32.mrf.mxu0
        %v2242 = vadd.f32 0.0, %v2241
        %v2243 = vpop.f32.mrf.mxu0
        %2244 = vmatprep.mubr.bf16.mxu0 0
        %2245 = vmatmul.mubr.bf16.gmra.mxu0 %v2033
        %v2246 = vpop.f32.mrf.mxu0
        %v2247 = vadd.f32 0.0, %v2246
        %v2248 = vpop.f32.mrf.mxu0
        %v2249 = vpop.f32.mrf.mxu0
        %v2250 = vadd.f32 0.0, %v2249
        %v2251 = vpop.f32.mrf.mxu0
        %2252 = vmatprep.mubr.bf16.mxu0 0
        %2253 = vmatmul.mubr.bf16.gmra.mxu0 %v2034
        %v2254 = vpop.f32.mrf.mxu0
        %v2255 = vadd.f32 0.0, %v2254
        %v2256 = vpop.f32.mrf.mxu0
        %v2257 = vpop.f32.mrf.mxu0
        %v2258 = vadd.f32 0.0, %v2257
        %v2259 = vpop.f32.mrf.mxu0
        %2260 = vdwg.mxu0
        %v2261 = vadd.f32 %v1955, %v2135
        %v2262 = vadd.f32 %v1956, %v2138
        %v2263 = vadd.f32 %v1957, %v2143
        %v2264 = vadd.f32 %v1958, %v2146
        %v2265 = vadd.f32 %v1959, %v2151
        %v2266 = vadd.f32 %v1960, %v2154
        %v2267 = vadd.f32 %v1961, %v2159
        %v2268 = vadd.f32 %v1962, %v2162
        %v2269 = vadd.f32 %v1963, %v2167
        %v2270 = vadd.f32 %v1964, %v2170
        %v2271 = vadd.f32 %v1965, %v2175
        %v2272 = vadd.f32 %v1966, %v2178
        %v2273 = vadd.f32 %v1967, %v2183
        %v2274 = vadd.f32 %v1968, %v2186
        %v2275 = vadd.f32 %v1969, %v2191
        %v2276 = vadd.f32 %v1970, %v2194
        %v2277 = vadd.f32 %v1971, %v2199
        %v2278 = vadd.f32 %v1972, %v2202
        %v2279 = vadd.f32 %v1973, %v2207
        %v2280 = vadd.f32 %v1974, %v2210
        %v2281 = vadd.f32 %v1975, %v2215
        %v2282 = vadd.f32 %v1976, %v2218
        %v2283 = vadd.f32 %v1977, %v2223
        %v2284 = vadd.f32 %v1978, %v2226
        %v2285 = vadd.f32 %v1979, %v2231
        %v2286 = vadd.f32 %v1980, %v2234
        %v2287 = vadd.f32 %v1981, %v2239
        %v2288 = vadd.f32 %v1982, %v2242
        %v2289 = vadd.f32 %v1983, %v2247
        %v2290 = vadd.f32 %v1984, %v2250
        %v2291 = vadd.f32 %v1985, %v2255
        %v2292 = vadd.f32 %v1986, %v2258
        %v2293 = vld [vmem:[%s795 + $0x2] sm:$0xff]
        %v2294 = vld [vmem:[%s795 + $0xa] sm:$0xff]
        %v2295 = vld [vmem:[%s795 + $0x1a] sm:$0xff]
        %v2296 = vld [vmem:[%s795 + $0x22] sm:$0xff]
        %v2297 = vld [vmem:[%s795 + $0x32] sm:$0xff]
        %v2298 = vld [vmem:[%s795 + $0x3a] sm:$0xff]
        %v2299 = vld [vmem:[%s795 + $0x4a] sm:$0xff]
        %v2300 = vld [vmem:[%s795 + $0x52] sm:$0xff]
        %v2301 = vld [vmem:[%s795 + $0x62] sm:$0xff]
        %v2302 = vld [vmem:[%s795 + $0x6a] sm:$0xff]
        %v2303 = vld [vmem:[%s795 + $0x7a] sm:$0xff]
        %v2304 = vld [vmem:[%s795 + $0x82] sm:$0xff]
        %v2305 = vld [vmem:[%s795 + $0x92] sm:$0xff]
        %v2306 = vld [vmem:[%s795 + $0x9a] sm:$0xff]
        %v2307 = vld [vmem:[%s795 + $0xaa] sm:$0xff]
        %v2308 = vld [vmem:[%s795 + $0xb2] sm:$0xff]
        %v2309 = vld [vmem:[%s795 + $0xc2] sm:$0xff]
        %v2310 = vld [vmem:[%s795 + $0xca] sm:$0xff]
        %v2311 = vld [vmem:[%s795 + $0xda] sm:$0xff]
        %v2312 = vld [vmem:[%s795 + $0xe2] sm:$0xff]
        %v2313 = vld [vmem:[%s795 + $0xf2] sm:$0xff]
        %v2314 = vld [vmem:[%s795 + $0xfa] sm:$0xff]
        %v2315 = vld [vmem:[%s795 + $0x10a] sm:$0xff]
        %v2316 = vld [vmem:[%s795 + $0x112] sm:$0xff]
        %v2317 = vld [vmem:[%s795 + $0x122] sm:$0xff]
        %v2318 = vld [vmem:[%s795 + $0x12a] sm:$0xff]
        %v2319 = vld [vmem:[%s795 + $0x13a] sm:$0xff]
        %v2320 = vld [vmem:[%s795 + $0x142] sm:$0xff]
        %v2321 = vld [vmem:[%s795 + $0x152] sm:$0xff]
        %v2322 = vld [vmem:[%s795 + $0x15a] sm:$0xff]
        %v2323 = vld [vmem:[%s795 + $0x16a] sm:$0xff]
        %v2324 = vld [vmem:[%s795 + $0x172] sm:$0xff]
        %v2325 = vpack.c.bf16 %v2294, %v2293
        %v2326 = vpack.c.bf16 %v2296, %v2295
        %v2327 = vpack.c.bf16 %v2298, %v2297
        %v2328 = vpack.c.bf16 %v2300, %v2299
        %v2329 = vpack.c.bf16 %v2302, %v2301
        %v2330 = vpack.c.bf16 %v2304, %v2303
        %v2331 = vpack.c.bf16 %v2306, %v2305
        %v2332 = vpack.c.bf16 %v2308, %v2307
        %v2333 = vpack.c.bf16 %v2310, %v2309
        %v2334 = vpack.c.bf16 %v2312, %v2311
        %v2335 = vpack.c.bf16 %v2314, %v2313
        %v2336 = vpack.c.bf16 %v2316, %v2315
        %v2337 = vpack.c.bf16 %v2318, %v2317
        %v2338 = vpack.c.bf16 %v2320, %v2319
        %v2339 = vpack.c.bf16 %v2322, %v2321
        %v2340 = vpack.c.bf16 %v2324, %v2323
        %s2341 = scalar_lea.vmem [#allocation7], 320
        %v2342 = vld [vmem:[%s2341] sm:$0xf]
        %v2343 = vld [vmem:[%s2341 + $0x4] sm:$0xf]
        %v2344 = vld [vmem:[%s2341 + $0x8] sm:$0xf]
        %v2345 = vld [vmem:[%s2341 + $0xc] sm:$0xf]
        %v2346 = vld [vmem:[%s2341 + $0x10] sm:$0xf]
        %v2347 = vld [vmem:[%s2341 + $0x14] sm:$0xf]
        %v2348 = vld [vmem:[%s2341 + $0x18] sm:$0xf]
        %v2349 = vld [vmem:[%s2341 + $0x1c] sm:$0xf]
        %v2350 = vld [vmem:[%s2341 + $0x20] sm:$0xf]
        %v2351 = vld [vmem:[%s2341 + $0x24] sm:$0xf]
        %v2352 = vld [vmem:[%s2341 + $0x28] sm:$0xf]
        %v2353 = vld [vmem:[%s2341 + $0x2c] sm:$0xf]
        %v2354 = vld [vmem:[%s2341 + $0x30] sm:$0xf]
        %v2355 = vld [vmem:[%s2341 + $0x34] sm:$0xf]
        %v2356 = vld [vmem:[%s2341 + $0x38] sm:$0xf]
        %v2357 = vld [vmem:[%s2341 + $0x3c] sm:$0xf]
        %v2374 = vunpack.c.l.b16 %v2342
        %v2375 = vunpack.c.l.b16 %v2343
        %v2376 = vunpack.c.l.b16 %v2344
        %v2377 = vunpack.c.l.b16 %v2345
        %v2378 = vunpack.c.l.b16 %v2346
        %v2379 = vunpack.c.l.b16 %v2347
        %v2380 = vunpack.c.l.b16 %v2348
        %v2381 = vunpack.c.l.b16 %v2349
        %v2382 = vunpack.c.l.b16 %v2350
        %v2383 = vunpack.c.l.b16 %v2351
        %v2384 = vunpack.c.l.b16 %v2352
        %v2385 = vunpack.c.l.b16 %v2353
        %v2386 = vunpack.c.l.b16 %v2354
        %v2387 = vunpack.c.l.b16 %v2355
        %v2388 = vunpack.c.l.b16 %v2356
        %v2389 = vunpack.c.l.b16 %v2357
        %v2390 = vpack.c.b16 %v2375, %v2374
        %v2391 = vpack.c.b16 %v2377, %v2376
        %v2392 = vpack.c.b16 %v2379, %v2378
        %v2393 = vpack.c.b16 %v2381, %v2380
        %v2394 = vpack.c.b16 %v2383, %v2382
        %v2395 = vpack.c.b16 %v2385, %v2384
        %v2396 = vpack.c.b16 %v2387, %v2386
        %v2397 = vpack.c.b16 %v2389, %v2388
        %2406 = vmatprep.subr.bf16.mxu0 0
        %2407 = vmatpush1.bf16.msra.mxu0 %v2397
        %2408 = vmatprep.subr.bf16.mxu0 0
        %2409 = vmatpush1.bf16.msra.mxu0 %v2396
        %2410 = vmatprep.subr.bf16.mxu0 0
        %2411 = vmatpush1.bf16.msra.mxu0 %v2395
        %2412 = vmatprep.subr.bf16.mxu0 0
        %2413 = vmatpush1.bf16.msra.mxu0 %v2394
        %2414 = vmatprep.subr.bf16.mxu0 0
        %2415 = vmatpush1.bf16.msra.mxu0 %v2393
        %2416 = vmatprep.subr.bf16.mxu0 0
        %2417 = vmatpush1.bf16.msra.mxu0 %v2392
        %2418 = vmatprep.subr.bf16.mxu0 0
        %2419 = vmatpush1.bf16.msra.mxu0 %v2391
        %2420 = vmatprep.subr.bf16.mxu0 0
        %2421 = vmatpush1.bf16.msra.mxu0 %v2390
        %2422 = vmatprep.subr.bf16.mxu0 0
        %2423 = vmatpush2.bf16.msra.mxu0 0
        %2424 = vmatprep.subr.bf16.mxu0 0
        %2425 = vmatpush2.bf16.msra.mxu0 0
        %2426 = vmatprep.subr.bf16.mxu0 0
        %2427 = vmatpush2.bf16.msra.mxu0 0
        %2428 = vmatprep.subr.bf16.mxu0 0
        %2429 = vmatpush2.bf16.msra.mxu0 0
        %2430 = vmatprep.subr.bf16.mxu0 0
        %2431 = vmatpush2.bf16.msra.mxu0 0
        %2432 = vmatprep.subr.bf16.mxu0 0
        %2433 = vmatpush2.bf16.msra.mxu0 0
        %2434 = vmatprep.subr.bf16.mxu0 0
        %2435 = vmatpush2.bf16.msra.mxu0 0
        %2436 = vmatprep.subr.bf16.mxu0 0
        %2437 = vmatpush2.bf16.msra.mxu0 0
        %2438 = vmatprep.mubr.bf16.mxu0 0
        %2439 = vmatmul.mubr.bf16.gmra.mxu0 %v2325
        %v2440 = vpop.f32.mrf.mxu0
        %v2441 = vadd.f32 0.0, %v2440
        %v2442 = vpop.f32.mrf.mxu0
        %v2443 = vpop.f32.mrf.mxu0
        %v2444 = vadd.f32 0.0, %v2443
        %v2445 = vpop.f32.mrf.mxu0
        %2446 = vmatprep.mubr.bf16.mxu0 0
        %2447 = vmatmul.mubr.bf16.gmra.mxu0 %v2326
        %v2448 = vpop.f32.mrf.mxu0
        %v2449 = vadd.f32 0.0, %v2448
        %v2450 = vpop.f32.mrf.mxu0
        %v2451 = vpop.f32.mrf.mxu0
        %v2452 = vadd.f32 0.0, %v2451
        %v2453 = vpop.f32.mrf.mxu0
        %2454 = vmatprep.mubr.bf16.mxu0 0
        %2455 = vmatmul.mubr.bf16.gmra.mxu0 %v2327
        %v2456 = vpop.f32.mrf.mxu0
        %v2457 = vadd.f32 0.0, %v2456
        %v2458 = vpop.f32.mrf.mxu0
        %v2459 = vpop.f32.mrf.mxu0
        %v2460 = vadd.f32 0.0, %v2459
        %v2461 = vpop.f32.mrf.mxu0
        %2462 = vmatprep.mubr.bf16.mxu0 0
        %2463 = vmatmul.mubr.bf16.gmra.mxu0 %v2328
        %v2464 = vpop.f32.mrf.mxu0
        %v2465 = vadd.f32 0.0, %v2464
        %v2466 = vpop.f32.mrf.mxu0
        %v2467 = vpop.f32.mrf.mxu0
        %v2468 = vadd.f32 0.0, %v2467
        %v2469 = vpop.f32.mrf.mxu0
        %2470 = vmatprep.mubr.bf16.mxu0 0
        %2471 = vmatmul.mubr.bf16.gmra.mxu0 %v2329
        %v2472 = vpop.f32.mrf.mxu0
        %v2473 = vadd.f32 0.0, %v2472
        %v2474 = vpop.f32.mrf.mxu0
        %v2475 = vpop.f32.mrf.mxu0
        %v2476 = vadd.f32 0.0, %v2475
        %v2477 = vpop.f32.mrf.mxu0
        %2478 = vmatprep.mubr.bf16.mxu0 0
        %2479 = vmatmul.mubr.bf16.gmra.mxu0 %v2330
        %v2480 = vpop.f32.mrf.mxu0
        %v2481 = vadd.f32 0.0, %v2480
        %v2482 = vpop.f32.mrf.mxu0
        %v2483 = vpop.f32.mrf.mxu0
        %v2484 = vadd.f32 0.0, %v2483
        %v2485 = vpop.f32.mrf.mxu0
        %2486 = vmatprep.mubr.bf16.mxu0 0
        %2487 = vmatmul.mubr.bf16.gmra.mxu0 %v2331
        %v2488 = vpop.f32.mrf.mxu0
        %v2489 = vadd.f32 0.0, %v2488
        %v2490 = vpop.f32.mrf.mxu0
        %v2491 = vpop.f32.mrf.mxu0
        %v2492 = vadd.f32 0.0, %v2491
        %v2493 = vpop.f32.mrf.mxu0
        %2494 = vmatprep.mubr.bf16.mxu0 0
        %2495 = vmatmul.mubr.bf16.gmra.mxu0 %v2332
        %v2496 = vpop.f32.mrf.mxu0
        %v2497 = vadd.f32 0.0, %v2496
        %v2498 = vpop.f32.mrf.mxu0
        %v2499 = vpop.f32.mrf.mxu0
        %v2500 = vadd.f32 0.0, %v2499
        %v2501 = vpop.f32.mrf.mxu0
        %2502 = vmatprep.mubr.bf16.mxu0 0
        %2503 = vmatmul.mubr.bf16.gmra.mxu0 %v2333
        %v2504 = vpop.f32.mrf.mxu0
        %v2505 = vadd.f32 0.0, %v2504
        %v2506 = vpop.f32.mrf.mxu0
        %v2507 = vpop.f32.mrf.mxu0
        %v2508 = vadd.f32 0.0, %v2507
        %v2509 = vpop.f32.mrf.mxu0
        %2510 = vmatprep.mubr.bf16.mxu0 0
        %2511 = vmatmul.mubr.bf16.gmra.mxu0 %v2334
        %v2512 = vpop.f32.mrf.mxu0
        %v2513 = vadd.f32 0.0, %v2512
        %v2514 = vpop.f32.mrf.mxu0
        %v2515 = vpop.f32.mrf.mxu0
        %v2516 = vadd.f32 0.0, %v2515
        %v2517 = vpop.f32.mrf.mxu0
        %2518 = vmatprep.mubr.bf16.mxu0 0
        %2519 = vmatmul.mubr.bf16.gmra.mxu0 %v2335
        %v2520 = vpop.f32.mrf.mxu0
        %v2521 = vadd.f32 0.0, %v2520
        %v2522 = vpop.f32.mrf.mxu0
        %v2523 = vpop.f32.mrf.mxu0
        %v2524 = vadd.f32 0.0, %v2523
        %v2525 = vpop.f32.mrf.mxu0
        %2526 = vmatprep.mubr.bf16.mxu0 0
        %2527 = vmatmul.mubr.bf16.gmra.mxu0 %v2336
        %v2528 = vpop.f32.mrf.mxu0
        %v2529 = vadd.f32 0.0, %v2528
        %v2530 = vpop.f32.mrf.mxu0
        %v2531 = vpop.f32.mrf.mxu0
        %v2532 = vadd.f32 0.0, %v2531
        %v2533 = vpop.f32.mrf.mxu0
        %2534 = vmatprep.mubr.bf16.mxu0 0
        %2535 = vmatmul.mubr.bf16.gmra.mxu0 %v2337
        %v2536 = vpop.f32.mrf.mxu0
        %v2537 = vadd.f32 0.0, %v2536
        %v2538 = vpop.f32.mrf.mxu0
        %v2539 = vpop.f32.mrf.mxu0
        %v2540 = vadd.f32 0.0, %v2539
        %v2541 = vpop.f32.mrf.mxu0
        %2542 = vmatprep.mubr.bf16.mxu0 0
        %2543 = vmatmul.mubr.bf16.gmra.mxu0 %v2338
        %v2544 = vpop.f32.mrf.mxu0
        %v2545 = vadd.f32 0.0, %v2544
        %v2546 = vpop.f32.mrf.mxu0
        %v2547 = vpop.f32.mrf.mxu0
        %v2548 = vadd.f32 0.0, %v2547
        %v2549 = vpop.f32.mrf.mxu0
        %2550 = vmatprep.mubr.bf16.mxu0 0
        %2551 = vmatmul.mubr.bf16.gmra.mxu0 %v2339
        %v2552 = vpop.f32.mrf.mxu0
        %v2553 = vadd.f32 0.0, %v2552
        %v2554 = vpop.f32.mrf.mxu0
        %v2555 = vpop.f32.mrf.mxu0
        %v2556 = vadd.f32 0.0, %v2555
        %v2557 = vpop.f32.mrf.mxu0
        %2558 = vmatprep.mubr.bf16.mxu0 0
        %2559 = vmatmul.mubr.bf16.gmra.mxu0 %v2340
        %v2560 = vpop.f32.mrf.mxu0
        %v2561 = vadd.f32 0.0, %v2560
        %v2562 = vpop.f32.mrf.mxu0
        %v2563 = vpop.f32.mrf.mxu0
        %v2564 = vadd.f32 0.0, %v2563
        %v2565 = vpop.f32.mrf.mxu0
        %2566 = vdwg.mxu0
        %v2567 = vadd.f32 %v2261, %v2441
        %v2568 = vadd.f32 %v2262, %v2444
        %v2569 = vadd.f32 %v2263, %v2449
        %v2570 = vadd.f32 %v2264, %v2452
        %v2571 = vadd.f32 %v2265, %v2457
        %v2572 = vadd.f32 %v2266, %v2460
        %v2573 = vadd.f32 %v2267, %v2465
        %v2574 = vadd.f32 %v2268, %v2468
        %v2575 = vadd.f32 %v2269, %v2473
        %v2576 = vadd.f32 %v2270, %v2476
        %v2577 = vadd.f32 %v2271, %v2481
        %v2578 = vadd.f32 %v2272, %v2484
        %v2579 = vadd.f32 %v2273, %v2489
        %v2580 = vadd.f32 %v2274, %v2492
        %v2581 = vadd.f32 %v2275, %v2497
        %v2582 = vadd.f32 %v2276, %v2500
        %v2583 = vadd.f32 %v2277, %v2505
        %v2584 = vadd.f32 %v2278, %v2508
        %v2585 = vadd.f32 %v2279, %v2513
        %v2586 = vadd.f32 %v2280, %v2516
        %v2587 = vadd.f32 %v2281, %v2521
        %v2588 = vadd.f32 %v2282, %v2524
        %v2589 = vadd.f32 %v2283, %v2529
        %v2590 = vadd.f32 %v2284, %v2532
        %v2591 = vadd.f32 %v2285, %v2537
        %v2592 = vadd.f32 %v2286, %v2540
        %v2593 = vadd.f32 %v2287, %v2545
        %v2594 = vadd.f32 %v2288, %v2548
        %v2595 = vadd.f32 %v2289, %v2553
        %v2596 = vadd.f32 %v2290, %v2556
        %v2597 = vadd.f32 %v2291, %v2561
        %v2598 = vadd.f32 %v2292, %v2564
        %s2599 = scalar_lea.vmem [#allocation2], 48
        %v2600 = vld [vmem:[%s2599] sm:$0xff]
        %v2601 = vld [vmem:[%s2599 + $0x8] sm:$0xff]
        %v2602 = vld [vmem:[%s2599 + $0x18] sm:$0xff]
        %v2603 = vld [vmem:[%s2599 + $0x20] sm:$0xff]
        %v2604 = vld [vmem:[%s2599 + $0x30] sm:$0xff]
        %v2605 = vld [vmem:[%s2599 + $0x38] sm:$0xff]
        %v2606 = vld [vmem:[%s2599 + $0x48] sm:$0xff]
        %v2607 = vld [vmem:[%s2599 + $0x50] sm:$0xff]
        %v2608 = vld [vmem:[%s2599 + $0x60] sm:$0xff]
        %v2609 = vld [vmem:[%s2599 + $0x68] sm:$0xff]
        %v2610 = vld [vmem:[%s2599 + $0x78] sm:$0xff]
        %v2611 = vld [vmem:[%s2599 + $0x80] sm:$0xff]
        %v2612 = vld [vmem:[%s2599 + $0x90] sm:$0xff]
        %v2613 = vld [vmem:[%s2599 + $0x98] sm:$0xff]
        %v2614 = vld [vmem:[%s2599 + $0xa8] sm:$0xff]
        %v2615 = vld [vmem:[%s2599 + $0xb0] sm:$0xff]
        %v2616 = vld [vmem:[%s2599 + $0xc0] sm:$0xff]
        %v2617 = vld [vmem:[%s2599 + $0xc8] sm:$0xff]
        %v2618 = vld [vmem:[%s2599 + $0xd8] sm:$0xff]
        %v2619 = vld [vmem:[%s2599 + $0xe0] sm:$0xff]
        %v2620 = vld [vmem:[%s2599 + $0xf0] sm:$0xff]
        %v2621 = vld [vmem:[%s2599 + $0xf8] sm:$0xff]
        %v2622 = vld [vmem:[%s2599 + $0x108] sm:$0xff]
        %v2623 = vld [vmem:[%s2599 + $0x110] sm:$0xff]
        %v2624 = vld [vmem:[%s2599 + $0x120] sm:$0xff]
        %v2625 = vld [vmem:[%s2599 + $0x128] sm:$0xff]
        %v2626 = vld [vmem:[%s2599 + $0x138] sm:$0xff]
        %v2627 = vld [vmem:[%s2599 + $0x140] sm:$0xff]
        %v2628 = vld [vmem:[%s2599 + $0x150] sm:$0xff]
        %v2629 = vld [vmem:[%s2599 + $0x158] sm:$0xff]
        %v2630 = vld [vmem:[%s2599 + $0x168] sm:$0xff]
        %v2631 = vld [vmem:[%s2599 + $0x170] sm:$0xff]
        %v2632 = vpack.c.bf16 %v2601, %v2600
        %v2633 = vpack.c.bf16 %v2603, %v2602
        %v2634 = vpack.c.bf16 %v2605, %v2604
        %v2635 = vpack.c.bf16 %v2607, %v2606
        %v2636 = vpack.c.bf16 %v2609, %v2608
        %v2637 = vpack.c.bf16 %v2611, %v2610
        %v2638 = vpack.c.bf16 %v2613, %v2612
        %v2639 = vpack.c.bf16 %v2615, %v2614
        %v2640 = vpack.c.bf16 %v2617, %v2616
        %v2641 = vpack.c.bf16 %v2619, %v2618
        %v2642 = vpack.c.bf16 %v2621, %v2620
        %v2643 = vpack.c.bf16 %v2623, %v2622
        %v2644 = vpack.c.bf16 %v2625, %v2624
        %v2645 = vpack.c.bf16 %v2627, %v2626
        %v2646 = vpack.c.bf16 %v2629, %v2628
        %v2647 = vpack.c.bf16 %v2631, %v2630
        %s2648 = scalar_lea.vmem [#allocation7], 384
        %v2649 = vld [vmem:[%s2648] sm:$0xf]
        %v2650 = vld [vmem:[%s2648 + $0x4] sm:$0xf]
        %v2651 = vld [vmem:[%s2648 + $0x8] sm:$0xf]
        %v2652 = vld [vmem:[%s2648 + $0xc] sm:$0xf]
        %v2653 = vld [vmem:[%s2648 + $0x10] sm:$0xf]
        %v2654 = vld [vmem:[%s2648 + $0x14] sm:$0xf]
        %v2655 = vld [vmem:[%s2648 + $0x18] sm:$0xf]
        %v2656 = vld [vmem:[%s2648 + $0x1c] sm:$0xf]
        %v2657 = vld [vmem:[%s2648 + $0x20] sm:$0xf]
        %v2658 = vld [vmem:[%s2648 + $0x24] sm:$0xf]
        %v2659 = vld [vmem:[%s2648 + $0x28] sm:$0xf]
        %v2660 = vld [vmem:[%s2648 + $0x2c] sm:$0xf]
        %v2661 = vld [vmem:[%s2648 + $0x30] sm:$0xf]
        %v2662 = vld [vmem:[%s2648 + $0x34] sm:$0xf]
        %v2663 = vld [vmem:[%s2648 + $0x38] sm:$0xf]
        %v2664 = vld [vmem:[%s2648 + $0x3c] sm:$0xf]
        %v2681 = vunpack.c.l.b16 %v2649
        %v2682 = vunpack.c.l.b16 %v2650
        %v2683 = vunpack.c.l.b16 %v2651
        %v2684 = vunpack.c.l.b16 %v2652
        %v2685 = vunpack.c.l.b16 %v2653
        %v2686 = vunpack.c.l.b16 %v2654
        %v2687 = vunpack.c.l.b16 %v2655
        %v2688 = vunpack.c.l.b16 %v2656
        %v2689 = vunpack.c.l.b16 %v2657
        %v2690 = vunpack.c.l.b16 %v2658
        %v2691 = vunpack.c.l.b16 %v2659
        %v2692 = vunpack.c.l.b16 %v2660
        %v2693 = vunpack.c.l.b16 %v2661
        %v2694 = vunpack.c.l.b16 %v2662
        %v2695 = vunpack.c.l.b16 %v2663
        %v2696 = vunpack.c.l.b16 %v2664
        %v2697 = vpack.c.b16 %v2682, %v2681
        %v2698 = vpack.c.b16 %v2684, %v2683
        %v2699 = vpack.c.b16 %v2686, %v2685
        %v2700 = vpack.c.b16 %v2688, %v2687
        %v2701 = vpack.c.b16 %v2690, %v2689
        %v2702 = vpack.c.b16 %v2692, %v2691
        %v2703 = vpack.c.b16 %v2694, %v2693
        %v2704 = vpack.c.b16 %v2696, %v2695
        %2713 = vmatprep.subr.bf16.mxu0 0
        %2714 = vmatpush1.bf16.msra.mxu0 %v2704
        %2715 = vmatprep.subr.bf16.mxu0 0
        %2716 = vmatpush1.bf16.msra.mxu0 %v2703
        %2717 = vmatprep.subr.bf16.mxu0 0
        %2718 = vmatpush1.bf16.msra.mxu0 %v2702
        %2719 = vmatprep.subr.bf16.mxu0 0
        %2720 = vmatpush1.bf16.msra.mxu0 %v2701
        %2721 = vmatprep.subr.bf16.mxu0 0
        %2722 = vmatpush1.bf16.msra.mxu0 %v2700
        %2723 = vmatprep.subr.bf16.mxu0 0
        %2724 = vmatpush1.bf16.msra.mxu0 %v2699
        %2725 = vmatprep.subr.bf16.mxu0 0
        %2726 = vmatpush1.bf16.msra.mxu0 %v2698
        %2727 = vmatprep.subr.bf16.mxu0 0
        %2728 = vmatpush1.bf16.msra.mxu0 %v2697
        %2729 = vmatprep.subr.bf16.mxu0 0
        %2730 = vmatpush2.bf16.msra.mxu0 0
        %2731 = vmatprep.subr.bf16.mxu0 0
        %2732 = vmatpush2.bf16.msra.mxu0 0
        %2733 = vmatprep.subr.bf16.mxu0 0
        %2734 = vmatpush2.bf16.msra.mxu0 0
        %2735 = vmatprep.subr.bf16.mxu0 0
        %2736 = vmatpush2.bf16.msra.mxu0 0
        %2737 = vmatprep.subr.bf16.mxu0 0
        %2738 = vmatpush2.bf16.msra.mxu0 0
        %2739 = vmatprep.subr.bf16.mxu0 0
        %2740 = vmatpush2.bf16.msra.mxu0 0
        %2741 = vmatprep.subr.bf16.mxu0 0
        %2742 = vmatpush2.bf16.msra.mxu0 0
        %2743 = vmatprep.subr.bf16.mxu0 0
        %2744 = vmatpush2.bf16.msra.mxu0 0
        %2745 = vmatprep.mubr.bf16.mxu0 0
        %2746 = vmatmul.mubr.bf16.gmra.mxu0 %v2632
        %v2747 = vpop.f32.mrf.mxu0
        %v2748 = vadd.f32 0.0, %v2747
        %v2749 = vpop.f32.mrf.mxu0
        %v2750 = vpop.f32.mrf.mxu0
        %v2751 = vadd.f32 0.0, %v2750
        %v2752 = vpop.f32.mrf.mxu0
        %2753 = vmatprep.mubr.bf16.mxu0 0
        %2754 = vmatmul.mubr.bf16.gmra.mxu0 %v2633
        %v2755 = vpop.f32.mrf.mxu0
        %v2756 = vadd.f32 0.0, %v2755
        %v2757 = vpop.f32.mrf.mxu0
        %v2758 = vpop.f32.mrf.mxu0
        %v2759 = vadd.f32 0.0, %v2758
        %v2760 = vpop.f32.mrf.mxu0
        %2761 = vmatprep.mubr.bf16.mxu0 0
        %2762 = vmatmul.mubr.bf16.gmra.mxu0 %v2634
        %v2763 = vpop.f32.mrf.mxu0
        %v2764 = vadd.f32 0.0, %v2763
        %v2765 = vpop.f32.mrf.mxu0
        %v2766 = vpop.f32.mrf.mxu0
        %v2767 = vadd.f32 0.0, %v2766
        %v2768 = vpop.f32.mrf.mxu0
        %2769 = vmatprep.mubr.bf16.mxu0 0
        %2770 = vmatmul.mubr.bf16.gmra.mxu0 %v2635
        %v2771 = vpop.f32.mrf.mxu0
        %v2772 = vadd.f32 0.0, %v2771
        %v2773 = vpop.f32.mrf.mxu0
        %v2774 = vpop.f32.mrf.mxu0
        %v2775 = vadd.f32 0.0, %v2774
        %v2776 = vpop.f32.mrf.mxu0
        %2777 = vmatprep.mubr.bf16.mxu0 0
        %2778 = vmatmul.mubr.bf16.gmra.mxu0 %v2636
        %v2779 = vpop.f32.mrf.mxu0
        %v2780 = vadd.f32 0.0, %v2779
        %v2781 = vpop.f32.mrf.mxu0
        %v2782 = vpop.f32.mrf.mxu0
        %v2783 = vadd.f32 0.0, %v2782
        %v2784 = vpop.f32.mrf.mxu0
        %2785 = vmatprep.mubr.bf16.mxu0 0
        %2786 = vmatmul.mubr.bf16.gmra.mxu0 %v2637
        %v2787 = vpop.f32.mrf.mxu0
        %v2788 = vadd.f32 0.0, %v2787
        %v2789 = vpop.f32.mrf.mxu0
        %v2790 = vpop.f32.mrf.mxu0
        %v2791 = vadd.f32 0.0, %v2790
        %v2792 = vpop.f32.mrf.mxu0
        %2793 = vmatprep.mubr.bf16.mxu0 0
        %2794 = vmatmul.mubr.bf16.gmra.mxu0 %v2638
        %v2795 = vpop.f32.mrf.mxu0
        %v2796 = vadd.f32 0.0, %v2795
        %v2797 = vpop.f32.mrf.mxu0
        %v2798 = vpop.f32.mrf.mxu0
        %v2799 = vadd.f32 0.0, %v2798
        %v2800 = vpop.f32.mrf.mxu0
        %2801 = vmatprep.mubr.bf16.mxu0 0
        %2802 = vmatmul.mubr.bf16.gmra.mxu0 %v2639
        %v2803 = vpop.f32.mrf.mxu0
        %v2804 = vadd.f32 0.0, %v2803
        %v2805 = vpop.f32.mrf.mxu0
        %v2806 = vpop.f32.mrf.mxu0
        %v2807 = vadd.f32 0.0, %v2806
        %v2808 = vpop.f32.mrf.mxu0
        %2809 = vmatprep.mubr.bf16.mxu0 0
        %2810 = vmatmul.mubr.bf16.gmra.mxu0 %v2640
        %v2811 = vpop.f32.mrf.mxu0
        %v2812 = vadd.f32 0.0, %v2811
        %v2813 = vpop.f32.mrf.mxu0
        %v2814 = vpop.f32.mrf.mxu0
        %v2815 = vadd.f32 0.0, %v2814
        %v2816 = vpop.f32.mrf.mxu0
        %2817 = vmatprep.mubr.bf16.mxu0 0
        %2818 = vmatmul.mubr.bf16.gmra.mxu0 %v2641
        %v2819 = vpop.f32.mrf.mxu0
        %v2820 = vadd.f32 0.0, %v2819
        %v2821 = vpop.f32.mrf.mxu0
        %v2822 = vpop.f32.mrf.mxu0
        %v2823 = vadd.f32 0.0, %v2822
        %v2824 = vpop.f32.mrf.mxu0
        %2825 = vmatprep.mubr.bf16.mxu0 0
        %2826 = vmatmul.mubr.bf16.gmra.mxu0 %v2642
        %v2827 = vpop.f32.mrf.mxu0
        %v2828 = vadd.f32 0.0, %v2827
        %v2829 = vpop.f32.mrf.mxu0
        %v2830 = vpop.f32.mrf.mxu0
        %v2831 = vadd.f32 0.0, %v2830
        %v2832 = vpop.f32.mrf.mxu0
        %2833 = vmatprep.mubr.bf16.mxu0 0
        %2834 = vmatmul.mubr.bf16.gmra.mxu0 %v2643
        %v2835 = vpop.f32.mrf.mxu0
        %v2836 = vadd.f32 0.0, %v2835
        %v2837 = vpop.f32.mrf.mxu0
        %v2838 = vpop.f32.mrf.mxu0
        %v2839 = vadd.f32 0.0, %v2838
        %v2840 = vpop.f32.mrf.mxu0
        %2841 = vmatprep.mubr.bf16.mxu0 0
        %2842 = vmatmul.mubr.bf16.gmra.mxu0 %v2644
        %v2843 = vpop.f32.mrf.mxu0
        %v2844 = vadd.f32 0.0, %v2843
        %v2845 = vpop.f32.mrf.mxu0
        %v2846 = vpop.f32.mrf.mxu0
        %v2847 = vadd.f32 0.0, %v2846
        %v2848 = vpop.f32.mrf.mxu0
        %2849 = vmatprep.mubr.bf16.mxu0 0
        %2850 = vmatmul.mubr.bf16.gmra.mxu0 %v2645
        %v2851 = vpop.f32.mrf.mxu0
        %v2852 = vadd.f32 0.0, %v2851
        %v2853 = vpop.f32.mrf.mxu0
        %v2854 = vpop.f32.mrf.mxu0
        %v2855 = vadd.f32 0.0, %v2854
        %v2856 = vpop.f32.mrf.mxu0
        %2857 = vmatprep.mubr.bf16.mxu0 0
        %2858 = vmatmul.mubr.bf16.gmra.mxu0 %v2646
        %v2859 = vpop.f32.mrf.mxu0
        %v2860 = vadd.f32 0.0, %v2859
        %v2861 = vpop.f32.mrf.mxu0
        %v2862 = vpop.f32.mrf.mxu0
        %v2863 = vadd.f32 0.0, %v2862
        %v2864 = vpop.f32.mrf.mxu0
        %2865 = vmatprep.mubr.bf16.mxu0 0
        %2866 = vmatmul.mubr.bf16.gmra.mxu0 %v2647
        %v2867 = vpop.f32.mrf.mxu0
        %v2868 = vadd.f32 0.0, %v2867
        %v2869 = vpop.f32.mrf.mxu0
        %v2870 = vpop.f32.mrf.mxu0
        %v2871 = vadd.f32 0.0, %v2870
        %v2872 = vpop.f32.mrf.mxu0
        %2873 = vdwg.mxu0
        %v2874 = vadd.f32 %v2567, %v2748
        %v2875 = vadd.f32 %v2568, %v2751
        %v2876 = vadd.f32 %v2569, %v2756
        %v2877 = vadd.f32 %v2570, %v2759
        %v2878 = vadd.f32 %v2571, %v2764
        %v2879 = vadd.f32 %v2572, %v2767
        %v2880 = vadd.f32 %v2573, %v2772
        %v2881 = vadd.f32 %v2574, %v2775
        %v2882 = vadd.f32 %v2575, %v2780
        %v2883 = vadd.f32 %v2576, %v2783
        %v2884 = vadd.f32 %v2577, %v2788
        %v2885 = vadd.f32 %v2578, %v2791
        %v2886 = vadd.f32 %v2579, %v2796
        %v2887 = vadd.f32 %v2580, %v2799
        %v2888 = vadd.f32 %v2581, %v2804
        %v2889 = vadd.f32 %v2582, %v2807
        %v2890 = vadd.f32 %v2583, %v2812
        %v2891 = vadd.f32 %v2584, %v2815
        %v2892 = vadd.f32 %v2585, %v2820
        %v2893 = vadd.f32 %v2586, %v2823
        %v2894 = vadd.f32 %v2587, %v2828
        %v2895 = vadd.f32 %v2588, %v2831
        %v2896 = vadd.f32 %v2589, %v2836
        %v2897 = vadd.f32 %v2590, %v2839
        %v2898 = vadd.f32 %v2591, %v2844
        %v2899 = vadd.f32 %v2592, %v2847
        %v2900 = vadd.f32 %v2593, %v2852
        %v2901 = vadd.f32 %v2594, %v2855
        %v2902 = vadd.f32 %v2595, %v2860
        %v2903 = vadd.f32 %v2596, %v2863
        %v2904 = vadd.f32 %v2597, %v2868
        %v2905 = vadd.f32 %v2598, %v2871
        %v2906 = vld [vmem:[%s2599 + $0x1] sm:$0xff]
        %v2907 = vld [vmem:[%s2599 + $0x9] sm:$0xff]
        %v2908 = vld [vmem:[%s2599 + $0x19] sm:$0xff]
        %v2909 = vld [vmem:[%s2599 + $0x21] sm:$0xff]
        %v2910 = vld [vmem:[%s2599 + $0x31] sm:$0xff]
        %v2911 = vld [vmem:[%s2599 + $0x39] sm:$0xff]
        %v2912 = vld [vmem:[%s2599 + $0x49] sm:$0xff]
        %v2913 = vld [vmem:[%s2599 + $0x51] sm:$0xff]
        %v2914 = vld [vmem:[%s2599 + $0x61] sm:$0xff]
        %v2915 = vld [vmem:[%s2599 + $0x69] sm:$0xff]
        %v2916 = vld [vmem:[%s2599 + $0x79] sm:$0xff]
        %v2917 = vld [vmem:[%s2599 + $0x81] sm:$0xff]
        %v2918 = vld [vmem:[%s2599 + $0x91] sm:$0xff]
        %v2919 = vld [vmem:[%s2599 + $0x99] sm:$0xff]
        %v2920 = vld [vmem:[%s2599 + $0xa9] sm:$0xff]
        %v2921 = vld [vmem:[%s2599 + $0xb1] sm:$0xff]
        %v2922 = vld [vmem:[%s2599 + $0xc1] sm:$0xff]
        %v2923 = vld [vmem:[%s2599 + $0xc9] sm:$0xff]
        %v2924 = vld [vmem:[%s2599 + $0xd9] sm:$0xff]
        %v2925 = vld [vmem:[%s2599 + $0xe1] sm:$0xff]
        %v2926 = vld [vmem:[%s2599 + $0xf1] sm:$0xff]
        %v2927 = vld [vmem:[%s2599 + $0xf9] sm:$0xff]
        %v2928 = vld [vmem:[%s2599 + $0x109] sm:$0xff]
        %v2929 = vld [vmem:[%s2599 + $0x111] sm:$0xff]
        %v2930 = vld [vmem:[%s2599 + $0x121] sm:$0xff]
        %v2931 = vld [vmem:[%s2599 + $0x129] sm:$0xff]
        %v2932 = vld [vmem:[%s2599 + $0x139] sm:$0xff]
        %v2933 = vld [vmem:[%s2599 + $0x141] sm:$0xff]
        %v2934 = vld [vmem:[%s2599 + $0x151] sm:$0xff]
        %v2935 = vld [vmem:[%s2599 + $0x159] sm:$0xff]
        %v2936 = vld [vmem:[%s2599 + $0x169] sm:$0xff]
        %v2937 = vld [vmem:[%s2599 + $0x171] sm:$0xff]
        %v2938 = vpack.c.bf16 %v2907, %v2906
        %v2939 = vpack.c.bf16 %v2909, %v2908
        %v2940 = vpack.c.bf16 %v2911, %v2910
        %v2941 = vpack.c.bf16 %v2913, %v2912
        %v2942 = vpack.c.bf16 %v2915, %v2914
        %v2943 = vpack.c.bf16 %v2917, %v2916
        %v2944 = vpack.c.bf16 %v2919, %v2918
        %v2945 = vpack.c.bf16 %v2921, %v2920
        %v2946 = vpack.c.bf16 %v2923, %v2922
        %v2947 = vpack.c.bf16 %v2925, %v2924
        %v2948 = vpack.c.bf16 %v2927, %v2926
        %v2949 = vpack.c.bf16 %v2929, %v2928
        %v2950 = vpack.c.bf16 %v2931, %v2930
        %v2951 = vpack.c.bf16 %v2933, %v2932
        %v2952 = vpack.c.bf16 %v2935, %v2934
        %v2953 = vpack.c.bf16 %v2937, %v2936
        %s2954 = scalar_lea.vmem [#allocation7], 448
        %v2955 = vld [vmem:[%s2954] sm:$0xf]
        %v2956 = vld [vmem:[%s2954 + $0x4] sm:$0xf]
        %v2957 = vld [vmem:[%s2954 + $0x8] sm:$0xf]
        %v2958 = vld [vmem:[%s2954 + $0xc] sm:$0xf]
        %v2959 = vld [vmem:[%s2954 + $0x10] sm:$0xf]
        %v2960 = vld [vmem:[%s2954 + $0x14] sm:$0xf]
        %v2961 = vld [vmem:[%s2954 + $0x18] sm:$0xf]
        %v2962 = vld [vmem:[%s2954 + $0x1c] sm:$0xf]
        %v2963 = vld [vmem:[%s2954 + $0x20] sm:$0xf]
        %v2964 = vld [vmem:[%s2954 + $0x24] sm:$0xf]
        %v2965 = vld [vmem:[%s2954 + $0x28] sm:$0xf]
        %v2966 = vld [vmem:[%s2954 + $0x2c] sm:$0xf]
        %v2967 = vld [vmem:[%s2954 + $0x30] sm:$0xf]
        %v2968 = vld [vmem:[%s2954 + $0x34] sm:$0xf]
        %v2969 = vld [vmem:[%s2954 + $0x38] sm:$0xf]
        %v2970 = vld [vmem:[%s2954 + $0x3c] sm:$0xf]
        %v2987 = vunpack.c.l.b16 %v2955
        %v2988 = vunpack.c.l.b16 %v2956
        %v2989 = vunpack.c.l.b16 %v2957
        %v2990 = vunpack.c.l.b16 %v2958
        %v2991 = vunpack.c.l.b16 %v2959
        %v2992 = vunpack.c.l.b16 %v2960
        %v2993 = vunpack.c.l.b16 %v2961
        %v2994 = vunpack.c.l.b16 %v2962
        %v2995 = vunpack.c.l.b16 %v2963
        %v2996 = vunpack.c.l.b16 %v2964
        %v2997 = vunpack.c.l.b16 %v2965
        %v2998 = vunpack.c.l.b16 %v2966
        %v2999 = vunpack.c.l.b16 %v2967
        %v3000 = vunpack.c.l.b16 %v2968
        %v3001 = vunpack.c.l.b16 %v2969
        %v3002 = vunpack.c.l.b16 %v2970
        %v3003 = vpack.c.b16 %v2988, %v2987
        %v3004 = vpack.c.b16 %v2990, %v2989
        %v3005 = vpack.c.b16 %v2992, %v2991
        %v3006 = vpack.c.b16 %v2994, %v2993
        %v3007 = vpack.c.b16 %v2996, %v2995
        %v3008 = vpack.c.b16 %v2998, %v2997
        %v3009 = vpack.c.b16 %v3000, %v2999
        %v3010 = vpack.c.b16 %v3002, %v3001
        %3019 = vmatprep.subr.bf16.mxu0 0
        %3020 = vmatpush1.bf16.msra.mxu0 %v3010
        %3021 = vmatprep.subr.bf16.mxu0 0
        %3022 = vmatpush1.bf16.msra.mxu0 %v3009
        %3023 = vmatprep.subr.bf16.mxu0 0
        %3024 = vmatpush1.bf16.msra.mxu0 %v3008
        %3025 = vmatprep.subr.bf16.mxu0 0
        %3026 = vmatpush1.bf16.msra.mxu0 %v3007
        %3027 = vmatprep.subr.bf16.mxu0 0
        %3028 = vmatpush1.bf16.msra.mxu0 %v3006
        %3029 = vmatprep.subr.bf16.mxu0 0
        %3030 = vmatpush1.bf16.msra.mxu0 %v3005
        %3031 = vmatprep.subr.bf16.mxu0 0
        %3032 = vmatpush1.bf16.msra.mxu0 %v3004
        %3033 = vmatprep.subr.bf16.mxu0 0
        %3034 = vmatpush1.bf16.msra.mxu0 %v3003
        %3035 = vmatprep.subr.bf16.mxu0 0
        %3036 = vmatpush2.bf16.msra.mxu0 0
        %3037 = vmatprep.subr.bf16.mxu0 0
        %3038 = vmatpush2.bf16.msra.mxu0 0
        %3039 = vmatprep.subr.bf16.mxu0 0
        %3040 = vmatpush2.bf16.msra.mxu0 0
        %3041 = vmatprep.subr.bf16.mxu0 0
        %3042 = vmatpush2.bf16.msra.mxu0 0
        %3043 = vmatprep.subr.bf16.mxu0 0
        %3044 = vmatpush2.bf16.msra.mxu0 0
        %3045 = vmatprep.subr.bf16.mxu0 0
        %3046 = vmatpush2.bf16.msra.mxu0 0
        %3047 = vmatprep.subr.bf16.mxu0 0
        %3048 = vmatpush2.bf16.msra.mxu0 0
        %3049 = vmatprep.subr.bf16.mxu0 0
        %3050 = vmatpush2.bf16.msra.mxu0 0
        %3051 = vmatprep.mubr.bf16.mxu0 0
        %3052 = vmatmul.mubr.bf16.gmra.mxu0 %v2938
        %v3053 = vpop.f32.mrf.mxu0
        %v3054 = vadd.f32 0.0, %v3053
        %v3055 = vpop.f32.mrf.mxu0
        %v3056 = vpop.f32.mrf.mxu0
        %v3057 = vadd.f32 0.0, %v3056
        %v3058 = vpop.f32.mrf.mxu0
        %3059 = vmatprep.mubr.bf16.mxu0 0
        %3060 = vmatmul.mubr.bf16.gmra.mxu0 %v2939
        %v3061 = vpop.f32.mrf.mxu0
        %v3062 = vadd.f32 0.0, %v3061
        %v3063 = vpop.f32.mrf.mxu0
        %v3064 = vpop.f32.mrf.mxu0
        %v3065 = vadd.f32 0.0, %v3064
        %v3066 = vpop.f32.mrf.mxu0
        %3067 = vmatprep.mubr.bf16.mxu0 0
        %3068 = vmatmul.mubr.bf16.gmra.mxu0 %v2940
        %v3069 = vpop.f32.mrf.mxu0
        %v3070 = vadd.f32 0.0, %v3069
        %v3071 = vpop.f32.mrf.mxu0
        %v3072 = vpop.f32.mrf.mxu0
        %v3073 = vadd.f32 0.0, %v3072
        %v3074 = vpop.f32.mrf.mxu0
        %3075 = vmatprep.mubr.bf16.mxu0 0
        %3076 = vmatmul.mubr.bf16.gmra.mxu0 %v2941
        %v3077 = vpop.f32.mrf.mxu0
        %v3078 = vadd.f32 0.0, %v3077
        %v3079 = vpop.f32.mrf.mxu0
        %v3080 = vpop.f32.mrf.mxu0
        %v3081 = vadd.f32 0.0, %v3080
        %v3082 = vpop.f32.mrf.mxu0
        %3083 = vmatprep.mubr.bf16.mxu0 0
        %3084 = vmatmul.mubr.bf16.gmra.mxu0 %v2942
        %v3085 = vpop.f32.mrf.mxu0
        %v3086 = vadd.f32 0.0, %v3085
        %v3087 = vpop.f32.mrf.mxu0
        %v3088 = vpop.f32.mrf.mxu0
        %v3089 = vadd.f32 0.0, %v3088
        %v3090 = vpop.f32.mrf.mxu0
        %3091 = vmatprep.mubr.bf16.mxu0 0
        %3092 = vmatmul.mubr.bf16.gmra.mxu0 %v2943
        %v3093 = vpop.f32.mrf.mxu0
        %v3094 = vadd.f32 0.0, %v3093
        %v3095 = vpop.f32.mrf.mxu0
        %v3096 = vpop.f32.mrf.mxu0
        %v3097 = vadd.f32 0.0, %v3096
        %v3098 = vpop.f32.mrf.mxu0
        %3099 = vmatprep.mubr.bf16.mxu0 0
        %3100 = vmatmul.mubr.bf16.gmra.mxu0 %v2944
        %v3101 = vpop.f32.mrf.mxu0
        %v3102 = vadd.f32 0.0, %v3101
        %v3103 = vpop.f32.mrf.mxu0
        %v3104 = vpop.f32.mrf.mxu0
        %v3105 = vadd.f32 0.0, %v3104
        %v3106 = vpop.f32.mrf.mxu0
        %3107 = vmatprep.mubr.bf16.mxu0 0
        %3108 = vmatmul.mubr.bf16.gmra.mxu0 %v2945
        %v3109 = vpop.f32.mrf.mxu0
        %v3110 = vadd.f32 0.0, %v3109
        %v3111 = vpop.f32.mrf.mxu0
        %v3112 = vpop.f32.mrf.mxu0
        %v3113 = vadd.f32 0.0, %v3112
        %v3114 = vpop.f32.mrf.mxu0
        %3115 = vmatprep.mubr.bf16.mxu0 0
        %3116 = vmatmul.mubr.bf16.gmra.mxu0 %v2946
        %v3117 = vpop.f32.mrf.mxu0
        %v3118 = vadd.f32 0.0, %v3117
        %v3119 = vpop.f32.mrf.mxu0
        %v3120 = vpop.f32.mrf.mxu0
        %v3121 = vadd.f32 0.0, %v3120
        %v3122 = vpop.f32.mrf.mxu0
        %3123 = vmatprep.mubr.bf16.mxu0 0
        %3124 = vmatmul.mubr.bf16.gmra.mxu0 %v2947
        %v3125 = vpop.f32.mrf.mxu0
        %v3126 = vadd.f32 0.0, %v3125
        %v3127 = vpop.f32.mrf.mxu0
        %v3128 = vpop.f32.mrf.mxu0
        %v3129 = vadd.f32 0.0, %v3128
        %v3130 = vpop.f32.mrf.mxu0
        %3131 = vmatprep.mubr.bf16.mxu0 0
        %3132 = vmatmul.mubr.bf16.gmra.mxu0 %v2948
        %v3133 = vpop.f32.mrf.mxu0
        %v3134 = vadd.f32 0.0, %v3133
        %v3135 = vpop.f32.mrf.mxu0
        %v3136 = vpop.f32.mrf.mxu0
        %v3137 = vadd.f32 0.0, %v3136
        %v3138 = vpop.f32.mrf.mxu0
        %3139 = vmatprep.mubr.bf16.mxu0 0
        %3140 = vmatmul.mubr.bf16.gmra.mxu0 %v2949
        %v3141 = vpop.f32.mrf.mxu0
        %v3142 = vadd.f32 0.0, %v3141
        %v3143 = vpop.f32.mrf.mxu0
        %v3144 = vpop.f32.mrf.mxu0
        %v3145 = vadd.f32 0.0, %v3144
        %v3146 = vpop.f32.mrf.mxu0
        %3147 = vmatprep.mubr.bf16.mxu0 0
        %3148 = vmatmul.mubr.bf16.gmra.mxu0 %v2950
        %v3149 = vpop.f32.mrf.mxu0
        %v3150 = vadd.f32 0.0, %v3149
        %v3151 = vpop.f32.mrf.mxu0
        %v3152 = vpop.f32.mrf.mxu0
        %v3153 = vadd.f32 0.0, %v3152
        %v3154 = vpop.f32.mrf.mxu0
        %3155 = vmatprep.mubr.bf16.mxu0 0
        %3156 = vmatmul.mubr.bf16.gmra.mxu0 %v2951
        %v3157 = vpop.f32.mrf.mxu0
        %v3158 = vadd.f32 0.0, %v3157
        %v3159 = vpop.f32.mrf.mxu0
        %v3160 = vpop.f32.mrf.mxu0
        %v3161 = vadd.f32 0.0, %v3160
        %v3162 = vpop.f32.mrf.mxu0
        %3163 = vmatprep.mubr.bf16.mxu0 0
        %3164 = vmatmul.mubr.bf16.gmra.mxu0 %v2952
        %v3165 = vpop.f32.mrf.mxu0
        %v3166 = vadd.f32 0.0, %v3165
        %v3167 = vpop.f32.mrf.mxu0
        %v3168 = vpop.f32.mrf.mxu0
        %v3169 = vadd.f32 0.0, %v3168
        %v3170 = vpop.f32.mrf.mxu0
        %3171 = vmatprep.mubr.bf16.mxu0 0
        %3172 = vmatmul.mubr.bf16.gmra.mxu0 %v2953
        %v3173 = vpop.f32.mrf.mxu0
        %v3174 = vadd.f32 0.0, %v3173
        %v3175 = vpop.f32.mrf.mxu0
        %v3176 = vpop.f32.mrf.mxu0
        %v3177 = vadd.f32 0.0, %v3176
        %v3178 = vpop.f32.mrf.mxu0
        %3179 = vdwg.mxu0
        %v3180 = vadd.f32 %v2874, %v3054
        %v3181 = vadd.f32 %v2875, %v3057
        %v3182 = vadd.f32 %v2876, %v3062
        %v3183 = vadd.f32 %v2877, %v3065
        %v3184 = vadd.f32 %v2878, %v3070
        %v3185 = vadd.f32 %v2879, %v3073
        %v3186 = vadd.f32 %v2880, %v3078
        %v3187 = vadd.f32 %v2881, %v3081
        %v3188 = vadd.f32 %v2882, %v3086
        %v3189 = vadd.f32 %v2883, %v3089
        %v3190 = vadd.f32 %v2884, %v3094
        %v3191 = vadd.f32 %v2885, %v3097
        %v3192 = vadd.f32 %v2886, %v3102
        %v3193 = vadd.f32 %v2887, %v3105
        %v3194 = vadd.f32 %v2888, %v3110
        %v3195 = vadd.f32 %v2889, %v3113
        %v3196 = vadd.f32 %v2890, %v3118
        %v3197 = vadd.f32 %v2891, %v3121
        %v3198 = vadd.f32 %v2892, %v3126
        %v3199 = vadd.f32 %v2893, %v3129
        %v3200 = vadd.f32 %v2894, %v3134
        %v3201 = vadd.f32 %v2895, %v3137
        %v3202 = vadd.f32 %v2896, %v3142
        %v3203 = vadd.f32 %v2897, %v3145
        %v3204 = vadd.f32 %v2898, %v3150
        %v3205 = vadd.f32 %v2899, %v3153
        %v3206 = vadd.f32 %v2900, %v3158
        %v3207 = vadd.f32 %v2901, %v3161
        %v3208 = vadd.f32 %v2902, %v3166
        %v3209 = vadd.f32 %v2903, %v3169
        %v3210 = vadd.f32 %v2904, %v3174
        %v3211 = vadd.f32 %v2905, %v3177
        %v3212 = vld [vmem:[%s2599 + $0x2] sm:$0xff]
        %v3213 = vld [vmem:[%s2599 + $0xa] sm:$0xff]
        %v3214 = vld [vmem:[%s2599 + $0x1a] sm:$0xff]
        %v3215 = vld [vmem:[%s2599 + $0x22] sm:$0xff]
        %v3216 = vld [vmem:[%s2599 + $0x32] sm:$0xff]
        %v3217 = vld [vmem:[%s2599 + $0x3a] sm:$0xff]
        %v3218 = vld [vmem:[%s2599 + $0x4a] sm:$0xff]
        %v3219 = vld [vmem:[%s2599 + $0x52] sm:$0xff]
        %v3220 = vld [vmem:[%s2599 + $0x62] sm:$0xff]
        %v3221 = vld [vmem:[%s2599 + $0x6a] sm:$0xff]
        %v3222 = vld [vmem:[%s2599 + $0x7a] sm:$0xff]
        %v3223 = vld [vmem:[%s2599 + $0x82] sm:$0xff]
        %v3224 = vld [vmem:[%s2599 + $0x92] sm:$0xff]
        %v3225 = vld [vmem:[%s2599 + $0x9a] sm:$0xff]
        %v3226 = vld [vmem:[%s2599 + $0xaa] sm:$0xff]
        %v3227 = vld [vmem:[%s2599 + $0xb2] sm:$0xff]
        %v3228 = vld [vmem:[%s2599 + $0xc2] sm:$0xff]
        %v3229 = vld [vmem:[%s2599 + $0xca] sm:$0xff]
        %v3230 = vld [vmem:[%s2599 + $0xda] sm:$0xff]
        %v3231 = vld [vmem:[%s2599 + $0xe2] sm:$0xff]
        %v3232 = vld [vmem:[%s2599 + $0xf2] sm:$0xff]
        %v3233 = vld [vmem:[%s2599 + $0xfa] sm:$0xff]
        %v3234 = vld [vmem:[%s2599 + $0x10a] sm:$0xff]
        %v3235 = vld [vmem:[%s2599 + $0x112] sm:$0xff]
        %v3236 = vld [vmem:[%s2599 + $0x122] sm:$0xff]
        %v3237 = vld [vmem:[%s2599 + $0x12a] sm:$0xff]
        %v3238 = vld [vmem:[%s2599 + $0x13a] sm:$0xff]
        %v3239 = vld [vmem:[%s2599 + $0x142] sm:$0xff]
        %v3240 = vld [vmem:[%s2599 + $0x152] sm:$0xff]
        %v3241 = vld [vmem:[%s2599 + $0x15a] sm:$0xff]
        %v3242 = vld [vmem:[%s2599 + $0x16a] sm:$0xff]
        %v3243 = vld [vmem:[%s2599 + $0x172] sm:$0xff]
        %v3244 = vpack.c.bf16 %v3213, %v3212
        %v3245 = vpack.c.bf16 %v3215, %v3214
        %v3246 = vpack.c.bf16 %v3217, %v3216
        %v3247 = vpack.c.bf16 %v3219, %v3218
        %v3248 = vpack.c.bf16 %v3221, %v3220
        %v3249 = vpack.c.bf16 %v3223, %v3222
        %v3250 = vpack.c.bf16 %v3225, %v3224
        %v3251 = vpack.c.bf16 %v3227, %v3226
        %v3252 = vpack.c.bf16 %v3229, %v3228
        %v3253 = vpack.c.bf16 %v3231, %v3230
        %v3254 = vpack.c.bf16 %v3233, %v3232
        %v3255 = vpack.c.bf16 %v3235, %v3234
        %v3256 = vpack.c.bf16 %v3237, %v3236
        %v3257 = vpack.c.bf16 %v3239, %v3238
        %v3258 = vpack.c.bf16 %v3241, %v3240
        %v3259 = vpack.c.bf16 %v3243, %v3242
        %s3260 = scalar_lea.vmem [#allocation7], 512
        %v3261 = vld [vmem:[%s3260] sm:$0xf]
        %v3262 = vld [vmem:[%s3260 + $0x4] sm:$0xf]
        %v3263 = vld [vmem:[%s3260 + $0x8] sm:$0xf]
        %v3264 = vld [vmem:[%s3260 + $0xc] sm:$0xf]
        %v3265 = vld [vmem:[%s3260 + $0x10] sm:$0xf]
        %v3266 = vld [vmem:[%s3260 + $0x14] sm:$0xf]
        %v3267 = vld [vmem:[%s3260 + $0x18] sm:$0xf]
        %v3268 = vld [vmem:[%s3260 + $0x1c] sm:$0xf]
        %v3269 = vld [vmem:[%s3260 + $0x20] sm:$0xf]
        %v3270 = vld [vmem:[%s3260 + $0x24] sm:$0xf]
        %v3271 = vld [vmem:[%s3260 + $0x28] sm:$0xf]
        %v3272 = vld [vmem:[%s3260 + $0x2c] sm:$0xf]
        %v3273 = vld [vmem:[%s3260 + $0x30] sm:$0xf]
        %v3274 = vld [vmem:[%s3260 + $0x34] sm:$0xf]
        %v3275 = vld [vmem:[%s3260 + $0x38] sm:$0xf]
        %v3276 = vld [vmem:[%s3260 + $0x3c] sm:$0xf]
        %v3293 = vunpack.c.l.b16 %v3261
        %v3294 = vunpack.c.l.b16 %v3262
        %v3295 = vunpack.c.l.b16 %v3263
        %v3296 = vunpack.c.l.b16 %v3264
        %v3297 = vunpack.c.l.b16 %v3265
        %v3298 = vunpack.c.l.b16 %v3266
        %v3299 = vunpack.c.l.b16 %v3267
        %v3300 = vunpack.c.l.b16 %v3268
        %v3301 = vunpack.c.l.b16 %v3269
        %v3302 = vunpack.c.l.b16 %v3270
        %v3303 = vunpack.c.l.b16 %v3271
        %v3304 = vunpack.c.l.b16 %v3272
        %v3305 = vunpack.c.l.b16 %v3273
        %v3306 = vunpack.c.l.b16 %v3274
        %v3307 = vunpack.c.l.b16 %v3275
        %v3308 = vunpack.c.l.b16 %v3276
        %v3309 = vpack.c.b16 %v3294, %v3293
        %v3310 = vpack.c.b16 %v3296, %v3295
        %v3311 = vpack.c.b16 %v3298, %v3297
        %v3312 = vpack.c.b16 %v3300, %v3299
        %v3313 = vpack.c.b16 %v3302, %v3301
        %v3314 = vpack.c.b16 %v3304, %v3303
        %v3315 = vpack.c.b16 %v3306, %v3305
        %v3316 = vpack.c.b16 %v3308, %v3307
        %3325 = vmatprep.subr.bf16.mxu0 0
        %3326 = vmatpush1.bf16.msra.mxu0 %v3316
        %3327 = vmatprep.subr.bf16.mxu0 0
        %3328 = vmatpush1.bf16.msra.mxu0 %v3315
        %3329 = vmatprep.subr.bf16.mxu0 0
        %3330 = vmatpush1.bf16.msra.mxu0 %v3314
        %3331 = vmatprep.subr.bf16.mxu0 0
        %3332 = vmatpush1.bf16.msra.mxu0 %v3313
        %3333 = vmatprep.subr.bf16.mxu0 0
        %3334 = vmatpush1.bf16.msra.mxu0 %v3312
        %3335 = vmatprep.subr.bf16.mxu0 0
        %3336 = vmatpush1.bf16.msra.mxu0 %v3311
        %3337 = vmatprep.subr.bf16.mxu0 0
        %3338 = vmatpush1.bf16.msra.mxu0 %v3310
        %3339 = vmatprep.subr.bf16.mxu0 0
        %3340 = vmatpush1.bf16.msra.mxu0 %v3309
        %3341 = vmatprep.subr.bf16.mxu0 0
        %3342 = vmatpush2.bf16.msra.mxu0 0
        %3343 = vmatprep.subr.bf16.mxu0 0
        %3344 = vmatpush2.bf16.msra.mxu0 0
        %3345 = vmatprep.subr.bf16.mxu0 0
        %3346 = vmatpush2.bf16.msra.mxu0 0
        %3347 = vmatprep.subr.bf16.mxu0 0
        %3348 = vmatpush2.bf16.msra.mxu0 0
        %3349 = vmatprep.subr.bf16.mxu0 0
        %3350 = vmatpush2.bf16.msra.mxu0 0
        %3351 = vmatprep.subr.bf16.mxu0 0
        %3352 = vmatpush2.bf16.msra.mxu0 0
        %3353 = vmatprep.subr.bf16.mxu0 0
        %3354 = vmatpush2.bf16.msra.mxu0 0
        %3355 = vmatprep.subr.bf16.mxu0 0
        %3356 = vmatpush2.bf16.msra.mxu0 0
        %3357 = vmatprep.mubr.bf16.mxu0 0
        %3358 = vmatmul.mubr.bf16.gmra.mxu0 %v3244
        %v3359 = vpop.f32.mrf.mxu0
        %v3360 = vadd.f32 0.0, %v3359
        %v3361 = vpop.f32.mrf.mxu0
        %v3362 = vpop.f32.mrf.mxu0
        %v3363 = vadd.f32 0.0, %v3362
        %v3364 = vpop.f32.mrf.mxu0
        %3365 = vmatprep.mubr.bf16.mxu0 0
        %3366 = vmatmul.mubr.bf16.gmra.mxu0 %v3245
        %v3367 = vpop.f32.mrf.mxu0
        %v3368 = vadd.f32 0.0, %v3367
        %v3369 = vpop.f32.mrf.mxu0
        %v3370 = vpop.f32.mrf.mxu0
        %v3371 = vadd.f32 0.0, %v3370
        %v3372 = vpop.f32.mrf.mxu0
        %3373 = vmatprep.mubr.bf16.mxu0 0
        %3374 = vmatmul.mubr.bf16.gmra.mxu0 %v3246
        %v3375 = vpop.f32.mrf.mxu0
        %v3376 = vadd.f32 0.0, %v3375
        %v3377 = vpop.f32.mrf.mxu0
        %v3378 = vpop.f32.mrf.mxu0
        %v3379 = vadd.f32 0.0, %v3378
        %v3380 = vpop.f32.mrf.mxu0
        %3381 = vmatprep.mubr.bf16.mxu0 0
        %3382 = vmatmul.mubr.bf16.gmra.mxu0 %v3247
        %v3383 = vpop.f32.mrf.mxu0
        %v3384 = vadd.f32 0.0, %v3383
        %v3385 = vpop.f32.mrf.mxu0
        %v3386 = vpop.f32.mrf.mxu0
        %v3387 = vadd.f32 0.0, %v3386
        %v3388 = vpop.f32.mrf.mxu0
        %3389 = vmatprep.mubr.bf16.mxu0 0
        %3390 = vmatmul.mubr.bf16.gmra.mxu0 %v3248
        %v3391 = vpop.f32.mrf.mxu0
        %v3392 = vadd.f32 0.0, %v3391
        %v3393 = vpop.f32.mrf.mxu0
        %v3394 = vpop.f32.mrf.mxu0
        %v3395 = vadd.f32 0.0, %v3394
        %v3396 = vpop.f32.mrf.mxu0
        %3397 = vmatprep.mubr.bf16.mxu0 0
        %3398 = vmatmul.mubr.bf16.gmra.mxu0 %v3249
        %v3399 = vpop.f32.mrf.mxu0
        %v3400 = vadd.f32 0.0, %v3399
        %v3401 = vpop.f32.mrf.mxu0
        %v3402 = vpop.f32.mrf.mxu0
        %v3403 = vadd.f32 0.0, %v3402
        %v3404 = vpop.f32.mrf.mxu0
        %3405 = vmatprep.mubr.bf16.mxu0 0
        %3406 = vmatmul.mubr.bf16.gmra.mxu0 %v3250
        %v3407 = vpop.f32.mrf.mxu0
        %v3408 = vadd.f32 0.0, %v3407
        %v3409 = vpop.f32.mrf.mxu0
        %v3410 = vpop.f32.mrf.mxu0
        %v3411 = vadd.f32 0.0, %v3410
        %v3412 = vpop.f32.mrf.mxu0
        %3413 = vmatprep.mubr.bf16.mxu0 0
        %3414 = vmatmul.mubr.bf16.gmra.mxu0 %v3251
        %v3415 = vpop.f32.mrf.mxu0
        %v3416 = vadd.f32 0.0, %v3415
        %v3417 = vpop.f32.mrf.mxu0
        %v3418 = vpop.f32.mrf.mxu0
        %v3419 = vadd.f32 0.0, %v3418
        %v3420 = vpop.f32.mrf.mxu0
        %3421 = vmatprep.mubr.bf16.mxu0 0
        %3422 = vmatmul.mubr.bf16.gmra.mxu0 %v3252
        %v3423 = vpop.f32.mrf.mxu0
        %v3424 = vadd.f32 0.0, %v3423
        %v3425 = vpop.f32.mrf.mxu0
        %v3426 = vpop.f32.mrf.mxu0
        %v3427 = vadd.f32 0.0, %v3426
        %v3428 = vpop.f32.mrf.mxu0
        %3429 = vmatprep.mubr.bf16.mxu0 0
        %3430 = vmatmul.mubr.bf16.gmra.mxu0 %v3253
        %v3431 = vpop.f32.mrf.mxu0
        %v3432 = vadd.f32 0.0, %v3431
        %v3433 = vpop.f32.mrf.mxu0
        %v3434 = vpop.f32.mrf.mxu0
        %v3435 = vadd.f32 0.0, %v3434
        %v3436 = vpop.f32.mrf.mxu0
        %3437 = vmatprep.mubr.bf16.mxu0 0
        %3438 = vmatmul.mubr.bf16.gmra.mxu0 %v3254
        %v3439 = vpop.f32.mrf.mxu0
        %v3440 = vadd.f32 0.0, %v3439
        %v3441 = vpop.f32.mrf.mxu0
        %v3442 = vpop.f32.mrf.mxu0
        %v3443 = vadd.f32 0.0, %v3442
        %v3444 = vpop.f32.mrf.mxu0
        %3445 = vmatprep.mubr.bf16.mxu0 0
        %3446 = vmatmul.mubr.bf16.gmra.mxu0 %v3255
        %v3447 = vpop.f32.mrf.mxu0
        %v3448 = vadd.f32 0.0, %v3447
        %v3449 = vpop.f32.mrf.mxu0
        %v3450 = vpop.f32.mrf.mxu0
        %v3451 = vadd.f32 0.0, %v3450
        %v3452 = vpop.f32.mrf.mxu0
        %3453 = vmatprep.mubr.bf16.mxu0 0
        %3454 = vmatmul.mubr.bf16.gmra.mxu0 %v3256
        %v3455 = vpop.f32.mrf.mxu0
        %v3456 = vadd.f32 0.0, %v3455
        %v3457 = vpop.f32.mrf.mxu0
        %v3458 = vpop.f32.mrf.mxu0
        %v3459 = vadd.f32 0.0, %v3458
        %v3460 = vpop.f32.mrf.mxu0
        %3461 = vmatprep.mubr.bf16.mxu0 0
        %3462 = vmatmul.mubr.bf16.gmra.mxu0 %v3257
        %v3463 = vpop.f32.mrf.mxu0
        %v3464 = vadd.f32 0.0, %v3463
        %v3465 = vpop.f32.mrf.mxu0
        %v3466 = vpop.f32.mrf.mxu0
        %v3467 = vadd.f32 0.0, %v3466
        %v3468 = vpop.f32.mrf.mxu0
        %3469 = vmatprep.mubr.bf16.mxu0 0
        %3470 = vmatmul.mubr.bf16.gmra.mxu0 %v3258
        %v3471 = vpop.f32.mrf.mxu0
        %v3472 = vadd.f32 0.0, %v3471
        %v3473 = vpop.f32.mrf.mxu0
        %v3474 = vpop.f32.mrf.mxu0
        %v3475 = vadd.f32 0.0, %v3474
        %v3476 = vpop.f32.mrf.mxu0
        %3477 = vmatprep.mubr.bf16.mxu0 0
        %3478 = vmatmul.mubr.bf16.gmra.mxu0 %v3259
        %v3479 = vpop.f32.mrf.mxu0
        %v3480 = vadd.f32 0.0, %v3479
        %v3481 = vpop.f32.mrf.mxu0
        %v3482 = vpop.f32.mrf.mxu0
        %v3483 = vadd.f32 0.0, %v3482
        %v3484 = vpop.f32.mrf.mxu0
        %3485 = vdwg.mxu0
        %v3486 = vadd.f32 %v3180, %v3360
        %v3487 = vadd.f32 %v3181, %v3363
        %v3488 = vadd.f32 %v3182, %v3368
        %v3489 = vadd.f32 %v3183, %v3371
        %v3490 = vadd.f32 %v3184, %v3376
        %v3491 = vadd.f32 %v3185, %v3379
        %v3492 = vadd.f32 %v3186, %v3384
        %v3493 = vadd.f32 %v3187, %v3387
        %v3494 = vadd.f32 %v3188, %v3392
        %v3495 = vadd.f32 %v3189, %v3395
        %v3496 = vadd.f32 %v3190, %v3400
        %v3497 = vadd.f32 %v3191, %v3403
        %v3498 = vadd.f32 %v3192, %v3408
        %v3499 = vadd.f32 %v3193, %v3411
        %v3500 = vadd.f32 %v3194, %v3416
        %v3501 = vadd.f32 %v3195, %v3419
        %v3502 = vadd.f32 %v3196, %v3424
        %v3503 = vadd.f32 %v3197, %v3427
        %v3504 = vadd.f32 %v3198, %v3432
        %v3505 = vadd.f32 %v3199, %v3435
        %v3506 = vadd.f32 %v3200, %v3440
        %v3507 = vadd.f32 %v3201, %v3443
        %v3508 = vadd.f32 %v3202, %v3448
        %v3509 = vadd.f32 %v3203, %v3451
        %v3510 = vadd.f32 %v3204, %v3456
        %v3511 = vadd.f32 %v3205, %v3459
        %v3512 = vadd.f32 %v3206, %v3464
        %v3513 = vadd.f32 %v3207, %v3467
        %v3514 = vadd.f32 %v3208, %v3472
        %v3515 = vadd.f32 %v3209, %v3475
        %v3516 = vadd.f32 %v3210, %v3480
        %v3517 = vadd.f32 %v3211, %v3483
        %v3518 = vld [vmem:[%s4] sm:$0x1]
        %v3520 = vlaneseq
        %v3521 = vshrl.u32 %v3520, 7
        %v3522 = vsub.s32 0, %v3521
        %v3523 = vrot.slane %v3518, %v3522
        %v3525 = vadd.f32 %v3486, %v3523
        %v3526 = vadd.f32 %v3487, %v3523
        %v3527 = vadd.f32 %v3488, %v3523
        %v3528 = vadd.f32 %v3489, %v3523
        %v3529 = vadd.f32 %v3490, %v3523
        %v3530 = vadd.f32 %v3491, %v3523
        %v3531 = vadd.f32 %v3492, %v3523
        %v3532 = vadd.f32 %v3493, %v3523
        %v3533 = vadd.f32 %v3494, %v3523
        %v3534 = vadd.f32 %v3495, %v3523
        %v3535 = vadd.f32 %v3496, %v3523
        %v3536 = vadd.f32 %v3497, %v3523
        %v3537 = vadd.f32 %v3498, %v3523
        %v3538 = vadd.f32 %v3499, %v3523
        %v3539 = vadd.f32 %v3500, %v3523
        %v3540 = vadd.f32 %v3501, %v3523
        %v3541 = vadd.f32 %v3502, %v3523
        %v3542 = vadd.f32 %v3503, %v3523
        %v3543 = vadd.f32 %v3504, %v3523
        %v3544 = vadd.f32 %v3505, %v3523
        %v3545 = vadd.f32 %v3506, %v3523
        %v3546 = vadd.f32 %v3507, %v3523
        %v3547 = vadd.f32 %v3508, %v3523
        %v3548 = vadd.f32 %v3509, %v3523
        %v3549 = vadd.f32 %v3510, %v3523
        %v3550 = vadd.f32 %v3511, %v3523
        %v3551 = vadd.f32 %v3512, %v3523
        %v3552 = vadd.f32 %v3513, %v3523
        %v3553 = vadd.f32 %v3514, %v3523
        %v3554 = vadd.f32 %v3515, %v3523
        %v3555 = vadd.f32 %v3516, %v3523
        %v3556 = vadd.f32 %v3517, %v3523
        %v3557 = vmax.f32 %v3525, 0.0
        %v3558 = vmax.f32 %v3526, 0.0
        %v3559 = vmax.f32 %v3527, 0.0
        %v3560 = vmax.f32 %v3528, 0.0
        %v3561 = vmax.f32 %v3529, 0.0
        %v3562 = vmax.f32 %v3530, 0.0
        %v3563 = vmax.f32 %v3531, 0.0
        %v3564 = vmax.f32 %v3532, 0.0
        %v3565 = vmax.f32 %v3533, 0.0
        %v3566 = vmax.f32 %v3534, 0.0
        %v3567 = vmax.f32 %v3535, 0.0
        %v3568 = vmax.f32 %v3536, 0.0
        %v3569 = vmax.f32 %v3537, 0.0
        %v3570 = vmax.f32 %v3538, 0.0
        %v3571 = vmax.f32 %v3539, 0.0
        %v3572 = vmax.f32 %v3540, 0.0
        %v3573 = vmax.f32 %v3541, 0.0
        %v3574 = vmax.f32 %v3542, 0.0
        %v3575 = vmax.f32 %v3543, 0.0
        %v3576 = vmax.f32 %v3544, 0.0
        %v3577 = vmax.f32 %v3545, 0.0
        %v3578 = vmax.f32 %v3546, 0.0
        %v3579 = vmax.f32 %v3547, 0.0
        %v3580 = vmax.f32 %v3548, 0.0
        %v3581 = vmax.f32 %v3549, 0.0
        %v3582 = vmax.f32 %v3550, 0.0
        %v3583 = vmax.f32 %v3551, 0.0
        %v3584 = vmax.f32 %v3552, 0.0
        %v3585 = vmax.f32 %v3553, 0.0
        %v3586 = vmax.f32 %v3554, 0.0
        %v3587 = vmax.f32 %v3555, 0.0
        %v3588 = vmax.f32 %v3556, 0.0
        %v3589 = vpack.c.bf16 %v3558, %v3557
        %v3590 = vpack.c.bf16 %v3560, %v3559
        %v3591 = vpack.c.bf16 %v3562, %v3561
        %v3592 = vpack.c.bf16 %v3564, %v3563
        %v3593 = vpack.c.bf16 %v3566, %v3565
        %v3594 = vpack.c.bf16 %v3568, %v3567
        %v3595 = vpack.c.bf16 %v3570, %v3569
        %v3596 = vpack.c.bf16 %v3572, %v3571
        %v3597 = vpack.c.bf16 %v3574, %v3573
        %v3598 = vpack.c.bf16 %v3576, %v3575
        %v3599 = vpack.c.bf16 %v3578, %v3577
        %v3600 = vpack.c.bf16 %v3580, %v3579
        %v3601 = vpack.c.bf16 %v3582, %v3581
        %v3602 = vpack.c.bf16 %v3584, %v3583
        %v3603 = vpack.c.bf16 %v3586, %v3585
        %v3604 = vpack.c.bf16 %v3588, %v3587
        %v3605 = vld [vmem:[#allocation8] sm:$0xff]
        %v3606 = vld [vmem:[#allocation8 + $0x8] sm:$0xff]
        %v3607 = vld [vmem:[#allocation8 + $0x10] sm:$0xff]
        %v3608 = vld [vmem:[#allocation8 + $0x18] sm:$0xff]
        %v3609 = vld [vmem:[#allocation8 + $0x20] sm:$0xff]
        %v3610 = vld [vmem:[#allocation8 + $0x28] sm:$0xff]
        %v3611 = vld [vmem:[#allocation8 + $0x30] sm:$0xff]
        %v3612 = vld [vmem:[#allocation8 + $0x38] sm:$0xff]
        %v3613 = vld [vmem:[#allocation8 + $0x40] sm:$0xff]
        %v3614 = vld [vmem:[#allocation8 + $0x48] sm:$0xff]
        %v3615 = vld [vmem:[#allocation8 + $0x50] sm:$0xff]
        %v3616 = vld [vmem:[#allocation8 + $0x58] sm:$0xff]
        %v3617 = vld [vmem:[#allocation8 + $0x60] sm:$0xff]
        %v3618 = vld [vmem:[#allocation8 + $0x68] sm:$0xff]
        %v3619 = vld [vmem:[#allocation8 + $0x70] sm:$0xff]
        %v3620 = vld [vmem:[#allocation8 + $0x78] sm:$0xff]
        %v3621 = vld [vmem:[%s6] sm:$0x3]
        %v3623 = vlaneseq
        %v3624 = vshrl.u32 %v3623, 7
        %v3625 = vsub.s32 0, %v3624
        %v3626 = vrot.slane %v3621, %v3625
        %v3627 = vlaneseq
        %v3628 = vshrl.u32 %v3627, 7
        %v3629 = vsub.s32 1, %v3628
        %v3630 = vrot.slane %v3621, %v3629
        %v3649 = vunpack.c.l.b16 %v3605
        %v3650 = vunpack.c.h.b16 %v3605
        %v3651 = vunpack.c.l.b16 %v3606
        %v3652 = vunpack.c.h.b16 %v3606
        %v3653 = vunpack.c.l.b16 %v3607
        %v3654 = vunpack.c.h.b16 %v3607
        %v3655 = vunpack.c.l.b16 %v3608
        %v3656 = vunpack.c.h.b16 %v3608
        %v3657 = vunpack.c.l.b16 %v3609
        %v3658 = vunpack.c.h.b16 %v3609
        %v3659 = vunpack.c.l.b16 %v3610
        %v3660 = vunpack.c.h.b16 %v3610
        %v3661 = vunpack.c.l.b16 %v3611
        %v3662 = vunpack.c.h.b16 %v3611
        %v3663 = vunpack.c.l.b16 %v3612
        %v3664 = vunpack.c.h.b16 %v3612
        %v3665 = vunpack.c.l.b16 %v3613
        %v3666 = vunpack.c.h.b16 %v3613
        %v3667 = vunpack.c.l.b16 %v3614
        %v3668 = vunpack.c.h.b16 %v3614
        %v3669 = vunpack.c.l.b16 %v3615
        %v3670 = vunpack.c.h.b16 %v3615
        %v3671 = vunpack.c.l.b16 %v3616
        %v3672 = vunpack.c.h.b16 %v3616
        %v3673 = vunpack.c.l.b16 %v3617
        %v3674 = vunpack.c.h.b16 %v3617
        %v3675 = vunpack.c.l.b16 %v3618
        %v3676 = vunpack.c.h.b16 %v3618
        %v3677 = vunpack.c.l.b16 %v3619
        %v3678 = vunpack.c.h.b16 %v3619
        %v3679 = vunpack.c.l.b16 %v3620
        %v3680 = vunpack.c.h.b16 %v3620
        %v3681 = vpack.c.b16 %v3651, %v3649
        %v3682 = vpack.c.b16 %v3652, %v3650
        %v3683 = vpack.c.b16 %v3655, %v3653
        %v3684 = vpack.c.b16 %v3656, %v3654
        %v3685 = vpack.c.b16 %v3659, %v3657
        %v3686 = vpack.c.b16 %v3660, %v3658
        %v3687 = vpack.c.b16 %v3663, %v3661
        %v3688 = vpack.c.b16 %v3664, %v3662
        %v3689 = vpack.c.b16 %v3667, %v3665
        %v3690 = vpack.c.b16 %v3668, %v3666
        %v3691 = vpack.c.b16 %v3671, %v3669
        %v3692 = vpack.c.b16 %v3672, %v3670
        %v3693 = vpack.c.b16 %v3675, %v3673
        %v3694 = vpack.c.b16 %v3676, %v3674
        %v3695 = vpack.c.b16 %v3679, %v3677
        %v3696 = vpack.c.b16 %v3680, %v3678
        %3713 = vmatprep.subr.bf16.mxu0 %v3696
        %3714 = vmatpush1.bf16.msra.mxu0 %v3695
        %3715 = vmatprep.subr.bf16.mxu0 %v3694
        %3716 = vmatpush1.bf16.msra.mxu0 %v3693
        %3717 = vmatprep.subr.bf16.mxu0 %v3692
        %3718 = vmatpush1.bf16.msra.mxu0 %v3691
        %3719 = vmatprep.subr.bf16.mxu0 %v3690
        %3720 = vmatpush1.bf16.msra.mxu0 %v3689
        %3721 = vmatprep.subr.bf16.mxu0 %v3688
        %3722 = vmatpush1.bf16.msra.mxu0 %v3687
        %3723 = vmatprep.subr.bf16.mxu0 %v3686
        %3724 = vmatpush1.bf16.msra.mxu0 %v3685
        %3725 = vmatprep.subr.bf16.mxu0 %v3684
        %3726 = vmatpush1.bf16.msra.mxu0 %v3683
        %3727 = vmatprep.subr.bf16.mxu0 %v3682
        %3728 = vmatpush1.bf16.msra.mxu0 %v3681
        %3729 = vmatprep.subr.bf16.mxu0 0
        %3730 = vmatpush2.bf16.msra.mxu0 0
        %3731 = vmatprep.subr.bf16.mxu0 0
        %3732 = vmatpush2.bf16.msra.mxu0 0
        %3733 = vmatprep.subr.bf16.mxu0 0
        %3734 = vmatpush2.bf16.msra.mxu0 0
        %3735 = vmatprep.subr.bf16.mxu0 0
        %3736 = vmatpush2.bf16.msra.mxu0 0
        %3737 = vmatprep.subr.bf16.mxu0 0
        %3738 = vmatpush2.bf16.msra.mxu0 0
        %3739 = vmatprep.subr.bf16.mxu0 0
        %3740 = vmatpush2.bf16.msra.mxu0 0
        %3741 = vmatprep.subr.bf16.mxu0 0
        %3742 = vmatpush2.bf16.msra.mxu0 0
        %3743 = vmatprep.subr.bf16.mxu0 0
        %3744 = vmatpush2.bf16.msra.mxu0 0
        %3745 = vmatprep.mubr.bf16.mxu0 0
        %3746 = vmatmul.mubr.bf16.gmra.mxu0 %v3589
        %v3747 = vpop.f32.mrf.mxu0
        %v3748 = vadd.f32 %v3626, %v3747
        %v3749 = vpop.f32.mrf.mxu0
        %v3750 = vadd.f32 %v3630, %v3749
        %v3751 = vpop.f32.mrf.mxu0
        %v3752 = vadd.f32 %v3626, %v3751
        %v3753 = vpop.f32.mrf.mxu0
        %v3754 = vadd.f32 %v3630, %v3753
        %3755 = vmatprep.mubr.bf16.mxu0 0
        %3756 = vmatmul.mubr.bf16.gmra.mxu0 %v3590
        %v3757 = vpop.f32.mrf.mxu0
        %v3758 = vadd.f32 %v3626, %v3757
        %v3759 = vpop.f32.mrf.mxu0
        %v3760 = vadd.f32 %v3630, %v3759
        %v3761 = vpop.f32.mrf.mxu0
        %v3762 = vadd.f32 %v3626, %v3761
        %v3763 = vpop.f32.mrf.mxu0
        %v3764 = vadd.f32 %v3630, %v3763
        %3765 = vmatprep.mubr.bf16.mxu0 0
        %3766 = vmatmul.mubr.bf16.gmra.mxu0 %v3591
        %v3767 = vpop.f32.mrf.mxu0
        %v3768 = vadd.f32 %v3626, %v3767
        %v3769 = vpop.f32.mrf.mxu0
        %v3770 = vadd.f32 %v3630, %v3769
        %v3771 = vpop.f32.mrf.mxu0
        %v3772 = vadd.f32 %v3626, %v3771
        %v3773 = vpop.f32.mrf.mxu0
        %v3774 = vadd.f32 %v3630, %v3773
        %3775 = vmatprep.mubr.bf16.mxu0 0
        %3776 = vmatmul.mubr.bf16.gmra.mxu0 %v3592
        %v3777 = vpop.f32.mrf.mxu0
        %v3778 = vadd.f32 %v3626, %v3777
        %v3779 = vpop.f32.mrf.mxu0
        %v3780 = vadd.f32 %v3630, %v3779
        %v3781 = vpop.f32.mrf.mxu0
        %v3782 = vadd.f32 %v3626, %v3781
        %v3783 = vpop.f32.mrf.mxu0
        %v3784 = vadd.f32 %v3630, %v3783
        %3785 = vmatprep.mubr.bf16.mxu0 0
        %3786 = vmatmul.mubr.bf16.gmra.mxu0 %v3593
        %v3787 = vpop.f32.mrf.mxu0
        %v3788 = vadd.f32 %v3626, %v3787
        %v3789 = vpop.f32.mrf.mxu0
        %v3790 = vadd.f32 %v3630, %v3789
        %v3791 = vpop.f32.mrf.mxu0
        %v3792 = vadd.f32 %v3626, %v3791
        %v3793 = vpop.f32.mrf.mxu0
        %v3794 = vadd.f32 %v3630, %v3793
        %3795 = vmatprep.mubr.bf16.mxu0 0
        %3796 = vmatmul.mubr.bf16.gmra.mxu0 %v3594
        %v3797 = vpop.f32.mrf.mxu0
        %v3798 = vadd.f32 %v3626, %v3797
        %v3799 = vpop.f32.mrf.mxu0
        %v3800 = vadd.f32 %v3630, %v3799
        %v3801 = vpop.f32.mrf.mxu0
        %v3802 = vadd.f32 %v3626, %v3801
        %v3803 = vpop.f32.mrf.mxu0
        %v3804 = vadd.f32 %v3630, %v3803
        %3805 = vmatprep.mubr.bf16.mxu0 0
        %3806 = vmatmul.mubr.bf16.gmra.mxu0 %v3595
        %v3807 = vpop.f32.mrf.mxu0
        %v3808 = vadd.f32 %v3626, %v3807
        %v3809 = vpop.f32.mrf.mxu0
        %v3810 = vadd.f32 %v3630, %v3809
        %v3811 = vpop.f32.mrf.mxu0
        %v3812 = vadd.f32 %v3626, %v3811
        %v3813 = vpop.f32.mrf.mxu0
        %v3814 = vadd.f32 %v3630, %v3813
        %3815 = vmatprep.mubr.bf16.mxu0 0
        %3816 = vmatmul.mubr.bf16.gmra.mxu0 %v3596
        %v3817 = vpop.f32.mrf.mxu0
        %v3818 = vadd.f32 %v3626, %v3817
        %v3819 = vpop.f32.mrf.mxu0
        %v3820 = vadd.f32 %v3630, %v3819
        %v3821 = vpop.f32.mrf.mxu0
        %v3822 = vadd.f32 %v3626, %v3821
        %v3823 = vpop.f32.mrf.mxu0
        %v3824 = vadd.f32 %v3630, %v3823
        %3825 = vmatprep.mubr.bf16.mxu0 0
        %3826 = vmatmul.mubr.bf16.gmra.mxu0 %v3597
        %v3827 = vpop.f32.mrf.mxu0
        %v3828 = vadd.f32 %v3626, %v3827
        %v3829 = vpop.f32.mrf.mxu0
        %v3830 = vadd.f32 %v3630, %v3829
        %v3831 = vpop.f32.mrf.mxu0
        %v3832 = vadd.f32 %v3626, %v3831
        %v3833 = vpop.f32.mrf.mxu0
        %v3834 = vadd.f32 %v3630, %v3833
        %3835 = vmatprep.mubr.bf16.mxu0 0
        %3836 = vmatmul.mubr.bf16.gmra.mxu0 %v3598
        %v3837 = vpop.f32.mrf.mxu0
        %v3838 = vadd.f32 %v3626, %v3837
        %v3839 = vpop.f32.mrf.mxu0
        %v3840 = vadd.f32 %v3630, %v3839
        %v3841 = vpop.f32.mrf.mxu0
        %v3842 = vadd.f32 %v3626, %v3841
        %v3843 = vpop.f32.mrf.mxu0
        %v3844 = vadd.f32 %v3630, %v3843
        %3845 = vmatprep.mubr.bf16.mxu0 0
        %3846 = vmatmul.mubr.bf16.gmra.mxu0 %v3599
        %v3847 = vpop.f32.mrf.mxu0
        %v3848 = vadd.f32 %v3626, %v3847
        %v3849 = vpop.f32.mrf.mxu0
        %v3850 = vadd.f32 %v3630, %v3849
        %v3851 = vpop.f32.mrf.mxu0
        %v3852 = vadd.f32 %v3626, %v3851
        %v3853 = vpop.f32.mrf.mxu0
        %v3854 = vadd.f32 %v3630, %v3853
        %3855 = vmatprep.mubr.bf16.mxu0 0
        %3856 = vmatmul.mubr.bf16.gmra.mxu0 %v3600
        %v3857 = vpop.f32.mrf.mxu0
        %v3858 = vadd.f32 %v3626, %v3857
        %v3859 = vpop.f32.mrf.mxu0
        %v3860 = vadd.f32 %v3630, %v3859
        %v3861 = vpop.f32.mrf.mxu0
        %v3862 = vadd.f32 %v3626, %v3861
        %v3863 = vpop.f32.mrf.mxu0
        %v3864 = vadd.f32 %v3630, %v3863
        %3865 = vmatprep.mubr.bf16.mxu0 0
        %3866 = vmatmul.mubr.bf16.gmra.mxu0 %v3601
        %v3867 = vpop.f32.mrf.mxu0
        %v3868 = vadd.f32 %v3626, %v3867
        %v3869 = vpop.f32.mrf.mxu0
        %v3870 = vadd.f32 %v3630, %v3869
        %v3871 = vpop.f32.mrf.mxu0
        %v3872 = vadd.f32 %v3626, %v3871
        %v3873 = vpop.f32.mrf.mxu0
        %v3874 = vadd.f32 %v3630, %v3873
        %3875 = vmatprep.mubr.bf16.mxu0 0
        %3876 = vmatmul.mubr.bf16.gmra.mxu0 %v3602
        %v3877 = vpop.f32.mrf.mxu0
        %v3878 = vadd.f32 %v3626, %v3877
        %v3879 = vpop.f32.mrf.mxu0
        %v3880 = vadd.f32 %v3630, %v3879
        %v3881 = vpop.f32.mrf.mxu0
        %v3882 = vadd.f32 %v3626, %v3881
        %v3883 = vpop.f32.mrf.mxu0
        %v3884 = vadd.f32 %v3630, %v3883
        %3885 = vmatprep.mubr.bf16.mxu0 0
        %3886 = vmatmul.mubr.bf16.gmra.mxu0 %v3603
        %v3887 = vpop.f32.mrf.mxu0
        %v3888 = vadd.f32 %v3626, %v3887
        %v3889 = vpop.f32.mrf.mxu0
        %v3890 = vadd.f32 %v3630, %v3889
        %v3891 = vpop.f32.mrf.mxu0
        %v3892 = vadd.f32 %v3626, %v3891
        %v3893 = vpop.f32.mrf.mxu0
        %v3894 = vadd.f32 %v3630, %v3893
        %3895 = vmatprep.mubr.bf16.mxu0 0
        %3896 = vmatmul.mubr.bf16.gmra.mxu0 %v3604
        %v3897 = vpop.f32.mrf.mxu0
        %v3898 = vadd.f32 %v3626, %v3897
        %v3899 = vpop.f32.mrf.mxu0
        %v3900 = vadd.f32 %v3630, %v3899
        %v3901 = vpop.f32.mrf.mxu0
        %v3902 = vadd.f32 %v3626, %v3901
        %v3903 = vpop.f32.mrf.mxu0
        %v3904 = vadd.f32 %v3630, %v3903
        %3905 = vdwg.mxu0
        %v3906 = vld [vmem:[#allocation10] sm:$0xff]
        %v3907 = vld [vmem:[#allocation10 + $0x8] sm:$0xff]
        %v3908 = vld [vmem:[#allocation10 + $0x10] sm:$0xff]
        %v3909 = vld [vmem:[#allocation10 + $0x18] sm:$0xff]
        %v3910 = vld [vmem:[#allocation10 + $0x20] sm:$0xff]
        %v3911 = vld [vmem:[#allocation10 + $0x28] sm:$0xff]
        %v3912 = vld [vmem:[#allocation10 + $0x30] sm:$0xff]
        %v3913 = vld [vmem:[#allocation10 + $0x38] sm:$0xff]
        %v3914 = vld [vmem:[%s8] sm:$0x3]
        %v3916 = vlaneseq
        %v3917 = vshrl.u32 %v3916, 7
        %v3918 = vsub.s32 0, %v3917
        %v3919 = vrot.slane %v3914, %v3918
        %v3920 = vlaneseq
        %v3921 = vshrl.u32 %v3920, 7
        %v3922 = vsub.s32 1, %v3921
        %v3923 = vrot.slane %v3914, %v3922
        %v3934 = vunpack.c.l.b16 %v3906
        %v3935 = vunpack.c.h.b16 %v3906
        %v3936 = vunpack.c.l.b16 %v3907
        %v3937 = vunpack.c.h.b16 %v3907
        %v3938 = vunpack.c.l.b16 %v3908
        %v3939 = vunpack.c.h.b16 %v3908
        %v3940 = vunpack.c.l.b16 %v3909
        %v3941 = vunpack.c.h.b16 %v3909
        %v3942 = vunpack.c.l.b16 %v3910
        %v3943 = vunpack.c.h.b16 %v3910
        %v3944 = vunpack.c.l.b16 %v3911
        %v3945 = vunpack.c.h.b16 %v3911
        %v3946 = vunpack.c.l.b16 %v3912
        %v3947 = vunpack.c.h.b16 %v3912
        %v3948 = vunpack.c.l.b16 %v3913
        %v3949 = vunpack.c.h.b16 %v3913
        %v3950 = vpack.c.b16 %v3936, %v3934
        %v3951 = vpack.c.b16 %v3937, %v3935
        %v3952 = vpack.c.b16 %v3940, %v3938
        %v3953 = vpack.c.b16 %v3941, %v3939
        %v3954 = vpack.c.b16 %v3944, %v3942
        %v3955 = vpack.c.b16 %v3945, %v3943
        %v3956 = vpack.c.b16 %v3948, %v3946
        %v3957 = vpack.c.b16 %v3949, %v3947
        %3966 = vmatprep.subr.bf16.mxu0 0
        %3967 = vmatpush1.bf16.msra.mxu0 0
        %3968 = vmatprep.subr.bf16.mxu0 0
        %3969 = vmatpush1.bf16.msra.mxu0 0
        %3970 = vmatprep.subr.bf16.mxu0 0
        %3971 = vmatpush1.bf16.msra.mxu0 0
        %3972 = vmatprep.subr.bf16.mxu0 0
        %3973 = vmatpush1.bf16.msra.mxu0 0
        %3974 = vmatprep.subr.bf16.mxu0 %v3957
        %3975 = vmatpush1.bf16.msra.mxu0 %v3956
        %3976 = vmatprep.subr.bf16.mxu0 %v3955
        %3977 = vmatpush1.bf16.msra.mxu0 %v3954
        %3978 = vmatprep.subr.bf16.mxu0 %v3953
        %3979 = vmatpush1.bf16.msra.mxu0 %v3952
        %3980 = vmatprep.subr.bf16.mxu0 %v3951
        %3981 = vmatpush1.bf16.msra.mxu0 %v3950
        %3982 = vmatprep.subr.bf16.mxu0 0
        %3983 = vmatpush2.bf16.msra.mxu0 0
        %3984 = vmatprep.subr.bf16.mxu0 0
        %3985 = vmatpush2.bf16.msra.mxu0 0
        %3986 = vmatprep.subr.bf16.mxu0 0
        %3987 = vmatpush2.bf16.msra.mxu0 0
        %3988 = vmatprep.subr.bf16.mxu0 0
        %3989 = vmatpush2.bf16.msra.mxu0 0
        %3990 = vmatprep.subr.bf16.mxu0 0
        %3991 = vmatpush2.bf16.msra.mxu0 0
        %3992 = vmatprep.subr.bf16.mxu0 0
        %3993 = vmatpush2.bf16.msra.mxu0 0
        %3994 = vmatprep.subr.bf16.mxu0 0
        %3995 = vmatpush2.bf16.msra.mxu0 0
        %3996 = vmatprep.subr.bf16.mxu0 0
        %3997 = vmatpush2.bf16.msra.mxu0 0
        %3998 = vmatprep.mubr.bf16.mxu0 0
        %3999 = vmatmul.mubr.bf16.gmra.mxu0 %v501
        %v4000 = vpop.f32.mrf.mxu0
        %v4001 = vadd.f32 %v3919, %v4000
        %v4002 = vpop.f32.mrf.mxu0
        %v4003 = vadd.f32 %v3923, %v4002
        %v4004 = vpop.f32.mrf.mxu0
        %v4005 = vadd.f32 %v3919, %v4004
        %v4006 = vpop.f32.mrf.mxu0
        %v4007 = vadd.f32 %v3923, %v4006
        %4008 = vmatprep.mubr.bf16.mxu0 0
        %4009 = vmatmul.mubr.bf16.gmra.mxu0 %v504
        %v4010 = vpop.f32.mrf.mxu0
        %v4011 = vadd.f32 %v3919, %v4010
        %v4012 = vpop.f32.mrf.mxu0
        %v4013 = vadd.f32 %v3923, %v4012
        %v4014 = vpop.f32.mrf.mxu0
        %v4015 = vadd.f32 %v3919, %v4014
        %v4016 = vpop.f32.mrf.mxu0
        %v4017 = vadd.f32 %v3923, %v4016
        %4018 = vmatprep.mubr.bf16.mxu0 0
        %4019 = vmatmul.mubr.bf16.gmra.mxu0 %v507
        %v4020 = vpop.f32.mrf.mxu0
        %v4021 = vadd.f32 %v3919, %v4020
        %v4022 = vpop.f32.mrf.mxu0
        %v4023 = vadd.f32 %v3923, %v4022
        %v4024 = vpop.f32.mrf.mxu0
        %v4025 = vadd.f32 %v3919, %v4024
        %v4026 = vpop.f32.mrf.mxu0
        %v4027 = vadd.f32 %v3923, %v4026
        %4028 = vmatprep.mubr.bf16.mxu0 0
        %4029 = vmatmul.mubr.bf16.gmra.mxu0 %v510
        %v4030 = vpop.f32.mrf.mxu0
        %v4031 = vadd.f32 %v3919, %v4030
        %v4032 = vpop.f32.mrf.mxu0
        %v4033 = vadd.f32 %v3923, %v4032
        %v4034 = vpop.f32.mrf.mxu0
        %v4035 = vadd.f32 %v3919, %v4034
        %v4036 = vpop.f32.mrf.mxu0
        %v4037 = vadd.f32 %v3923, %v4036
        %4038 = vmatprep.mubr.bf16.mxu0 0
        %4039 = vmatmul.mubr.bf16.gmra.mxu0 %v513
        %v4040 = vpop.f32.mrf.mxu0
        %v4041 = vadd.f32 %v3919, %v4040
        %v4042 = vpop.f32.mrf.mxu0
        %v4043 = vadd.f32 %v3923, %v4042
        %v4044 = vpop.f32.mrf.mxu0
        %v4045 = vadd.f32 %v3919, %v4044
        %v4046 = vpop.f32.mrf.mxu0
        %v4047 = vadd.f32 %v3923, %v4046
        %4048 = vmatprep.mubr.bf16.mxu0 0
        %4049 = vmatmul.mubr.bf16.gmra.mxu0 %v516
        %v4050 = vpop.f32.mrf.mxu0
        %v4051 = vadd.f32 %v3919, %v4050
        %v4052 = vpop.f32.mrf.mxu0
        %v4053 = vadd.f32 %v3923, %v4052
        %v4054 = vpop.f32.mrf.mxu0
        %v4055 = vadd.f32 %v3919, %v4054
        %v4056 = vpop.f32.mrf.mxu0
        %v4057 = vadd.f32 %v3923, %v4056
        %4058 = vmatprep.mubr.bf16.mxu0 0
        %4059 = vmatmul.mubr.bf16.gmra.mxu0 %v519
        %v4060 = vpop.f32.mrf.mxu0
        %v4061 = vadd.f32 %v3919, %v4060
        %v4062 = vpop.f32.mrf.mxu0
        %v4063 = vadd.f32 %v3923, %v4062
        %v4064 = vpop.f32.mrf.mxu0
        %v4065 = vadd.f32 %v3919, %v4064
        %v4066 = vpop.f32.mrf.mxu0
        %v4067 = vadd.f32 %v3923, %v4066
        %4068 = vmatprep.mubr.bf16.mxu0 0
        %4069 = vmatmul.mubr.bf16.gmra.mxu0 %v522
        %v4070 = vpop.f32.mrf.mxu0
        %v4071 = vadd.f32 %v3919, %v4070
        %v4072 = vpop.f32.mrf.mxu0
        %v4073 = vadd.f32 %v3923, %v4072
        %v4074 = vpop.f32.mrf.mxu0
        %v4075 = vadd.f32 %v3919, %v4074
        %v4076 = vpop.f32.mrf.mxu0
        %v4077 = vadd.f32 %v3923, %v4076
        %4078 = vmatprep.mubr.bf16.mxu0 0
        %4079 = vmatmul.mubr.bf16.gmra.mxu0 %v525
        %v4080 = vpop.f32.mrf.mxu0
        %v4081 = vadd.f32 %v3919, %v4080
        %v4082 = vpop.f32.mrf.mxu0
        %v4083 = vadd.f32 %v3923, %v4082
        %v4084 = vpop.f32.mrf.mxu0
        %v4085 = vadd.f32 %v3919, %v4084
        %v4086 = vpop.f32.mrf.mxu0
        %v4087 = vadd.f32 %v3923, %v4086
        %4088 = vmatprep.mubr.bf16.mxu0 0
        %4089 = vmatmul.mubr.bf16.gmra.mxu0 %v528
        %v4090 = vpop.f32.mrf.mxu0
        %v4091 = vadd.f32 %v3919, %v4090
        %v4092 = vpop.f32.mrf.mxu0
        %v4093 = vadd.f32 %v3923, %v4092
        %v4094 = vpop.f32.mrf.mxu0
        %v4095 = vadd.f32 %v3919, %v4094
        %v4096 = vpop.f32.mrf.mxu0
        %v4097 = vadd.f32 %v3923, %v4096
        %4098 = vmatprep.mubr.bf16.mxu0 0
        %4099 = vmatmul.mubr.bf16.gmra.mxu0 %v531
        %v4100 = vpop.f32.mrf.mxu0
        %v4101 = vadd.f32 %v3919, %v4100
        %v4102 = vpop.f32.mrf.mxu0
        %v4103 = vadd.f32 %v3923, %v4102
        %v4104 = vpop.f32.mrf.mxu0
        %v4105 = vadd.f32 %v3919, %v4104
        %v4106 = vpop.f32.mrf.mxu0
        %v4107 = vadd.f32 %v3923, %v4106
        %4108 = vmatprep.mubr.bf16.mxu0 0
        %4109 = vmatmul.mubr.bf16.gmra.mxu0 %v534
        %v4110 = vpop.f32.mrf.mxu0
        %v4111 = vadd.f32 %v3919, %v4110
        %v4112 = vpop.f32.mrf.mxu0
        %v4113 = vadd.f32 %v3923, %v4112
        %v4114 = vpop.f32.mrf.mxu0
        %v4115 = vadd.f32 %v3919, %v4114
        %v4116 = vpop.f32.mrf.mxu0
        %v4117 = vadd.f32 %v3923, %v4116
        %4118 = vmatprep.mubr.bf16.mxu0 0
        %4119 = vmatmul.mubr.bf16.gmra.mxu0 %v537
        %v4120 = vpop.f32.mrf.mxu0
        %v4121 = vadd.f32 %v3919, %v4120
        %v4122 = vpop.f32.mrf.mxu0
        %v4123 = vadd.f32 %v3923, %v4122
        %v4124 = vpop.f32.mrf.mxu0
        %v4125 = vadd.f32 %v3919, %v4124
        %v4126 = vpop.f32.mrf.mxu0
        %v4127 = vadd.f32 %v3923, %v4126
        %4128 = vmatprep.mubr.bf16.mxu0 0
        %4129 = vmatmul.mubr.bf16.gmra.mxu0 %v540
        %v4130 = vpop.f32.mrf.mxu0
        %v4131 = vadd.f32 %v3919, %v4130
        %v4132 = vpop.f32.mrf.mxu0
        %v4133 = vadd.f32 %v3923, %v4132
        %v4134 = vpop.f32.mrf.mxu0
        %v4135 = vadd.f32 %v3919, %v4134
        %v4136 = vpop.f32.mrf.mxu0
        %v4137 = vadd.f32 %v3923, %v4136
        %4138 = vmatprep.mubr.bf16.mxu0 0
        %4139 = vmatmul.mubr.bf16.gmra.mxu0 %v543
        %v4140 = vpop.f32.mrf.mxu0
        %v4141 = vadd.f32 %v3919, %v4140
        %v4142 = vpop.f32.mrf.mxu0
        %v4143 = vadd.f32 %v3923, %v4142
        %v4144 = vpop.f32.mrf.mxu0
        %v4145 = vadd.f32 %v3919, %v4144
        %v4146 = vpop.f32.mrf.mxu0
        %v4147 = vadd.f32 %v3923, %v4146
        %4148 = vmatprep.mubr.bf16.mxu0 0
        %4149 = vmatmul.mubr.bf16.gmra.mxu0 %v546
        %v4150 = vpop.f32.mrf.mxu0
        %v4151 = vadd.f32 %v3919, %v4150
        %v4152 = vpop.f32.mrf.mxu0
        %v4153 = vadd.f32 %v3923, %v4152
        %v4154 = vpop.f32.mrf.mxu0
        %v4155 = vadd.f32 %v3919, %v4154
        %v4156 = vpop.f32.mrf.mxu0
        %v4157 = vadd.f32 %v3923, %v4156
        %4158 = vdwg.mxu0
        %v4159 = vadd.f32 %v3748, %v4001
        %v4160 = vadd.f32 %v3750, %v4003
        %v4161 = vadd.f32 %v3752, %v4005
        %v4162 = vadd.f32 %v3754, %v4007
        %v4163 = vadd.f32 %v3758, %v4011
        %v4164 = vadd.f32 %v3760, %v4013
        %v4165 = vadd.f32 %v3762, %v4015
        %v4166 = vadd.f32 %v3764, %v4017
        %v4167 = vadd.f32 %v3768, %v4021
        %v4168 = vadd.f32 %v3770, %v4023
        %v4169 = vadd.f32 %v3772, %v4025
        %v4170 = vadd.f32 %v3774, %v4027
        %v4171 = vadd.f32 %v3778, %v4031
        %v4172 = vadd.f32 %v3780, %v4033
        %v4173 = vadd.f32 %v3782, %v4035
        %v4174 = vadd.f32 %v3784, %v4037
        %v4175 = vadd.f32 %v3788, %v4041
        %v4176 = vadd.f32 %v3790, %v4043
        %v4177 = vadd.f32 %v3792, %v4045
        %v4178 = vadd.f32 %v3794, %v4047
        %v4179 = vadd.f32 %v3798, %v4051
        %v4180 = vadd.f32 %v3800, %v4053
        %v4181 = vadd.f32 %v3802, %v4055
        %v4182 = vadd.f32 %v3804, %v4057
        %v4183 = vadd.f32 %v3808, %v4061
        %v4184 = vadd.f32 %v3810, %v4063
        %v4185 = vadd.f32 %v3812, %v4065
        %v4186 = vadd.f32 %v3814, %v4067
        %v4187 = vadd.f32 %v3818, %v4071
        %v4188 = vadd.f32 %v3820, %v4073
        %v4189 = vadd.f32 %v3822, %v4075
        %v4190 = vadd.f32 %v3824, %v4077
        %v4191 = vadd.f32 %v3828, %v4081
        %v4192 = vadd.f32 %v3830, %v4083
        %v4193 = vadd.f32 %v3832, %v4085
        %v4194 = vadd.f32 %v3834, %v4087
        %v4195 = vadd.f32 %v3838, %v4091
        %v4196 = vadd.f32 %v3840, %v4093
        %v4197 = vadd.f32 %v3842, %v4095
        %v4198 = vadd.f32 %v3844, %v4097
        %v4199 = vadd.f32 %v3848, %v4101
        %v4200 = vadd.f32 %v3850, %v4103
        %v4201 = vadd.f32 %v3852, %v4105
        %v4202 = vadd.f32 %v3854, %v4107
        %v4203 = vadd.f32 %v3858, %v4111
        %v4204 = vadd.f32 %v3860, %v4113
        %v4205 = vadd.f32 %v3862, %v4115
        %v4206 = vadd.f32 %v3864, %v4117
        %v4207 = vadd.f32 %v3868, %v4121
        %v4208 = vadd.f32 %v3870, %v4123
        %v4209 = vadd.f32 %v3872, %v4125
        %v4210 = vadd.f32 %v3874, %v4127
        %v4211 = vadd.f32 %v3878, %v4131
        %v4212 = vadd.f32 %v3880, %v4133
        %v4213 = vadd.f32 %v3882, %v4135
        %v4214 = vadd.f32 %v3884, %v4137
        %v4215 = vadd.f32 %v3888, %v4141
        %v4216 = vadd.f32 %v3890, %v4143
        %v4217 = vadd.f32 %v3892, %v4145
        %v4218 = vadd.f32 %v3894, %v4147
        %v4219 = vadd.f32 %v3898, %v4151
        %v4220 = vadd.f32 %v3900, %v4153
        %v4221 = vadd.f32 %v3902, %v4155
        %v4222 = vadd.f32 %v3904, %v4157
        %v4223 = vmax.f32 %v4159, 0.0
        %v4224 = vmax.f32 %v4160, 0.0
        %v4225 = vmax.f32 %v4161, 0.0
        %v4226 = vmax.f32 %v4162, 0.0
        %v4227 = vmax.f32 %v4163, 0.0
        %v4228 = vmax.f32 %v4164, 0.0
        %v4229 = vmax.f32 %v4165, 0.0
        %v4230 = vmax.f32 %v4166, 0.0
        %v4231 = vmax.f32 %v4167, 0.0
        %v4232 = vmax.f32 %v4168, 0.0
        %v4233 = vmax.f32 %v4169, 0.0
        %v4234 = vmax.f32 %v4170, 0.0
        %v4235 = vmax.f32 %v4171, 0.0
        %v4236 = vmax.f32 %v4172, 0.0
        %v4237 = vmax.f32 %v4173, 0.0
        %v4238 = vmax.f32 %v4174, 0.0
        %v4239 = vmax.f32 %v4175, 0.0
        %v4240 = vmax.f32 %v4176, 0.0
        %v4241 = vmax.f32 %v4177, 0.0
        %v4242 = vmax.f32 %v4178, 0.0
        %v4243 = vmax.f32 %v4179, 0.0
        %v4244 = vmax.f32 %v4180, 0.0
        %v4245 = vmax.f32 %v4181, 0.0
        %v4246 = vmax.f32 %v4182, 0.0
        %v4247 = vmax.f32 %v4183, 0.0
        %v4248 = vmax.f32 %v4184, 0.0
        %v4249 = vmax.f32 %v4185, 0.0
        %v4250 = vmax.f32 %v4186, 0.0
        %v4251 = vmax.f32 %v4187, 0.0
        %v4252 = vmax.f32 %v4188, 0.0
        %v4253 = vmax.f32 %v4189, 0.0
        %v4254 = vmax.f32 %v4190, 0.0
        %v4255 = vmax.f32 %v4191, 0.0
        %v4256 = vmax.f32 %v4192, 0.0
        %v4257 = vmax.f32 %v4193, 0.0
        %v4258 = vmax.f32 %v4194, 0.0
        %v4259 = vmax.f32 %v4195, 0.0
        %v4260 = vmax.f32 %v4196, 0.0
        %v4261 = vmax.f32 %v4197, 0.0
        %v4262 = vmax.f32 %v4198, 0.0
        %v4263 = vmax.f32 %v4199, 0.0
        %v4264 = vmax.f32 %v4200, 0.0
        %v4265 = vmax.f32 %v4201, 0.0
        %v4266 = vmax.f32 %v4202, 0.0
        %v4267 = vmax.f32 %v4203, 0.0
        %v4268 = vmax.f32 %v4204, 0.0
        %v4269 = vmax.f32 %v4205, 0.0
        %v4270 = vmax.f32 %v4206, 0.0
        %v4271 = vmax.f32 %v4207, 0.0
        %v4272 = vmax.f32 %v4208, 0.0
        %v4273 = vmax.f32 %v4209, 0.0
        %v4274 = vmax.f32 %v4210, 0.0
        %v4275 = vmax.f32 %v4211, 0.0
        %v4276 = vmax.f32 %v4212, 0.0
        %v4277 = vmax.f32 %v4213, 0.0
        %v4278 = vmax.f32 %v4214, 0.0
        %v4279 = vmax.f32 %v4215, 0.0
        %v4280 = vmax.f32 %v4216, 0.0
        %v4281 = vmax.f32 %v4217, 0.0
        %v4282 = vmax.f32 %v4218, 0.0
        %v4283 = vmax.f32 %v4219, 0.0
        %v4284 = vmax.f32 %v4220, 0.0
        %v4285 = vmax.f32 %v4221, 0.0
        %v4286 = vmax.f32 %v4222, 0.0
        %4287 = vst [vmem:[%s410] sm:$0xff] %v4223
        %4288 = vst [vmem:[%s410 + $0x8] sm:$0xff] %v4224
        %4289 = vst [vmem:[%s410 + $0x10] sm:$0xff] %v4225
        %4290 = vst [vmem:[%s410 + $0x18] sm:$0xff] %v4226
        %4291 = vst [vmem:[%s410 + $0x20] sm:$0xff] %v4227
        %4292 = vst [vmem:[%s410 + $0x28] sm:$0xff] %v4228
        %4293 = vst [vmem:[%s410 + $0x30] sm:$0xff] %v4229
        %4294 = vst [vmem:[%s410 + $0x38] sm:$0xff] %v4230
        %4295 = vst [vmem:[%s410 + $0x40] sm:$0xff] %v4231
        %4296 = vst [vmem:[%s410 + $0x48] sm:$0xff] %v4232
        %4297 = vst [vmem:[%s410 + $0x50] sm:$0xff] %v4233
        %4298 = vst [vmem:[%s410 + $0x58] sm:$0xff] %v4234
        %4299 = vst [vmem:[%s410 + $0x60] sm:$0xff] %v4235
        %4300 = vst [vmem:[%s410 + $0x68] sm:$0xff] %v4236
        %4301 = vst [vmem:[%s410 + $0x70] sm:$0xff] %v4237
        %4302 = vst [vmem:[%s410 + $0x78] sm:$0xff] %v4238
        %4303 = vst [vmem:[%s410 + $0x80] sm:$0xff] %v4239
        %4304 = vst [vmem:[%s410 + $0x88] sm:$0xff] %v4240
        %4305 = vst [vmem:[%s410 + $0x90] sm:$0xff] %v4241
        %4306 = vst [vmem:[%s410 + $0x98] sm:$0xff] %v4242
        %4307 = vst [vmem:[%s410 + $0xa0] sm:$0xff] %v4243
        %4308 = vst [vmem:[%s410 + $0xa8] sm:$0xff] %v4244
        %4309 = vst [vmem:[%s410 + $0xb0] sm:$0xff] %v4245
        %4310 = vst [vmem:[%s410 + $0xb8] sm:$0xff] %v4246
        %4311 = vst [vmem:[%s410 + $0xc0] sm:$0xff] %v4247
        %4312 = vst [vmem:[%s410 + $0xc8] sm:$0xff] %v4248
        %4313 = vst [vmem:[%s410 + $0xd0] sm:$0xff] %v4249
        %4314 = vst [vmem:[%s410 + $0xd8] sm:$0xff] %v4250
        %4315 = vst [vmem:[%s410 + $0xe0] sm:$0xff] %v4251
        %4316 = vst [vmem:[%s410 + $0xe8] sm:$0xff] %v4252
        %4317 = vst [vmem:[%s410 + $0xf0] sm:$0xff] %v4253
        %4318 = vst [vmem:[%s410 + $0xf8] sm:$0xff] %v4254
        %4319 = vst [vmem:[%s410 + $0x100] sm:$0xff] %v4255
        %4320 = vst [vmem:[%s410 + $0x108] sm:$0xff] %v4256
        %4321 = vst [vmem:[%s410 + $0x110] sm:$0xff] %v4257
        %4322 = vst [vmem:[%s410 + $0x118] sm:$0xff] %v4258
        %4323 = vst [vmem:[%s410 + $0x120] sm:$0xff] %v4259
        %4324 = vst [vmem:[%s410 + $0x128] sm:$0xff] %v4260
        %4325 = vst [vmem:[%s410 + $0x130] sm:$0xff] %v4261
        %4326 = vst [vmem:[%s410 + $0x138] sm:$0xff] %v4262
        %4327 = vst [vmem:[%s410 + $0x140] sm:$0xff] %v4263
        %4328 = vst [vmem:[%s410 + $0x148] sm:$0xff] %v4264
        %4329 = vst [vmem:[%s410 + $0x150] sm:$0xff] %v4265
        %4330 = vst [vmem:[%s410 + $0x158] sm:$0xff] %v4266
        %4331 = vst [vmem:[%s410 + $0x160] sm:$0xff] %v4267
        %4332 = vst [vmem:[%s410 + $0x168] sm:$0xff] %v4268
        %4333 = vst [vmem:[%s410 + $0x170] sm:$0xff] %v4269
        %4334 = vst [vmem:[%s410 + $0x178] sm:$0xff] %v4270
        %4335 = vst [vmem:[%s410 + $0x180] sm:$0xff] %v4271
        %4336 = vst [vmem:[%s410 + $0x188] sm:$0xff] %v4272
        %4337 = vst [vmem:[%s410 + $0x190] sm:$0xff] %v4273
        %4338 = vst [vmem:[%s410 + $0x198] sm:$0xff] %v4274
        %4339 = vst [vmem:[%s410 + $0x1a0] sm:$0xff] %v4275
        %4340 = vst [vmem:[%s410 + $0x1a8] sm:$0xff] %v4276
        %4341 = vst [vmem:[%s410 + $0x1b0] sm:$0xff] %v4277
        %4342 = vst [vmem:[%s410 + $0x1b8] sm:$0xff] %v4278
        %4343 = vst [vmem:[%s410 + $0x1c0] sm:$0xff] %v4279
        %4344 = vst [vmem:[%s410 + $0x1c8] sm:$0xff] %v4280
        %4345 = vst [vmem:[%s410 + $0x1d0] sm:$0xff] %v4281
        %4346 = vst [vmem:[%s410 + $0x1d8] sm:$0xff] %v4282
        %4347 = vst [vmem:[%s410 + $0x1e0] sm:$0xff] %v4283
        %4348 = vst [vmem:[%s410 + $0x1e8] sm:$0xff] %v4284
        %4349 = vst [vmem:[%s410 + $0x1f0] sm:$0xff] %v4285
        %4350 = vst [vmem:[%s410 + $0x1f8] sm:$0xff] %v4286
        %p4351 = scmp.lt.s32.totalorder %s25, 1
        %s4352 = scalar_select %p4351, %s25, 1
        %s4353 = smul.addr %s4352, 64
        %s4354 = smul.addr %s4353, 8
        %s4355 = scalar_lea.vmem %s9, %s4354
        // Predicated region
        $region77: #{_lambda_.2} parent=55 // pred_check
          %p4356 = pneg %p237
        $region78: #{_lambda_.2} parent=55 // pred_check_branch
          %4358 = sbr.rel (%p4356) target = $region80
        $region79: #{_lambda_.2} parent=55 // pred_region
          _
        $region80: #{_lambda_.2} parent=55 // pred_fallthru
          _
      $region56: #{_lambda_.2} parent=5 // pred_fallthru
        _
      %p4359 = scmp.le.s32.totalorder 2, %s20
      // Predicated region
      $region81: #{_lambda_.2} parent=5 // pred_check
        %p4360 = pneg %p4359
      $region82: #{_lambda_.2} parent=5 // pred_check_branch
        %4362 = sbr.rel (%p4360) target = $region84
      $region83: #{_lambda_.2} parent=5 // pred_region
        %s4363 = ssub.s32 %s20, 2
        // Predicated region
        $region85: #{_lambda_.2} parent=83 // pred_check
          %p4364 = pneg %p243
        $region86: #{_lambda_.2} parent=83 // pred_check_branch
          %4366 = sbr.rel (%p4364) target = $region88
        $region87: #{_lambda_.2} parent=83 // pred_region
          %p4367 = scmp.lt.s32.totalorder %s26, 1
          %s4368 = scalar_select %p4367, %s26, 1
          %s4369 = smul.addr %s4368, 64
          %s4370 = smul.addr %s4369, 8
          %s4371 = scalar_lea.vmem %s9, %s4370
        $region88: #{_lambda_.2} parent=83 // pred_fallthru
          _
      $region84: #{_lambda_.2} parent=5 // pred_fallthru
        _
    $region6: #{_lambda_.2} parent=1 // loop_footer
      %s24 = sadd.s32 1, %s20
    $region7: #{_lambda_.2} parent=1 // loop_footer_branch
      %19 = sbr.rel target = $region3
    $region8: #{_lambda_.2} parent=1 // loop_exit
      _
    %4372 = vsyncpa [#allocation4], 1
    %s4373 = scalar_lea.sflag [#allocation4], 1
    %4374 = vsyncpa %s4373, 1
    %4375 = vsyncpa [#allocation6], 1
    %4376 = vsyncpa [#allocation9], 1

</llo_original>
